<compile_context>
chip_gen: v5e
topology: v5e:2x2
jax: 0.10.0
libtpu: 0.0.40
codegen_flags: <defaults>
</compile_context>

<pallas_src>
import functools

import jax
import jax.numpy as jnp
from jax import lax
from jax.experimental import pallas as pl
from jax.experimental.pallas import tpu as pltpu

BATCH_NORM_EPSILON = 0.001
LANE = 128                              # lane width: channel padding target
VMEM_LIMIT_BYTES = 32 * 1024 * 1024     # explicit, safe on v5e/v6e/v7x


def _round_up(n, m):
    return ((n + m - 1) // m) * m


def _pick_row_tile(m, target=256):
    """Largest row tile <= target that divides m (multiples of 8), else m."""
    for t in (target, target // 2, 128, 64, 32, 16, 8):
        if t <= m and m % t == 0:
            return t
    return m


# ---------------------------------------------------------------------------
# Kernel 1: BatchNorm batch statistics -> per-channel scale / shift
#   two-pass tiled reduction:  pass 0 accumulates sum -> mean,
#                              pass 1 accumulates (x - mean)^2 -> variance.
# ---------------------------------------------------------------------------
def _bn_stats_kernel(a_ref, gamma_ref, beta_ref, scale_ref, shift_ref,
                     acc_ref, mean_ref, *, inv_count, eps):
    p = pl.program_id(0)                  # 0 = mean pass, 1 = variance pass
    t = pl.program_id(1)                  # row-tile index (reduction axis, last)
    last = pl.num_programs(1) - 1

    @pl.when(t == 0)
    def _zero_acc():
        acc_ref[...] = jnp.zeros_like(acc_ref)

    a = a_ref[...]                        # (tile_rows, C) f32

    @pl.when(p == 0)
    def _accum_sum():
        acc_ref[...] += jnp.sum(a, axis=0, keepdims=True)

    @pl.when(p == 1)
    def _accum_centered_sq():
        d = a - mean_ref[...]
        acc_ref[...] += jnp.sum(d * d, axis=0, keepdims=True)

    @pl.when((p == 0) & (t == last))
    def _finish_mean():
        mean_ref[...] = acc_ref[...] * inv_count

    @pl.when((p == 1) & (t == last))
    def _finish_scale_shift():
        var = acc_ref[...] * inv_count            # biased batch variance
        sc = gamma_ref[...] * lax.rsqrt(var + eps)
        scale_ref[...] = sc
        shift_ref[...] = beta_ref[...] - mean_ref[...] * sc


def bn_stats(a2d, gamma, beta):
    """a2d: (M, C) f32 -> (scale, shift) each (1, C) f32."""
    M, C = a2d.shape
    tm = _pick_row_tile(M)
    nt = M // tm
    kernel = functools.partial(_bn_stats_kernel, inv_count=1.0 / M,
                               eps=BATCH_NORM_EPSILON)
    scale, shift = pl.pallas_call(
        kernel,
        out_shape=[jax.ShapeDtypeStruct((1, C), jnp.float32),
                   jax.ShapeDtypeStruct((1, C), jnp.float32)],
        grid_spec=pltpu.PrefetchScalarGridSpec(
            num_scalar_prefetch=0,
            grid=(2, nt),
            in_specs=[pl.BlockSpec((tm, C), lambda p, t: (t, 0)),
                      pl.BlockSpec((1, C), lambda p, t: (0, 0)),
                      pl.BlockSpec((1, C), lambda p, t: (0, 0))],
            out_specs=[pl.BlockSpec((1, C), lambda p, t: (0, 0)),
                       pl.BlockSpec((1, C), lambda p, t: (0, 0))],
            scratch_shapes=[pltpu.VMEM((1, C), jnp.float32),    # running sum
                            pltpu.VMEM((1, C), jnp.float32)]),  # mean
        compiler_params=pltpu.CompilerParams(
            dimension_semantics=("arbitrary", "arbitrary"),
            vmem_limit_bytes=VMEM_LIMIT_BYTES),
        cost_estimate=pl.CostEstimate(flops=int(4 * M * C),
                                      transcendentals=int(C),
                                      bytes_accessed=int(2 * M * C * 4 + 6 * C * 4)),
    )(a2d, gamma, beta)
    return scale, shift


# ---------------------------------------------------------------------------
# Kernel 2: fused BN-affine + ReLU + 3x3 conv (9 shifted-window MXU matmuls,
#           f32 VMEM accumulator), optional fused 1x1 strided shortcut output,
#           optional fused residual add.
# ---------------------------------------------------------------------------
def _conv_body(scale_ref, shift_ref, mask_ref, xq_ref, w_ref, ws_ref, res_ref,
               y_ref, short_ref, h_scr, acc_ref, *, stride):
    s = stride
    n_planes, Hq, Wq, cin_p = h_scr.shape
    _, Ho, Wo, tn = y_ref.shape

    scale = scale_ref[...]            # (1, cin_p)  gamma / sqrt(var + eps)
    shift = shift_ref[...]            # (1, cin_p)  beta - mean * scale

    # Fused BN affine + ReLU + conv zero-padding, once per spatial phase.
    # mask is 1.0 on real pixels and 0.0 on the conv's zero-padding ring
    # (padding must be applied *after* bn+relu, as in the PyTorch module).
    for pidx in range(n_planes):
        xpl = xq_ref[pidx]                                  # (Hq, Wq, cin_p) f32
        h = jnp.maximum(xpl * scale + shift, 0.0)
        h_scr[pidx] = h * mask_ref[pidx]

    # 3x3 conv = 9 shifted-window matmuls, bf16 operands, f32 accumulation.
    acc_ref[...] = jnp.zeros_like(acc_ref)
    for t in range(9):
        ky, kx = t // 3, t % 3
        pidx = (ky % s) * s + (kx % s)      # spatial phase holding this tap
        by, bx = ky // s, kx // s           # window offset inside the phase
        win = h_scr[pidx, by:by + Ho, bx:bx + Wo, :]
        a = win.reshape(Ho * Wo, cin_p).astype(jnp.bfloat16)
        acc_ref[...] += jnp.dot(a, w_ref[t], preferred_element_type=jnp.float32)

    out = acc_ref[...]
    if res_ref is not None:                 # fused residual add (conv2)
        out = out + res_ref[0].reshape(Ho * Wo, tn)
    y_ref[0] = out.reshape(Ho, Wo, tn).astype(y_ref.dtype)

    if ws_ref is not None:                  # fused 1x1 strided shortcut (conv1)
        pidx = (1 % s) * s + (1 % s)        # shortcut reads the centre-tap window
        b0 = 1 // s
        win = h_scr[pidx, b0:b0 + Ho, b0:b0 + Wo, :]
        a = win.reshape(Ho * Wo, cin_p).astype(jnp.bfloat16)
        sc = jnp.dot(a, ws_ref[...], preferred_element_type=jnp.float32)
        short_ref[0] = sc.reshape(Ho, Wo, tn).astype(short_ref.dtype)


def _conv_shortcut_kernel(scale_ref, shift_ref, mask_ref, xq_ref, w_ref, ws_ref,
                          y_ref, short_ref, h_scr, acc_ref, *, stride):
    _conv_body(scale_ref, shift_ref, mask_ref, xq_ref, w_ref, ws_ref, None,
               y_ref, short_ref, h_scr, acc_ref, stride=stride)


def _conv_plain_kernel(scale_ref, shift_ref, mask_ref, xq_ref, w_ref,
                       y_ref, h_scr, acc_ref, *, stride):
    _conv_body(scale_ref, shift_ref, mask_ref, xq_ref, w_ref, None, None,
               y_ref, None, h_scr, acc_ref, stride=stride)


def _conv_residual_kernel(scale_ref, shift_ref, mask_ref, xq_ref, w_ref, res_ref,
                          y_ref, h_scr, acc_ref, *, stride):
    _conv_body(scale_ref, shift_ref, mask_ref, xq_ref, w_ref, None, res_ref,
               y_ref, None, h_scr, acc_ref, stride=stride)


def fused_conv(scale, shift, mask, xq, w, ws=None, resid=None, *,
               stride, n_planes, Ho, Wo, tn=LANE):
    """Fused bn-affine/relu + 3x3 conv (+ optional shortcut out / residual in).

    xq:   (N * n_planes, Hq, Wq, cin_p) f32 -- spatial phases of the padded
          input (n_planes = stride**2, phase order (p, q) row-major).
    mask: (n_planes, Hq, Wq, 1) f32 -- 1.0 on real pixels, 0.0 on padding.
    w:    (9, cin_p, cout_p) bf16;  ws: (cin_p, cout_p) bf16 or None.
    resid:(N, Ho, Wo, cout_p) f32 or None.
    """
    total, Hq, Wq, cin_p = xq.shape
    N = total // n_planes
    cout_p = w.shape[-1]
    assert cout_p % tn == 0
    assert Wo % 8 == 0, "output width must be a multiple of 8 (sublane tiling)"
    nj = cout_p // tn

    in_specs = [
        pl.BlockSpec((1, cin_p), lambda n, j: (0, 0)),                      # scale
        pl.BlockSpec((1, cin_p), lambda n, j: (0, 0)),                      # shift
        pl.BlockSpec((n_planes, Hq, Wq, 1), lambda n, j: (0, 0, 0, 0)),     # pad mask
        pl.BlockSpec((n_planes, Hq, Wq, cin_p), lambda n, j: (n, 0, 0, 0)), # act phases
        pl.BlockSpec((9, cin_p, tn), lambda n, j: (0, 0, j)),               # 3x3 weights
    ]
    args = [scale, shift, mask, xq, w]
    if ws is not None:
        in_specs.append(pl.BlockSpec((cin_p, tn), lambda n, j: (0, j)))
        args.append(ws)
    if resid is not None:
        in_specs.append(pl.BlockSpec((1, Ho, Wo, tn), lambda n, j: (n, 0, 0, j)))
        args.append(resid)

    out_shape = [jax.ShapeDtypeStruct((N, Ho, Wo, cout_p), jnp.float32)]
    out_specs = [pl.BlockSpec((1, Ho, Wo, tn), lambda n, j: (n, 0, 0, j))]
    if ws is not None:
        out_shape.append(jax.ShapeDtypeStruct((N, Ho, Wo, cout_p), jnp.float32))
        out_specs.append(pl.BlockSpec((1, Ho, Wo, tn), lambda n, j: (n, 0, 0, j)))

    scratch_shapes = [
        pltpu.VMEM((n_planes, Hq, Wq, cin_p), jnp.float32),  # normalized phases
        pltpu.VMEM((Ho * Wo, tn), jnp.float32),              # f32 matmul accumulator
    ]

    if ws is not None:
        kernel = functools.partial(_conv_shortcut_kernel, stride=stride)
    elif resid is not None:
        kernel = functools.partial(_conv_residual_kernel, stride=stride)
    else:
        kernel = functools.partial(_conv_plain_kernel, stride=stride)

    flops = 2 * N * Ho * Wo * 9 * cin_p * cout_p
    if ws is not None:
        flops += 2 * N * Ho * Wo * cin_p * cout_p
    bytes_accessed = (xq.size * 4 + w.size * 2
                      + len(out_shape) * N * Ho * Wo * cout_p * 4
                      + (resid.size * 4 if resid is not None else 0))

    return pl.pallas_call(
        kernel,
        out_shape=out_shape,
        grid_spec=pltpu.PrefetchScalarGridSpec(
            num_scalar_prefetch=0,
            grid=(N, nj),                       # (image, cout tile): both parallel
            in_specs=in_specs,
            out_specs=out_specs,
            scratch_shapes=scratch_shapes),
        compiler_params=pltpu.CompilerParams(
            dimension_semantics=("parallel", "parallel"),
            vmem_limit_bytes=VMEM_LIMIT_BYTES),
        cost_estimate=pl.CostEstimate(flops=int(flops), transcendentals=0,
                                      bytes_accessed=int(bytes_accessed)),
    )(*args)


# ---------------------------------------------------------------------------
# JAX-side glue: layout prep (cheap, no 9x im2col expansion)
# ---------------------------------------------------------------------------
def _phase_split(xp, s):
    """(N, Hp, Wp, C) padded input -> (N*s*s, Hq, Wq, C) spatial phases."""
    if s == 1:
        return xp, 1
    N, Hp, Wp, C = xp.shape
    planes = [xp[:, p::s, q::s, :] for p in range(s) for q in range(s)]
    xq = jnp.stack(planes, axis=1)
    return xq.reshape(N * s * s, xq.shape[2], xq.shape[3], C), s * s


def _phase_masks(H, W, s, Hq, Wq):
    """1.0 on real pixels, 0.0 on the conv zero-padding ring, per phase."""
    masks = []
    for p in range(s):
        for q in range(s):
            rr = p + s * jnp.arange(Hq)           # padded-grid row coordinate
            cc = q + s * jnp.arange(Wq)
            valid = (((rr >= 1) & (rr <= H))[:, None]
                     & ((cc >= 1) & (cc <= W))[None, :])
            masks.append(valid.astype(jnp.float32))
    return jnp.stack(masks, axis=0)[..., None]    # (s*s, Hq, Wq, 1)


def make_params(w1_hwio, w2_hwio, ws_hwio, g1, b1, g2, b2, cin, cout):
    """Pad channels to multiples of 128 (lane-dense) and cast weights to bf16."""
    cin_p = _round_up(cin, LANE)
    cout_p = _round_up(cout, LANE)

    def pad_w(w, ci_p, co_p):
        ci, co = w.shape[2], w.shape[3]
        w = jnp.pad(w, ((0, 0), (0, 0), (0, ci_p - ci), (0, co_p - co)))
        kk = w.shape[0] * w.shape[1]
        return w.reshape(kk, ci_p, co_p).astype(jnp.bfloat16)

    def pad_v(v, c_p):
        return jnp.pad(v.astype(jnp.float32), (0, c_p - v.shape[0])).reshape(1, c_p)

    params = {
        "w1": pad_w(w1_hwio, cin_p, cout_p),          # (9, cin_p, cout_p) bf16
        "w2": pad_w(w2_hwio, cout_p, cout_p),         # (9, cout_p, cout_p) bf16
        "gamma1": pad_v(g1, cin_p), "beta1": pad_v(b1, cin_p),
        "gamma2": pad_v(g2, cout_p), "beta2": pad_v(b2, cout_p),
    }
    if ws_hwio is not None:
        params["ws"] = pad_w(ws_hwio, cin_p, cout_p).reshape(cin_p, cout_p)
    return params


# ---------------------------------------------------------------------------
# ResidualBlock forward
# ---------------------------------------------------------------------------
def residual_block_forward(x_nchw, params, *, input_channels, channels, stride):
    conv_shortcut = (stride != 1) or (input_channels != channels)
    cin_p = _round_up(input_channels, LANE)
    cout_p = _round_up(channels, LANE)

    x = jnp.transpose(x_nchw, (0, 2, 3, 1)).astype(jnp.float32)   # NCHW -> NHWC
    N, H, W, _ = x.shape
    if stride != 1:
        assert H % stride == 0 and W % stride == 0
    Ho = (H - 1) // stride + 1
    Wo = (W - 1) // stride + 1
    x = jnp.pad(x, ((0, 0), (0, 0), (0, 0), (0, cin_p - input_channels)))

    # bn1 statistics (two-pass tiled reduction) -> per-channel scale / shift
    scale1, shift1 = bn_stats(x.reshape(N * H * W, cin_p),
                              params["gamma1"], params["beta1"])

    # conv1 (3x3, stride) fused with bn1 affine + ReLU (+ fused 1x1 shortcut)
    xp = jnp.pad(x, ((0, 0), (1, 1), (1, 1), (0, 0)))
    xq1, np1 = _phase_split(xp, stride)
    mask1 = _phase_masks(H, W, stride, xq1.shape[1], xq1.shape[2])
    outs = fused_conv(scale1, shift1, mask1, xq1, params["w1"],
                      ws=params["ws"] if conv_shortcut else None,
                      stride=stride, n_planes=np1, Ho=Ho, Wo=Wo)
    if conv_shortcut:
        y1, shortcut = outs
    else:
        (y1,) = outs
        shortcut = x            # identity shortcut: the original input

    # bn2 statistics
    scale2, shift2 = bn_stats(y1.reshape(N * Ho * Wo, cout_p),
                              params["gamma2"], params["beta2"])

    # conv2 (3x3, stride 1) fused with bn2 affine + ReLU + residual add
    y1p = jnp.pad(y1, ((0, 0), (1, 1), (1, 1), (0, 0)))
    xq2, np2 = _phase_split(y1p, 1)
    mask2 = _phase_masks(Ho, Wo, 1, Ho + 2, Wo + 2)
    (out,) = fused_conv(scale2, shift2, mask2, xq2, params["w2"],
                        resid=shortcut,
                        stride=1, n_planes=np2, Ho=Ho, Wo=Wo)

    out = out[..., :channels]                      # drop channel padding
    return jnp.transpose(out, (0, 3, 1, 2))        # NHWC -> NCHW


# ---------------------------------------------------------------------------
# Pure-JAX reference (f32, HIGHEST precision) for in-script validation
# ---------------------------------------------------------------------------
def residual_block_ref(x_nchw, w1, w2, ws, g1, b1, g2, b2, *, stride):
    conv_shortcut = (stride != 1) or (w1.shape[2] != w1.shape[3])
    x = jnp.transpose(x_nchw, (0, 2, 3, 1)).astype(jnp.float32)

    def bn_relu(v, g, b):
        mean = jnp.mean(v, axis=(0, 1, 2), keepdims=True)
        var = jnp.mean(jnp.square(v - mean), axis=(0, 1, 2), keepdims=True)
        y = (v - mean) * lax.rsqrt(var + BATCH_NORM_EPSILON)
        return jnp.maximum(y * g.reshape(1, 1, 1, -1) + b.reshape(1, 1, 1, -1), 0.0)

    def conv(v, w, s, pad):
        return lax.conv_general_dilated(
            v, w, (s, s), ((pad, pad), (pad, pad)),
            dimension_numbers=("NHWC", "HWIO", "NHWC"),
            precision=lax.Precision.HIGHEST,
            preferred_element_type=jnp.float32)

    h1 = bn_relu(x, g1, b1)
    shortcut = conv(h1, ws, stride, 0) if conv_shortcut else x
    y1 = conv(h1, w1, stride, 1)
    h2 = bn_relu(y1, g2, b2)
    y2 = conv(h2, w2, 1, 1)
    return jnp.transpose(y2 + shortcut, (0, 3, 1, 2))


# ---------------------------------------------------------------------------
def _run_case(key, *, N, Cin, Cout, H, W, stride):
    kx, k1, k2, ks, kg1, kb1, kg2, kb2 = jax.random.split(key, 8)
    x = jax.random.normal(kx, (N, Cin, H, W), dtype=jnp.float32)
    w1 = jax.random.normal(k1, (3, 3, Cin, Cout), dtype=jnp.float32) * 0.1
    w2 = jax.random.normal(k2, (3, 3, Cout, Cout), dtype=jnp.float32) * 0.1
    conv_shortcut = (stride != 1) or (Cin != Cout)
    ws = (jax.random.normal(ks, (1, 1, Cin, Cout), dtype=jnp.float32) * 0.1
          if conv_shortcut else None)
    g1 = 1.0 + 0.1 * jax.random.normal(kg1, (Cin,), dtype=jnp.float32)
    b1 = 0.1 * jax.random.normal(kb1, (Cin,), dtype=jnp.float32)
    g2 = 1.0 + 0.1 * jax.random.normal(kg2, (Cout,), dtype=jnp.float32)
    b2 = 0.1 * jax.random.normal(kb2, (Cout,), dtype=jnp.float32)

    params = make_params(w1, w2, ws, g1, b1, g2, b2, Cin, Cout)
    fwd = jax.jit(functools.partial(residual_block_forward,
                                    input_channels=Cin, channels=Cout,
                                    stride=stride))
    out = jax.block_until_ready(fwd(x, params))

    ref = residual_block_ref(x, w1, w2, ws, g1, b1, g2, b2, stride=stride)
    assert out.shape == ref.shape, (out.shape, ref.shape)
    err = float(jnp.max(jnp.abs(out - ref)))
    # Error budget: bf16 MXU operands in the Pallas path vs f32 HIGHEST reference.
    assert jnp.allclose(out, ref, atol=3e-2, rtol=3e-2), err


if __name__ == "__main__":
    key = jax.random.PRNGKey(0)
    k_a, k_b = jax.random.split(key)
    # stride-2 / channel-change block: exercises the fused 1x1 conv shortcut
    _run_case(k_a, N=2, Cin=4, Cout=8, H=16, W=16, stride=2)
    # stride-1 identity-shortcut block: exercises the fused residual-add path
    _run_case(k_b, N=2, Cin=8, Cout=8, H=16, W=16, stride=1)
    print("KERNEL_OK")
</pallas_src>

<mosaic_0001>
module attributes {stable_mosaic.version = 11 : i64} {
  func.func @_bn_stats_kernel(%arg0: i32, %arg1: i32, %arg2: memref<256x128xf32, #tpu.memory_space<vmem>>, %arg3: memref<1x128xf32, #tpu.memory_space<vmem>>, %arg4: memref<1x128xf32, #tpu.memory_space<vmem>>, %arg5: memref<1x128xf32, #tpu.memory_space<vmem>>, %arg6: memref<1x128xf32, #tpu.memory_space<vmem>>, %arg7: memref<1x128xf32, #tpu.memory_space<vmem>>, %arg8: memref<1x128xf32, #tpu.memory_space<vmem>>) attributes {dimension_semantics = [#tpu.dimension_semantics<arbitrary>, #tpu.dimension_semantics<arbitrary>], iteration_bounds = array<i64: 2, 2>, scalar_prefetch = 0 : i64, scratch_operands = 2 : i64, tpu.core_type = #tpu.core_type<tc>, window_params = [{transform_indices = @transform_0, window_bounds = array<i64: 256, 128>}, {pipeline_mode = #tpu.pipeline_mode<synchronous>, transform_indices = @transform_1, window_bounds = array<i64: 1, 128>}, {pipeline_mode = #tpu.pipeline_mode<synchronous>, transform_indices = @transform_2, window_bounds = array<i64: 1, 128>}, {pipeline_mode = #tpu.pipeline_mode<synchronous>, transform_indices = @transform_3, window_bounds = array<i64: 1, 128>}, {pipeline_mode = #tpu.pipeline_mode<synchronous>, transform_indices = @transform_4, window_bounds = array<i64: 1, 128>}]} {
    %c0_i32 = arith.constant 0 : i32
    %0 = arith.cmpi eq, %arg1, %c0_i32 : i32
    %1 = arith.extui %0 : i1 to i32
    %c0_i32_0 = arith.constant 0 : i32
    %2 = arith.cmpi ne, %1, %c0_i32_0 : i32
    scf.if %2 {
      %cst = arith.constant 0.000000e+00 : f32
      %20 = vector.broadcast %cst : f32 to vector<1x128xf32>
      %c0_11 = arith.constant 0 : index
      %c0_12 = arith.constant 0 : index
      %21 = vector.load %arg7[%c0_11, %c0_12] : memref<1x128xf32, #tpu.memory_space<vmem>>, vector<1x128xf32>
      tpu.vector_store %arg7[%c0_11, %c0_12], %20 {strides = array<i32>} : memref<1x128xf32, #tpu.memory_space<vmem>>, vector<1x128xf32>,
    } else {
    }
    %c0 = arith.constant 0 : index
    %c0_1 = arith.constant 0 : index
    %3 = vector.load %arg2[%c0, %c0_1] : memref<256x128xf32, #tpu.memory_space<vmem>>, vector<256x128xf32>
    %c0_i32_2 = arith.constant 0 : i32
    %4 = arith.cmpi eq, %arg0, %c0_i32_2 : i32
    %5 = arith.extui %4 : i1 to i32
    %c0_i32_3 = arith.constant 0 : i32
    %6 = arith.cmpi ne, %5, %c0_i32_3 : i32
    scf.if %6 {
      %c0_11 = arith.constant 0 : index
      %c0_12 = arith.constant 0 : index
      %20 = vector.load %arg7[%c0_11, %c0_12] : memref<1x128xf32, #tpu.memory_space<vmem>>, vector<1x128xf32>
      %cst = arith.constant dense<0.000000e+00> : vector<128xf32>
      %21 = vector.multi_reduction <add>, %3, %cst [0] : vector<256x128xf32> to vector<128xf32>
      %22 = vector.shape_cast %21 : vector<128xf32> to vector<1x128xf32>
      %23 = arith.addf %20, %22 : vector<1x128xf32>
      %c0_13 = arith.constant 0 : index
      %c0_14 = arith.constant 0 : index
      %24 = vector.load %arg7[%c0_13, %c0_14] : memref<1x128xf32, #tpu.memory_space<vmem>>, vector<1x128xf32>
      tpu.vector_store %arg7[%c0_13, %c0_14], %23 {strides = array<i32>} : memref<1x128xf32, #tpu.memory_space<vmem>>, vector<1x128xf32>,
    } else {
    }
    %c1_i32 = arith.constant 1 : i32
    %7 = arith.cmpi eq, %arg0, %c1_i32 : i32
    %8 = arith.extui %7 : i1 to i32
    %c0_i32_4 = arith.constant 0 : i32
    %9 = arith.cmpi ne, %8, %c0_i32_4 : i32
    scf.if %9 {
      %c0_11 = arith.constant 0 : index
      %c0_12 = arith.constant 0 : index
      %20 = vector.load %arg8[%c0_11, %c0_12] : memref<1x128xf32, #tpu.memory_space<vmem>>, vector<1x128xf32>
      %21 = vector.broadcast %20 : vector<1x128xf32> to vector<256x128xf32>
      %22 = arith.subf %3, %21 : vector<256x128xf32>
      %c0_13 = arith.constant 0 : index
      %c0_14 = arith.constant 0 : index
      %23 = vector.load %arg7[%c0_13, %c0_14] : memref<1x128xf32, #tpu.memory_space<vmem>>, vector<1x128xf32>
      %24 = arith.mulf %22, %22 : vector<256x128xf32>
      %cst = arith.constant dense<0.000000e+00> : vector<128xf32>
      %25 = vector.multi_reduction <add>, %24, %cst [0] : vector<256x128xf32> to vector<128xf32>
      %26 = vector.shape_cast %25 : vector<128xf32> to vector<1x128xf32>
      %27 = arith.addf %23, %26 : vector<1x128xf32>
      %c0_15 = arith.constant 0 : index
      %c0_16 = arith.constant 0 : index
      %28 = vector.load %arg7[%c0_15, %c0_16] : memref<1x128xf32, #tpu.memory_space<vmem>>, vector<1x128xf32>
      tpu.vector_store %arg7[%c0_15, %c0_16], %27 {strides = array<i32>} : memref<1x128xf32, #tpu.memory_space<vmem>>, vector<1x128xf32>,
    } else {
    }
    %c0_i32_5 = arith.constant 0 : i32
    %10 = arith.cmpi eq, %arg0, %c0_i32_5 : i32
    %c1_i32_6 = arith.constant 1 : i32
    %11 = arith.cmpi eq, %arg1, %c1_i32_6 : i32
    %12 = arith.andi %10, %11 : i1
    %13 = arith.extui %12 : i1 to i32
    %c0_i32_7 = arith.constant 0 : i32
    %14 = arith.cmpi ne, %13, %c0_i32_7 : i32
    scf.if %14 {
      %c0_11 = arith.constant 0 : index
      %c0_12 = arith.constant 0 : index
      %20 = vector.load %arg7[%c0_11, %c0_12] : memref<1x128xf32, #tpu.memory_space<vmem>>, vector<1x128xf32>
      %cst = arith.constant 0.001953125 : f32
      %21 = vector.broadcast %cst : f32 to vector<1x128xf32>
      %22 = arith.mulf %20, %21 : vector<1x128xf32>
      %c0_13 = arith.constant 0 : index
      %c0_14 = arith.constant 0 : index
      %23 = vector.load %arg8[%c0_13, %c0_14] : memref<1x128xf32, #tpu.memory_space<vmem>>, vector<1x128xf32>
      tpu.vector_store %arg8[%c0_13, %c0_14], %22 {strides = array<i32>} : memref<1x128xf32, #tpu.memory_space<vmem>>, vector<1x128xf32>,
    } else {
    }
    %c1_i32_8 = arith.constant 1 : i32
    %15 = arith.cmpi eq, %arg0, %c1_i32_8 : i32
    %c1_i32_9 = arith.constant 1 : i32
    %16 = arith.cmpi eq, %arg1, %c1_i32_9 : i32
    %17 = arith.andi %15, %16 : i1
    %18 = arith.extui %17 : i1 to i32
    %c0_i32_10 = arith.constant 0 : i32
    %19 = arith.cmpi ne, %18, %c0_i32_10 : i32
    scf.if %19 {
      %c0_11 = arith.constant 0 : index
      %c0_12 = arith.constant 0 : index
      %20 = vector.load %arg7[%c0_11, %c0_12] : memref<1x128xf32, #tpu.memory_space<vmem>>, vector<1x128xf32>
      %cst = arith.constant 0.001953125 : f32
      %21 = vector.broadcast %cst : f32 to vector<1x128xf32>
      %22 = arith.mulf %20, %21 : vector<1x128xf32>
      %c0_13 = arith.constant 0 : index
      %c0_14 = arith.constant 0 : index
      %23 = vector.load %arg3[%c0_13, %c0_14] : memref<1x128xf32, #tpu.memory_space<vmem>>, vector<1x128xf32>
      %cst_15 = arith.constant 1.000000e-03 : f32
      %24 = vector.broadcast %cst_15 : f32 to vector<1x128xf32>
      %25 = arith.addf %22, %24 : vector<1x128xf32>
      %26 = math.rsqrt %25 : vector<1x128xf32>
      %27 = arith.mulf %23, %26 : vector<1x128xf32>
      %c0_16 = arith.constant 0 : index
      %c0_17 = arith.constant 0 : index
      %28 = vector.load %arg5[%c0_16, %c0_17] : memref<1x128xf32, #tpu.memory_space<vmem>>, vector<1x128xf32>
      tpu.vector_store %arg5[%c0_16, %c0_17], %27 {strides = array<i32>} : memref<1x128xf32, #tpu.memory_space<vmem>>, vector<1x128xf32>,
      %c0_18 = arith.constant 0 : index
      %c0_19 = arith.constant 0 : index
      %29 = vector.load %arg4[%c0_18, %c0_19] : memref<1x128xf32, #tpu.memory_space<vmem>>, vector<1x128xf32>
      %c0_20 = arith.constant 0 : index
      %c0_21 = arith.constant 0 : index
      %30 = vector.load %arg8[%c0_20, %c0_21] : memref<1x128xf32, #tpu.memory_space<vmem>>, vector<1x128xf32>
      %31 = arith.mulf %30, %27 : vector<1x128xf32>
      %32 = arith.subf %29, %31 : vector<1x128xf32>
      %c0_22 = arith.constant 0 : index
      %c0_23 = arith.constant 0 : index
      %33 = vector.load %arg6[%c0_22, %c0_23] : memref<1x128xf32, #tpu.memory_space<vmem>>, vector<1x128xf32>
      tpu.vector_store %arg6[%c0_22, %c0_23], %32 {strides = array<i32>} : memref<1x128xf32, #tpu.memory_space<vmem>>, vector<1x128xf32>,
    } else {
    }
    return
  }
  func.func @transform_0(%arg0: i32, %arg1: i32) -> (i32, i32) {
    %c0_i32 = arith.constant 0 : i32
    %c0_i32_0 = arith.constant 0 : i32
    return %arg1, %c0_i32 : i32, i32
  }
  func.func @transform_1(%arg0: i32, %arg1: i32) -> (i32, i32) {
    %c0_i32 = arith.constant 0 : i32
    %c0_i32_0 = arith.constant 0 : i32
    %c0_i32_1 = arith.constant 0 : i32
    return %c0_i32, %c0_i32_0 : i32, i32
  }
  func.func @transform_2(%arg0: i32, %arg1: i32) -> (i32, i32) {
    %c0_i32 = arith.constant 0 : i32
    %c0_i32_0 = arith.constant 0 : i32
    %c0_i32_1 = arith.constant 0 : i32
    return %c0_i32, %c0_i32_0 : i32, i32
  }
  func.func @transform_3(%arg0: i32, %arg1: i32) -> (i32, i32) {
    %c0_i32 = arith.constant 0 : i32
    %c0_i32_0 = arith.constant 0 : i32
    %c0_i32_1 = arith.constant 0 : i32
    return %c0_i32, %c0_i32_0 : i32, i32
  }
  func.func @transform_4(%arg0: i32, %arg1: i32) -> (i32, i32) {
    %c0_i32 = arith.constant 0 : i32
    %c0_i32_0 = arith.constant 0 : i32
    %c0_i32_1 = arith.constant 0 : i32
    return %c0_i32, %c0_i32_0 : i32, i32
  }
}

module attributes {stable_mosaic.version = 11 : i64} {
  func.func @_conv_shortcut_kernel(%arg0: i32, %arg1: i32, %arg2: memref<1x128xf32, #tpu.memory_space<vmem>>, %arg3: memref<1x128xf32, #tpu.memory_space<vmem>>, %arg4: memref<4x9x9x1xf32, #tpu.memory_space<vmem>>, %arg5: memref<4x9x9x128xf32, #tpu.memory_space<vmem>>, %arg6: memref<9x128x128xbf16, #tpu.memory_space<vmem>>, %arg7: memref<128x128xbf16, #tpu.memory_space<vmem>>, %arg8: memref<1x8x8x128xf32, #tpu.memory_space<vmem>>, %arg9: memref<1x8x8x128xf32, #tpu.memory_space<vmem>>, %arg10: memref<4x9x9x128xf32, #tpu.memory_space<vmem>>, %arg11: memref<64x128xf32, #tpu.memory_space<vmem>>) attributes {dimension_semantics = [#tpu.dimension_semantics<parallel>, #tpu.dimension_semantics<parallel>], iteration_bounds = array<i64: 2, 1>, scalar_prefetch = 0 : i64, scratch_operands = 2 : i64, tpu.core_type = #tpu.core_type<tc>, window_params = [{pipeline_mode = #tpu.pipeline_mode<synchronous>, transform_indices = @transform_0, window_bounds = array<i64: 1, 128>}, {pipeline_mode = #tpu.pipeline_mode<synchronous>, transform_indices = @transform_1, window_bounds = array<i64: 1, 128>}, {pipeline_mode = #tpu.pipeline_mode<synchronous>, transform_indices = @transform_2, window_bounds = array<i64: 4, 9, 9, 1>}, {transform_indices = @transform_3, window_bounds = array<i64: 4, 9, 9, 128>}, {transform_indices = @transform_4, window_bounds = array<i64: 9, 128, 128>}, {transform_indices = @transform_5, window_bounds = array<i64: 128, 128>}, {transform_indices = @transform_6, window_bounds = array<i64: 1, 8, 8, 128>}, {transform_indices = @transform_7, window_bounds = array<i64: 1, 8, 8, 128>}]} {
    %c0 = arith.constant 0 : index
    %c0_0 = arith.constant 0 : index
    %0 = vector.load %arg2[%c0, %c0_0] : memref<1x128xf32, #tpu.memory_space<vmem>>, vector<1x128xf32>
    %c0_1 = arith.constant 0 : index
    %c0_2 = arith.constant 0 : index
    %1 = vector.load %arg3[%c0_1, %c0_2] : memref<1x128xf32, #tpu.memory_space<vmem>>, vector<1x128xf32>
    %c0_3 = arith.constant 0 : index
    %c0_4 = arith.constant 0 : index
    %c0_5 = arith.constant 0 : index
    %c0_6 = arith.constant 0 : index
    %2 = vector.load %arg5[%c0_3, %c0_4, %c0_5, %c0_6] : memref<4x9x9x128xf32, #tpu.memory_space<vmem>>, vector<1x9x9x128xf32>
    %3 = vector.shape_cast %2 : vector<1x9x9x128xf32> to vector<9x9x128xf32>
    %4 = vector.shape_cast %0 : vector<1x128xf32> to vector<1x1x128xf32>
    %5 = vector.broadcast %4 : vector<1x1x128xf32> to vector<9x9x128xf32>
    %6 = arith.mulf %3, %5 : vector<9x9x128xf32>
    %7 = vector.shape_cast %1 : vector<1x128xf32> to vector<1x1x128xf32>
    %8 = vector.broadcast %7 : vector<1x1x128xf32> to vector<9x9x128xf32>
    %9 = arith.addf %6, %8 : vector<9x9x128xf32>
    %cst = arith.constant 0.000000e+00 : f32
    %10 = vector.broadcast %cst : f32 to vector<9x9x128xf32>
    %11 = arith.maximumf %9, %10 : vector<9x9x128xf32>
    %c0_7 = arith.constant 0 : index
    %c0_8 = arith.constant 0 : index
    %c0_9 = arith.constant 0 : index
    %c0_10 = arith.constant 0 : index
    %12 = vector.load %arg4[%c0_7, %c0_8, %c0_9, %c0_10] : memref<4x9x9x1xf32, #tpu.memory_space<vmem>>, vector<1x9x9x1xf32>
    %13 = vector.shape_cast %12 : vector<1x9x9x1xf32> to vector<9x9x1xf32>
    %14 = vector.broadcast %13 : vector<9x9x1xf32> to vector<9x9x128xf32>
    %15 = arith.mulf %11, %14 : vector<9x9x128xf32>
    %c0_11 = arith.constant 0 : index
    %c0_12 = arith.constant 0 : index
    %c0_13 = arith.constant 0 : index
    %c0_14 = arith.constant 0 : index
    %16 = vector.load %arg10[%c0_11, %c0_12, %c0_13, %c0_14] : memref<4x9x9x128xf32, #tpu.memory_space<vmem>>, vector<1x9x9x128xf32>
    %17 = vector.shape_cast %16 : vector<1x9x9x128xf32> to vector<9x9x128xf32>
    %18 = vector.shape_cast %15 : vector<9x9x128xf32> to vector<1x9x9x128xf32>
    tpu.vector_store %arg10[%c0_11, %c0_12, %c0_13, %c0_14], %18 {strides = array<i32>} : memref<4x9x9x128xf32, #tpu.memory_space<vmem>>, vector<1x9x9x128xf32>,
    %c1 = arith.constant 1 : index
    %c0_15 = arith.constant 0 : index
    %c0_16 = arith.constant 0 : index
    %c0_17 = arith.constant 0 : index
    %19 = vector.load %arg5[%c1, %c0_15, %c0_16, %c0_17] : memref<4x9x9x128xf32, #tpu.memory_space<vmem>>, vector<1x9x9x128xf32>
    %20 = vector.shape_cast %19 : vector<1x9x9x128xf32> to vector<9x9x128xf32>
    %21 = vector.shape_cast %0 : vector<1x128xf32> to vector<1x1x128xf32>
    %22 = vector.broadcast %21 : vector<1x1x128xf32> to vector<9x9x128xf32>
    %23 = arith.mulf %20, %22 : vector<9x9x128xf32>
    %24 = vector.shape_cast %1 : vector<1x128xf32> to vector<1x1x128xf32>
    %25 = vector.broadcast %24 : vector<1x1x128xf32> to vector<9x9x128xf32>
    %26 = arith.addf %23, %25 : vector<9x9x128xf32>
    %cst_18 = arith.constant 0.000000e+00 : f32
    %27 = vector.broadcast %cst_18 : f32 to vector<9x9x128xf32>
    %28 = arith.maximumf %26, %27 : vector<9x9x128xf32>
    %c1_19 = arith.constant 1 : index
    %c0_20 = arith.constant 0 : index
    %c0_21 = arith.constant 0 : index
    %c0_22 = arith.constant 0 : index
    %29 = vector.load %arg4[%c1_19, %c0_20, %c0_21, %c0_22] : memref<4x9x9x1xf32, #tpu.memory_space<vmem>>, vector<1x9x9x1xf32>
    %30 = vector.shape_cast %29 : vector<1x9x9x1xf32> to vector<9x9x1xf32>
    %31 = vector.broadcast %30 : vector<9x9x1xf32> to vector<9x9x128xf32>
    %32 = arith.mulf %28, %31 : vector<9x9x128xf32>
    %c1_23 = arith.constant 1 : index
    %c0_24 = arith.constant 0 : index
    %c0_25 = arith.constant 0 : index
    %c0_26 = arith.constant 0 : index
    %33 = vector.load %arg10[%c1_23, %c0_24, %c0_25, %c0_26] : memref<4x9x9x128xf32, #tpu.memory_space<vmem>>, vector<1x9x9x128xf32>
    %34 = vector.shape_cast %33 : vector<1x9x9x128xf32> to vector<9x9x128xf32>
    %35 = vector.shape_cast %32 : vector<9x9x128xf32> to vector<1x9x9x128xf32>
    tpu.vector_store %arg10[%c1_23, %c0_24, %c0_25, %c0_26], %35 {strides = array<i32>} : memref<4x9x9x128xf32, #tpu.memory_space<vmem>>, vector<1x9x9x128xf32>,
    %c2 = arith.constant 2 : index
    %c0_27 = arith.constant 0 : index
    %c0_28 = arith.constant 0 : index
    %c0_29 = arith.constant 0 : index
    %36 = vector.load %arg5[%c2, %c0_27, %c0_28, %c0_29] : memref<4x9x9x128xf32, #tpu.memory_space<vmem>>, vector<1x9x9x128xf32>
    %37 = vector.shape_cast %36 : vector<1x9x9x128xf32> to vector<9x9x128xf32>
    %38 = vector.shape_cast %0 : vector<1x128xf32> to vector<1x1x128xf32>
    %39 = vector.broadcast %38 : vector<1x1x128xf32> to vector<9x9x128xf32>
    %40 = arith.mulf %37, %39 : vector<9x9x128xf32>
    %41 = vector.shape_cast %1 : vector<1x128xf32> to vector<1x1x128xf32>
    %42 = vector.broadcast %41 : vector<1x1x128xf32> to vector<9x9x128xf32>
    %43 = arith.addf %40, %42 : vector<9x9x128xf32>
    %cst_30 = arith.constant 0.000000e+00 : f32
    %44 = vector.broadcast %cst_30 : f32 to vector<9x9x128xf32>
    %45 = arith.maximumf %43, %44 : vector<9x9x128xf32>
    %c2_31 = arith.constant 2 : index
    %c0_32 = arith.constant 0 : index
    %c0_33 = arith.constant 0 : index
    %c0_34 = arith.constant 0 : index
    %46 = vector.load %arg4[%c2_31, %c0_32, %c0_33, %c0_34] : memref<4x9x9x1xf32, #tpu.memory_space<vmem>>, vector<1x9x9x1xf32>
    %47 = vector.shape_cast %46 : vector<1x9x9x1xf32> to vector<9x9x1xf32>
    %48 = vector.broadcast %47 : vector<9x9x1xf32> to vector<9x9x128xf32>
    %49 = arith.mulf %45, %48 : vector<9x9x128xf32>
    %c2_35 = arith.constant 2 : index
    %c0_36 = arith.constant 0 : index
    %c0_37 = arith.constant 0 : index
    %c0_38 = arith.constant 0 : index
    %50 = vector.load %arg10[%c2_35, %c0_36, %c0_37, %c0_38] : memref<4x9x9x128xf32, #tpu.memory_space<vmem>>, vector<1x9x9x128xf32>
    %51 = vector.shape_cast %50 : vector<1x9x9x128xf32> to vector<9x9x128xf32>
    %52 = vector.shape_cast %49 : vector<9x9x128xf32> to vector<1x9x9x128xf32>
    tpu.vector_store %arg10[%c2_35, %c0_36, %c0_37, %c0_38], %52 {strides = array<i32>} : memref<4x9x9x128xf32, #tpu.memory_space<vmem>>, vector<1x9x9x128xf32>,
    %c3 = arith.constant 3 : index
    %c0_39 = arith.constant 0 : index
    %c0_40 = arith.constant 0 : index
    %c0_41 = arith.constant 0 : index
    %53 = vector.load %arg5[%c3, %c0_39, %c0_40, %c0_41] : memref<4x9x9x128xf32, #tpu.memory_space<vmem>>, vector<1x9x9x128xf32>
    %54 = vector.shape_cast %53 : vector<1x9x9x128xf32> to vector<9x9x128xf32>
    %55 = vector.shape_cast %0 : vector<1x128xf32> to vector<1x1x128xf32>
    %56 = vector.broadcast %55 : vector<1x1x128xf32> to vector<9x9x128xf32>
    %57 = arith.mulf %54, %56 : vector<9x9x128xf32>
    %58 = vector.shape_cast %1 : vector<1x128xf32> to vector<1x1x128xf32>
    %59 = vector.broadcast %58 : vector<1x1x128xf32> to vector<9x9x128xf32>
    %60 = arith.addf %57, %59 : vector<9x9x128xf32>
    %cst_42 = arith.constant 0.000000e+00 : f32
    %61 = vector.broadcast %cst_42 : f32 to vector<9x9x128xf32>
    %62 = arith.maximumf %60, %61 : vector<9x9x128xf32>
    %c3_43 = arith.constant 3 : index
    %c0_44 = arith.constant 0 : index
    %c0_45 = arith.constant 0 : index
    %c0_46 = arith.constant 0 : index
    %63 = vector.load %arg4[%c3_43, %c0_44, %c0_45, %c0_46] : memref<4x9x9x1xf32, #tpu.memory_space<vmem>>, vector<1x9x9x1xf32>
    %64 = vector.shape_cast %63 : vector<1x9x9x1xf32> to vector<9x9x1xf32>
    %65 = vector.broadcast %64 : vector<9x9x1xf32> to vector<9x9x128xf32>
    %66 = arith.mulf %62, %65 : vector<9x9x128xf32>
    %c3_47 = arith.constant 3 : index
    %c0_48 = arith.constant 0 : index
    %c0_49 = arith.constant 0 : index
    %c0_50 = arith.constant 0 : index
    %67 = vector.load %arg10[%c3_47, %c0_48, %c0_49, %c0_50] : memref<4x9x9x128xf32, #tpu.memory_space<vmem>>, vector<1x9x9x128xf32>
    %68 = vector.shape_cast %67 : vector<1x9x9x128xf32> to vector<9x9x128xf32>
    %69 = vector.shape_cast %66 : vector<9x9x128xf32> to vector<1x9x9x128xf32>
    tpu.vector_store %arg10[%c3_47, %c0_48, %c0_49, %c0_50], %69 {strides = array<i32>} : memref<4x9x9x128xf32, #tpu.memory_space<vmem>>, vector<1x9x9x128xf32>,
    %cst_51 = arith.constant 0.000000e+00 : f32
    %70 = vector.broadcast %cst_51 : f32 to vector<64x128xf32>
    %c0_52 = arith.constant 0 : index
    %c0_53 = arith.constant 0 : index
    %71 = vector.load %arg11[%c0_52, %c0_53] : memref<64x128xf32, #tpu.memory_space<vmem>>, vector<64x128xf32>
    tpu.vector_store %arg11[%c0_52, %c0_53], %70 {strides = array<i32>} : memref<64x128xf32, #tpu.memory_space<vmem>>, vector<64x128xf32>,
    %c0_54 = arith.constant 0 : index
    %c0_55 = arith.constant 0 : index
    %c0_56 = arith.constant 0 : index
    %c0_57 = arith.constant 0 : index
    %72 = vector.load %arg10[%c0_54, %c0_55, %c0_56, %c0_57] : memref<4x9x9x128xf32, #tpu.memory_space<vmem>>, vector<1x8x8x128xf32>
    %73 = vector.shape_cast %72 : vector<1x8x8x128xf32> to vector<8x8x128xf32>
    %74 = vector.shape_cast %73 : vector<8x8x128xf32> to vector<64x128xf32>
    %75 = arith.truncf %74 : vector<64x128xf32> to vector<64x128xbf16>
    %c0_58 = arith.constant 0 : index
    %c0_59 = arith.constant 0 : index
    %76 = vector.load %arg11[%c0_58, %c0_59] : memref<64x128xf32, #tpu.memory_space<vmem>>, vector<64x128xf32>
    %c0_60 = arith.constant 0 : index
    %c0_61 = arith.constant 0 : index
    %c0_62 = arith.constant 0 : index
    %77 = vector.load %arg6[%c0_60, %c0_61, %c0_62] : memref<9x128x128xbf16, #tpu.memory_space<vmem>>, vector<1x128x128xbf16>
    %78 = vector.shape_cast %77 : vector<1x128x128xbf16> to vector<128x128xbf16>
    %cst_63 = arith.constant dense<0.000000e+00> : vector<64x128xf32>
    %79 = tpu.matmul %75, %78, %cst_63 {dimension_numbers = #tpu.dot_dimension_numbers<[1], [0], [0], [1], [0, 0, 1, 1], [], []>} : vector<64x128xbf16>, vector<128x128xbf16>, vector<64x128xf32> -> vector<64x128xf32>
    %80 = arith.addf %76, %79 : vector<64x128xf32>
    %c0_64 = arith.constant 0 : index
    %c0_65 = arith.constant 0 : index
    %81 = vector.load %arg11[%c0_64, %c0_65] : memref<64x128xf32, #tpu.memory_space<vmem>>, vector<64x128xf32>
    tpu.vector_store %arg11[%c0_64, %c0_65], %80 {strides = array<i32>} : memref<64x128xf32, #tpu.memory_space<vmem>>, vector<64x128xf32>,
    %c1_66 = arith.constant 1 : index
    %c0_67 = arith.constant 0 : index
    %c0_68 = arith.constant 0 : index
    %c0_69 = arith.constant 0 : index
    %82 = vector.load %arg10[%c1_66, %c0_67, %c0_68, %c0_69] : memref<4x9x9x128xf32, #tpu.memory_space<vmem>>, vector<1x8x8x128xf32>
    %83 = vector.shape_cast %82 : vector<1x8x8x128xf32> to vector<8x8x128xf32>
    %84 = vector.shape_cast %83 : vector<8x8x128xf32> to vector<64x128xf32>
    %85 = arith.truncf %84 : vector<64x128xf32> to vector<64x128xbf16>
    %c0_70 = arith.constant 0 : index
    %c0_71 = arith.constant 0 : index
    %86 = vector.load %arg11[%c0_70, %c0_71] : memref<64x128xf32, #tpu.memory_space<vmem>>, vector<64x128xf32>
    %c1_72 = arith.constant 1 : index
    %c0_73 = arith.constant 0 : index
    %c0_74 = arith.constant 0 : index
    %87 = vector.load %arg6[%c1_72, %c0_73, %c0_74] : memref<9x128x128xbf16, #tpu.memory_space<vmem>>, vector<1x128x128xbf16>
    %88 = vector.shape_cast %87 : vector<1x128x128xbf16> to vector<128x128xbf16>
    %cst_75 = arith.constant dense<0.000000e+00> : vector<64x128xf32>
    %89 = tpu.matmul %85, %88, %cst_75 {dimension_numbers = #tpu.dot_dimension_numbers<[1], [0], [0], [1], [0, 0, 1, 1], [], []>} : vector<64x128xbf16>, vector<128x128xbf16>, vector<64x128xf32> -> vector<64x128xf32>
    %90 = arith.addf %86, %89 : vector<64x128xf32>
    %c0_76 = arith.constant 0 : index
    %c0_77 = arith.constant 0 : index
    %91 = vector.load %arg11[%c0_76, %c0_77] : memref<64x128xf32, #tpu.memory_space<vmem>>, vector<64x128xf32>
    tpu.vector_store %arg11[%c0_76, %c0_77], %90 {strides = array<i32>} : memref<64x128xf32, #tpu.memory_space<vmem>>, vector<64x128xf32>,
    %c0_78 = arith.constant 0 : index
    %c0_79 = arith.constant 0 : index
    %c1_80 = arith.constant 1 : index
    %c0_81 = arith.constant 0 : index
    %92 = vector.load %arg10[%c0_78, %c0_79, %c1_80, %c0_81] : memref<4x9x9x128xf32, #tpu.memory_space<vmem>>, vector<1x8x8x128xf32>
    %93 = vector.shape_cast %92 : vector<1x8x8x128xf32> to vector<8x8x128xf32>
    %94 = vector.shape_cast %93 : vector<8x8x128xf32> to vector<64x128xf32>
    %95 = arith.truncf %94 : vector<64x128xf32> to vector<64x128xbf16>
    %c0_82 = arith.constant 0 : index
    %c0_83 = arith.constant 0 : index
    %96 = vector.load %arg11[%c0_82, %c0_83] : memref<64x128xf32, #tpu.memory_space<vmem>>, vector<64x128xf32>
    %c2_84 = arith.constant 2 : index
    %c0_85 = arith.constant 0 : index
    %c0_86 = arith.constant 0 : index
    %97 = vector.load %arg6[%c2_84, %c0_85, %c0_86] : memref<9x128x128xbf16, #tpu.memory_space<vmem>>, vector<1x128x128xbf16>
    %98 = vector.shape_cast %97 : vector<1x128x128xbf16> to vector<128x128xbf16>
    %cst_87 = arith.constant dense<0.000000e+00> : vector<64x128xf32>
    %99 = tpu.matmul %95, %98, %cst_87 {dimension_numbers = #tpu.dot_dimension_numbers<[1], [0], [0], [1], [0, 0, 1, 1], [], []>} : vector<64x128xbf16>, vector<128x128xbf16>, vector<64x128xf32> -> vector<64x128xf32>
    %100 = arith.addf %96, %99 : vector<64x128xf32>
    %c0_88 = arith.constant 0 : index
    %c0_89 = arith.constant 0 : index
    %101 = vector.load %arg11[%c0_88, %c0_89] : memref<64x128xf32, #tpu.memory_space<vmem>>, vector<64x128xf32>
    tpu.vector_store %arg11[%c0_88, %c0_89], %100 {strides = array<i32>} : memref<64x128xf32, #tpu.memory_space<vmem>>, vector<64x128xf32>,
    %c2_90 = arith.constant 2 : index
    %c0_91 = arith.constant 0 : index
    %c0_92 = arith.constant 0 : index
    %c0_93 = arith.constant 0 : index
    %102 = vector.load %arg10[%c2_90, %c0_91, %c0_92, %c0_93] : memref<4x9x9x128xf32, #tpu.memory_space<vmem>>, vector<1x8x8x128xf32>
    %103 = vector.shape_cast %102 : vector<1x8x8x128xf32> to vector<8x8x128xf32>
    %104 = vector.shape_cast %103 : vector<8x8x128xf32> to vector<64x128xf32>
    %105 = arith.truncf %104 : vector<64x128xf32> to vector<64x128xbf16>
    %c0_94 = arith.constant 0 : index
    %c0_95 = arith.constant 0 : index
    %106 = vector.load %arg11[%c0_94, %c0_95] : memref<64x128xf32, #tpu.memory_space<vmem>>, vector<64x128xf32>
    %c3_96 = arith.constant 3 : index
    %c0_97 = arith.constant 0 : index
    %c0_98 = arith.constant 0 : index
    %107 = vector.load %arg6[%c3_96, %c0_97, %c0_98] : memref<9x128x128xbf16, #tpu.memory_space<vmem>>, vector<1x128x128xbf16>
    %108 = vector.shape_cast %107 : vector<1x128x128xbf16> to vector<128x128xbf16>
    %cst_99 = arith.constant dense<0.000000e+00> : vector<64x128xf32>
    %109 = tpu.matmul %105, %108, %cst_99 {dimension_numbers = #tpu.dot_dimension_numbers<[1], [0], [0], [1], [0, 0, 1, 1], [], []>} : vector<64x128xbf16>, vector<128x128xbf16>, vector<64x128xf32> -> vector<64x128xf32>
    %110 = arith.addf %106, %109 : vector<64x128xf32>
    %c0_100 = arith.constant 0 : index
    %c0_101 = arith.constant 0 : index
    %111 = vector.load %arg11[%c0_100, %c0_101] : memref<64x128xf32, #tpu.memory_space<vmem>>, vector<64x128xf32>
    tpu.vector_store %arg11[%c0_100, %c0_101], %110 {strides = array<i32>} : memref<64x128xf32, #tpu.memory_space<vmem>>, vector<64x128xf32>,
    %c3_102 = arith.constant 3 : index
    %c0_103 = arith.constant 0 : index
    %c0_104 = arith.constant 0 : index
    %c0_105 = arith.constant 0 : index
    %112 = vector.load %arg10[%c3_102, %c0_103, %c0_104, %c0_105] : memref<4x9x9x128xf32, #tpu.memory_space<vmem>>, vector<1x8x8x128xf32>
    %113 = vector.shape_cast %112 : vector<1x8x8x128xf32> to vector<8x8x128xf32>
    %114 = vector.shape_cast %113 : vector<8x8x128xf32> to vector<64x128xf32>
    %115 = arith.truncf %114 : vector<64x128xf32> to vector<64x128xbf16>
    %c0_106 = arith.constant 0 : index
    %c0_107 = arith.constant 0 : index
    %116 = vector.load %arg11[%c0_106, %c0_107] : memref<64x128xf32, #tpu.memory_space<vmem>>, vector<64x128xf32>
    %c4 = arith.constant 4 : index
    %c0_108 = arith.constant 0 : index
    %c0_109 = arith.constant 0 : index
    %117 = vector.load %arg6[%c4, %c0_108, %c0_109] : memref<9x128x128xbf16, #tpu.memory_space<vmem>>, vector<1x128x128xbf16>
    %118 = vector.shape_cast %117 : vector<1x128x128xbf16> to vector<128x128xbf16>
    %cst_110 = arith.constant dense<0.000000e+00> : vector<64x128xf32>
    %119 = tpu.matmul %115, %118, %cst_110 {dimension_numbers = #tpu.dot_dimension_numbers<[1], [0], [0], [1], [0, 0, 1, 1], [], []>} : vector<64x128xbf16>, vector<128x128xbf16>, vector<64x128xf32> -> vector<64x128xf32>
    %120 = arith.addf %116, %119 : vector<64x128xf32>
    %c0_111 = arith.constant 0 : index
    %c0_112 = arith.constant 0 : index
    %121 = vector.load %arg11[%c0_111, %c0_112] : memref<64x128xf32, #tpu.memory_space<vmem>>, vector<64x128xf32>
    tpu.vector_store %arg11[%c0_111, %c0_112], %120 {strides = array<i32>} : memref<64x128xf32, #tpu.memory_space<vmem>>, vector<64x128xf32>,
    %c2_113 = arith.constant 2 : index
    %c0_114 = arith.constant 0 : index
    %c1_115 = arith.constant 1 : index
    %c0_116 = arith.constant 0 : index
    %122 = vector.load %arg10[%c2_113, %c0_114, %c1_115, %c0_116] : memref<4x9x9x128xf32, #tpu.memory_space<vmem>>, vector<1x8x8x128xf32>
    %123 = vector.shape_cast %122 : vector<1x8x8x128xf32> to vector<8x8x128xf32>
    %124 = vector.shape_cast %123 : vector<8x8x128xf32> to vector<64x128xf32>
    %125 = arith.truncf %124 : vector<64x128xf32> to vector<64x128xbf16>
    %c0_117 = arith.constant 0 : index
    %c0_118 = arith.constant 0 : index
    %126 = vector.load %arg11[%c0_117, %c0_118] : memref<64x128xf32, #tpu.memory_space<vmem>>, vector<64x128xf32>
    %c5 = arith.constant 5 : index
    %c0_119 = arith.constant 0 : index
    %c0_120 = arith.constant 0 : index
    %127 = vector.load %arg6[%c5, %c0_119, %c0_120] : memref<9x128x128xbf16, #tpu.memory_space<vmem>>, vector<1x128x128xbf16>
    %128 = vector.shape_cast %127 : vector<1x128x128xbf16> to vector<128x128xbf16>
    %cst_121 = arith.constant dense<0.000000e+00> : vector<64x128xf32>
    %129 = tpu.matmul %125, %128, %cst_121 {dimension_numbers = #tpu.dot_dimension_numbers<[1], [0], [0], [1], [0, 0, 1, 1], [], []>} : vector<64x128xbf16>, vector<128x128xbf16>, vector<64x128xf32> -> vector<64x128xf32>
    %130 = arith.addf %126, %129 : vector<64x128xf32>
    %c0_122 = arith.constant 0 : index
    %c0_123 = arith.constant 0 : index
    %131 = vector.load %arg11[%c0_122, %c0_123] : memref<64x128xf32, #tpu.memory_space<vmem>>, vector<64x128xf32>
    tpu.vector_store %arg11[%c0_122, %c0_123], %130 {strides = array<i32>} : memref<64x128xf32, #tpu.memory_space<vmem>>, vector<64x128xf32>,
    %c0_124 = arith.constant 0 : index
    %c1_125 = arith.constant 1 : index
    %c0_126 = arith.constant 0 : index
    %c0_127 = arith.constant 0 : index
    %132 = vector.load %arg10[%c0_124, %c1_125, %c0_126, %c0_127] : memref<4x9x9x128xf32, #tpu.memory_space<vmem>>, vector<1x8x8x128xf32>
    %133 = vector.shape_cast %132 : vector<1x8x8x128xf32> to vector<8x8x128xf32>
    %134 = vector.shape_cast %133 : vector<8x8x128xf32> to vector<64x128xf32>
    %135 = arith.truncf %134 : vector<64x128xf32> to vector<64x128xbf16>
    %c0_128 = arith.constant 0 : index
    %c0_129 = arith.constant 0 : index
    %136 = vector.load %arg11[%c0_128, %c0_129] : memref<64x128xf32, #tpu.memory_space<vmem>>, vector<64x128xf32>
    %c6 = arith.constant 6 : index
    %c0_130 = arith.constant 0 : index
    %c0_131 = arith.constant 0 : index
    %137 = vector.load %arg6[%c6, %c0_130, %c0_131] : memref<9x128x128xbf16, #tpu.memory_space<vmem>>, vector<1x128x128xbf16>
    %138 = vector.shape_cast %137 : vector<1x128x128xbf16> to vector<128x128xbf16>
    %cst_132 = arith.constant dense<0.000000e+00> : vector<64x128xf32>
    %139 = tpu.matmul %135, %138, %cst_132 {dimension_numbers = #tpu.dot_dimension_numbers<[1], [0], [0], [1], [0, 0, 1, 1], [], []>} : vector<64x128xbf16>, vector<128x128xbf16>, vector<64x128xf32> -> vector<64x128xf32>
    %140 = arith.addf %136, %139 : vector<64x128xf32>
    %c0_133 = arith.constant 0 : index
    %c0_134 = arith.constant 0 : index
    %141 = vector.load %arg11[%c0_133, %c0_134] : memref<64x128xf32, #tpu.memory_space<vmem>>, vector<64x128xf32>
    tpu.vector_store %arg11[%c0_133, %c0_134], %140 {strides = array<i32>} : memref<64x128xf32, #tpu.memory_space<vmem>>, vector<64x128xf32>,
    %c1_135 = arith.constant 1 : index
    %c1_136 = arith.constant 1 : index
    %c0_137 = arith.constant 0 : index
    %c0_138 = arith.constant 0 : index
    %142 = vector.load %arg10[%c1_135, %c1_136, %c0_137, %c0_138] : memref<4x9x9x128xf32, #tpu.memory_space<vmem>>, vector<1x8x8x128xf32>
    %143 = vector.shape_cast %142 : vector<1x8x8x128xf32> to vector<8x8x128xf32>
    %144 = vector.shape_cast %143 : vector<8x8x128xf32> to vector<64x128xf32>
    %145 = arith.truncf %144 : vector<64x128xf32> to vector<64x128xbf16>
    %c0_139 = arith.constant 0 : index
    %c0_140 = arith.constant 0 : index
    %146 = vector.load %arg11[%c0_139, %c0_140] : memref<64x128xf32, #tpu.memory_space<vmem>>, vector<64x128xf32>
    %c7 = arith.constant 7 : index
    %c0_141 = arith.constant 0 : index
    %c0_142 = arith.constant 0 : index
    %147 = vector.load %arg6[%c7, %c0_141, %c0_142] : memref<9x128x128xbf16, #tpu.memory_space<vmem>>, vector<1x128x128xbf16>
    %148 = vector.shape_cast %147 : vector<1x128x128xbf16> to vector<128x128xbf16>
    %cst_143 = arith.constant dense<0.000000e+00> : vector<64x128xf32>
    %149 = tpu.matmul %145, %148, %cst_143 {dimension_numbers = #tpu.dot_dimension_numbers<[1], [0], [0], [1], [0, 0, 1, 1], [], []>} : vector<64x128xbf16>, vector<128x128xbf16>, vector<64x128xf32> -> vector<64x128xf32>
    %150 = arith.addf %146, %149 : vector<64x128xf32>
    %c0_144 = arith.constant 0 : index
    %c0_145 = arith.constant 0 : index
    %151 = vector.load %arg11[%c0_144, %c0_145] : memref<64x128xf32, #tpu.memory_space<vmem>>, vector<64x128xf32>
    tpu.vector_store %arg11[%c0_144, %c0_145], %150 {strides = array<i32>} : memref<64x128xf32, #tpu.memory_space<vmem>>, vector<64x128xf32>,
    %c0_146 = arith.constant 0 : index
    %c1_147 = arith.constant 1 : index
    %c1_148 = arith.constant 1 : index
    %c0_149 = arith.constant 0 : index
    %152 = vector.load %arg10[%c0_146, %c1_147, %c1_148, %c0_149] : memref<4x9x9x128xf32, #tpu.memory_space<vmem>>, vector<1x8x8x128xf32>
    %153 = vector.shape_cast %152 : vector<1x8x8x128xf32> to vector<8x8x128xf32>
    %154 = vector.shape_cast %153 : vector<8x8x128xf32> to vector<64x128xf32>
    %155 = arith.truncf %154 : vector<64x128xf32> to vector<64x128xbf16>
    %c0_150 = arith.constant 0 : index
    %c0_151 = arith.constant 0 : index
    %156 = vector.load %arg11[%c0_150, %c0_151] : memref<64x128xf32, #tpu.memory_space<vmem>>, vector<64x128xf32>
    %c8 = arith.constant 8 : index
    %c0_152 = arith.constant 0 : index
    %c0_153 = arith.constant 0 : index
    %157 = vector.load %arg6[%c8, %c0_152, %c0_153] : memref<9x128x128xbf16, #tpu.memory_space<vmem>>, vector<1x128x128xbf16>
    %158 = vector.shape_cast %157 : vector<1x128x128xbf16> to vector<128x128xbf16>
    %cst_154 = arith.constant dense<0.000000e+00> : vector<64x128xf32>
    %159 = tpu.matmul %155, %158, %cst_154 {dimension_numbers = #tpu.dot_dimension_numbers<[1], [0], [0], [1], [0, 0, 1, 1], [], []>} : vector<64x128xbf16>, vector<128x128xbf16>, vector<64x128xf32> -> vector<64x128xf32>
    %160 = arith.addf %156, %159 : vector<64x128xf32>
    %c0_155 = arith.constant 0 : index
    %c0_156 = arith.constant 0 : index
    %161 = vector.load %arg11[%c0_155, %c0_156] : memref<64x128xf32, #tpu.memory_space<vmem>>, vector<64x128xf32>
    tpu.vector_store %arg11[%c0_155, %c0_156], %160 {strides = array<i32>} : memref<64x128xf32, #tpu.memory_space<vmem>>, vector<64x128xf32>,
    %c0_157 = arith.constant 0 : index
    %c0_158 = arith.constant 0 : index
    %162 = vector.load %arg11[%c0_157, %c0_158] : memref<64x128xf32, #tpu.memory_space<vmem>>, vector<64x128xf32>
    %163 = vector.shape_cast %162 : vector<64x128xf32> to vector<8x8x128xf32>
    %c0_159 = arith.constant 0 : index
    %c0_160 = arith.constant 0 : index
    %c0_161 = arith.constant 0 : index
    %c0_162 = arith.constant 0 : index
    %164 = vector.load %arg8[%c0_159, %c0_160, %c0_161, %c0_162] : memref<1x8x8x128xf32, #tpu.memory_space<vmem>>, vector<1x8x8x128xf32>
    %165 = vector.shape_cast %164 : vector<1x8x8x128xf32> to vector<8x8x128xf32>
    %166 = vector.shape_cast %163 : vector<8x8x128xf32> to vector<1x8x8x128xf32>
    tpu.vector_store %arg8[%c0_159, %c0_160, %c0_161, %c0_162], %166 {strides = array<i32>} : memref<1x8x8x128xf32, #tpu.memory_space<vmem>>, vector<1x8x8x128xf32>,
    %c3_163 = arith.constant 3 : index
    %c0_164 = arith.constant 0 : index
    %c0_165 = arith.constant 0 : index
    %c0_166 = arith.constant 0 : index
    %167 = vector.load %arg10[%c3_163, %c0_164, %c0_165, %c0_166] : memref<4x9x9x128xf32, #tpu.memory_space<vmem>>, vector<1x8x8x128xf32>
    %168 = vector.shape_cast %167 : vector<1x8x8x128xf32> to vector<8x8x128xf32>
    %169 = vector.shape_cast %168 : vector<8x8x128xf32> to vector<64x128xf32>
    %170 = arith.truncf %169 : vector<64x128xf32> to vector<64x128xbf16>
    %c0_167 = arith.constant 0 : index
    %c0_168 = arith.constant 0 : index
    %171 = vector.load %arg7[%c0_167, %c0_168] : memref<128x128xbf16, #tpu.memory_space<vmem>>, vector<128x128xbf16>
    %cst_169 = arith.constant dense<0.000000e+00> : vector<64x128xf32>
    %172 = tpu.matmul %170, %171, %cst_169 {dimension_numbers = #tpu.dot_dimension_numbers<[1], [0], [0], [1], [0, 0, 1, 1], [], []>} : vector<64x128xbf16>, vector<128x128xbf16>, vector<64x128xf32> -> vector<64x128xf32>
    %173 = vector.shape_cast %172 : vector<64x128xf32> to vector<8x8x128xf32>
    %c0_170 = arith.constant 0 : index
    %c0_171 = arith.constant 0 : index
    %c0_172 = arith.constant 0 : index
    %c0_173 = arith.constant 0 : index
    %174 = vector.load %arg9[%c0_170, %c0_171, %c0_172, %c0_173] : memref<1x8x8x128xf32, #tpu.memory_space<vmem>>, vector<1x8x8x128xf32>
    %175 = vector.shape_cast %174 : vector<1x8x8x128xf32> to vector<8x8x128xf32>
    %176 = vector.shape_cast %173 : vector<8x8x128xf32> to vector<1x8x8x128xf32>
    tpu.vector_store %arg9[%c0_170, %c0_171, %c0_172, %c0_173], %176 {strides = array<i32>} : memref<1x8x8x128xf32, #tpu.memory_space<vmem>>, vector<1x8x8x128xf32>,
    return
  }
  func.func @transform_0(%arg0: i32, %arg1: i32) -> (i32, i32) {
    %c0_i32 = arith.constant 0 : i32
    %c0_i32_0 = arith.constant 0 : i32
    %c0_i32_1 = arith.constant 0 : i32
    return %c0_i32, %c0_i32_0 : i32, i32
  }
  func.func @transform_1(%arg0: i32, %arg1: i32) -> (i32, i32) {
    %c0_i32 = arith.constant 0 : i32
    %c0_i32_0 = arith.constant 0 : i32
    %c0_i32_1 = arith.constant 0 : i32
    return %c0_i32, %c0_i32_0 : i32, i32
  }
  func.func @transform_2(%arg0: i32, %arg1: i32) -> (i32, i32, i32, i32) {
    %c0_i32 = arith.constant 0 : i32
    %c0_i32_0 = arith.constant 0 : i32
    %c0_i32_1 = arith.constant 0 : i32
    %c0_i32_2 = arith.constant 0 : i32
    %c0_i32_3 = arith.constant 0 : i32
    return %c0_i32, %c0_i32_0, %c0_i32_1, %c0_i32_2 : i32, i32, i32, i32
  }
  func.func @transform_3(%arg0: i32, %arg1: i32) -> (i32, i32, i32, i32) {
    %c0_i32 = arith.constant 0 : i32
    %c0_i32_0 = arith.constant 0 : i32
    %c0_i32_1 = arith.constant 0 : i32
    %c0_i32_2 = arith.constant 0 : i32
    return %arg0, %c0_i32, %c0_i32_0, %c0_i32_1 : i32, i32, i32, i32
  }
  func.func @transform_4(%arg0: i32, %arg1: i32) -> (i32, i32, i32) {
    %c0_i32 = arith.constant 0 : i32
    %c0_i32_0 = arith.constant 0 : i32
    %c0_i32_1 = arith.constant 0 : i32
    return %c0_i32, %c0_i32_0, %arg1 : i32, i32, i32
  }
  func.func @transform_5(%arg0: i32, %arg1: i32) -> (i32, i32) {
    %c0_i32 = arith.constant 0 : i32
    %c0_i32_0 = arith.constant 0 : i32
    return %c0_i32, %arg1 : i32, i32
  }
  func.func @transform_6(%arg0: i32, %arg1: i32) -> (i32, i32, i32, i32) {
    %c0_i32 = arith.constant 0 : i32
    %c0_i32_0 = arith.constant 0 : i32
    %c0_i32_1 = arith.constant 0 : i32
    return %arg0, %c0_i32, %c0_i32_0, %arg1 : i32, i32, i32, i32
  }
  func.func @transform_7(%arg0: i32, %arg1: i32) -> (i32, i32, i32, i32) {
    %c0_i32 = arith.constant 0 : i32
    %c0_i32_0 = arith.constant 0 : i32
    %c0_i32_1 = arith.constant 0 : i32
    return %arg0, %c0_i32, %c0_i32_0, %arg1 : i32, i32, i32, i32
  }
}

module attributes {stable_mosaic.version = 11 : i64} {
  func.func @_bn_stats_kernel(%arg0: i32, %arg1: i32, %arg2: memref<128x128xf32, #tpu.memory_space<vmem>>, %arg3: memref<1x128xf32, #tpu.memory_space<vmem>>, %arg4: memref<1x128xf32, #tpu.memory_space<vmem>>, %arg5: memref<1x128xf32, #tpu.memory_space<vmem>>, %arg6: memref<1x128xf32, #tpu.memory_space<vmem>>, %arg7: memref<1x128xf32, #tpu.memory_space<vmem>>, %arg8: memref<1x128xf32, #tpu.memory_space<vmem>>) attributes {dimension_semantics = [#tpu.dimension_semantics<arbitrary>, #tpu.dimension_semantics<arbitrary>], iteration_bounds = array<i64: 2, 1>, scalar_prefetch = 0 : i64, scratch_operands = 2 : i64, tpu.core_type = #tpu.core_type<tc>, window_params = [{transform_indices = @transform_0, window_bounds = array<i64: 128, 128>}, {pipeline_mode = #tpu.pipeline_mode<synchronous>, transform_indices = @transform_1, window_bounds = array<i64: 1, 128>}, {pipeline_mode = #tpu.pipeline_mode<synchronous>, transform_indices = @transform_2, window_bounds = array<i64: 1, 128>}, {pipeline_mode = #tpu.pipeline_mode<synchronous>, transform_indices = @transform_3, window_bounds = array<i64: 1, 128>}, {pipeline_mode = #tpu.pipeline_mode<synchronous>, transform_indices = @transform_4, window_bounds = array<i64: 1, 128>}]} {
    %c0_i32 = arith.constant 0 : i32
    %0 = arith.cmpi eq, %arg1, %c0_i32 : i32
    %1 = arith.extui %0 : i1 to i32
    %c0_i32_0 = arith.constant 0 : i32
    %2 = arith.cmpi ne, %1, %c0_i32_0 : i32
    scf.if %2 {
      %cst = arith.constant 0.000000e+00 : f32
      %20 = vector.broadcast %cst : f32 to vector<1x128xf32>
      %c0_11 = arith.constant 0 : index
      %c0_12 = arith.constant 0 : index
      %21 = vector.load %arg7[%c0_11, %c0_12] : memref<1x128xf32, #tpu.memory_space<vmem>>, vector<1x128xf32>
      tpu.vector_store %arg7[%c0_11, %c0_12], %20 {strides = array<i32>} : memref<1x128xf32, #tpu.memory_space<vmem>>, vector<1x128xf32>,
    } else {
    }
    %c0 = arith.constant 0 : index
    %c0_1 = arith.constant 0 : index
    %3 = vector.load %arg2[%c0, %c0_1] : memref<128x128xf32, #tpu.memory_space<vmem>>, vector<128x128xf32>
    %c0_i32_2 = arith.constant 0 : i32
    %4 = arith.cmpi eq, %arg0, %c0_i32_2 : i32
    %5 = arith.extui %4 : i1 to i32
    %c0_i32_3 = arith.constant 0 : i32
    %6 = arith.cmpi ne, %5, %c0_i32_3 : i32
    scf.if %6 {
      %c0_11 = arith.constant 0 : index
      %c0_12 = arith.constant 0 : index
      %20 = vector.load %arg7[%c0_11, %c0_12] : memref<1x128xf32, #tpu.memory_space<vmem>>, vector<1x128xf32>
      %cst = arith.constant dense<0.000000e+00> : vector<128xf32>
      %21 = vector.multi_reduction <add>, %3, %cst [0] : vector<128x128xf32> to vector<128xf32>
      %22 = vector.shape_cast %21 : vector<128xf32> to vector<1x128xf32>
      %23 = arith.addf %20, %22 : vector<1x128xf32>
      %c0_13 = arith.constant 0 : index
      %c0_14 = arith.constant 0 : index
      %24 = vector.load %arg7[%c0_13, %c0_14] : memref<1x128xf32, #tpu.memory_space<vmem>>, vector<1x128xf32>
      tpu.vector_store %arg7[%c0_13, %c0_14], %23 {strides = array<i32>} : memref<1x128xf32, #tpu.memory_space<vmem>>, vector<1x128xf32>,
    } else {
    }
    %c1_i32 = arith.constant 1 : i32
    %7 = arith.cmpi eq, %arg0, %c1_i32 : i32
    %8 = arith.extui %7 : i1 to i32
    %c0_i32_4 = arith.constant 0 : i32
    %9 = arith.cmpi ne, %8, %c0_i32_4 : i32
    scf.if %9 {
      %c0_11 = arith.constant 0 : index
      %c0_12 = arith.constant 0 : index
      %20 = vector.load %arg8[%c0_11, %c0_12] : memref<1x128xf32, #tpu.memory_space<vmem>>, vector<1x128xf32>
      %21 = vector.broadcast %20 : vector<1x128xf32> to vector<128x128xf32>
      %22 = arith.subf %3, %21 : vector<128x128xf32>
      %c0_13 = arith.constant 0 : index
      %c0_14 = arith.constant 0 : index
      %23 = vector.load %arg7[%c0_13, %c0_14] : memref<1x128xf32, #tpu.memory_space<vmem>>, vector<1x128xf32>
      %24 = arith.mulf %22, %22 : vector<128x128xf32>
      %cst = arith.constant dense<0.000000e+00> : vector<128xf32>
      %25 = vector.multi_reduction <add>, %24, %cst [0] : vector<128x128xf32> to vector<128xf32>
      %26 = vector.shape_cast %25 : vector<128xf32> to vector<1x128xf32>
      %27 = arith.addf %23, %26 : vector<1x128xf32>
      %c0_15 = arith.constant 0 : index
      %c0_16 = arith.constant 0 : index
      %28 = vector.load %arg7[%c0_15, %c0_16] : memref<1x128xf32, #tpu.memory_space<vmem>>, vector<1x128xf32>
      tpu.vector_store %arg7[%c0_15, %c0_16], %27 {strides = array<i32>} : memref<1x128xf32, #tpu.memory_space<vmem>>, vector<1x128xf32>,
    } else {
    }
    %c0_i32_5 = arith.constant 0 : i32
    %10 = arith.cmpi eq, %arg0, %c0_i32_5 : i32
    %c0_i32_6 = arith.constant 0 : i32
    %11 = arith.cmpi eq, %arg1, %c0_i32_6 : i32
    %12 = arith.andi %10, %11 : i1
    %13 = arith.extui %12 : i1 to i32
    %c0_i32_7 = arith.constant 0 : i32
    %14 = arith.cmpi ne, %13, %c0_i32_7 : i32
    scf.if %14 {
      %c0_11 = arith.constant 0 : index
      %c0_12 = arith.constant 0 : index
      %20 = vector.load %arg7[%c0_11, %c0_12] : memref<1x128xf32, #tpu.memory_space<vmem>>, vector<1x128xf32>
      %cst = arith.constant 7.812500e-03 : f32
      %21 = vector.broadcast %cst : f32 to vector<1x128xf32>
      %22 = arith.mulf %20, %21 : vector<1x128xf32>
      %c0_13 = arith.constant 0 : index
      %c0_14 = arith.constant 0 : index
      %23 = vector.load %arg8[%c0_13, %c0_14] : memref<1x128xf32, #tpu.memory_space<vmem>>, vector<1x128xf32>
      tpu.vector_store %arg8[%c0_13, %c0_14], %22 {strides = array<i32>} : memref<1x128xf32, #tpu.memory_space<vmem>>, vector<1x128xf32>,
    } else {
    }
    %c1_i32_8 = arith.constant 1 : i32
    %15 = arith.cmpi eq, %arg0, %c1_i32_8 : i32
    %c0_i32_9 = arith.constant 0 : i32
    %16 = arith.cmpi eq, %arg1, %c0_i32_9 : i32
    %17 = arith.andi %15, %16 : i1
    %18 = arith.extui %17 : i1 to i32
    %c0_i32_10 = arith.constant 0 : i32
    %19 = arith.cmpi ne, %18, %c0_i32_10 : i32
    scf.if %19 {
      %c0_11 = arith.constant 0 : index
      %c0_12 = arith.constant 0 : index
      %20 = vector.load %arg7[%c0_11, %c0_12] : memref<1x128xf32, #tpu.memory_space<vmem>>, vector<1x128xf32>
      %cst = arith.constant 7.812500e-03 : f32
      %21 = vector.broadcast %cst : f32 to vector<1x128xf32>
      %22 = arith.mulf %20, %21 : vector<1x128xf32>
      %c0_13 = arith.constant 0 : index
      %c0_14 = arith.constant 0 : index
      %23 = vector.load %arg3[%c0_13, %c0_14] : memref<1x128xf32, #tpu.memory_space<vmem>>, vector<1x128xf32>
      %cst_15 = arith.constant 1.000000e-03 : f32
      %24 = vector.broadcast %cst_15 : f32 to vector<1x128xf32>
      %25 = arith.addf %22, %24 : vector<1x128xf32>
      %26 = math.rsqrt %25 : vector<1x128xf32>
      %27 = arith.mulf %23, %26 : vector<1x128xf32>
      %c0_16 = arith.constant 0 : index
      %c0_17 = arith.constant 0 : index
      %28 = vector.load %arg5[%c0_16, %c0_17] : memref<1x128xf32, #tpu.memory_space<vmem>>, vector<1x128xf32>
      tpu.vector_store %arg5[%c0_16, %c0_17], %27 {strides = array<i32>} : memref<1x128xf32, #tpu.memory_space<vmem>>, vector<1x128xf32>,
      %c0_18 = arith.constant 0 : index
      %c0_19 = arith.constant 0 : index
      %29 = vector.load %arg4[%c0_18, %c0_19] : memref<1x128xf32, #tpu.memory_space<vmem>>, vector<1x128xf32>
      %c0_20 = arith.constant 0 : index
      %c0_21 = arith.constant 0 : index
      %30 = vector.load %arg8[%c0_20, %c0_21] : memref<1x128xf32, #tpu.memory_space<vmem>>, vector<1x128xf32>
      %31 = arith.mulf %30, %27 : vector<1x128xf32>
      %32 = arith.subf %29, %31 : vector<1x128xf32>
      %c0_22 = arith.constant 0 : index
      %c0_23 = arith.constant 0 : index
      %33 = vector.load %arg6[%c0_22, %c0_23] : memref<1x128xf32, #tpu.memory_space<vmem>>, vector<1x128xf32>
      tpu.vector_store %arg6[%c0_22, %c0_23], %32 {strides = array<i32>} : memref<1x128xf32, #tpu.memory_space<vmem>>, vector<1x128xf32>,
    } else {
    }
    return
  }
  func.func @transform_0(%arg0: i32, %arg1: i32) -> (i32, i32) {
    %c0_i32 = arith.constant 0 : i32
    %c0_i32_0 = arith.constant 0 : i32
    return %arg1, %c0_i32 : i32, i32
  }
  func.func @transform_1(%arg0: i32, %arg1: i32) -> (i32, i32) {
    %c0_i32 = arith.constant 0 : i32
    %c0_i32_0 = arith.constant 0 : i32
    %c0_i32_1 = arith.constant 0 : i32
    return %c0_i32, %c0_i32_0 : i32, i32
  }
  func.func @transform_2(%arg0: i32, %arg1: i32) -> (i32, i32) {
    %c0_i32 = arith.constant 0 : i32
    %c0_i32_0 = arith.constant 0 : i32
    %c0_i32_1 = arith.constant 0 : i32
    return %c0_i32, %c0_i32_0 : i32, i32
  }
  func.func @transform_3(%arg0: i32, %arg1: i32) -> (i32, i32) {
    %c0_i32 = arith.constant 0 : i32
    %c0_i32_0 = arith.constant 0 : i32
    %c0_i32_1 = arith.constant 0 : i32
    return %c0_i32, %c0_i32_0 : i32, i32
  }
  func.func @transform_4(%arg0: i32, %arg1: i32) -> (i32, i32) {
    %c0_i32 = arith.constant 0 : i32
    %c0_i32_0 = arith.constant 0 : i32
    %c0_i32_1 = arith.constant 0 : i32
    return %c0_i32, %c0_i32_0 : i32, i32
  }
}

module attributes {stable_mosaic.version = 11 : i64} {
  func.func @_conv_residual_kernel(%arg0: i32, %arg1: i32, %arg2: memref<1x128xf32, #tpu.memory_space<vmem>>, %arg3: memref<1x128xf32, #tpu.memory_space<vmem>>, %arg4: memref<1x10x10x1xf32, #tpu.memory_space<vmem>>, %arg5: memref<1x10x10x128xf32, #tpu.memory_space<vmem>>, %arg6: memref<9x128x128xbf16, #tpu.memory_space<vmem>>, %arg7: memref<1x8x8x128xf32, #tpu.memory_space<vmem>>, %arg8: memref<1x8x8x128xf32, #tpu.memory_space<vmem>>, %arg9: memref<1x10x10x128xf32, #tpu.memory_space<vmem>>, %arg10: memref<64x128xf32, #tpu.memory_space<vmem>>) attributes {dimension_semantics = [#tpu.dimension_semantics<parallel>, #tpu.dimension_semantics<parallel>], iteration_bounds = array<i64: 2, 1>, scalar_prefetch = 0 : i64, scratch_operands = 2 : i64, tpu.core_type = #tpu.core_type<tc>, window_params = [{pipeline_mode = #tpu.pipeline_mode<synchronous>, transform_indices = @transform_0, window_bounds = array<i64: 1, 128>}, {pipeline_mode = #tpu.pipeline_mode<synchronous>, transform_indices = @transform_1, window_bounds = array<i64: 1, 128>}, {pipeline_mode = #tpu.pipeline_mode<synchronous>, transform_indices = @transform_2, window_bounds = array<i64: 1, 10, 10, 1>}, {transform_indices = @transform_3, window_bounds = array<i64: 1, 10, 10, 128>}, {transform_indices = @transform_4, window_bounds = array<i64: 9, 128, 128>}, {transform_indices = @transform_5, window_bounds = array<i64: 1, 8, 8, 128>}, {transform_indices = @transform_6, window_bounds = array<i64: 1, 8, 8, 128>}]} {
    %c0 = arith.constant 0 : index
    %c0_0 = arith.constant 0 : index
    %0 = vector.load %arg2[%c0, %c0_0] : memref<1x128xf32, #tpu.memory_space<vmem>>, vector<1x128xf32>
    %c0_1 = arith.constant 0 : index
    %c0_2 = arith.constant 0 : index
    %1 = vector.load %arg3[%c0_1, %c0_2] : memref<1x128xf32, #tpu.memory_space<vmem>>, vector<1x128xf32>
    %c0_3 = arith.constant 0 : index
    %c0_4 = arith.constant 0 : index
    %c0_5 = arith.constant 0 : index
    %c0_6 = arith.constant 0 : index
    %2 = vector.load %arg5[%c0_3, %c0_4, %c0_5, %c0_6] : memref<1x10x10x128xf32, #tpu.memory_space<vmem>>, vector<1x10x10x128xf32>
    %3 = vector.shape_cast %2 : vector<1x10x10x128xf32> to vector<10x10x128xf32>
    %4 = vector.shape_cast %0 : vector<1x128xf32> to vector<1x1x128xf32>
    %5 = vector.broadcast %4 : vector<1x1x128xf32> to vector<10x10x128xf32>
    %6 = arith.mulf %3, %5 : vector<10x10x128xf32>
    %7 = vector.shape_cast %1 : vector<1x128xf32> to vector<1x1x128xf32>
    %8 = vector.broadcast %7 : vector<1x1x128xf32> to vector<10x10x128xf32>
    %9 = arith.addf %6, %8 : vector<10x10x128xf32>
    %cst = arith.constant 0.000000e+00 : f32
    %10 = vector.broadcast %cst : f32 to vector<10x10x128xf32>
    %11 = arith.maximumf %9, %10 : vector<10x10x128xf32>
    %c0_7 = arith.constant 0 : index
    %c0_8 = arith.constant 0 : index
    %c0_9 = arith.constant 0 : index
    %c0_10 = arith.constant 0 : index
    %12 = vector.load %arg4[%c0_7, %c0_8, %c0_9, %c0_10] : memref<1x10x10x1xf32, #tpu.memory_space<vmem>>, vector<1x10x10x1xf32>
    %13 = vector.shape_cast %12 : vector<1x10x10x1xf32> to vector<10x10x1xf32>
    %14 = vector.broadcast %13 : vector<10x10x1xf32> to vector<10x10x128xf32>
    %15 = arith.mulf %11, %14 : vector<10x10x128xf32>
    %c0_11 = arith.constant 0 : index
    %c0_12 = arith.constant 0 : index
    %c0_13 = arith.constant 0 : index
    %c0_14 = arith.constant 0 : index
    %16 = vector.load %arg9[%c0_11, %c0_12, %c0_13, %c0_14] : memref<1x10x10x128xf32, #tpu.memory_space<vmem>>, vector<1x10x10x128xf32>
    %17 = vector.shape_cast %16 : vector<1x10x10x128xf32> to vector<10x10x128xf32>
    %18 = vector.shape_cast %15 : vector<10x10x128xf32> to vector<1x10x10x128xf32>
    tpu.vector_store %arg9[%c0_11, %c0_12, %c0_13, %c0_14], %18 {strides = array<i32>} : memref<1x10x10x128xf32, #tpu.memory_space<vmem>>, vector<1x10x10x128xf32>,
    %cst_15 = arith.constant 0.000000e+00 : f32
    %19 = vector.broadcast %cst_15 : f32 to vector<64x128xf32>
    %c0_16 = arith.constant 0 : index
    %c0_17 = arith.constant 0 : index
    %20 = vector.load %arg10[%c0_16, %c0_17] : memref<64x128xf32, #tpu.memory_space<vmem>>, vector<64x128xf32>
    tpu.vector_store %arg10[%c0_16, %c0_17], %19 {strides = array<i32>} : memref<64x128xf32, #tpu.memory_space<vmem>>, vector<64x128xf32>,
    %c0_18 = arith.constant 0 : index
    %c0_19 = arith.constant 0 : index
    %c0_20 = arith.constant 0 : index
    %c0_21 = arith.constant 0 : index
    %21 = vector.load %arg9[%c0_18, %c0_19, %c0_20, %c0_21] : memref<1x10x10x128xf32, #tpu.memory_space<vmem>>, vector<1x8x8x128xf32>
    %22 = vector.shape_cast %21 : vector<1x8x8x128xf32> to vector<8x8x128xf32>
    %23 = vector.shape_cast %22 : vector<8x8x128xf32> to vector<64x128xf32>
    %24 = arith.truncf %23 : vector<64x128xf32> to vector<64x128xbf16>
    %c0_22 = arith.constant 0 : index
    %c0_23 = arith.constant 0 : index
    %25 = vector.load %arg10[%c0_22, %c0_23] : memref<64x128xf32, #tpu.memory_space<vmem>>, vector<64x128xf32>
    %c0_24 = arith.constant 0 : index
    %c0_25 = arith.constant 0 : index
    %c0_26 = arith.constant 0 : index
    %26 = vector.load %arg6[%c0_24, %c0_25, %c0_26] : memref<9x128x128xbf16, #tpu.memory_space<vmem>>, vector<1x128x128xbf16>
    %27 = vector.shape_cast %26 : vector<1x128x128xbf16> to vector<128x128xbf16>
    %cst_27 = arith.constant dense<0.000000e+00> : vector<64x128xf32>
    %28 = tpu.matmul %24, %27, %cst_27 {dimension_numbers = #tpu.dot_dimension_numbers<[1], [0], [0], [1], [0, 0, 1, 1], [], []>} : vector<64x128xbf16>, vector<128x128xbf16>, vector<64x128xf32> -> vector<64x128xf32>
    %29 = arith.addf %25, %28 : vector<64x128xf32>
    %c0_28 = arith.constant 0 : index
    %c0_29 = arith.constant 0 : index
    %30 = vector.load %arg10[%c0_28, %c0_29] : memref<64x128xf32, #tpu.memory_space<vmem>>, vector<64x128xf32>
    tpu.vector_store %arg10[%c0_28, %c0_29], %29 {strides = array<i32>} : memref<64x128xf32, #tpu.memory_space<vmem>>, vector<64x128xf32>,
    %c0_30 = arith.constant 0 : index
    %c0_31 = arith.constant 0 : index
    %c1 = arith.constant 1 : index
    %c0_32 = arith.constant 0 : index
    %31 = vector.load %arg9[%c0_30, %c0_31, %c1, %c0_32] : memref<1x10x10x128xf32, #tpu.memory_space<vmem>>, vector<1x8x8x128xf32>
    %32 = vector.shape_cast %31 : vector<1x8x8x128xf32> to vector<8x8x128xf32>
    %33 = vector.shape_cast %32 : vector<8x8x128xf32> to vector<64x128xf32>
    %34 = arith.truncf %33 : vector<64x128xf32> to vector<64x128xbf16>
    %c0_33 = arith.constant 0 : index
    %c0_34 = arith.constant 0 : index
    %35 = vector.load %arg10[%c0_33, %c0_34] : memref<64x128xf32, #tpu.memory_space<vmem>>, vector<64x128xf32>
    %c1_35 = arith.constant 1 : index
    %c0_36 = arith.constant 0 : index
    %c0_37 = arith.constant 0 : index
    %36 = vector.load %arg6[%c1_35, %c0_36, %c0_37] : memref<9x128x128xbf16, #tpu.memory_space<vmem>>, vector<1x128x128xbf16>
    %37 = vector.shape_cast %36 : vector<1x128x128xbf16> to vector<128x128xbf16>
    %cst_38 = arith.constant dense<0.000000e+00> : vector<64x128xf32>
    %38 = tpu.matmul %34, %37, %cst_38 {dimension_numbers = #tpu.dot_dimension_numbers<[1], [0], [0], [1], [0, 0, 1, 1], [], []>} : vector<64x128xbf16>, vector<128x128xbf16>, vector<64x128xf32> -> vector<64x128xf32>
    %39 = arith.addf %35, %38 : vector<64x128xf32>
    %c0_39 = arith.constant 0 : index
    %c0_40 = arith.constant 0 : index
    %40 = vector.load %arg10[%c0_39, %c0_40] : memref<64x128xf32, #tpu.memory_space<vmem>>, vector<64x128xf32>
    tpu.vector_store %arg10[%c0_39, %c0_40], %39 {strides = array<i32>} : memref<64x128xf32, #tpu.memory_space<vmem>>, vector<64x128xf32>,
    %c0_41 = arith.constant 0 : index
    %c0_42 = arith.constant 0 : index
    %c2 = arith.constant 2 : index
    %c0_43 = arith.constant 0 : index
    %41 = vector.load %arg9[%c0_41, %c0_42, %c2, %c0_43] : memref<1x10x10x128xf32, #tpu.memory_space<vmem>>, vector<1x8x8x128xf32>
    %42 = vector.shape_cast %41 : vector<1x8x8x128xf32> to vector<8x8x128xf32>
    %43 = vector.shape_cast %42 : vector<8x8x128xf32> to vector<64x128xf32>
    %44 = arith.truncf %43 : vector<64x128xf32> to vector<64x128xbf16>
    %c0_44 = arith.constant 0 : index
    %c0_45 = arith.constant 0 : index
    %45 = vector.load %arg10[%c0_44, %c0_45] : memref<64x128xf32, #tpu.memory_space<vmem>>, vector<64x128xf32>
    %c2_46 = arith.constant 2 : index
    %c0_47 = arith.constant 0 : index
    %c0_48 = arith.constant 0 : index
    %46 = vector.load %arg6[%c2_46, %c0_47, %c0_48] : memref<9x128x128xbf16, #tpu.memory_space<vmem>>, vector<1x128x128xbf16>
    %47 = vector.shape_cast %46 : vector<1x128x128xbf16> to vector<128x128xbf16>
    %cst_49 = arith.constant dense<0.000000e+00> : vector<64x128xf32>
    %48 = tpu.matmul %44, %47, %cst_49 {dimension_numbers = #tpu.dot_dimension_numbers<[1], [0], [0], [1], [0, 0, 1, 1], [], []>} : vector<64x128xbf16>, vector<128x128xbf16>, vector<64x128xf32> -> vector<64x128xf32>
    %49 = arith.addf %45, %48 : vector<64x128xf32>
    %c0_50 = arith.constant 0 : index
    %c0_51 = arith.constant 0 : index
    %50 = vector.load %arg10[%c0_50, %c0_51] : memref<64x128xf32, #tpu.memory_space<vmem>>, vector<64x128xf32>
    tpu.vector_store %arg10[%c0_50, %c0_51], %49 {strides = array<i32>} : memref<64x128xf32, #tpu.memory_space<vmem>>, vector<64x128xf32>,
    %c0_52 = arith.constant 0 : index
    %c1_53 = arith.constant 1 : index
    %c0_54 = arith.constant 0 : index
    %c0_55 = arith.constant 0 : index
    %51 = vector.load %arg9[%c0_52, %c1_53, %c0_54, %c0_55] : memref<1x10x10x128xf32, #tpu.memory_space<vmem>>, vector<1x8x8x128xf32>
    %52 = vector.shape_cast %51 : vector<1x8x8x128xf32> to vector<8x8x128xf32>
    %53 = vector.shape_cast %52 : vector<8x8x128xf32> to vector<64x128xf32>
    %54 = arith.truncf %53 : vector<64x128xf32> to vector<64x128xbf16>
    %c0_56 = arith.constant 0 : index
    %c0_57 = arith.constant 0 : index
    %55 = vector.load %arg10[%c0_56, %c0_57] : memref<64x128xf32, #tpu.memory_space<vmem>>, vector<64x128xf32>
    %c3 = arith.constant 3 : index
    %c0_58 = arith.constant 0 : index
    %c0_59 = arith.constant 0 : index
    %56 = vector.load %arg6[%c3, %c0_58, %c0_59] : memref<9x128x128xbf16, #tpu.memory_space<vmem>>, vector<1x128x128xbf16>
    %57 = vector.shape_cast %56 : vector<1x128x128xbf16> to vector<128x128xbf16>
    %cst_60 = arith.constant dense<0.000000e+00> : vector<64x128xf32>
    %58 = tpu.matmul %54, %57, %cst_60 {dimension_numbers = #tpu.dot_dimension_numbers<[1], [0], [0], [1], [0, 0, 1, 1], [], []>} : vector<64x128xbf16>, vector<128x128xbf16>, vector<64x128xf32> -> vector<64x128xf32>
    %59 = arith.addf %55, %58 : vector<64x128xf32>
    %c0_61 = arith.constant 0 : index
    %c0_62 = arith.constant 0 : index
    %60 = vector.load %arg10[%c0_61, %c0_62] : memref<64x128xf32, #tpu.memory_space<vmem>>, vector<64x128xf32>
    tpu.vector_store %arg10[%c0_61, %c0_62], %59 {strides = array<i32>} : memref<64x128xf32, #tpu.memory_space<vmem>>, vector<64x128xf32>,
    %c0_63 = arith.constant 0 : index
    %c1_64 = arith.constant 1 : index
    %c1_65 = arith.constant 1 : index
    %c0_66 = arith.constant 0 : index
    %61 = vector.load %arg9[%c0_63, %c1_64, %c1_65, %c0_66] : memref<1x10x10x128xf32, #tpu.memory_space<vmem>>, vector<1x8x8x128xf32>
    %62 = vector.shape_cast %61 : vector<1x8x8x128xf32> to vector<8x8x128xf32>
    %63 = vector.shape_cast %62 : vector<8x8x128xf32> to vector<64x128xf32>
    %64 = arith.truncf %63 : vector<64x128xf32> to vector<64x128xbf16>
    %c0_67 = arith.constant 0 : index
    %c0_68 = arith.constant 0 : index
    %65 = vector.load %arg10[%c0_67, %c0_68] : memref<64x128xf32, #tpu.memory_space<vmem>>, vector<64x128xf32>
    %c4 = arith.constant 4 : index
    %c0_69 = arith.constant 0 : index
    %c0_70 = arith.constant 0 : index
    %66 = vector.load %arg6[%c4, %c0_69, %c0_70] : memref<9x128x128xbf16, #tpu.memory_space<vmem>>, vector<1x128x128xbf16>
    %67 = vector.shape_cast %66 : vector<1x128x128xbf16> to vector<128x128xbf16>
    %cst_71 = arith.constant dense<0.000000e+00> : vector<64x128xf32>
    %68 = tpu.matmul %64, %67, %cst_71 {dimension_numbers = #tpu.dot_dimension_numbers<[1], [0], [0], [1], [0, 0, 1, 1], [], []>} : vector<64x128xbf16>, vector<128x128xbf16>, vector<64x128xf32> -> vector<64x128xf32>
    %69 = arith.addf %65, %68 : vector<64x128xf32>
    %c0_72 = arith.constant 0 : index
    %c0_73 = arith.constant 0 : index
    %70 = vector.load %arg10[%c0_72, %c0_73] : memref<64x128xf32, #tpu.memory_space<vmem>>, vector<64x128xf32>
    tpu.vector_store %arg10[%c0_72, %c0_73], %69 {strides = array<i32>} : memref<64x128xf32, #tpu.memory_space<vmem>>, vector<64x128xf32>,
    %c0_74 = arith.constant 0 : index
    %c1_75 = arith.constant 1 : index
    %c2_76 = arith.constant 2 : index
    %c0_77 = arith.constant 0 : index
    %71 = vector.load %arg9[%c0_74, %c1_75, %c2_76, %c0_77] : memref<1x10x10x128xf32, #tpu.memory_space<vmem>>, vector<1x8x8x128xf32>
    %72 = vector.shape_cast %71 : vector<1x8x8x128xf32> to vector<8x8x128xf32>
    %73 = vector.shape_cast %72 : vector<8x8x128xf32> to vector<64x128xf32>
    %74 = arith.truncf %73 : vector<64x128xf32> to vector<64x128xbf16>
    %c0_78 = arith.constant 0 : index
    %c0_79 = arith.constant 0 : index
    %75 = vector.load %arg10[%c0_78, %c0_79] : memref<64x128xf32, #tpu.memory_space<vmem>>, vector<64x128xf32>
    %c5 = arith.constant 5 : index
    %c0_80 = arith.constant 0 : index
    %c0_81 = arith.constant 0 : index
    %76 = vector.load %arg6[%c5, %c0_80, %c0_81] : memref<9x128x128xbf16, #tpu.memory_space<vmem>>, vector<1x128x128xbf16>
    %77 = vector.shape_cast %76 : vector<1x128x128xbf16> to vector<128x128xbf16>
    %cst_82 = arith.constant dense<0.000000e+00> : vector<64x128xf32>
    %78 = tpu.matmul %74, %77, %cst_82 {dimension_numbers = #tpu.dot_dimension_numbers<[1], [0], [0], [1], [0, 0, 1, 1], [], []>} : vector<64x128xbf16>, vector<128x128xbf16>, vector<64x128xf32> -> vector<64x128xf32>
    %79 = arith.addf %75, %78 : vector<64x128xf32>
    %c0_83 = arith.constant 0 : index
    %c0_84 = arith.constant 0 : index
    %80 = vector.load %arg10[%c0_83, %c0_84] : memref<64x128xf32, #tpu.memory_space<vmem>>, vector<64x128xf32>
    tpu.vector_store %arg10[%c0_83, %c0_84], %79 {strides = array<i32>} : memref<64x128xf32, #tpu.memory_space<vmem>>, vector<64x128xf32>,
    %c0_85 = arith.constant 0 : index
    %c2_86 = arith.constant 2 : index
    %c0_87 = arith.constant 0 : index
    %c0_88 = arith.constant 0 : index
    %81 = vector.load %arg9[%c0_85, %c2_86, %c0_87, %c0_88] : memref<1x10x10x128xf32, #tpu.memory_space<vmem>>, vector<1x8x8x128xf32>
    %82 = vector.shape_cast %81 : vector<1x8x8x128xf32> to vector<8x8x128xf32>
    %83 = vector.shape_cast %82 : vector<8x8x128xf32> to vector<64x128xf32>
    %84 = arith.truncf %83 : vector<64x128xf32> to vector<64x128xbf16>
    %c0_89 = arith.constant 0 : index
    %c0_90 = arith.constant 0 : index
    %85 = vector.load %arg10[%c0_89, %c0_90] : memref<64x128xf32, #tpu.memory_space<vmem>>, vector<64x128xf32>
    %c6 = arith.constant 6 : index
    %c0_91 = arith.constant 0 : index
    %c0_92 = arith.constant 0 : index
    %86 = vector.load %arg6[%c6, %c0_91, %c0_92] : memref<9x128x128xbf16, #tpu.memory_space<vmem>>, vector<1x128x128xbf16>
    %87 = vector.shape_cast %86 : vector<1x128x128xbf16> to vector<128x128xbf16>
    %cst_93 = arith.constant dense<0.000000e+00> : vector<64x128xf32>
    %88 = tpu.matmul %84, %87, %cst_93 {dimension_numbers = #tpu.dot_dimension_numbers<[1], [0], [0], [1], [0, 0, 1, 1], [], []>} : vector<64x128xbf16>, vector<128x128xbf16>, vector<64x128xf32> -> vector<64x128xf32>
    %89 = arith.addf %85, %88 : vector<64x128xf32>
    %c0_94 = arith.constant 0 : index
    %c0_95 = arith.constant 0 : index
    %90 = vector.load %arg10[%c0_94, %c0_95] : memref<64x128xf32, #tpu.memory_space<vmem>>, vector<64x128xf32>
    tpu.vector_store %arg10[%c0_94, %c0_95], %89 {strides = array<i32>} : memref<64x128xf32, #tpu.memory_space<vmem>>, vector<64x128xf32>,
    %c0_96 = arith.constant 0 : index
    %c2_97 = arith.constant 2 : index
    %c1_98 = arith.constant 1 : index
    %c0_99 = arith.constant 0 : index
    %91 = vector.load %arg9[%c0_96, %c2_97, %c1_98, %c0_99] : memref<1x10x10x128xf32, #tpu.memory_space<vmem>>, vector<1x8x8x128xf32>
    %92 = vector.shape_cast %91 : vector<1x8x8x128xf32> to vector<8x8x128xf32>
    %93 = vector.shape_cast %92 : vector<8x8x128xf32> to vector<64x128xf32>
    %94 = arith.truncf %93 : vector<64x128xf32> to vector<64x128xbf16>
    %c0_100 = arith.constant 0 : index
    %c0_101 = arith.constant 0 : index
    %95 = vector.load %arg10[%c0_100, %c0_101] : memref<64x128xf32, #tpu.memory_space<vmem>>, vector<64x128xf32>
    %c7 = arith.constant 7 : index
    %c0_102 = arith.constant 0 : index
    %c0_103 = arith.constant 0 : index
    %96 = vector.load %arg6[%c7, %c0_102, %c0_103] : memref<9x128x128xbf16, #tpu.memory_space<vmem>>, vector<1x128x128xbf16>
    %97 = vector.shape_cast %96 : vector<1x128x128xbf16> to vector<128x128xbf16>
    %cst_104 = arith.constant dense<0.000000e+00> : vector<64x128xf32>
    %98 = tpu.matmul %94, %97, %cst_104 {dimension_numbers = #tpu.dot_dimension_numbers<[1], [0], [0], [1], [0, 0, 1, 1], [], []>} : vector<64x128xbf16>, vector<128x128xbf16>, vector<64x128xf32> -> vector<64x128xf32>
    %99 = arith.addf %95, %98 : vector<64x128xf32>
    %c0_105 = arith.constant 0 : index
    %c0_106 = arith.constant 0 : index
    %100 = vector.load %arg10[%c0_105, %c0_106] : memref<64x128xf32, #tpu.memory_space<vmem>>, vector<64x128xf32>
    tpu.vector_store %arg10[%c0_105, %c0_106], %99 {strides = array<i32>} : memref<64x128xf32, #tpu.memory_space<vmem>>, vector<64x128xf32>,
    %c0_107 = arith.constant 0 : index
    %c2_108 = arith.constant 2 : index
    %c2_109 = arith.constant 2 : index
    %c0_110 = arith.constant 0 : index
    %101 = vector.load %arg9[%c0_107, %c2_108, %c2_109, %c0_110] : memref<1x10x10x128xf32, #tpu.memory_space<vmem>>, vector<1x8x8x128xf32>
    %102 = vector.shape_cast %101 : vector<1x8x8x128xf32> to vector<8x8x128xf32>
    %103 = vector.shape_cast %102 : vector<8x8x128xf32> to vector<64x128xf32>
    %104 = arith.truncf %103 : vector<64x128xf32> to vector<64x128xbf16>
    %c0_111 = arith.constant 0 : index
    %c0_112 = arith.constant 0 : index
    %105 = vector.load %arg10[%c0_111, %c0_112] : memref<64x128xf32, #tpu.memory_space<vmem>>, vector<64x128xf32>
    %c8 = arith.constant 8 : index
    %c0_113 = arith.constant 0 : index
    %c0_114 = arith.constant 0 : index
    %106 = vector.load %arg6[%c8, %c0_113, %c0_114] : memref<9x128x128xbf16, #tpu.memory_space<vmem>>, vector<1x128x128xbf16>
    %107 = vector.shape_cast %106 : vector<1x128x128xbf16> to vector<128x128xbf16>
    %cst_115 = arith.constant dense<0.000000e+00> : vector<64x128xf32>
    %108 = tpu.matmul %104, %107, %cst_115 {dimension_numbers = #tpu.dot_dimension_numbers<[1], [0], [0], [1], [0, 0, 1, 1], [], []>} : vector<64x128xbf16>, vector<128x128xbf16>, vector<64x128xf32> -> vector<64x128xf32>
    %109 = arith.addf %105, %108 : vector<64x128xf32>
    %c0_116 = arith.constant 0 : index
    %c0_117 = arith.constant 0 : index
    %110 = vector.load %arg10[%c0_116, %c0_117] : memref<64x128xf32, #tpu.memory_space<vmem>>, vector<64x128xf32>
    tpu.vector_store %arg10[%c0_116, %c0_117], %109 {strides = array<i32>} : memref<64x128xf32, #tpu.memory_space<vmem>>, vector<64x128xf32>,
    %c0_118 = arith.constant 0 : index
    %c0_119 = arith.constant 0 : index
    %111 = vector.load %arg10[%c0_118, %c0_119] : memref<64x128xf32, #tpu.memory_space<vmem>>, vector<64x128xf32>
    %c0_120 = arith.constant 0 : index
    %c0_121 = arith.constant 0 : index
    %c0_122 = arith.constant 0 : index
    %c0_123 = arith.constant 0 : index
    %112 = vector.load %arg7[%c0_120, %c0_121, %c0_122, %c0_123] : memref<1x8x8x128xf32, #tpu.memory_space<vmem>>, vector<1x8x8x128xf32>
    %113 = vector.shape_cast %112 : vector<1x8x8x128xf32> to vector<8x8x128xf32>
    %114 = vector.shape_cast %113 : vector<8x8x128xf32> to vector<64x128xf32>
    %115 = arith.addf %111, %114 : vector<64x128xf32>
    %116 = vector.shape_cast %115 : vector<64x128xf32> to vector<8x8x128xf32>
    %c0_124 = arith.constant 0 : index
    %c0_125 = arith.constant 0 : index
    %c0_126 = arith.constant 0 : index
    %c0_127 = arith.constant 0 : index
    %117 = vector.load %arg8[%c0_124, %c0_125, %c0_126, %c0_127] : memref<1x8x8x128xf32, #tpu.memory_space<vmem>>, vector<1x8x8x128xf32>
    %118 = vector.shape_cast %117 : vector<1x8x8x128xf32> to vector<8x8x128xf32>
    %119 = vector.shape_cast %116 : vector<8x8x128xf32> to vector<1x8x8x128xf32>
    tpu.vector_store %arg8[%c0_124, %c0_125, %c0_126, %c0_127], %119 {strides = array<i32>} : memref<1x8x8x128xf32, #tpu.memory_space<vmem>>, vector<1x8x8x128xf32>,
    return
  }
  func.func @transform_0(%arg0: i32, %arg1: i32) -> (i32, i32) {
    %c0_i32 = arith.constant 0 : i32
    %c0_i32_0 = arith.constant 0 : i32
    %c0_i32_1 = arith.constant 0 : i32
    return %c0_i32, %c0_i32_0 : i32, i32
  }
  func.func @transform_1(%arg0: i32, %arg1: i32) -> (i32, i32) {
    %c0_i32 = arith.constant 0 : i32
    %c0_i32_0 = arith.constant 0 : i32
    %c0_i32_1 = arith.constant 0 : i32
    return %c0_i32, %c0_i32_0 : i32, i32
  }
  func.func @transform_2(%arg0: i32, %arg1: i32) -> (i32, i32, i32, i32) {
    %c0_i32 = arith.constant 0 : i32
    %c0_i32_0 = arith.constant 0 : i32
    %c0_i32_1 = arith.constant 0 : i32
    %c0_i32_2 = arith.constant 0 : i32
    %c0_i32_3 = arith.constant 0 : i32
    return %c0_i32, %c0_i32_0, %c0_i32_1, %c0_i32_2 : i32, i32, i32, i32
  }
  func.func @transform_3(%arg0: i32, %arg1: i32) -> (i32, i32, i32, i32) {
    %c0_i32 = arith.constant 0 : i32
    %c0_i32_0 = arith.constant 0 : i32
    %c0_i32_1 = arith.constant 0 : i32
    %c0_i32_2 = arith.constant 0 : i32
    return %arg0, %c0_i32, %c0_i32_0, %c0_i32_1 : i32, i32, i32, i32
  }
  func.func @transform_4(%arg0: i32, %arg1: i32) -> (i32, i32, i32) {
    %c0_i32 = arith.constant 0 : i32
    %c0_i32_0 = arith.constant 0 : i32
    %c0_i32_1 = arith.constant 0 : i32
    return %c0_i32, %c0_i32_0, %arg1 : i32, i32, i32
  }
  func.func @transform_5(%arg0: i32, %arg1: i32) -> (i32, i32, i32, i32) {
    %c0_i32 = arith.constant 0 : i32
    %c0_i32_0 = arith.constant 0 : i32
    %c0_i32_1 = arith.constant 0 : i32
    return %arg0, %c0_i32, %c0_i32_0, %arg1 : i32, i32, i32, i32
  }
  func.func @transform_6(%arg0: i32, %arg1: i32) -> (i32, i32, i32, i32) {
    %c0_i32 = arith.constant 0 : i32
    %c0_i32_0 = arith.constant 0 : i32
    %c0_i32_1 = arith.constant 0 : i32
    return %arg0, %c0_i32, %c0_i32_0, %arg1 : i32, i32, i32, i32
  }
}

</mosaic_0001>

<llo_original>
// kernel: residual_block_forward.4
$region0: #{residual_block_forward.4}
  #allocation0 [shape = 'u32[]', space=smem, size = 0x4, offset = 0x4, fixed_abs, tag = 'smem constant byte address 0x4 - core index']
  #allocation1 [shape = 'u32[72,128]{1,0:T(1,128)}', space=vmem, size = 0x9000, scoped, tag = 'internal scratch']
  #allocation2 [shape = 'f32[1,128]{1,0:T(1,128)}', space=vmem, size = 0x200, scoped, tag = 'scratch operand']
  #allocation3 [shape = 'f32[1,128]{1,0:T(1,128)}', space=vmem, size = 0x200, scoped, tag = 'scratch operand']
  %s0 = inlined_call_operand.vmem [shape: f32[512,128], index: 0, kind: input, shape index: {}]
  %s1 = inlined_call_operand.vmem [shape: f32[1,128], index: 1, kind: input, shape index: {}]
  %s2 = inlined_call_operand.vmem [shape: f32[1,128], index: 2, kind: input, shape index: {}]
  %s3 = inlined_call_operand.vmem [shape: f32[1,128], index: 3, kind: output, shape index: {0}]
  %s4 = inlined_call_operand.vmem [shape: f32[1,128], index: 4, kind: output, shape index: {1}]
  %5 = xla_tuple %s3, %s4
  %s6 = sld [smem:[#allocation0]]
  $region73: #{residual_block_forward.4} parent=0
    _
  %s8 = ssub.s32 1, %s6
  %s9 = scalar_select 0, %s8, %s6
  loop: start=0, step=1, limit=6
  $region2: #{residual_block_forward.4} parent=0 // loop_pre_header
    _
  $region3: #{residual_block_forward.4} parent=0 // loop_header
    %s11 = sphi 0, %s15
    %p12 = scmp.ge.s32.totalorder %s11, 6
    %s18 = sphi 0, %s30
    %s19 = sphi 0, %s26
    %s20 = sphi 0, %s18
    %s21 = sphi 0, %s19
    %s22 = sphi 0, %s20
    %s23 = sphi 0, %s21
    %s33 = sphi 0, %s35
    %s36 = sphi 0, %s33
    %s37 = sphi 0, %s36
    %s53 = sphi 0, %s37
    %s57 = sphi 0, %s57
    %s59 = sphi 0, %s57
    %s60 = sphi 0, %s59
    %s74 = sphi 0, %s60
    %s78 = sphi 0, %s78
    %s80 = sphi 0, %s78
    %s81 = sphi 0, %s80
    %s95 = sphi 0, %s81
    %s99 = sphi 0, %s99
    %s101 = sphi 0, %s99
    %s102 = sphi 0, %s101
    %s116 = sphi 0, %s102
    %s120 = sphi 0, %s120
    %s122 = sphi 0, %s120
    %s123 = sphi 0, %s122
    %s137 = sphi 0, %s123
  $region4: #{residual_block_forward.4} parent=0 // loop_header_branch
    %14 = sbr.rel (%p12) target = $region8
  $region5: #{residual_block_forward.4} parent=0 // loop_body
    %s16 = ssub.s32 %s11, 1
    %s17 = ssub.s32 %s11, 2
    %s24 = sadd.s32 1, %s19
    %p25 = scmp.ge.s32.totalorder %s24, 2
    %s26 = scalar_select %p25, 0, %s24
    %s27 = sadd.s32 1, %s18
    %s28 = scalar_select %p25, %s27, %s18
    %p29 = scmp.ge.s32.totalorder %s28, 2
    %s30 = scalar_select %p29, 0, %s28
    %s31 = ssub.s32 %s19, %s26
    %p32 = scmp.eq.s32.totalorder %s31, 0
    %s34 = sadd.s32 %s33, 1
    %s35 = scalar_select %p32, %s33, %s34
    %p38 = pneg %p32
    %p39 = scmp.eq.s32.totalorder %s11, 3
    %p40 = por %p38, %p39
    %p41 = scmp.ne.s32.totalorder %s33, %s36
    %p42 = scmp.eq.s32.totalorder %s11, 0
    %p43 = por %p41, %p42
    %p44 = scmp.ne.s32.totalorder %s33, %s36
    %p45 = scmp.eq.s32.totalorder %s16, 3
    %p46 = por %p44, %p45
    %p47 = scmp.ne.s32.totalorder %s36, %s37
    %p48 = scmp.eq.s32.totalorder %s16, 0
    %p49 = por %p47, %p48
    %p50 = scmp.ne.s32.totalorder %s36, %s37
    %p51 = scmp.eq.s32.totalorder %s17, 3
    %p52 = por %p50, %p51
    %p54 = scmp.ne.s32.totalorder %s37, %s53
    %p55 = scmp.eq.s32.totalorder %s17, 0
    %p56 = por %p54, %p55
    %s58 = sadd.s32 %s57, 1
    %p61 = scmp.eq.s32.totalorder %s11, 3
    %p62 = scmp.ne.s32.totalorder %s57, %s59
    %p63 = scmp.eq.s32.totalorder %s11, 0
    %p64 = por %p62, %p63
    %p65 = scmp.ne.s32.totalorder %s57, %s59
    %p66 = scmp.eq.s32.totalorder %s16, 3
    %p67 = por %p65, %p66
    %p68 = scmp.ne.s32.totalorder %s59, %s60
    %p69 = scmp.eq.s32.totalorder %s16, 0
    %p70 = por %p68, %p69
    %p71 = scmp.ne.s32.totalorder %s59, %s60
    %p72 = scmp.eq.s32.totalorder %s17, 3
    %p73 = por %p71, %p72
    %p75 = scmp.ne.s32.totalorder %s60, %s74
    %p76 = scmp.eq.s32.totalorder %s17, 0
    %p77 = por %p75, %p76
    %s79 = sadd.s32 %s78, 1
    %p82 = scmp.eq.s32.totalorder %s11, 3
    %p83 = scmp.ne.s32.totalorder %s78, %s80
    %p84 = scmp.eq.s32.totalorder %s11, 0
    %p85 = por %p83, %p84
    %p86 = scmp.ne.s32.totalorder %s78, %s80
    %p87 = scmp.eq.s32.totalorder %s16, 3
    %p88 = por %p86, %p87
    %p89 = scmp.ne.s32.totalorder %s80, %s81
    %p90 = scmp.eq.s32.totalorder %s16, 0
    %p91 = por %p89, %p90
    %p92 = scmp.ne.s32.totalorder %s80, %s81
    %p93 = scmp.eq.s32.totalorder %s17, 3
    %p94 = por %p92, %p93
    %p96 = scmp.ne.s32.totalorder %s81, %s95
    %p97 = scmp.eq.s32.totalorder %s17, 0
    %p98 = por %p96, %p97
    %s100 = sadd.s32 %s99, 1
    %p103 = scmp.eq.s32.totalorder %s11, 3
    %p104 = scmp.ne.s32.totalorder %s99, %s101
    %p105 = scmp.eq.s32.totalorder %s11, 0
    %p106 = por %p104, %p105
    %p107 = scmp.ne.s32.totalorder %s99, %s101
    %p108 = scmp.eq.s32.totalorder %s16, 3
    %p109 = por %p107, %p108
    %p110 = scmp.ne.s32.totalorder %s101, %s102
    %p111 = scmp.eq.s32.totalorder %s16, 0
    %p112 = por %p110, %p111
    %p113 = scmp.ne.s32.totalorder %s101, %s102
    %p114 = scmp.eq.s32.totalorder %s17, 3
    %p115 = por %p113, %p114
    %p117 = scmp.ne.s32.totalorder %s102, %s116
    %p118 = scmp.eq.s32.totalorder %s17, 0
    %p119 = por %p117, %p118
    %s121 = sadd.s32 %s120, 1
    %p124 = scmp.eq.s32.totalorder %s11, 3
    %p125 = scmp.ne.s32.totalorder %s120, %s122
    %p126 = scmp.eq.s32.totalorder %s11, 0
    %p127 = por %p125, %p126
    %p128 = scmp.ne.s32.totalorder %s120, %s122
    %p129 = scmp.eq.s32.totalorder %s16, 3
    %p130 = por %p128, %p129
    %p131 = scmp.ne.s32.totalorder %s122, %s123
    %p132 = scmp.eq.s32.totalorder %s16, 0
    %p133 = por %p131, %p132
    %p134 = scmp.ne.s32.totalorder %s122, %s123
    %p135 = scmp.eq.s32.totalorder %s17, 3
    %p136 = por %p134, %p135
    %p138 = scmp.ne.s32.totalorder %s123, %s137
    %p139 = scmp.eq.s32.totalorder %s17, 0
    %p140 = por %p138, %p139
    %p141 = scmp.le.s32.totalorder 1, %s11
    %p142 = scmp.lt.s32.totalorder %s11, 5
    %p143 = pnand %p141, %p142
    %p144 = pneg %p143
    // Predicated region
    $region9: #{residual_block_forward.4} parent=5 // pred_check
      _
    $region10: #{residual_block_forward.4} parent=5 // pred_check_branch
      %146 = sbr.rel (%p143) target = $region12
    $region11: #{residual_block_forward.4} parent=5 // pred_region
      %s147 = ssub.s32 %s11, 1
      // Predicated region
      $region13: #{residual_block_forward.4} parent=11 // pred_check
        %p148 = pneg %p70
      $region14: #{residual_block_forward.4} parent=11 // pred_check_branch
        %150 = sbr.rel (%p148) target = $region16
      $region15: #{residual_block_forward.4} parent=11 // pred_region
        _
      $region16: #{residual_block_forward.4} parent=11 // pred_fallthru
        _
      // Predicated region
      $region17: #{residual_block_forward.4} parent=11 // pred_check
        %p151 = pneg %p91
      $region18: #{residual_block_forward.4} parent=11 // pred_check_branch
        %153 = sbr.rel (%p151) target = $region20
      $region19: #{residual_block_forward.4} parent=11 // pred_region
        _
      $region20: #{residual_block_forward.4} parent=11 // pred_fallthru
        _
    $region12: #{residual_block_forward.4} parent=5 // pred_fallthru
      _
    %p154 = scmp.lt.s32.totalorder %s11, 4
    // Predicated region
    $region21: #{residual_block_forward.4} parent=5 // pred_check
      %p155 = pneg %p154
    $region22: #{residual_block_forward.4} parent=5 // pred_check_branch
      %157 = sbr.rel (%p155) target = $region24
    $region23: #{residual_block_forward.4} parent=5 // pred_region
      // Predicated region
      $region25: #{residual_block_forward.4} parent=23 // pred_check
        %p158 = pneg %p43
      $region26: #{residual_block_forward.4} parent=23 // pred_check_branch
        %160 = sbr.rel (%p158) target = $region28
      $region27: #{residual_block_forward.4} parent=23 // pred_region
        %s161 = smul.u32 32, %s19
        %p162 = scmp.lt.s32.totalorder %s161, 63
        %s163 = scalar_select %p162, %s161, 63
        %s164 = smul.addr %s163, 8
        %s165 = scalar_lea.vmem %s0, %s164
        %s166 = smul.u32 32, %s19
      $region28: #{residual_block_forward.4} parent=23 // pred_fallthru
        _
    $region24: #{residual_block_forward.4} parent=5 // pred_fallthru
      _
    %p167 = scmp.le.s32.totalorder 1, %s11
    %p168 = scmp.lt.s32.totalorder %s11, 5
    %p169 = pnand %p167, %p168
    %p170 = pneg %p169
    // Predicated region
    $region29: #{residual_block_forward.4} parent=5 // pred_check
      _
    $region30: #{residual_block_forward.4} parent=5 // pred_check_branch
      %172 = sbr.rel (%p169) target = $region32
    $region31: #{residual_block_forward.4} parent=5 // pred_region
      %s173 = ssub.s32 %s11, 1
      %s174 = smul.u32 32, %s21
      %p175 = scmp.lt.s32.totalorder %s174, 63
      %s176 = scalar_select %p175, %s174, 63
      %s177 = smul.addr %s176, 8
      %s178 = scalar_lea.vmem %s0, %s177
      %p179 = pneg %p49
      %p180 = pneg %p46
      %p181 = pneg %p70
      %p182 = pneg %p67
      %p183 = pneg %p91
      %p184 = pneg %p88
      %p185 = pneg %p112
      %p186 = pneg %p109
      %p187 = pneg %p133
      %p188 = pneg %p130
      %s189 = smul.u32 32, %s21
      %p190 = scmp.lt.s32.totalorder %s189, 63
      %s191 = scalar_select %p190, %s189, 63
      %s192 = smul.addr %s191, 8
      %s193 = scalar_lea.vmem %s0, %s192
      %s194 = smul.u32 32, %s21
      %p195 = scmp.eq.s32.totalorder %s21, 0
      // Predicated region
      $region33: #{residual_block_forward.4} parent=31 // pred_check
        %p196 = pneg %p195
      $region34: #{residual_block_forward.4} parent=31 // pred_check_branch
        %198 = sbr.rel (%p196) target = $region36
      $region35: #{residual_block_forward.4} parent=31 // pred_region
        %199 = vst [vmem:[#allocation2] sm:$0x1] 0.0
      $region36: #{residual_block_forward.4} parent=31 // pred_fallthru
        _
      %v200 = vld [vmem:[%s193] sm:$0xff]
      %v201 = vld [vmem:[%s193 + $0x8] sm:$0xff]
      %v202 = vld [vmem:[%s193 + $0x10] sm:$0xff]
      %v203 = vld [vmem:[%s193 + $0x18] sm:$0xff]
      %v204 = vld [vmem:[%s193 + $0x20] sm:$0xff]
      %v205 = vld [vmem:[%s193 + $0x28] sm:$0xff]
      %v206 = vld [vmem:[%s193 + $0x30] sm:$0xff]
      %v207 = vld [vmem:[%s193 + $0x38] sm:$0xff]
      %v208 = vld [vmem:[%s193 + $0x40] sm:$0xff]
      %v209 = vld [vmem:[%s193 + $0x48] sm:$0xff]
      %v210 = vld [vmem:[%s193 + $0x50] sm:$0xff]
      %v211 = vld [vmem:[%s193 + $0x58] sm:$0xff]
      %v212 = vld [vmem:[%s193 + $0x60] sm:$0xff]
      %v213 = vld [vmem:[%s193 + $0x68] sm:$0xff]
      %v214 = vld [vmem:[%s193 + $0x70] sm:$0xff]
      %v215 = vld [vmem:[%s193 + $0x78] sm:$0xff]
      %v216 = vld [vmem:[%s193 + $0x80] sm:$0xff]
      %v217 = vld [vmem:[%s193 + $0x88] sm:$0xff]
      %v218 = vld [vmem:[%s193 + $0x90] sm:$0xff]
      %v219 = vld [vmem:[%s193 + $0x98] sm:$0xff]
      %v220 = vld [vmem:[%s193 + $0xa0] sm:$0xff]
      %v221 = vld [vmem:[%s193 + $0xa8] sm:$0xff]
      %v222 = vld [vmem:[%s193 + $0xb0] sm:$0xff]
      %v223 = vld [vmem:[%s193 + $0xb8] sm:$0xff]
      %v224 = vld [vmem:[%s193 + $0xc0] sm:$0xff]
      %v225 = vld [vmem:[%s193 + $0xc8] sm:$0xff]
      %v226 = vld [vmem:[%s193 + $0xd0] sm:$0xff]
      %v227 = vld [vmem:[%s193 + $0xd8] sm:$0xff]
      %v228 = vld [vmem:[%s193 + $0xe0] sm:$0xff]
      %v229 = vld [vmem:[%s193 + $0xe8] sm:$0xff]
      %v230 = vld [vmem:[%s193 + $0xf0] sm:$0xff]
      %v231 = vld [vmem:[%s193 + $0xf8] sm:$0xff]
      %p232 = scmp.eq.s32.totalorder %s20, 0
      // Predicated region
      $region37: #{residual_block_forward.4} parent=31 // pred_check
        %p233 = pneg %p232
      $region38: #{residual_block_forward.4} parent=31 // pred_check_branch
        %235 = sbr.rel (%p233) target = $region40
      $region39: #{residual_block_forward.4} parent=31 // pred_region
        %v236 = vld [vmem:[#allocation2] sm:$0x1]
        %v237 = vadd.f32 %v200, %v201
        %v238 = vadd.f32 %v237, %v202
        %v239 = vadd.f32 %v238, %v203
        %v240 = vadd.f32 %v239, %v204
        %v241 = vadd.f32 %v240, %v205
        %v242 = vadd.f32 %v241, %v206
        %v243 = vadd.f32 %v242, %v207
        %v244 = vadd.f32 %v243, %v208
        %v245 = vadd.f32 %v244, %v209
        %v246 = vadd.f32 %v245, %v210
        %v247 = vadd.f32 %v246, %v211
        %v248 = vadd.f32 %v247, %v212
        %v249 = vadd.f32 %v248, %v213
        %v250 = vadd.f32 %v249, %v214
        %v251 = vadd.f32 %v250, %v215
        %v252 = vadd.f32 %v251, %v216
        %v253 = vadd.f32 %v252, %v217
        %v254 = vadd.f32 %v253, %v218
        %v255 = vadd.f32 %v254, %v219
        %v256 = vadd.f32 %v255, %v220
        %v257 = vadd.f32 %v256, %v221
        %v258 = vadd.f32 %v257, %v222
        %v259 = vadd.f32 %v258, %v223
        %v260 = vadd.f32 %v259, %v224
        %v261 = vadd.f32 %v260, %v225
        %v262 = vadd.f32 %v261, %v226
        %v263 = vadd.f32 %v262, %v227
        %v264 = vadd.f32 %v263, %v228
        %v265 = vadd.f32 %v264, %v229
        %v266 = vadd.f32 %v265, %v230
        %v267 = vadd.f32 %v266, %v231
        %v268 = vrot.slane %v267, 4
        %v269 = vadd.f32 %v267, %v268
        %v270 = vrot.slane %v269, 2
        %v271 = vadd.f32 %v269, %v270
        %v272 = vrot.slane %v271, 1
        %v273 = vadd.f32 %v271, %v272
        %v274 = vadd.f32 %v236, %v273
        %275 = vst [vmem:[#allocation2] sm:$0x1] %v274
      $region40: #{residual_block_forward.4} parent=31 // pred_fallthru
        _
      %p276 = scmp.eq.s32.totalorder %s20, 1
      // Predicated region
      $region41: #{residual_block_forward.4} parent=31 // pred_check
        %p277 = pneg %p276
      $region42: #{residual_block_forward.4} parent=31 // pred_check_branch
        %279 = sbr.rel (%p277) target = $region44
      $region43: #{residual_block_forward.4} parent=31 // pred_region
        %v280 = vld [vmem:[#allocation3] sm:$0x1]
        %v282 = vperm.slane %v280, 0
        %v284 = vsub.f32 %v200, %v282
        %v285 = vsub.f32 %v201, %v282
        %v286 = vsub.f32 %v202, %v282
        %v287 = vsub.f32 %v203, %v282
        %v288 = vsub.f32 %v204, %v282
        %v289 = vsub.f32 %v205, %v282
        %v290 = vsub.f32 %v206, %v282
        %v291 = vsub.f32 %v207, %v282
        %v292 = vsub.f32 %v208, %v282
        %v293 = vsub.f32 %v209, %v282
        %v294 = vsub.f32 %v210, %v282
        %v295 = vsub.f32 %v211, %v282
        %v296 = vsub.f32 %v212, %v282
        %v297 = vsub.f32 %v213, %v282
        %v298 = vsub.f32 %v214, %v282
        %v299 = vsub.f32 %v215, %v282
        %v300 = vsub.f32 %v216, %v282
        %v301 = vsub.f32 %v217, %v282
        %v302 = vsub.f32 %v218, %v282
        %v303 = vsub.f32 %v219, %v282
        %v304 = vsub.f32 %v220, %v282
        %v305 = vsub.f32 %v221, %v282
        %v306 = vsub.f32 %v222, %v282
        %v307 = vsub.f32 %v223, %v282
        %v308 = vsub.f32 %v224, %v282
        %v309 = vsub.f32 %v225, %v282
        %v310 = vsub.f32 %v226, %v282
        %v311 = vsub.f32 %v227, %v282
        %v312 = vsub.f32 %v228, %v282
        %v313 = vsub.f32 %v229, %v282
        %v314 = vsub.f32 %v230, %v282
        %v315 = vsub.f32 %v231, %v282
        %v316 = vld [vmem:[#allocation2] sm:$0x1]
        %v317 = vmul.f32 %v284, %v284
        %v318 = vmul.f32 %v285, %v285
        %v319 = vmul.f32 %v286, %v286
        %v320 = vmul.f32 %v287, %v287
        %v321 = vmul.f32 %v288, %v288
        %v322 = vmul.f32 %v289, %v289
        %v323 = vmul.f32 %v290, %v290
        %v324 = vmul.f32 %v291, %v291
        %v325 = vmul.f32 %v292, %v292
        %v326 = vmul.f32 %v293, %v293
        %v327 = vmul.f32 %v294, %v294
        %v328 = vmul.f32 %v295, %v295
        %v329 = vmul.f32 %v296, %v296
        %v330 = vmul.f32 %v297, %v297
        %v331 = vmul.f32 %v298, %v298
        %v332 = vmul.f32 %v299, %v299
        %v333 = vmul.f32 %v300, %v300
        %v334 = vmul.f32 %v301, %v301
        %v335 = vmul.f32 %v302, %v302
        %v336 = vmul.f32 %v303, %v303
        %v337 = vmul.f32 %v304, %v304
        %v338 = vmul.f32 %v305, %v305
        %v339 = vmul.f32 %v306, %v306
        %v340 = vmul.f32 %v307, %v307
        %v341 = vmul.f32 %v308, %v308
        %v342 = vmul.f32 %v309, %v309
        %v343 = vmul.f32 %v310, %v310
        %v344 = vmul.f32 %v311, %v311
        %v345 = vmul.f32 %v312, %v312
        %v346 = vmul.f32 %v313, %v313
        %v347 = vmul.f32 %v314, %v314
        %v348 = vmul.f32 %v315, %v315
        %v349 = vadd.f32 %v317, %v318
        %v350 = vadd.f32 %v349, %v319
        %v351 = vadd.f32 %v350, %v320
        %v352 = vadd.f32 %v351, %v321
        %v353 = vadd.f32 %v352, %v322
        %v354 = vadd.f32 %v353, %v323
        %v355 = vadd.f32 %v354, %v324
        %v356 = vadd.f32 %v355, %v325
        %v357 = vadd.f32 %v356, %v326
        %v358 = vadd.f32 %v357, %v327
        %v359 = vadd.f32 %v358, %v328
        %v360 = vadd.f32 %v359, %v329
        %v361 = vadd.f32 %v360, %v330
        %v362 = vadd.f32 %v361, %v331
        %v363 = vadd.f32 %v362, %v332
        %v364 = vadd.f32 %v363, %v333
        %v365 = vadd.f32 %v364, %v334
        %v366 = vadd.f32 %v365, %v335
        %v367 = vadd.f32 %v366, %v336
        %v368 = vadd.f32 %v367, %v337
        %v369 = vadd.f32 %v368, %v338
        %v370 = vadd.f32 %v369, %v339
        %v371 = vadd.f32 %v370, %v340
        %v372 = vadd.f32 %v371, %v341
        %v373 = vadd.f32 %v372, %v342
        %v374 = vadd.f32 %v373, %v343
        %v375 = vadd.f32 %v374, %v344
        %v376 = vadd.f32 %v375, %v345
        %v377 = vadd.f32 %v376, %v346
        %v378 = vadd.f32 %v377, %v347
        %v379 = vadd.f32 %v378, %v348
        %v380 = vrot.slane %v379, 4
        %v381 = vadd.f32 %v379, %v380
        %v382 = vrot.slane %v381, 2
        %v383 = vadd.f32 %v381, %v382
        %v384 = vrot.slane %v383, 1
        %v385 = vadd.f32 %v383, %v384
        %v386 = vadd.f32 %v316, %v385
        %387 = vst [vmem:[#allocation2] sm:$0x1] %v386
      $region44: #{residual_block_forward.4} parent=31 // pred_fallthru
        _
      %p388 = scmp.eq.s32.totalorder %s21, 1
      %p389 = pnand %p232, %p388
      %p390 = pneg %p389
      // Predicated region
      $region45: #{residual_block_forward.4} parent=31 // pred_check
        _
      $region46: #{residual_block_forward.4} parent=31 // pred_check_branch
        %392 = sbr.rel (%p389) target = $region48
      $region47: #{residual_block_forward.4} parent=31 // pred_region
        %v393 = vld [vmem:[#allocation2] sm:$0x1]
        %v394 = vmul.f32 %v393, 0.001953125
        %395 = vst [vmem:[#allocation3] sm:$0x1] %v394
      $region48: #{residual_block_forward.4} parent=31 // pred_fallthru
        _
      %p396 = pnand %p276, %p388
      %p397 = pneg %p396
      // Predicated region
      $region49: #{residual_block_forward.4} parent=31 // pred_check
        _
      $region50: #{residual_block_forward.4} parent=31 // pred_check_branch
        %399 = sbr.rel (%p396) target = $region52
      $region51: #{residual_block_forward.4} parent=31 // pred_region
        %v400 = vld [vmem:[#allocation2] sm:$0x1]
        %v401 = vmul.f32 %v400, 0.001953125
        %v402 = vld [vmem:[%s1] sm:$0x1]
        %v403 = vadd.f32 %v401, 0.001
        %v404 = vrsqrt.pop %v403
        %v405 = vmul.f32 %v404, %v403
        %v406 = vmul.f32 %v405, %v404
        %v407 = vmul.f32 0.5, %v406
        %v408 = vsub.f32 1.5, %v407
        %v409 = vmul.f32 %v404, %v408
        %vm410 = vweird.f32 %v403
        %vm411 = vweird.f32 %v404
        %vm412 = vmor %vm410, %vm411
        %v413 = vsel %vm412, %v404, %v409
        %v414 = vmul.f32 %v402, %v413
        %415 = vst [vmem:[%s3] sm:$0x1] %v414
        %v416 = vld [vmem:[%s2] sm:$0x1]
        %v417 = vld [vmem:[#allocation3] sm:$0x1]
        %v418 = vmul.f32 %v417, %v414
        %v419 = vsub.f32 %v416, %v418
        %420 = vst [vmem:[%s4] sm:$0x1] %v419
      $region52: #{residual_block_forward.4} parent=31 // pred_fallthru
        _
      // Predicated region
      $region53: #{residual_block_forward.4} parent=31 // pred_check
        %p421 = pneg %p109
      $region54: #{residual_block_forward.4} parent=31 // pred_check_branch
        %423 = sbr.rel (%p421) target = $region56
      $region55: #{residual_block_forward.4} parent=31 // pred_region
        _
      $region56: #{residual_block_forward.4} parent=31 // pred_fallthru
        _
      // Predicated region
      $region57: #{residual_block_forward.4} parent=31 // pred_check
        %p424 = pneg %p130
      $region58: #{residual_block_forward.4} parent=31 // pred_check_branch
        %426 = sbr.rel (%p424) target = $region60
      $region59: #{residual_block_forward.4} parent=31 // pred_region
        _
      $region60: #{residual_block_forward.4} parent=31 // pred_fallthru
        _
      // Predicated region
      $region61: #{residual_block_forward.4} parent=31 // pred_check
        %p427 = pneg %p109
      $region62: #{residual_block_forward.4} parent=31 // pred_check_branch
        %429 = sbr.rel (%p427) target = $region64
      $region63: #{residual_block_forward.4} parent=31 // pred_region
        _
      $region64: #{residual_block_forward.4} parent=31 // pred_fallthru
        _
      // Predicated region
      $region65: #{residual_block_forward.4} parent=31 // pred_check
        %p430 = pneg %p130
      $region66: #{residual_block_forward.4} parent=31 // pred_check_branch
        %432 = sbr.rel (%p430) target = $region68
      $region67: #{residual_block_forward.4} parent=31 // pred_region
        _
      $region68: #{residual_block_forward.4} parent=31 // pred_fallthru
        _
    $region32: #{residual_block_forward.4} parent=5 // pred_fallthru
      _
    %p433 = scmp.le.s32.totalorder 2, %s11
    // Predicated region
    $region69: #{residual_block_forward.4} parent=5 // pred_check
      %p434 = pneg %p433
    $region70: #{residual_block_forward.4} parent=5 // pred_check_branch
      %436 = sbr.rel (%p434) target = $region72
    $region71: #{residual_block_forward.4} parent=5 // pred_region
      %s437 = ssub.s32 %s11, 2
    $region72: #{residual_block_forward.4} parent=5 // pred_fallthru
      _
  $region6: #{residual_block_forward.4} parent=0 // loop_footer
    %s15 = sadd.s32 1, %s11
  $region7: #{residual_block_forward.4} parent=0 // loop_footer_branch
    %10 = sbr.rel target = $region3
  $region8: #{residual_block_forward.4} parent=0 // loop_exit
    _

// kernel: residual_block_forward.6
$region0: #{residual_block_forward.6}
  #allocation0 [shape = 'u32[]', space=smem, size = 0x4, offset = 0x4, fixed_abs, tag = 'smem constant byte address 0x4 - core index']
  #allocation1 [shape = 'u32[72,128]{1,0:T(1,128)}', space=vmem, size = 0x9000, scoped, tag = 'internal scratch']
  #allocation2 [shape = 'f32[1,128]{1,0:T(1,128)}', space=vmem, size = 0x200, scoped, tag = 'scratch operand']
  #allocation3 [shape = 'f32[1,128]{1,0:T(1,128)}', space=vmem, size = 0x200, scoped, tag = 'scratch operand']
  %s0 = inlined_call_operand.vmem [shape: f32[128,128], index: 0, kind: input, shape index: {}]
  %s1 = inlined_call_operand.vmem [shape: f32[1,128], index: 1, kind: input, shape index: {}]
  %s2 = inlined_call_operand.vmem [shape: f32[1,128], index: 2, kind: input, shape index: {}]
  %s3 = inlined_call_operand.vmem [shape: f32[1,128], index: 3, kind: output, shape index: {0}]
  %s4 = inlined_call_operand.vmem [shape: f32[1,128], index: 4, kind: output, shape index: {1}]
  %5 = xla_tuple %s3, %s4
  %s6 = sld [smem:[#allocation0]]
  $region73: #{residual_block_forward.6} parent=0
    _
  %s8 = ssub.s32 1, %s6
  %s9 = scalar_select 0, %s8, %s6
  loop: start=0, step=1, limit=4
  $region2: #{residual_block_forward.6} parent=0 // loop_pre_header
    _
  $region3: #{residual_block_forward.6} parent=0 // loop_header
    %s11 = sphi 0, %s15
    %p12 = scmp.ge.s32.totalorder %s11, 4
    %s18 = sphi 0, %s30
    %s19 = sphi 0, %s26
    %s20 = sphi 0, %s18
    %s21 = sphi 0, %s19
    %s22 = sphi 0, %s20
    %s23 = sphi 0, %s21
    %s33 = sphi 0, %s35
    %s36 = sphi 0, %s33
    %s37 = sphi 0, %s36
    %s53 = sphi 0, %s37
    %s57 = sphi 0, %s57
    %s59 = sphi 0, %s57
    %s60 = sphi 0, %s59
    %s74 = sphi 0, %s60
    %s78 = sphi 0, %s78
    %s80 = sphi 0, %s78
    %s81 = sphi 0, %s80
    %s95 = sphi 0, %s81
    %s99 = sphi 0, %s99
    %s101 = sphi 0, %s99
    %s102 = sphi 0, %s101
    %s116 = sphi 0, %s102
    %s120 = sphi 0, %s120
    %s122 = sphi 0, %s120
    %s123 = sphi 0, %s122
    %s137 = sphi 0, %s123
  $region4: #{residual_block_forward.6} parent=0 // loop_header_branch
    %14 = sbr.rel (%p12) target = $region8
  $region5: #{residual_block_forward.6} parent=0 // loop_body
    %s16 = ssub.s32 %s11, 1
    %s17 = ssub.s32 %s11, 2
    %s24 = sadd.s32 1, %s19
    %p25 = scmp.ge.s32.totalorder %s24, 1
    %s26 = scalar_select %p25, 0, %s24
    %s27 = sadd.s32 1, %s18
    %s28 = scalar_select %p25, %s27, %s18
    %p29 = scmp.ge.s32.totalorder %s28, 2
    %s30 = scalar_select %p29, 0, %s28
    %s31 = ssub.s32 %s19, %s26
    %p32 = scmp.eq.s32.totalorder %s31, 0
    %s34 = sadd.s32 %s33, 1
    %s35 = scalar_select %p32, %s33, %s34
    %p38 = pneg %p32
    %p39 = scmp.eq.s32.totalorder %s11, 1
    %p40 = por %p38, %p39
    %p41 = scmp.ne.s32.totalorder %s33, %s36
    %p42 = scmp.eq.s32.totalorder %s11, 0
    %p43 = por %p41, %p42
    %p44 = scmp.ne.s32.totalorder %s33, %s36
    %p45 = scmp.eq.s32.totalorder %s16, 1
    %p46 = por %p44, %p45
    %p47 = scmp.ne.s32.totalorder %s36, %s37
    %p48 = scmp.eq.s32.totalorder %s16, 0
    %p49 = por %p47, %p48
    %p50 = scmp.ne.s32.totalorder %s36, %s37
    %p51 = scmp.eq.s32.totalorder %s17, 1
    %p52 = por %p50, %p51
    %p54 = scmp.ne.s32.totalorder %s37, %s53
    %p55 = scmp.eq.s32.totalorder %s17, 0
    %p56 = por %p54, %p55
    %s58 = sadd.s32 %s57, 1
    %p61 = scmp.eq.s32.totalorder %s11, 1
    %p62 = scmp.ne.s32.totalorder %s57, %s59
    %p63 = scmp.eq.s32.totalorder %s11, 0
    %p64 = por %p62, %p63
    %p65 = scmp.ne.s32.totalorder %s57, %s59
    %p66 = scmp.eq.s32.totalorder %s16, 1
    %p67 = por %p65, %p66
    %p68 = scmp.ne.s32.totalorder %s59, %s60
    %p69 = scmp.eq.s32.totalorder %s16, 0
    %p70 = por %p68, %p69
    %p71 = scmp.ne.s32.totalorder %s59, %s60
    %p72 = scmp.eq.s32.totalorder %s17, 1
    %p73 = por %p71, %p72
    %p75 = scmp.ne.s32.totalorder %s60, %s74
    %p76 = scmp.eq.s32.totalorder %s17, 0
    %p77 = por %p75, %p76
    %s79 = sadd.s32 %s78, 1
    %p82 = scmp.eq.s32.totalorder %s11, 1
    %p83 = scmp.ne.s32.totalorder %s78, %s80
    %p84 = scmp.eq.s32.totalorder %s11, 0
    %p85 = por %p83, %p84
    %p86 = scmp.ne.s32.totalorder %s78, %s80
    %p87 = scmp.eq.s32.totalorder %s16, 1
    %p88 = por %p86, %p87
    %p89 = scmp.ne.s32.totalorder %s80, %s81
    %p90 = scmp.eq.s32.totalorder %s16, 0
    %p91 = por %p89, %p90
    %p92 = scmp.ne.s32.totalorder %s80, %s81
    %p93 = scmp.eq.s32.totalorder %s17, 1
    %p94 = por %p92, %p93
    %p96 = scmp.ne.s32.totalorder %s81, %s95
    %p97 = scmp.eq.s32.totalorder %s17, 0
    %p98 = por %p96, %p97
    %s100 = sadd.s32 %s99, 1
    %p103 = scmp.eq.s32.totalorder %s11, 1
    %p104 = scmp.ne.s32.totalorder %s99, %s101
    %p105 = scmp.eq.s32.totalorder %s11, 0
    %p106 = por %p104, %p105
    %p107 = scmp.ne.s32.totalorder %s99, %s101
    %p108 = scmp.eq.s32.totalorder %s16, 1
    %p109 = por %p107, %p108
    %p110 = scmp.ne.s32.totalorder %s101, %s102
    %p111 = scmp.eq.s32.totalorder %s16, 0
    %p112 = por %p110, %p111
    %p113 = scmp.ne.s32.totalorder %s101, %s102
    %p114 = scmp.eq.s32.totalorder %s17, 1
    %p115 = por %p113, %p114
    %p117 = scmp.ne.s32.totalorder %s102, %s116
    %p118 = scmp.eq.s32.totalorder %s17, 0
    %p119 = por %p117, %p118
    %s121 = sadd.s32 %s120, 1
    %p124 = scmp.eq.s32.totalorder %s11, 1
    %p125 = scmp.ne.s32.totalorder %s120, %s122
    %p126 = scmp.eq.s32.totalorder %s11, 0
    %p127 = por %p125, %p126
    %p128 = scmp.ne.s32.totalorder %s120, %s122
    %p129 = scmp.eq.s32.totalorder %s16, 1
    %p130 = por %p128, %p129
    %p131 = scmp.ne.s32.totalorder %s122, %s123
    %p132 = scmp.eq.s32.totalorder %s16, 0
    %p133 = por %p131, %p132
    %p134 = scmp.ne.s32.totalorder %s122, %s123
    %p135 = scmp.eq.s32.totalorder %s17, 1
    %p136 = por %p134, %p135
    %p138 = scmp.ne.s32.totalorder %s123, %s137
    %p139 = scmp.eq.s32.totalorder %s17, 0
    %p140 = por %p138, %p139
    %p141 = scmp.le.s32.totalorder 1, %s11
    %p142 = scmp.lt.s32.totalorder %s11, 3
    %p143 = pnand %p141, %p142
    %p144 = pneg %p143
    // Predicated region
    $region9: #{residual_block_forward.6} parent=5 // pred_check
      _
    $region10: #{residual_block_forward.6} parent=5 // pred_check_branch
      %146 = sbr.rel (%p143) target = $region12
    $region11: #{residual_block_forward.6} parent=5 // pred_region
      %s147 = ssub.s32 %s11, 1
      // Predicated region
      $region13: #{residual_block_forward.6} parent=11 // pred_check
        %p148 = pneg %p49
      $region14: #{residual_block_forward.6} parent=11 // pred_check_branch
        %150 = sbr.rel (%p148) target = $region16
      $region15: #{residual_block_forward.6} parent=11 // pred_region
        %s151 = smul.u32 16, %s21
        %p152 = scmp.lt.s32.totalorder %s151, 15
        %s153 = scalar_select %p152, %s151, 15
        %s154 = smul.addr %s153, 8
        %s155 = scalar_lea.vmem %s0, %s154
        %s156 = smul.u32 16, %s21
      $region16: #{residual_block_forward.6} parent=11 // pred_fallthru
        _
      // Predicated region
      $region17: #{residual_block_forward.6} parent=11 // pred_check
        %p157 = pneg %p70
      $region18: #{residual_block_forward.6} parent=11 // pred_check_branch
        %159 = sbr.rel (%p157) target = $region20
      $region19: #{residual_block_forward.6} parent=11 // pred_region
        _
      $region20: #{residual_block_forward.6} parent=11 // pred_fallthru
        _
      // Predicated region
      $region21: #{residual_block_forward.6} parent=11 // pred_check
        %p160 = pneg %p91
      $region22: #{residual_block_forward.6} parent=11 // pred_check_branch
        %162 = sbr.rel (%p160) target = $region24
      $region23: #{residual_block_forward.6} parent=11 // pred_region
        _
      $region24: #{residual_block_forward.6} parent=11 // pred_fallthru
        _
    $region12: #{residual_block_forward.6} parent=5 // pred_fallthru
      _
    %p163 = scmp.lt.s32.totalorder %s11, 2
    // Predicated region
    $region25: #{residual_block_forward.6} parent=5 // pred_check
      %p164 = pneg %p163
    $region26: #{residual_block_forward.6} parent=5 // pred_check_branch
      %166 = sbr.rel (%p164) target = $region28
    $region27: #{residual_block_forward.6} parent=5 // pred_region
      _
    $region28: #{residual_block_forward.6} parent=5 // pred_fallthru
      _
    %p167 = scmp.le.s32.totalorder 1, %s11
    %p168 = scmp.lt.s32.totalorder %s11, 3
    %p169 = pnand %p167, %p168
    %p170 = pneg %p169
    // Predicated region
    $region29: #{residual_block_forward.6} parent=5 // pred_check
      _
    $region30: #{residual_block_forward.6} parent=5 // pred_check_branch
      %172 = sbr.rel (%p169) target = $region32
    $region31: #{residual_block_forward.6} parent=5 // pred_region
      %s173 = ssub.s32 %s11, 1
      %s174 = smul.u32 16, %s21
      %p175 = scmp.lt.s32.totalorder %s174, 15
      %s176 = scalar_select %p175, %s174, 15
      %s177 = smul.addr %s176, 8
      %s178 = scalar_lea.vmem %s0, %s177
      %p179 = pneg %p49
      %p180 = pneg %p46
      %p181 = pneg %p70
      %p182 = pneg %p67
      %p183 = pneg %p91
      %p184 = pneg %p88
      %p185 = pneg %p112
      %p186 = pneg %p109
      %p187 = pneg %p133
      %p188 = pneg %p130
      %s189 = smul.u32 16, %s21
      %p190 = scmp.lt.s32.totalorder %s189, 15
      %s191 = scalar_select %p190, %s189, 15
      %s192 = smul.addr %s191, 8
      %s193 = scalar_lea.vmem %s0, %s192
      %s194 = smul.u32 16, %s21
      %p195 = scmp.eq.s32.totalorder %s21, 0
      // Predicated region
      $region33: #{residual_block_forward.6} parent=31 // pred_check
        %p196 = pneg %p195
      $region34: #{residual_block_forward.6} parent=31 // pred_check_branch
        %198 = sbr.rel (%p196) target = $region36
      $region35: #{residual_block_forward.6} parent=31 // pred_region
        %199 = vst [vmem:[#allocation2] sm:$0x1] 0.0
      $region36: #{residual_block_forward.6} parent=31 // pred_fallthru
        _
      %v200 = vld [vmem:[%s193] sm:$0xff]
      %v201 = vld [vmem:[%s193 + $0x8] sm:$0xff]
      %v202 = vld [vmem:[%s193 + $0x10] sm:$0xff]
      %v203 = vld [vmem:[%s193 + $0x18] sm:$0xff]
      %v204 = vld [vmem:[%s193 + $0x20] sm:$0xff]
      %v205 = vld [vmem:[%s193 + $0x28] sm:$0xff]
      %v206 = vld [vmem:[%s193 + $0x30] sm:$0xff]
      %v207 = vld [vmem:[%s193 + $0x38] sm:$0xff]
      %v208 = vld [vmem:[%s193 + $0x40] sm:$0xff]
      %v209 = vld [vmem:[%s193 + $0x48] sm:$0xff]
      %v210 = vld [vmem:[%s193 + $0x50] sm:$0xff]
      %v211 = vld [vmem:[%s193 + $0x58] sm:$0xff]
      %v212 = vld [vmem:[%s193 + $0x60] sm:$0xff]
      %v213 = vld [vmem:[%s193 + $0x68] sm:$0xff]
      %v214 = vld [vmem:[%s193 + $0x70] sm:$0xff]
      %v215 = vld [vmem:[%s193 + $0x78] sm:$0xff]
      %p216 = scmp.eq.s32.totalorder %s20, 0
      // Predicated region
      $region37: #{residual_block_forward.6} parent=31 // pred_check
        %p217 = pneg %p216
      $region38: #{residual_block_forward.6} parent=31 // pred_check_branch
        %219 = sbr.rel (%p217) target = $region40
      $region39: #{residual_block_forward.6} parent=31 // pred_region
        %v220 = vld [vmem:[#allocation2] sm:$0x1]
        %v221 = vadd.f32 %v200, %v201
        %v222 = vadd.f32 %v221, %v202
        %v223 = vadd.f32 %v222, %v203
        %v224 = vadd.f32 %v223, %v204
        %v225 = vadd.f32 %v224, %v205
        %v226 = vadd.f32 %v225, %v206
        %v227 = vadd.f32 %v226, %v207
        %v228 = vadd.f32 %v227, %v208
        %v229 = vadd.f32 %v228, %v209
        %v230 = vadd.f32 %v229, %v210
        %v231 = vadd.f32 %v230, %v211
        %v232 = vadd.f32 %v231, %v212
        %v233 = vadd.f32 %v232, %v213
        %v234 = vadd.f32 %v233, %v214
        %v235 = vadd.f32 %v234, %v215
        %v236 = vrot.slane %v235, 4
        %v237 = vadd.f32 %v235, %v236
        %v238 = vrot.slane %v237, 2
        %v239 = vadd.f32 %v237, %v238
        %v240 = vrot.slane %v239, 1
        %v241 = vadd.f32 %v239, %v240
        %v242 = vadd.f32 %v220, %v241
        %243 = vst [vmem:[#allocation2] sm:$0x1] %v242
      $region40: #{residual_block_forward.6} parent=31 // pred_fallthru
        _
      %p244 = scmp.eq.s32.totalorder %s20, 1
      // Predicated region
      $region41: #{residual_block_forward.6} parent=31 // pred_check
        %p245 = pneg %p244
      $region42: #{residual_block_forward.6} parent=31 // pred_check_branch
        %247 = sbr.rel (%p245) target = $region44
      $region43: #{residual_block_forward.6} parent=31 // pred_region
        %v248 = vld [vmem:[#allocation3] sm:$0x1]
        %v250 = vperm.slane %v248, 0
        %v252 = vsub.f32 %v200, %v250
        %v253 = vsub.f32 %v201, %v250
        %v254 = vsub.f32 %v202, %v250
        %v255 = vsub.f32 %v203, %v250
        %v256 = vsub.f32 %v204, %v250
        %v257 = vsub.f32 %v205, %v250
        %v258 = vsub.f32 %v206, %v250
        %v259 = vsub.f32 %v207, %v250
        %v260 = vsub.f32 %v208, %v250
        %v261 = vsub.f32 %v209, %v250
        %v262 = vsub.f32 %v210, %v250
        %v263 = vsub.f32 %v211, %v250
        %v264 = vsub.f32 %v212, %v250
        %v265 = vsub.f32 %v213, %v250
        %v266 = vsub.f32 %v214, %v250
        %v267 = vsub.f32 %v215, %v250
        %v268 = vld [vmem:[#allocation2] sm:$0x1]
        %v269 = vmul.f32 %v252, %v252
        %v270 = vmul.f32 %v253, %v253
        %v271 = vmul.f32 %v254, %v254
        %v272 = vmul.f32 %v255, %v255
        %v273 = vmul.f32 %v256, %v256
        %v274 = vmul.f32 %v257, %v257
        %v275 = vmul.f32 %v258, %v258
        %v276 = vmul.f32 %v259, %v259
        %v277 = vmul.f32 %v260, %v260
        %v278 = vmul.f32 %v261, %v261
        %v279 = vmul.f32 %v262, %v262
        %v280 = vmul.f32 %v263, %v263
        %v281 = vmul.f32 %v264, %v264
        %v282 = vmul.f32 %v265, %v265
        %v283 = vmul.f32 %v266, %v266
        %v284 = vmul.f32 %v267, %v267
        %v285 = vadd.f32 %v269, %v270
        %v286 = vadd.f32 %v285, %v271
        %v287 = vadd.f32 %v286, %v272
        %v288 = vadd.f32 %v287, %v273
        %v289 = vadd.f32 %v288, %v274
        %v290 = vadd.f32 %v289, %v275
        %v291 = vadd.f32 %v290, %v276
        %v292 = vadd.f32 %v291, %v277
        %v293 = vadd.f32 %v292, %v278
        %v294 = vadd.f32 %v293, %v279
        %v295 = vadd.f32 %v294, %v280
        %v296 = vadd.f32 %v295, %v281
        %v297 = vadd.f32 %v296, %v282
        %v298 = vadd.f32 %v297, %v283
        %v299 = vadd.f32 %v298, %v284
        %v300 = vrot.slane %v299, 4
        %v301 = vadd.f32 %v299, %v300
        %v302 = vrot.slane %v301, 2
        %v303 = vadd.f32 %v301, %v302
        %v304 = vrot.slane %v303, 1
        %v305 = vadd.f32 %v303, %v304
        %v306 = vadd.f32 %v268, %v305
        %307 = vst [vmem:[#allocation2] sm:$0x1] %v306
      $region44: #{residual_block_forward.6} parent=31 // pred_fallthru
        _
      %p308 = pnand %p216, %p195
      %p309 = pneg %p308
      // Predicated region
      $region45: #{residual_block_forward.6} parent=31 // pred_check
        _
      $region46: #{residual_block_forward.6} parent=31 // pred_check_branch
        %311 = sbr.rel (%p308) target = $region48
      $region47: #{residual_block_forward.6} parent=31 // pred_region
        %v312 = vld [vmem:[#allocation2] sm:$0x1]
        %v313 = vmul.f32 %v312, 0.0078125
        %314 = vst [vmem:[#allocation3] sm:$0x1] %v313
      $region48: #{residual_block_forward.6} parent=31 // pred_fallthru
        _
      %p315 = pnand %p244, %p195
      %p316 = pneg %p315
      // Predicated region
      $region49: #{residual_block_forward.6} parent=31 // pred_check
        _
      $region50: #{residual_block_forward.6} parent=31 // pred_check_branch
        %318 = sbr.rel (%p315) target = $region52
      $region51: #{residual_block_forward.6} parent=31 // pred_region
        %v319 = vld [vmem:[#allocation2] sm:$0x1]
        %v320 = vmul.f32 %v319, 0.0078125
        %v321 = vld [vmem:[%s1] sm:$0x1]
        %v322 = vadd.f32 %v320, 0.001
        %v323 = vrsqrt.pop %v322
        %v324 = vmul.f32 %v323, %v322
        %v325 = vmul.f32 %v324, %v323
        %v326 = vmul.f32 0.5, %v325
        %v327 = vsub.f32 1.5, %v326
        %v328 = vmul.f32 %v323, %v327
        %vm329 = vweird.f32 %v322
        %vm330 = vweird.f32 %v323
        %vm331 = vmor %vm329, %vm330
        %v332 = vsel %vm331, %v323, %v328
        %v333 = vmul.f32 %v321, %v332
        %334 = vst [vmem:[%s3] sm:$0x1] %v333
        %v335 = vld [vmem:[%s2] sm:$0x1]
        %v336 = vld [vmem:[#allocation3] sm:$0x1]
        %v337 = vmul.f32 %v336, %v333
        %v338 = vsub.f32 %v335, %v337
        %339 = vst [vmem:[%s4] sm:$0x1] %v338
      $region52: #{residual_block_forward.6} parent=31 // pred_fallthru
        _
      // Predicated region
      $region53: #{residual_block_forward.6} parent=31 // pred_check
        %p340 = pneg %p109
      $region54: #{residual_block_forward.6} parent=31 // pred_check_branch
        %342 = sbr.rel (%p340) target = $region56
      $region55: #{residual_block_forward.6} parent=31 // pred_region
        _
      $region56: #{residual_block_forward.6} parent=31 // pred_fallthru
        _
      // Predicated region
      $region57: #{residual_block_forward.6} parent=31 // pred_check
        %p343 = pneg %p130
      $region58: #{residual_block_forward.6} parent=31 // pred_check_branch
        %345 = sbr.rel (%p343) target = $region60
      $region59: #{residual_block_forward.6} parent=31 // pred_region
        _
      $region60: #{residual_block_forward.6} parent=31 // pred_fallthru
        _
      // Predicated region
      $region61: #{residual_block_forward.6} parent=31 // pred_check
        %p346 = pneg %p109
      $region62: #{residual_block_forward.6} parent=31 // pred_check_branch
        %348 = sbr.rel (%p346) target = $region64
      $region63: #{residual_block_forward.6} parent=31 // pred_region
        _
      $region64: #{residual_block_forward.6} parent=31 // pred_fallthru
        _
      // Predicated region
      $region65: #{residual_block_forward.6} parent=31 // pred_check
        %p349 = pneg %p130
      $region66: #{residual_block_forward.6} parent=31 // pred_check_branch
        %351 = sbr.rel (%p349) target = $region68
      $region67: #{residual_block_forward.6} parent=31 // pred_region
        _
      $region68: #{residual_block_forward.6} parent=31 // pred_fallthru
        _
    $region32: #{residual_block_forward.6} parent=5 // pred_fallthru
      _
    %p352 = scmp.le.s32.totalorder 2, %s11
    // Predicated region
    $region69: #{residual_block_forward.6} parent=5 // pred_check
      %p353 = pneg %p352
    $region70: #{residual_block_forward.6} parent=5 // pred_check_branch
      %355 = sbr.rel (%p353) target = $region72
    $region71: #{residual_block_forward.6} parent=5 // pred_region
      %s356 = ssub.s32 %s11, 2
    $region72: #{residual_block_forward.6} parent=5 // pred_fallthru
      _
  $region6: #{residual_block_forward.6} parent=0 // loop_footer
    %s15 = sadd.s32 1, %s11
  $region7: #{residual_block_forward.6} parent=0 // loop_footer_branch
    %10 = sbr.rel target = $region3
  $region8: #{residual_block_forward.6} parent=0 // loop_exit
    _

// kernel: residual_block_forward.5
$region0: #{residual_block_forward.5}
  #allocation0 [shape = 'u32[]', space=smem, size = 0x4, offset = 0x4, fixed_abs, tag = 'smem constant byte address 0x4 - core index']
  #allocation1 [shape = 'u32[72,128]{1,0:T(1,128)}', space=vmem, size = 0x9000, scoped, tag = 'internal scratch']
  #allocation2 [shape = 'f32[4,9,9,128]{3,2,1,0:T(8,128)}', space=vmem, size = 0x48000, scoped, tag = 'scratch operand']
  #allocation3 [shape = 'f32[64,128]{1,0:T(8,128)}', space=vmem, size = 0x8000, scoped, tag = 'scratch operand']
  %s0 = inlined_call_operand.vmem [shape: f32[1,128], index: 0, kind: input, shape index: {}]
  %s1 = inlined_call_operand.vmem [shape: f32[1,128], index: 1, kind: input, shape index: {}]
  %s2 = inlined_call_operand.vmem [shape: f32[4,9,9,1], index: 2, kind: input, shape index: {}]
  %s3 = inlined_call_operand.vmem [shape: f32[8,9,9,128], index: 3, kind: input, shape index: {}]
  %s4 = inlined_call_operand.vmem [shape: bf16[9,128,128], index: 4, kind: input, shape index: {}]
  %s5 = inlined_call_operand.vmem [shape: bf16[128,128], index: 5, kind: input, shape index: {}]
  %s6 = inlined_call_operand.vmem [shape: f32[2,8,8,128], index: 6, kind: output, shape index: {0}]
  %s7 = inlined_call_operand.vmem [shape: f32[2,8,8,128], index: 7, kind: output, shape index: {1}]
  %8 = xla_tuple %s6, %s7
  %s9 = sld [smem:[#allocation0]]
  $region65: #{residual_block_forward.5} parent=0
    _
  %s11 = ssub.s32 1, %s9
  %s12 = scalar_select 0, %s11, %s9
  loop: start=0, step=1, limit=4
  $region2: #{residual_block_forward.5} parent=0 // loop_pre_header
    _
  $region3: #{residual_block_forward.5} parent=0 // loop_header
    %s14 = sphi 0, %s18
    %p15 = scmp.ge.s32.totalorder %s14, 4
    %s21 = sphi 0, %s33
    %s22 = sphi 0, %s29
    %s23 = sphi 0, %s21
    %s24 = sphi 0, %s22
    %s25 = sphi 0, %s23
    %s26 = sphi 0, %s24
    %s34 = sphi 0, %s34
    %s36 = sphi 0, %s34
    %s37 = sphi 0, %s36
    %s51 = sphi 0, %s37
    %s55 = sphi 0, %s55
    %s57 = sphi 0, %s55
    %s58 = sphi 0, %s57
    %s72 = sphi 0, %s58
    %s76 = sphi 0, %s76
    %s78 = sphi 0, %s76
    %s79 = sphi 0, %s78
    %s93 = sphi 0, %s79
    %s99 = sphi 0, %s101
    %s102 = sphi 0, %s99
    %s103 = sphi 0, %s102
    %s119 = sphi 0, %s103
    %s125 = sphi 0, %s127
    %s128 = sphi 0, %s125
    %s129 = sphi 0, %s128
    %s145 = sphi 0, %s129
    %s151 = sphi 0, %s153
    %s154 = sphi 0, %s151
    %s155 = sphi 0, %s154
    %s171 = sphi 0, %s155
    %s179 = sphi 0, %s181
    %s182 = sphi 0, %s179
    %s183 = sphi 0, %s182
    %s199 = sphi 0, %s183
    %s207 = sphi 0, %s209
    %s210 = sphi 0, %s207
    %s211 = sphi 0, %s210
    %s227 = sphi 0, %s211
  $region4: #{residual_block_forward.5} parent=0 // loop_header_branch
    %17 = sbr.rel (%p15) target = $region8
  $region5: #{residual_block_forward.5} parent=0 // loop_body
    %s19 = ssub.s32 %s14, 1
    %s20 = ssub.s32 %s14, 2
    %s27 = sadd.s32 1, %s22
    %p28 = scmp.ge.s32.totalorder %s27, 1
    %s29 = scalar_select %p28, 0, %s27
    %s30 = sadd.s32 1, %s21
    %s31 = scalar_select %p28, %s30, %s21
    %p32 = scmp.ge.s32.totalorder %s31, 2
    %s33 = scalar_select %p32, 0, %s31
    %s35 = sadd.s32 %s34, 1
    %p38 = scmp.eq.s32.totalorder %s14, 1
    %p39 = scmp.ne.s32.totalorder %s34, %s36
    %p40 = scmp.eq.s32.totalorder %s14, 0
    %p41 = por %p39, %p40
    %p42 = scmp.ne.s32.totalorder %s34, %s36
    %p43 = scmp.eq.s32.totalorder %s19, 1
    %p44 = por %p42, %p43
    %p45 = scmp.ne.s32.totalorder %s36, %s37
    %p46 = scmp.eq.s32.totalorder %s19, 0
    %p47 = por %p45, %p46
    %p48 = scmp.ne.s32.totalorder %s36, %s37
    %p49 = scmp.eq.s32.totalorder %s20, 1
    %p50 = por %p48, %p49
    %p52 = scmp.ne.s32.totalorder %s37, %s51
    %p53 = scmp.eq.s32.totalorder %s20, 0
    %p54 = por %p52, %p53
    %s56 = sadd.s32 %s55, 1
    %p59 = scmp.eq.s32.totalorder %s14, 1
    %p60 = scmp.ne.s32.totalorder %s55, %s57
    %p61 = scmp.eq.s32.totalorder %s14, 0
    %p62 = por %p60, %p61
    %p63 = scmp.ne.s32.totalorder %s55, %s57
    %p64 = scmp.eq.s32.totalorder %s19, 1
    %p65 = por %p63, %p64
    %p66 = scmp.ne.s32.totalorder %s57, %s58
    %p67 = scmp.eq.s32.totalorder %s19, 0
    %p68 = por %p66, %p67
    %p69 = scmp.ne.s32.totalorder %s57, %s58
    %p70 = scmp.eq.s32.totalorder %s20, 1
    %p71 = por %p69, %p70
    %p73 = scmp.ne.s32.totalorder %s58, %s72
    %p74 = scmp.eq.s32.totalorder %s20, 0
    %p75 = por %p73, %p74
    %s77 = sadd.s32 %s76, 1
    %p80 = scmp.eq.s32.totalorder %s14, 1
    %p81 = scmp.ne.s32.totalorder %s76, %s78
    %p82 = scmp.eq.s32.totalorder %s14, 0
    %p83 = por %p81, %p82
    %p84 = scmp.ne.s32.totalorder %s76, %s78
    %p85 = scmp.eq.s32.totalorder %s19, 1
    %p86 = por %p84, %p85
    %p87 = scmp.ne.s32.totalorder %s78, %s79
    %p88 = scmp.eq.s32.totalorder %s19, 0
    %p89 = por %p87, %p88
    %p90 = scmp.ne.s32.totalorder %s78, %s79
    %p91 = scmp.eq.s32.totalorder %s20, 1
    %p92 = por %p90, %p91
    %p94 = scmp.ne.s32.totalorder %s79, %s93
    %p95 = scmp.eq.s32.totalorder %s20, 0
    %p96 = por %p94, %p95
    %s97 = ssub.s32 %s21, %s33
    %p98 = scmp.eq.s32.totalorder %s97, 0
    %s100 = sadd.s32 %s99, 1
    %s101 = scalar_select %p98, %s99, %s100
    %p104 = pneg %p98
    %p105 = scmp.eq.s32.totalorder %s14, 1
    %p106 = por %p104, %p105
    %p107 = scmp.ne.s32.totalorder %s99, %s102
    %p108 = scmp.eq.s32.totalorder %s14, 0
    %p109 = por %p107, %p108
    %p110 = scmp.ne.s32.totalorder %s99, %s102
    %p111 = scmp.eq.s32.totalorder %s19, 1
    %p112 = por %p110, %p111
    %p113 = scmp.ne.s32.totalorder %s102, %s103
    %p114 = scmp.eq.s32.totalorder %s19, 0
    %p115 = por %p113, %p114
    %p116 = scmp.ne.s32.totalorder %s102, %s103
    %p117 = scmp.eq.s32.totalorder %s20, 1
    %p118 = por %p116, %p117
    %p120 = scmp.ne.s32.totalorder %s103, %s119
    %p121 = scmp.eq.s32.totalorder %s20, 0
    %p122 = por %p120, %p121
    %s123 = ssub.s32 %s22, %s29
    %p124 = scmp.eq.s32.totalorder %s123, 0
    %s126 = sadd.s32 %s125, 1
    %s127 = scalar_select %p124, %s125, %s126
    %p130 = pneg %p124
    %p131 = scmp.eq.s32.totalorder %s14, 1
    %p132 = por %p130, %p131
    %p133 = scmp.ne.s32.totalorder %s125, %s128
    %p134 = scmp.eq.s32.totalorder %s14, 0
    %p135 = por %p133, %p134
    %p136 = scmp.ne.s32.totalorder %s125, %s128
    %p137 = scmp.eq.s32.totalorder %s19, 1
    %p138 = por %p136, %p137
    %p139 = scmp.ne.s32.totalorder %s128, %s129
    %p140 = scmp.eq.s32.totalorder %s19, 0
    %p141 = por %p139, %p140
    %p142 = scmp.ne.s32.totalorder %s128, %s129
    %p143 = scmp.eq.s32.totalorder %s20, 1
    %p144 = por %p142, %p143
    %p146 = scmp.ne.s32.totalorder %s129, %s145
    %p147 = scmp.eq.s32.totalorder %s20, 0
    %p148 = por %p146, %p147
    %s149 = ssub.s32 %s22, %s29
    %p150 = scmp.eq.s32.totalorder %s149, 0
    %s152 = sadd.s32 %s151, 1
    %s153 = scalar_select %p150, %s151, %s152
    %p156 = pneg %p150
    %p157 = scmp.eq.s32.totalorder %s14, 1
    %p158 = por %p156, %p157
    %p159 = scmp.ne.s32.totalorder %s151, %s154
    %p160 = scmp.eq.s32.totalorder %s14, 0
    %p161 = por %p159, %p160
    %p162 = scmp.ne.s32.totalorder %s151, %s154
    %p163 = scmp.eq.s32.totalorder %s19, 1
    %p164 = por %p162, %p163
    %p165 = scmp.ne.s32.totalorder %s154, %s155
    %p166 = scmp.eq.s32.totalorder %s19, 0
    %p167 = por %p165, %p166
    %p168 = scmp.ne.s32.totalorder %s154, %s155
    %p169 = scmp.eq.s32.totalorder %s20, 1
    %p170 = por %p168, %p169
    %p172 = scmp.ne.s32.totalorder %s155, %s171
    %p173 = scmp.eq.s32.totalorder %s20, 0
    %p174 = por %p172, %p173
    %s175 = ssub.s32 %s21, %s33
    %s176 = ssub.s32 %s22, %s29
    %s177 = sor.u32 %s175, %s176
    %p178 = scmp.eq.s32.totalorder %s177, 0
    %s180 = sadd.s32 %s179, 1
    %s181 = scalar_select %p178, %s179, %s180
    %p184 = pneg %p178
    %p185 = scmp.eq.s32.totalorder %s14, 1
    %p186 = por %p184, %p185
    %p187 = scmp.ne.s32.totalorder %s179, %s182
    %p188 = scmp.eq.s32.totalorder %s14, 0
    %p189 = por %p187, %p188
    %p190 = scmp.ne.s32.totalorder %s179, %s182
    %p191 = scmp.eq.s32.totalorder %s19, 1
    %p192 = por %p190, %p191
    %p193 = scmp.ne.s32.totalorder %s182, %s183
    %p194 = scmp.eq.s32.totalorder %s19, 0
    %p195 = por %p193, %p194
    %p196 = scmp.ne.s32.totalorder %s182, %s183
    %p197 = scmp.eq.s32.totalorder %s20, 1
    %p198 = por %p196, %p197
    %p200 = scmp.ne.s32.totalorder %s183, %s199
    %p201 = scmp.eq.s32.totalorder %s20, 0
    %p202 = por %p200, %p201
    %s203 = ssub.s32 %s21, %s33
    %s204 = ssub.s32 %s22, %s29
    %s205 = sor.u32 %s203, %s204
    %p206 = scmp.eq.s32.totalorder %s205, 0
    %s208 = sadd.s32 %s207, 1
    %s209 = scalar_select %p206, %s207, %s208
    %p212 = pneg %p206
    %p213 = scmp.eq.s32.totalorder %s14, 1
    %p214 = por %p212, %p213
    %p215 = scmp.ne.s32.totalorder %s207, %s210
    %p216 = scmp.eq.s32.totalorder %s14, 0
    %p217 = por %p215, %p216
    %p218 = scmp.ne.s32.totalorder %s207, %s210
    %p219 = scmp.eq.s32.totalorder %s19, 1
    %p220 = por %p218, %p219
    %p221 = scmp.ne.s32.totalorder %s210, %s211
    %p222 = scmp.eq.s32.totalorder %s19, 0
    %p223 = por %p221, %p222
    %p224 = scmp.ne.s32.totalorder %s210, %s211
    %p225 = scmp.eq.s32.totalorder %s20, 1
    %p226 = por %p224, %p225
    %p228 = scmp.ne.s32.totalorder %s211, %s227
    %p229 = scmp.eq.s32.totalorder %s20, 0
    %p230 = por %p228, %p229
    %p231 = scmp.le.s32.totalorder 1, %s14
    %p232 = scmp.lt.s32.totalorder %s14, 3
    %p233 = pnand %p231, %p232
    %p234 = pneg %p233
    // Predicated region
    $region9: #{residual_block_forward.5} parent=5 // pred_check
      _
    $region10: #{residual_block_forward.5} parent=5 // pred_check_branch
      %236 = sbr.rel (%p233) target = $region12
    $region11: #{residual_block_forward.5} parent=5 // pred_region
      %s237 = ssub.s32 %s14, 1
      // Predicated region
      $region13: #{residual_block_forward.5} parent=11 // pred_check
        %p238 = pneg %p47
      $region14: #{residual_block_forward.5} parent=11 // pred_check_branch
        %240 = sbr.rel (%p238) target = $region16
      $region15: #{residual_block_forward.5} parent=11 // pred_region
        _
      $region16: #{residual_block_forward.5} parent=11 // pred_fallthru
        _
      // Predicated region
      $region17: #{residual_block_forward.5} parent=11 // pred_check
        %p241 = pneg %p68
      $region18: #{residual_block_forward.5} parent=11 // pred_check_branch
        %243 = sbr.rel (%p241) target = $region20
      $region19: #{residual_block_forward.5} parent=11 // pred_region
        _
      $region20: #{residual_block_forward.5} parent=11 // pred_fallthru
        _
      // Predicated region
      $region21: #{residual_block_forward.5} parent=11 // pred_check
        %p244 = pneg %p89
      $region22: #{residual_block_forward.5} parent=11 // pred_check_branch
        %246 = sbr.rel (%p244) target = $region24
      $region23: #{residual_block_forward.5} parent=11 // pred_region
        _
      $region24: #{residual_block_forward.5} parent=11 // pred_fallthru
        _
      // Predicated region
      $region25: #{residual_block_forward.5} parent=11 // pred_check
        %p247 = pneg %p141
      $region26: #{residual_block_forward.5} parent=11 // pred_check_branch
        %249 = sbr.rel (%p247) target = $region28
      $region27: #{residual_block_forward.5} parent=11 // pred_region
        %p250 = scmp.lt.s32.totalorder %s24, 0
        %s251 = scalar_select %p250, %s24, 0
        %s252 = smul.addr %s251, 4
        %s253 = scalar_lea.vmem %s4, %s252
      $region28: #{residual_block_forward.5} parent=11 // pred_fallthru
        _
      // Predicated region
      $region29: #{residual_block_forward.5} parent=11 // pred_check
        %p254 = pneg %p167
      $region30: #{residual_block_forward.5} parent=11 // pred_check_branch
        %256 = sbr.rel (%p254) target = $region32
      $region31: #{residual_block_forward.5} parent=11 // pred_region
        %p257 = scmp.lt.s32.totalorder %s24, 0
        %s258 = scalar_select %p257, %s24, 0
        %s259 = smul.addr %s258, 4
        %s260 = scalar_lea.vmem %s5, %s259
      $region32: #{residual_block_forward.5} parent=11 // pred_fallthru
        _
    $region12: #{residual_block_forward.5} parent=5 // pred_fallthru
      _
    %p261 = scmp.lt.s32.totalorder %s14, 2
    // Predicated region
    $region33: #{residual_block_forward.5} parent=5 // pred_check
      %p262 = pneg %p261
    $region34: #{residual_block_forward.5} parent=5 // pred_check_branch
      %264 = sbr.rel (%p262) target = $region36
    $region35: #{residual_block_forward.5} parent=5 // pred_region
      // Predicated region
      $region37: #{residual_block_forward.5} parent=35 // pred_check
        %p265 = pneg %p109
      $region38: #{residual_block_forward.5} parent=35 // pred_check_branch
        %267 = sbr.rel (%p265) target = $region40
      $region39: #{residual_block_forward.5} parent=35 // pred_region
        %s268 = smul.u32 4, %s21
        %p269 = scmp.lt.s32.totalorder %s268, 7
        %s270 = scalar_select %p269, %s268, 7
        %s271 = smul.addr %s270, 18
        %s272 = smul.addr %s271, 8
        %s273 = scalar_lea.vmem %s3, %s272
        %s274 = smul.u32 4, %s21
      $region40: #{residual_block_forward.5} parent=35 // pred_fallthru
        _
    $region36: #{residual_block_forward.5} parent=5 // pred_fallthru
      _
    %p275 = scmp.le.s32.totalorder 1, %s14
    %p276 = scmp.lt.s32.totalorder %s14, 3
    %p277 = pnand %p275, %p276
    %p278 = pneg %p277
    // Predicated region
    $region41: #{residual_block_forward.5} parent=5 // pred_check
      _
    $region42: #{residual_block_forward.5} parent=5 // pred_check_branch
      %280 = sbr.rel (%p277) target = $region44
    $region43: #{residual_block_forward.5} parent=5 // pred_region
      %s281 = ssub.s32 %s14, 1
      %p282 = pneg %p47
      %p283 = pneg %p44
      %p284 = pneg %p68
      %p285 = pneg %p65
      %p286 = pneg %p89
      %p287 = pneg %p86
      %s288 = smul.u32 4, %s23
      %p289 = scmp.lt.s32.totalorder %s288, 7
      %s290 = scalar_select %p289, %s288, 7
      %s291 = smul.addr %s290, 18
      %s292 = smul.addr %s291, 8
      %s293 = scalar_lea.vmem %s3, %s292
      %p294 = pneg %p115
      %p295 = pneg %p112
      %p296 = scmp.lt.s32.totalorder %s24, 0
      %s297 = scalar_select %p296, %s24, 0
      %s298 = smul.addr %s297, 4
      %s299 = scalar_lea.vmem %s4, %s298
      %p300 = pneg %p141
      %p301 = pneg %p138
      %p302 = scmp.lt.s32.totalorder %s24, 0
      %s303 = scalar_select %p302, %s24, 0
      %s304 = smul.addr %s303, 4
      %s305 = scalar_lea.vmem %s5, %s304
      %p306 = pneg %p167
      %p307 = pneg %p164
      %p308 = pneg %p195
      %p309 = pneg %p192
      %p310 = scmp.lt.s32.totalorder %s23, 1
      %s311 = scalar_select %p310, %s23, 1
      %p312 = scmp.lt.s32.totalorder %s24, 0
      %s313 = scalar_select %p312, %s24, 0
      %s314 = smul.addr %s311, 8
      %s315 = sadd.s32 %s313, %s314
      %s316 = smul.addr %s315, 8
      %s317 = scalar_lea.vmem %s6, %s316
      %p318 = pneg %p223
      %p319 = pneg %p220
      %p320 = scmp.lt.s32.totalorder %s23, 1
      %s321 = scalar_select %p320, %s23, 1
      %p322 = scmp.lt.s32.totalorder %s24, 0
      %s323 = scalar_select %p322, %s24, 0
      %s324 = smul.addr %s321, 8
      %s325 = sadd.s32 %s323, %s324
      %s326 = smul.addr %s325, 8
      %s327 = scalar_lea.vmem %s7, %s326
      %s328 = smul.u32 4, %s23
      %p329 = scmp.lt.s32.totalorder %s328, 7
      %s330 = scalar_select %p329, %s328, 7
      %s331 = smul.addr %s330, 18
      %s332 = smul.addr %s331, 8
      %s333 = scalar_lea.vmem %s3, %s332
      %s334 = smul.u32 4, %s23
      %p335 = scmp.lt.s32.totalorder %s24, 0
      %s336 = scalar_select %p335, %s24, 0
      %s337 = smul.addr %s336, 4
      %s338 = scalar_lea.vmem %s4, %s337
      %p339 = scmp.lt.s32.totalorder %s24, 0
      %s340 = scalar_select %p339, %s24, 0
      %s341 = smul.addr %s340, 4
      %s342 = scalar_lea.vmem %s5, %s341
      %p343 = scmp.lt.s32.totalorder %s23, 1
      %s344 = scalar_select %p343, %s23, 1
      %p345 = scmp.lt.s32.totalorder %s24, 0
      %s346 = scalar_select %p345, %s24, 0
      %s347 = smul.addr %s344, 8
      %s348 = sadd.s32 %s346, %s347
      %s349 = smul.addr %s348, 8
      %s350 = scalar_lea.vmem %s6, %s349
      %p351 = scmp.lt.s32.totalorder %s23, 1
      %s352 = scalar_select %p351, %s23, 1
      %p353 = scmp.lt.s32.totalorder %s24, 0
      %s354 = scalar_select %p353, %s24, 0
      %s355 = smul.addr %s352, 8
      %s356 = sadd.s32 %s354, %s355
      %s357 = smul.addr %s356, 8
      %s358 = scalar_lea.vmem %s7, %s357
      %v359 = vld [vmem:[%s0] sm:$0x1]
      %v360 = vld [vmem:[%s1] sm:$0x1]
      %v361 = vld [vmem:[%s333] sm:$0xff]
      %v362 = vld [vmem:[%s333 + $0x8] sm:$0x1]
      %v363 = vld [vmem:[%s333 + $0x10] sm:$0xff]
      %v364 = vld [vmem:[%s333 + $0x18] sm:$0x1]
      %v365 = vld [vmem:[%s333 + $0x20] sm:$0xff]
      %v366 = vld [vmem:[%s333 + $0x28] sm:$0x1]
      %v367 = vld [vmem:[%s333 + $0x30] sm:$0xff]
      %v368 = vld [vmem:[%s333 + $0x38] sm:$0x1]
      %v369 = vld [vmem:[%s333 + $0x40] sm:$0xff]
      %v370 = vld [vmem:[%s333 + $0x48] sm:$0x1]
      %v371 = vld [vmem:[%s333 + $0x50] sm:$0xff]
      %v372 = vld [vmem:[%s333 + $0x58] sm:$0x1]
      %v373 = vld [vmem:[%s333 + $0x60] sm:$0xff]
      %v374 = vld [vmem:[%s333 + $0x68] sm:$0x1]
      %v375 = vld [vmem:[%s333 + $0x70] sm:$0xff]
      %v376 = vld [vmem:[%s333 + $0x78] sm:$0x1]
      %v377 = vld [vmem:[%s333 + $0x80] sm:$0xff]
      %v378 = vld [vmem:[%s333 + $0x88] sm:$0x1]
      %v380 = vperm.slane %v359, 0
      %v382 = vmul.f32 %v361, %v380
      %v383 = vmul.f32 %v362, %v380
      %v384 = vmul.f32 %v363, %v380
      %v385 = vmul.f32 %v364, %v380
      %v386 = vmul.f32 %v365, %v380
      %v387 = vmul.f32 %v366, %v380
      %v388 = vmul.f32 %v367, %v380
      %v389 = vmul.f32 %v368, %v380
      %v390 = vmul.f32 %v369, %v380
      %v391 = vmul.f32 %v370, %v380
      %v392 = vmul.f32 %v371, %v380
      %v393 = vmul.f32 %v372, %v380
      %v394 = vmul.f32 %v373, %v380
      %v395 = vmul.f32 %v374, %v380
      %v396 = vmul.f32 %v375, %v380
      %v397 = vmul.f32 %v376, %v380
      %v398 = vmul.f32 %v377, %v380
      %v399 = vmul.f32 %v378, %v380
      %v401 = vperm.slane %v360, 0
      %v403 = vadd.f32 %v382, %v401
      %v404 = vadd.f32 %v383, %v401
      %v405 = vadd.f32 %v384, %v401
      %v406 = vadd.f32 %v385, %v401
      %v407 = vadd.f32 %v386, %v401
      %v408 = vadd.f32 %v387, %v401
      %v409 = vadd.f32 %v388, %v401
      %v410 = vadd.f32 %v389, %v401
      %v411 = vadd.f32 %v390, %v401
      %v412 = vadd.f32 %v391, %v401
      %v413 = vadd.f32 %v392, %v401
      %v414 = vadd.f32 %v393, %v401
      %v415 = vadd.f32 %v394, %v401
      %v416 = vadd.f32 %v395, %v401
      %v417 = vadd.f32 %v396, %v401
      %v418 = vadd.f32 %v397, %v401
      %v419 = vadd.f32 %v398, %v401
      %v420 = vadd.f32 %v399, %v401
      %v421 = vmax.f32 %v403, 0.0
      %v422 = vmax.f32 %v404, 0.0
      %v423 = vmax.f32 %v405, 0.0
      %v424 = vmax.f32 %v406, 0.0
      %v425 = vmax.f32 %v407, 0.0
      %v426 = vmax.f32 %v408, 0.0
      %v427 = vmax.f32 %v409, 0.0
      %v428 = vmax.f32 %v410, 0.0
      %v429 = vmax.f32 %v411, 0.0
      %v430 = vmax.f32 %v412, 0.0
      %v431 = vmax.f32 %v413, 0.0
      %v432 = vmax.f32 %v414, 0.0
      %v433 = vmax.f32 %v415, 0.0
      %v434 = vmax.f32 %v416, 0.0
      %v435 = vmax.f32 %v417, 0.0
      %v436 = vmax.f32 %v418, 0.0
      %v437 = vmax.f32 %v419, 0.0
      %v438 = vmax.f32 %v420, 0.0
      %v439 = vld [vmem:[%s2] sm:$0xff]
      %v440 = vld [vmem:[%s2 + $0x8] sm:$0x1]
      %v441 = vld [vmem:[%s2 + $0x10] sm:$0xff]
      %v442 = vld [vmem:[%s2 + $0x18] sm:$0x1]
      %v443 = vld [vmem:[%s2 + $0x20] sm:$0xff]
      %v444 = vld [vmem:[%s2 + $0x28] sm:$0x1]
      %v445 = vld [vmem:[%s2 + $0x30] sm:$0xff]
      %v446 = vld [vmem:[%s2 + $0x38] sm:$0x1]
      %v447 = vld [vmem:[%s2 + $0x40] sm:$0xff]
      %v448 = vld [vmem:[%s2 + $0x48] sm:$0x1]
      %v449 = vld [vmem:[%s2 + $0x50] sm:$0xff]
      %v450 = vld [vmem:[%s2 + $0x58] sm:$0x1]
      %v451 = vld [vmem:[%s2 + $0x60] sm:$0xff]
      %v452 = vld [vmem:[%s2 + $0x68] sm:$0x1]
      %v453 = vld [vmem:[%s2 + $0x70] sm:$0xff]
      %v454 = vld [vmem:[%s2 + $0x78] sm:$0x1]
      %v455 = vld [vmem:[%s2 + $0x80] sm:$0xff]
      %v456 = vld [vmem:[%s2 + $0x88] sm:$0x1]
      %458 = vset.pattern.permute.xlu0 0
      %459 = vperm.xlu0 %458, %v439
      %v460 = vpop.permute.xlu0 %459
      %463 = vset.pattern.permute.xlu0 0
      %464 = vperm.xlu0 %463, %v440
      %v465 = vpop.permute.xlu0 %464
      %468 = vset.pattern.permute.xlu0 0
      %469 = vperm.xlu0 %468, %v441
      %v470 = vpop.permute.xlu0 %469
      %473 = vset.pattern.permute.xlu0 0
      %474 = vperm.xlu0 %473, %v442
      %v475 = vpop.permute.xlu0 %474
      %478 = vset.pattern.permute.xlu0 0
      %479 = vperm.xlu0 %478, %v443
      %v480 = vpop.permute.xlu0 %479
      %483 = vset.pattern.permute.xlu0 0
      %484 = vperm.xlu0 %483, %v444
      %v485 = vpop.permute.xlu0 %484
      %488 = vset.pattern.permute.xlu0 0
      %489 = vperm.xlu0 %488, %v445
      %v490 = vpop.permute.xlu0 %489
      %493 = vset.pattern.permute.xlu0 0
      %494 = vperm.xlu0 %493, %v446
      %v495 = vpop.permute.xlu0 %494
      %498 = vset.pattern.permute.xlu0 0
      %499 = vperm.xlu0 %498, %v447
      %v500 = vpop.permute.xlu0 %499
      %503 = vset.pattern.permute.xlu0 0
      %504 = vperm.xlu0 %503, %v448
      %v505 = vpop.permute.xlu0 %504
      %508 = vset.pattern.permute.xlu0 0
      %509 = vperm.xlu0 %508, %v449
      %v510 = vpop.permute.xlu0 %509
      %513 = vset.pattern.permute.xlu0 0
      %514 = vperm.xlu0 %513, %v450
      %v515 = vpop.permute.xlu0 %514
      %518 = vset.pattern.permute.xlu0 0
      %519 = vperm.xlu0 %518, %v451
      %v520 = vpop.permute.xlu0 %519
      %523 = vset.pattern.permute.xlu0 0
      %524 = vperm.xlu0 %523, %v452
      %v525 = vpop.permute.xlu0 %524
      %528 = vset.pattern.permute.xlu0 0
      %529 = vperm.xlu0 %528, %v453
      %v530 = vpop.permute.xlu0 %529
      %533 = vset.pattern.permute.xlu0 0
      %534 = vperm.xlu0 %533, %v454
      %v535 = vpop.permute.xlu0 %534
      %538 = vset.pattern.permute.xlu0 0
      %539 = vperm.xlu0 %538, %v455
      %v540 = vpop.permute.xlu0 %539
      %543 = vset.pattern.permute.xlu0 0
      %544 = vperm.xlu0 %543, %v456
      %v545 = vpop.permute.xlu0 %544
      %v547 = vmul.f32 %v421, %v460
      %v548 = vmul.f32 %v422, %v465
      %v549 = vmul.f32 %v423, %v470
      %v550 = vmul.f32 %v424, %v475
      %v551 = vmul.f32 %v425, %v480
      %v552 = vmul.f32 %v426, %v485
      %v553 = vmul.f32 %v427, %v490
      %v554 = vmul.f32 %v428, %v495
      %v555 = vmul.f32 %v429, %v500
      %v556 = vmul.f32 %v430, %v505
      %v557 = vmul.f32 %v431, %v510
      %v558 = vmul.f32 %v432, %v515
      %v559 = vmul.f32 %v433, %v520
      %v560 = vmul.f32 %v434, %v525
      %v561 = vmul.f32 %v435, %v530
      %v562 = vmul.f32 %v436, %v535
      %v563 = vmul.f32 %v437, %v540
      %v564 = vmul.f32 %v438, %v545
      %565 = vst [vmem:[#allocation2] sm:$0xff] %v547
      %566 = vst [vmem:[#allocation2 + $0x8] sm:$0x1] %v548
      %567 = vst [vmem:[#allocation2 + $0x10] sm:$0xff] %v549
      %568 = vst [vmem:[#allocation2 + $0x18] sm:$0x1] %v550
      %569 = vst [vmem:[#allocation2 + $0x20] sm:$0xff] %v551
      %570 = vst [vmem:[#allocation2 + $0x28] sm:$0x1] %v552
      %571 = vst [vmem:[#allocation2 + $0x30] sm:$0xff] %v553
      %572 = vst [vmem:[#allocation2 + $0x38] sm:$0x1] %v554
      %573 = vst [vmem:[#allocation2 + $0x40] sm:$0xff] %v555
      %574 = vst [vmem:[#allocation2 + $0x48] sm:$0x1] %v556
      %575 = vst [vmem:[#allocation2 + $0x50] sm:$0xff] %v557
      %576 = vst [vmem:[#allocation2 + $0x58] sm:$0x1] %v558
      %577 = vst [vmem:[#allocation2 + $0x60] sm:$0xff] %v559
      %578 = vst [vmem:[#allocation2 + $0x68] sm:$0x1] %v560
      %579 = vst [vmem:[#allocation2 + $0x70] sm:$0xff] %v561
      %580 = vst [vmem:[#allocation2 + $0x78] sm:$0x1] %v562
      %581 = vst [vmem:[#allocation2 + $0x80] sm:$0xff] %v563
      %582 = vst [vmem:[#allocation2 + $0x88] sm:$0x1] %v564
      %s583 = scalar_lea.vmem %s333, 144
      %v584 = vld [vmem:[%s583] sm:$0xff]
      %v585 = vld [vmem:[%s583 + $0x8] sm:$0x1]
      %v586 = vld [vmem:[%s583 + $0x10] sm:$0xff]
      %v587 = vld [vmem:[%s583 + $0x18] sm:$0x1]
      %v588 = vld [vmem:[%s583 + $0x20] sm:$0xff]
      %v589 = vld [vmem:[%s583 + $0x28] sm:$0x1]
      %v590 = vld [vmem:[%s583 + $0x30] sm:$0xff]
      %v591 = vld [vmem:[%s583 + $0x38] sm:$0x1]
      %v592 = vld [vmem:[%s583 + $0x40] sm:$0xff]
      %v593 = vld [vmem:[%s583 + $0x48] sm:$0x1]
      %v594 = vld [vmem:[%s583 + $0x50] sm:$0xff]
      %v595 = vld [vmem:[%s583 + $0x58] sm:$0x1]
      %v596 = vld [vmem:[%s583 + $0x60] sm:$0xff]
      %v597 = vld [vmem:[%s583 + $0x68] sm:$0x1]
      %v598 = vld [vmem:[%s583 + $0x70] sm:$0xff]
      %v599 = vld [vmem:[%s583 + $0x78] sm:$0x1]
      %v600 = vld [vmem:[%s583 + $0x80] sm:$0xff]
      %v601 = vld [vmem:[%s583 + $0x88] sm:$0x1]
      %v602 = vmul.f32 %v584, %v380
      %v603 = vmul.f32 %v585, %v380
      %v604 = vmul.f32 %v586, %v380
      %v605 = vmul.f32 %v587, %v380
      %v606 = vmul.f32 %v588, %v380
      %v607 = vmul.f32 %v589, %v380
      %v608 = vmul.f32 %v590, %v380
      %v609 = vmul.f32 %v591, %v380
      %v610 = vmul.f32 %v592, %v380
      %v611 = vmul.f32 %v593, %v380
      %v612 = vmul.f32 %v594, %v380
      %v613 = vmul.f32 %v595, %v380
      %v614 = vmul.f32 %v596, %v380
      %v615 = vmul.f32 %v597, %v380
      %v616 = vmul.f32 %v598, %v380
      %v617 = vmul.f32 %v599, %v380
      %v618 = vmul.f32 %v600, %v380
      %v619 = vmul.f32 %v601, %v380
      %v620 = vadd.f32 %v602, %v401
      %v621 = vadd.f32 %v603, %v401
      %v622 = vadd.f32 %v604, %v401
      %v623 = vadd.f32 %v605, %v401
      %v624 = vadd.f32 %v606, %v401
      %v625 = vadd.f32 %v607, %v401
      %v626 = vadd.f32 %v608, %v401
      %v627 = vadd.f32 %v609, %v401
      %v628 = vadd.f32 %v610, %v401
      %v629 = vadd.f32 %v611, %v401
      %v630 = vadd.f32 %v612, %v401
      %v631 = vadd.f32 %v613, %v401
      %v632 = vadd.f32 %v614, %v401
      %v633 = vadd.f32 %v615, %v401
      %v634 = vadd.f32 %v616, %v401
      %v635 = vadd.f32 %v617, %v401
      %v636 = vadd.f32 %v618, %v401
      %v637 = vadd.f32 %v619, %v401
      %v638 = vmax.f32 %v620, 0.0
      %v639 = vmax.f32 %v621, 0.0
      %v640 = vmax.f32 %v622, 0.0
      %v641 = vmax.f32 %v623, 0.0
      %v642 = vmax.f32 %v624, 0.0
      %v643 = vmax.f32 %v625, 0.0
      %v644 = vmax.f32 %v626, 0.0
      %v645 = vmax.f32 %v627, 0.0
      %v646 = vmax.f32 %v628, 0.0
      %v647 = vmax.f32 %v629, 0.0
      %v648 = vmax.f32 %v630, 0.0
      %v649 = vmax.f32 %v631, 0.0
      %v650 = vmax.f32 %v632, 0.0
      %v651 = vmax.f32 %v633, 0.0
      %v652 = vmax.f32 %v634, 0.0
      %v653 = vmax.f32 %v635, 0.0
      %v654 = vmax.f32 %v636, 0.0
      %v655 = vmax.f32 %v637, 0.0
      %s656 = scalar_lea.vmem %s2, 144
      %v657 = vld [vmem:[%s656] sm:$0xff]
      %v658 = vld [vmem:[%s656 + $0x8] sm:$0x1]
      %v659 = vld [vmem:[%s656 + $0x10] sm:$0xff]
      %v660 = vld [vmem:[%s656 + $0x18] sm:$0x1]
      %v661 = vld [vmem:[%s656 + $0x20] sm:$0xff]
      %v662 = vld [vmem:[%s656 + $0x28] sm:$0x1]
      %v663 = vld [vmem:[%s656 + $0x30] sm:$0xff]
      %v664 = vld [vmem:[%s656 + $0x38] sm:$0x1]
      %v665 = vld [vmem:[%s656 + $0x40] sm:$0xff]
      %v666 = vld [vmem:[%s656 + $0x48] sm:$0x1]
      %v667 = vld [vmem:[%s656 + $0x50] sm:$0xff]
      %v668 = vld [vmem:[%s656 + $0x58] sm:$0x1]
      %v669 = vld [vmem:[%s656 + $0x60] sm:$0xff]
      %v670 = vld [vmem:[%s656 + $0x68] sm:$0x1]
      %v671 = vld [vmem:[%s656 + $0x70] sm:$0xff]
      %v672 = vld [vmem:[%s656 + $0x78] sm:$0x1]
      %v673 = vld [vmem:[%s656 + $0x80] sm:$0xff]
      %v674 = vld [vmem:[%s656 + $0x88] sm:$0x1]
      %676 = vset.pattern.permute.xlu0 0
      %677 = vperm.xlu0 %676, %v657
      %v678 = vpop.permute.xlu0 %677
      %681 = vset.pattern.permute.xlu0 0
      %682 = vperm.xlu0 %681, %v658
      %v683 = vpop.permute.xlu0 %682
      %686 = vset.pattern.permute.xlu0 0
      %687 = vperm.xlu0 %686, %v659
      %v688 = vpop.permute.xlu0 %687
      %691 = vset.pattern.permute.xlu0 0
      %692 = vperm.xlu0 %691, %v660
      %v693 = vpop.permute.xlu0 %692
      %696 = vset.pattern.permute.xlu0 0
      %697 = vperm.xlu0 %696, %v661
      %v698 = vpop.permute.xlu0 %697
      %701 = vset.pattern.permute.xlu0 0
      %702 = vperm.xlu0 %701, %v662
      %v703 = vpop.permute.xlu0 %702
      %706 = vset.pattern.permute.xlu0 0
      %707 = vperm.xlu0 %706, %v663
      %v708 = vpop.permute.xlu0 %707
      %711 = vset.pattern.permute.xlu0 0
      %712 = vperm.xlu0 %711, %v664
      %v713 = vpop.permute.xlu0 %712
      %716 = vset.pattern.permute.xlu0 0
      %717 = vperm.xlu0 %716, %v665
      %v718 = vpop.permute.xlu0 %717
      %721 = vset.pattern.permute.xlu0 0
      %722 = vperm.xlu0 %721, %v666
      %v723 = vpop.permute.xlu0 %722
      %726 = vset.pattern.permute.xlu0 0
      %727 = vperm.xlu0 %726, %v667
      %v728 = vpop.permute.xlu0 %727
      %731 = vset.pattern.permute.xlu0 0
      %732 = vperm.xlu0 %731, %v668
      %v733 = vpop.permute.xlu0 %732
      %736 = vset.pattern.permute.xlu0 0
      %737 = vperm.xlu0 %736, %v669
      %v738 = vpop.permute.xlu0 %737
      %741 = vset.pattern.permute.xlu0 0
      %742 = vperm.xlu0 %741, %v670
      %v743 = vpop.permute.xlu0 %742
      %746 = vset.pattern.permute.xlu0 0
      %747 = vperm.xlu0 %746, %v671
      %v748 = vpop.permute.xlu0 %747
      %751 = vset.pattern.permute.xlu0 0
      %752 = vperm.xlu0 %751, %v672
      %v753 = vpop.permute.xlu0 %752
      %756 = vset.pattern.permute.xlu0 0
      %757 = vperm.xlu0 %756, %v673
      %v758 = vpop.permute.xlu0 %757
      %761 = vset.pattern.permute.xlu0 0
      %762 = vperm.xlu0 %761, %v674
      %v763 = vpop.permute.xlu0 %762
      %v765 = vmul.f32 %v638, %v678
      %v766 = vmul.f32 %v639, %v683
      %v767 = vmul.f32 %v640, %v688
      %v768 = vmul.f32 %v641, %v693
      %v769 = vmul.f32 %v642, %v698
      %v770 = vmul.f32 %v643, %v703
      %v771 = vmul.f32 %v644, %v708
      %v772 = vmul.f32 %v645, %v713
      %v773 = vmul.f32 %v646, %v718
      %v774 = vmul.f32 %v647, %v723
      %v775 = vmul.f32 %v648, %v728
      %v776 = vmul.f32 %v649, %v733
      %v777 = vmul.f32 %v650, %v738
      %v778 = vmul.f32 %v651, %v743
      %v779 = vmul.f32 %v652, %v748
      %v780 = vmul.f32 %v653, %v753
      %v781 = vmul.f32 %v654, %v758
      %v782 = vmul.f32 %v655, %v763
      %s783 = scalar_lea.vmem [#allocation2], 144
      %784 = vst [vmem:[%s783] sm:$0xff] %v765
      %785 = vst [vmem:[%s783 + $0x8] sm:$0x1] %v766
      %786 = vst [vmem:[%s783 + $0x10] sm:$0xff] %v767
      %787 = vst [vmem:[%s783 + $0x18] sm:$0x1] %v768
      %788 = vst [vmem:[%s783 + $0x20] sm:$0xff] %v769
      %789 = vst [vmem:[%s783 + $0x28] sm:$0x1] %v770
      %790 = vst [vmem:[%s783 + $0x30] sm:$0xff] %v771
      %791 = vst [vmem:[%s783 + $0x38] sm:$0x1] %v772
      %792 = vst [vmem:[%s783 + $0x40] sm:$0xff] %v773
      %793 = vst [vmem:[%s783 + $0x48] sm:$0x1] %v774
      %794 = vst [vmem:[%s783 + $0x50] sm:$0xff] %v775
      %795 = vst [vmem:[%s783 + $0x58] sm:$0x1] %v776
      %796 = vst [vmem:[%s783 + $0x60] sm:$0xff] %v777
      %797 = vst [vmem:[%s783 + $0x68] sm:$0x1] %v778
      %798 = vst [vmem:[%s783 + $0x70] sm:$0xff] %v779
      %799 = vst [vmem:[%s783 + $0x78] sm:$0x1] %v780
      %800 = vst [vmem:[%s783 + $0x80] sm:$0xff] %v781
      %801 = vst [vmem:[%s783 + $0x88] sm:$0x1] %v782
      %s802 = scalar_lea.vmem %s333, 288
      %v803 = vld [vmem:[%s802] sm:$0xff]
      %v804 = vld [vmem:[%s802 + $0x8] sm:$0x1]
      %v805 = vld [vmem:[%s802 + $0x10] sm:$0xff]
      %v806 = vld [vmem:[%s802 + $0x18] sm:$0x1]
      %v807 = vld [vmem:[%s802 + $0x20] sm:$0xff]
      %v808 = vld [vmem:[%s802 + $0x28] sm:$0x1]
      %v809 = vld [vmem:[%s802 + $0x30] sm:$0xff]
      %v810 = vld [vmem:[%s802 + $0x38] sm:$0x1]
      %v811 = vld [vmem:[%s802 + $0x40] sm:$0xff]
      %v812 = vld [vmem:[%s802 + $0x48] sm:$0x1]
      %v813 = vld [vmem:[%s802 + $0x50] sm:$0xff]
      %v814 = vld [vmem:[%s802 + $0x58] sm:$0x1]
      %v815 = vld [vmem:[%s802 + $0x60] sm:$0xff]
      %v816 = vld [vmem:[%s802 + $0x68] sm:$0x1]
      %v817 = vld [vmem:[%s802 + $0x70] sm:$0xff]
      %v818 = vld [vmem:[%s802 + $0x78] sm:$0x1]
      %v819 = vld [vmem:[%s802 + $0x80] sm:$0xff]
      %v820 = vld [vmem:[%s802 + $0x88] sm:$0x1]
      %v821 = vmul.f32 %v803, %v380
      %v822 = vmul.f32 %v804, %v380
      %v823 = vmul.f32 %v805, %v380
      %v824 = vmul.f32 %v806, %v380
      %v825 = vmul.f32 %v807, %v380
      %v826 = vmul.f32 %v808, %v380
      %v827 = vmul.f32 %v809, %v380
      %v828 = vmul.f32 %v810, %v380
      %v829 = vmul.f32 %v811, %v380
      %v830 = vmul.f32 %v812, %v380
      %v831 = vmul.f32 %v813, %v380
      %v832 = vmul.f32 %v814, %v380
      %v833 = vmul.f32 %v815, %v380
      %v834 = vmul.f32 %v816, %v380
      %v835 = vmul.f32 %v817, %v380
      %v836 = vmul.f32 %v818, %v380
      %v837 = vmul.f32 %v819, %v380
      %v838 = vmul.f32 %v820, %v380
      %v839 = vadd.f32 %v821, %v401
      %v840 = vadd.f32 %v822, %v401
      %v841 = vadd.f32 %v823, %v401
      %v842 = vadd.f32 %v824, %v401
      %v843 = vadd.f32 %v825, %v401
      %v844 = vadd.f32 %v826, %v401
      %v845 = vadd.f32 %v827, %v401
      %v846 = vadd.f32 %v828, %v401
      %v847 = vadd.f32 %v829, %v401
      %v848 = vadd.f32 %v830, %v401
      %v849 = vadd.f32 %v831, %v401
      %v850 = vadd.f32 %v832, %v401
      %v851 = vadd.f32 %v833, %v401
      %v852 = vadd.f32 %v834, %v401
      %v853 = vadd.f32 %v835, %v401
      %v854 = vadd.f32 %v836, %v401
      %v855 = vadd.f32 %v837, %v401
      %v856 = vadd.f32 %v838, %v401
      %v857 = vmax.f32 %v839, 0.0
      %v858 = vmax.f32 %v840, 0.0
      %v859 = vmax.f32 %v841, 0.0
      %v860 = vmax.f32 %v842, 0.0
      %v861 = vmax.f32 %v843, 0.0
      %v862 = vmax.f32 %v844, 0.0
      %v863 = vmax.f32 %v845, 0.0
      %v864 = vmax.f32 %v846, 0.0
      %v865 = vmax.f32 %v847, 0.0
      %v866 = vmax.f32 %v848, 0.0
      %v867 = vmax.f32 %v849, 0.0
      %v868 = vmax.f32 %v850, 0.0
      %v869 = vmax.f32 %v851, 0.0
      %v870 = vmax.f32 %v852, 0.0
      %v871 = vmax.f32 %v853, 0.0
      %v872 = vmax.f32 %v854, 0.0
      %v873 = vmax.f32 %v855, 0.0
      %v874 = vmax.f32 %v856, 0.0
      %s875 = scalar_lea.vmem %s2, 288
      %v876 = vld [vmem:[%s875] sm:$0xff]
      %v877 = vld [vmem:[%s875 + $0x8] sm:$0x1]
      %v878 = vld [vmem:[%s875 + $0x10] sm:$0xff]
      %v879 = vld [vmem:[%s875 + $0x18] sm:$0x1]
      %v880 = vld [vmem:[%s875 + $0x20] sm:$0xff]
      %v881 = vld [vmem:[%s875 + $0x28] sm:$0x1]
      %v882 = vld [vmem:[%s875 + $0x30] sm:$0xff]
      %v883 = vld [vmem:[%s875 + $0x38] sm:$0x1]
      %v884 = vld [vmem:[%s875 + $0x40] sm:$0xff]
      %v885 = vld [vmem:[%s875 + $0x48] sm:$0x1]
      %v886 = vld [vmem:[%s875 + $0x50] sm:$0xff]
      %v887 = vld [vmem:[%s875 + $0x58] sm:$0x1]
      %v888 = vld [vmem:[%s875 + $0x60] sm:$0xff]
      %v889 = vld [vmem:[%s875 + $0x68] sm:$0x1]
      %v890 = vld [vmem:[%s875 + $0x70] sm:$0xff]
      %v891 = vld [vmem:[%s875 + $0x78] sm:$0x1]
      %v892 = vld [vmem:[%s875 + $0x80] sm:$0xff]
      %v893 = vld [vmem:[%s875 + $0x88] sm:$0x1]
      %895 = vset.pattern.permute.xlu0 0
      %896 = vperm.xlu0 %895, %v876
      %v897 = vpop.permute.xlu0 %896
      %900 = vset.pattern.permute.xlu0 0
      %901 = vperm.xlu0 %900, %v877
      %v902 = vpop.permute.xlu0 %901
      %905 = vset.pattern.permute.xlu0 0
      %906 = vperm.xlu0 %905, %v878
      %v907 = vpop.permute.xlu0 %906
      %910 = vset.pattern.permute.xlu0 0
      %911 = vperm.xlu0 %910, %v879
      %v912 = vpop.permute.xlu0 %911
      %915 = vset.pattern.permute.xlu0 0
      %916 = vperm.xlu0 %915, %v880
      %v917 = vpop.permute.xlu0 %916
      %920 = vset.pattern.permute.xlu0 0
      %921 = vperm.xlu0 %920, %v881
      %v922 = vpop.permute.xlu0 %921
      %925 = vset.pattern.permute.xlu0 0
      %926 = vperm.xlu0 %925, %v882
      %v927 = vpop.permute.xlu0 %926
      %930 = vset.pattern.permute.xlu0 0
      %931 = vperm.xlu0 %930, %v883
      %v932 = vpop.permute.xlu0 %931
      %935 = vset.pattern.permute.xlu0 0
      %936 = vperm.xlu0 %935, %v884
      %v937 = vpop.permute.xlu0 %936
      %940 = vset.pattern.permute.xlu0 0
      %941 = vperm.xlu0 %940, %v885
      %v942 = vpop.permute.xlu0 %941
      %945 = vset.pattern.permute.xlu0 0
      %946 = vperm.xlu0 %945, %v886
      %v947 = vpop.permute.xlu0 %946
      %950 = vset.pattern.permute.xlu0 0
      %951 = vperm.xlu0 %950, %v887
      %v952 = vpop.permute.xlu0 %951
      %955 = vset.pattern.permute.xlu0 0
      %956 = vperm.xlu0 %955, %v888
      %v957 = vpop.permute.xlu0 %956
      %960 = vset.pattern.permute.xlu0 0
      %961 = vperm.xlu0 %960, %v889
      %v962 = vpop.permute.xlu0 %961
      %965 = vset.pattern.permute.xlu0 0
      %966 = vperm.xlu0 %965, %v890
      %v967 = vpop.permute.xlu0 %966
      %970 = vset.pattern.permute.xlu0 0
      %971 = vperm.xlu0 %970, %v891
      %v972 = vpop.permute.xlu0 %971
      %975 = vset.pattern.permute.xlu0 0
      %976 = vperm.xlu0 %975, %v892
      %v977 = vpop.permute.xlu0 %976
      %980 = vset.pattern.permute.xlu0 0
      %981 = vperm.xlu0 %980, %v893
      %v982 = vpop.permute.xlu0 %981
      %v984 = vmul.f32 %v857, %v897
      %v985 = vmul.f32 %v858, %v902
      %v986 = vmul.f32 %v859, %v907
      %v987 = vmul.f32 %v860, %v912
      %v988 = vmul.f32 %v861, %v917
      %v989 = vmul.f32 %v862, %v922
      %v990 = vmul.f32 %v863, %v927
      %v991 = vmul.f32 %v864, %v932
      %v992 = vmul.f32 %v865, %v937
      %v993 = vmul.f32 %v866, %v942
      %v994 = vmul.f32 %v867, %v947
      %v995 = vmul.f32 %v868, %v952
      %v996 = vmul.f32 %v869, %v957
      %v997 = vmul.f32 %v870, %v962
      %v998 = vmul.f32 %v871, %v967
      %v999 = vmul.f32 %v872, %v972
      %v1000 = vmul.f32 %v873, %v977
      %v1001 = vmul.f32 %v874, %v982
      %s1002 = scalar_lea.vmem [#allocation2], 288
      %1003 = vst [vmem:[%s1002] sm:$0xff] %v984
      %1004 = vst [vmem:[%s1002 + $0x8] sm:$0x1] %v985
      %1005 = vst [vmem:[%s1002 + $0x10] sm:$0xff] %v986
      %1006 = vst [vmem:[%s1002 + $0x18] sm:$0x1] %v987
      %1007 = vst [vmem:[%s1002 + $0x20] sm:$0xff] %v988
      %1008 = vst [vmem:[%s1002 + $0x28] sm:$0x1] %v989
      %1009 = vst [vmem:[%s1002 + $0x30] sm:$0xff] %v990
      %1010 = vst [vmem:[%s1002 + $0x38] sm:$0x1] %v991
      %1011 = vst [vmem:[%s1002 + $0x40] sm:$0xff] %v992
      %1012 = vst [vmem:[%s1002 + $0x48] sm:$0x1] %v993
      %1013 = vst [vmem:[%s1002 + $0x50] sm:$0xff] %v994
      %1014 = vst [vmem:[%s1002 + $0x58] sm:$0x1] %v995
      %1015 = vst [vmem:[%s1002 + $0x60] sm:$0xff] %v996
      %1016 = vst [vmem:[%s1002 + $0x68] sm:$0x1] %v997
      %1017 = vst [vmem:[%s1002 + $0x70] sm:$0xff] %v998
      %1018 = vst [vmem:[%s1002 + $0x78] sm:$0x1] %v999
      %1019 = vst [vmem:[%s1002 + $0x80] sm:$0xff] %v1000
      %1020 = vst [vmem:[%s1002 + $0x88] sm:$0x1] %v1001
      %s1021 = scalar_lea.vmem %s333, 432
      %v1022 = vld [vmem:[%s1021] sm:$0xff]
      %v1023 = vld [vmem:[%s1021 + $0x8] sm:$0x1]
      %v1024 = vld [vmem:[%s1021 + $0x10] sm:$0xff]
      %v1025 = vld [vmem:[%s1021 + $0x18] sm:$0x1]
      %v1026 = vld [vmem:[%s1021 + $0x20] sm:$0xff]
      %v1027 = vld [vmem:[%s1021 + $0x28] sm:$0x1]
      %v1028 = vld [vmem:[%s1021 + $0x30] sm:$0xff]
      %v1029 = vld [vmem:[%s1021 + $0x38] sm:$0x1]
      %v1030 = vld [vmem:[%s1021 + $0x40] sm:$0xff]
      %v1031 = vld [vmem:[%s1021 + $0x48] sm:$0x1]
      %v1032 = vld [vmem:[%s1021 + $0x50] sm:$0xff]
      %v1033 = vld [vmem:[%s1021 + $0x58] sm:$0x1]
      %v1034 = vld [vmem:[%s1021 + $0x60] sm:$0xff]
      %v1035 = vld [vmem:[%s1021 + $0x68] sm:$0x1]
      %v1036 = vld [vmem:[%s1021 + $0x70] sm:$0xff]
      %v1037 = vld [vmem:[%s1021 + $0x78] sm:$0x1]
      %v1038 = vld [vmem:[%s1021 + $0x80] sm:$0xff]
      %v1039 = vld [vmem:[%s1021 + $0x88] sm:$0x1]
      %v1040 = vmul.f32 %v1022, %v380
      %v1041 = vmul.f32 %v1023, %v380
      %v1042 = vmul.f32 %v1024, %v380
      %v1043 = vmul.f32 %v1025, %v380
      %v1044 = vmul.f32 %v1026, %v380
      %v1045 = vmul.f32 %v1027, %v380
      %v1046 = vmul.f32 %v1028, %v380
      %v1047 = vmul.f32 %v1029, %v380
      %v1048 = vmul.f32 %v1030, %v380
      %v1049 = vmul.f32 %v1031, %v380
      %v1050 = vmul.f32 %v1032, %v380
      %v1051 = vmul.f32 %v1033, %v380
      %v1052 = vmul.f32 %v1034, %v380
      %v1053 = vmul.f32 %v1035, %v380
      %v1054 = vmul.f32 %v1036, %v380
      %v1055 = vmul.f32 %v1037, %v380
      %v1056 = vmul.f32 %v1038, %v380
      %v1057 = vmul.f32 %v1039, %v380
      %v1058 = vadd.f32 %v1040, %v401
      %v1059 = vadd.f32 %v1041, %v401
      %v1060 = vadd.f32 %v1042, %v401
      %v1061 = vadd.f32 %v1043, %v401
      %v1062 = vadd.f32 %v1044, %v401
      %v1063 = vadd.f32 %v1045, %v401
      %v1064 = vadd.f32 %v1046, %v401
      %v1065 = vadd.f32 %v1047, %v401
      %v1066 = vadd.f32 %v1048, %v401
      %v1067 = vadd.f32 %v1049, %v401
      %v1068 = vadd.f32 %v1050, %v401
      %v1069 = vadd.f32 %v1051, %v401
      %v1070 = vadd.f32 %v1052, %v401
      %v1071 = vadd.f32 %v1053, %v401
      %v1072 = vadd.f32 %v1054, %v401
      %v1073 = vadd.f32 %v1055, %v401
      %v1074 = vadd.f32 %v1056, %v401
      %v1075 = vadd.f32 %v1057, %v401
      %v1076 = vmax.f32 %v1058, 0.0
      %v1077 = vmax.f32 %v1059, 0.0
      %v1078 = vmax.f32 %v1060, 0.0
      %v1079 = vmax.f32 %v1061, 0.0
      %v1080 = vmax.f32 %v1062, 0.0
      %v1081 = vmax.f32 %v1063, 0.0
      %v1082 = vmax.f32 %v1064, 0.0
      %v1083 = vmax.f32 %v1065, 0.0
      %v1084 = vmax.f32 %v1066, 0.0
      %v1085 = vmax.f32 %v1067, 0.0
      %v1086 = vmax.f32 %v1068, 0.0
      %v1087 = vmax.f32 %v1069, 0.0
      %v1088 = vmax.f32 %v1070, 0.0
      %v1089 = vmax.f32 %v1071, 0.0
      %v1090 = vmax.f32 %v1072, 0.0
      %v1091 = vmax.f32 %v1073, 0.0
      %v1092 = vmax.f32 %v1074, 0.0
      %v1093 = vmax.f32 %v1075, 0.0
      %s1094 = scalar_lea.vmem %s2, 432
      %v1095 = vld [vmem:[%s1094] sm:$0xff]
      %v1096 = vld [vmem:[%s1094 + $0x8] sm:$0x1]
      %v1097 = vld [vmem:[%s1094 + $0x10] sm:$0xff]
      %v1098 = vld [vmem:[%s1094 + $0x18] sm:$0x1]
      %v1099 = vld [vmem:[%s1094 + $0x20] sm:$0xff]
      %v1100 = vld [vmem:[%s1094 + $0x28] sm:$0x1]
      %v1101 = vld [vmem:[%s1094 + $0x30] sm:$0xff]
      %v1102 = vld [vmem:[%s1094 + $0x38] sm:$0x1]
      %v1103 = vld [vmem:[%s1094 + $0x40] sm:$0xff]
      %v1104 = vld [vmem:[%s1094 + $0x48] sm:$0x1]
      %v1105 = vld [vmem:[%s1094 + $0x50] sm:$0xff]
      %v1106 = vld [vmem:[%s1094 + $0x58] sm:$0x1]
      %v1107 = vld [vmem:[%s1094 + $0x60] sm:$0xff]
      %v1108 = vld [vmem:[%s1094 + $0x68] sm:$0x1]
      %v1109 = vld [vmem:[%s1094 + $0x70] sm:$0xff]
      %v1110 = vld [vmem:[%s1094 + $0x78] sm:$0x1]
      %v1111 = vld [vmem:[%s1094 + $0x80] sm:$0xff]
      %v1112 = vld [vmem:[%s1094 + $0x88] sm:$0x1]
      %1114 = vset.pattern.permute.xlu0 0
      %1115 = vperm.xlu0 %1114, %v1095
      %v1116 = vpop.permute.xlu0 %1115
      %1119 = vset.pattern.permute.xlu0 0
      %1120 = vperm.xlu0 %1119, %v1096
      %v1121 = vpop.permute.xlu0 %1120
      %1124 = vset.pattern.permute.xlu0 0
      %1125 = vperm.xlu0 %1124, %v1097
      %v1126 = vpop.permute.xlu0 %1125
      %1129 = vset.pattern.permute.xlu0 0
      %1130 = vperm.xlu0 %1129, %v1098
      %v1131 = vpop.permute.xlu0 %1130
      %1134 = vset.pattern.permute.xlu0 0
      %1135 = vperm.xlu0 %1134, %v1099
      %v1136 = vpop.permute.xlu0 %1135
      %1139 = vset.pattern.permute.xlu0 0
      %1140 = vperm.xlu0 %1139, %v1100
      %v1141 = vpop.permute.xlu0 %1140
      %1144 = vset.pattern.permute.xlu0 0
      %1145 = vperm.xlu0 %1144, %v1101
      %v1146 = vpop.permute.xlu0 %1145
      %1149 = vset.pattern.permute.xlu0 0
      %1150 = vperm.xlu0 %1149, %v1102
      %v1151 = vpop.permute.xlu0 %1150
      %1154 = vset.pattern.permute.xlu0 0
      %1155 = vperm.xlu0 %1154, %v1103
      %v1156 = vpop.permute.xlu0 %1155
      %1159 = vset.pattern.permute.xlu0 0
      %1160 = vperm.xlu0 %1159, %v1104
      %v1161 = vpop.permute.xlu0 %1160
      %1164 = vset.pattern.permute.xlu0 0
      %1165 = vperm.xlu0 %1164, %v1105
      %v1166 = vpop.permute.xlu0 %1165
      %1169 = vset.pattern.permute.xlu0 0
      %1170 = vperm.xlu0 %1169, %v1106
      %v1171 = vpop.permute.xlu0 %1170
      %1174 = vset.pattern.permute.xlu0 0
      %1175 = vperm.xlu0 %1174, %v1107
      %v1176 = vpop.permute.xlu0 %1175
      %1179 = vset.pattern.permute.xlu0 0
      %1180 = vperm.xlu0 %1179, %v1108
      %v1181 = vpop.permute.xlu0 %1180
      %1184 = vset.pattern.permute.xlu0 0
      %1185 = vperm.xlu0 %1184, %v1109
      %v1186 = vpop.permute.xlu0 %1185
      %1189 = vset.pattern.permute.xlu0 0
      %1190 = vperm.xlu0 %1189, %v1110
      %v1191 = vpop.permute.xlu0 %1190
      %1194 = vset.pattern.permute.xlu0 0
      %1195 = vperm.xlu0 %1194, %v1111
      %v1196 = vpop.permute.xlu0 %1195
      %1199 = vset.pattern.permute.xlu0 0
      %1200 = vperm.xlu0 %1199, %v1112
      %v1201 = vpop.permute.xlu0 %1200
      %v1203 = vmul.f32 %v1076, %v1116
      %v1204 = vmul.f32 %v1077, %v1121
      %v1205 = vmul.f32 %v1078, %v1126
      %v1206 = vmul.f32 %v1079, %v1131
      %v1207 = vmul.f32 %v1080, %v1136
      %v1208 = vmul.f32 %v1081, %v1141
      %v1209 = vmul.f32 %v1082, %v1146
      %v1210 = vmul.f32 %v1083, %v1151
      %v1211 = vmul.f32 %v1084, %v1156
      %v1212 = vmul.f32 %v1085, %v1161
      %v1213 = vmul.f32 %v1086, %v1166
      %v1214 = vmul.f32 %v1087, %v1171
      %v1215 = vmul.f32 %v1088, %v1176
      %v1216 = vmul.f32 %v1089, %v1181
      %v1217 = vmul.f32 %v1090, %v1186
      %v1218 = vmul.f32 %v1091, %v1191
      %v1219 = vmul.f32 %v1092, %v1196
      %v1220 = vmul.f32 %v1093, %v1201
      %s1221 = scalar_lea.vmem [#allocation2], 432
      %1222 = vst [vmem:[%s1221] sm:$0xff] %v1203
      %1223 = vst [vmem:[%s1221 + $0x8] sm:$0x1] %v1204
      %1224 = vst [vmem:[%s1221 + $0x10] sm:$0xff] %v1205
      %1225 = vst [vmem:[%s1221 + $0x18] sm:$0x1] %v1206
      %1226 = vst [vmem:[%s1221 + $0x20] sm:$0xff] %v1207
      %1227 = vst [vmem:[%s1221 + $0x28] sm:$0x1] %v1208
      %1228 = vst [vmem:[%s1221 + $0x30] sm:$0xff] %v1209
      %1229 = vst [vmem:[%s1221 + $0x38] sm:$0x1] %v1210
      %1230 = vst [vmem:[%s1221 + $0x40] sm:$0xff] %v1211
      %1231 = vst [vmem:[%s1221 + $0x48] sm:$0x1] %v1212
      %1232 = vst [vmem:[%s1221 + $0x50] sm:$0xff] %v1213
      %1233 = vst [vmem:[%s1221 + $0x58] sm:$0x1] %v1214
      %1234 = vst [vmem:[%s1221 + $0x60] sm:$0xff] %v1215
      %1235 = vst [vmem:[%s1221 + $0x68] sm:$0x1] %v1216
      %1236 = vst [vmem:[%s1221 + $0x70] sm:$0xff] %v1217
      %1237 = vst [vmem:[%s1221 + $0x78] sm:$0x1] %v1218
      %1238 = vst [vmem:[%s1221 + $0x80] sm:$0xff] %v1219
      %1239 = vst [vmem:[%s1221 + $0x88] sm:$0x1] %v1220
      %1240 = vst [vmem:[#allocation3] sm:$0xff] 0.0
      %1241 = vst [vmem:[#allocation3 + $0x8] sm:$0xff] 0.0
      %1242 = vst [vmem:[#allocation3 + $0x10] sm:$0xff] 0.0
      %1243 = vst [vmem:[#allocation3 + $0x18] sm:$0xff] 0.0
      %1244 = vst [vmem:[#allocation3 + $0x20] sm:$0xff] 0.0
      %1245 = vst [vmem:[#allocation3 + $0x28] sm:$0xff] 0.0
      %1246 = vst [vmem:[#allocation3 + $0x30] sm:$0xff] 0.0
      %1247 = vst [vmem:[#allocation3 + $0x38] sm:$0xff] 0.0
      %v1248 = vld [vmem:[#allocation2] sm:$0xff]
      %v1249 = vld [vmem:[#allocation2 + $0x10] sm:$0xff]
      %v1250 = vld [vmem:[#allocation2 + $0x20] sm:$0xff]
      %v1251 = vld [vmem:[#allocation2 + $0x30] sm:$0xff]
      %v1252 = vld [vmem:[#allocation2 + $0x40] sm:$0xff]
      %v1253 = vld [vmem:[#allocation2 + $0x50] sm:$0xff]
      %v1254 = vld [vmem:[#allocation2 + $0x60] sm:$0xff]
      %v1255 = vld [vmem:[#allocation2 + $0x70] sm:$0xff]
      %v1256 = vpack.c.bf16 %v1249, %v1248
      %v1257 = vpack.c.bf16 %v1251, %v1250
      %v1258 = vpack.c.bf16 %v1253, %v1252
      %v1259 = vpack.c.bf16 %v1255, %v1254
      %v1260 = vld [vmem:[#allocation3] sm:$0xff]
      %v1261 = vld [vmem:[#allocation3 + $0x8] sm:$0xff]
      %v1262 = vld [vmem:[#allocation3 + $0x10] sm:$0xff]
      %v1263 = vld [vmem:[#allocation3 + $0x18] sm:$0xff]
      %v1264 = vld [vmem:[#allocation3 + $0x20] sm:$0xff]
      %v1265 = vld [vmem:[#allocation3 + $0x28] sm:$0xff]
      %v1266 = vld [vmem:[#allocation3 + $0x30] sm:$0xff]
      %v1267 = vld [vmem:[#allocation3 + $0x38] sm:$0xff]
      %v1268 = vld [vmem:[%s338] sm:$0xf]
      %v1269 = vld [vmem:[%s338 + $0x4] sm:$0xf]
      %v1270 = vld [vmem:[%s338 + $0x8] sm:$0xf]
      %v1271 = vld [vmem:[%s338 + $0xc] sm:$0xf]
      %v1272 = vld [vmem:[%s338 + $0x10] sm:$0xf]
      %v1273 = vld [vmem:[%s338 + $0x14] sm:$0xf]
      %v1274 = vld [vmem:[%s338 + $0x18] sm:$0xf]
      %v1275 = vld [vmem:[%s338 + $0x1c] sm:$0xf]
      %v1276 = vld [vmem:[%s338 + $0x20] sm:$0xf]
      %v1277 = vld [vmem:[%s338 + $0x24] sm:$0xf]
      %v1278 = vld [vmem:[%s338 + $0x28] sm:$0xf]
      %v1279 = vld [vmem:[%s338 + $0x2c] sm:$0xf]
      %v1280 = vld [vmem:[%s338 + $0x30] sm:$0xf]
      %v1281 = vld [vmem:[%s338 + $0x34] sm:$0xf]
      %v1282 = vld [vmem:[%s338 + $0x38] sm:$0xf]
      %v1283 = vld [vmem:[%s338 + $0x3c] sm:$0xf]
      %v1300 = vunpack.c.l.b16 %v1268
      %v1301 = vunpack.c.l.b16 %v1269
      %v1302 = vunpack.c.l.b16 %v1270
      %v1303 = vunpack.c.l.b16 %v1271
      %v1304 = vunpack.c.l.b16 %v1272
      %v1305 = vunpack.c.l.b16 %v1273
      %v1306 = vunpack.c.l.b16 %v1274
      %v1307 = vunpack.c.l.b16 %v1275
      %v1308 = vunpack.c.l.b16 %v1276
      %v1309 = vunpack.c.l.b16 %v1277
      %v1310 = vunpack.c.l.b16 %v1278
      %v1311 = vunpack.c.l.b16 %v1279
      %v1312 = vunpack.c.l.b16 %v1280
      %v1313 = vunpack.c.l.b16 %v1281
      %v1314 = vunpack.c.l.b16 %v1282
      %v1315 = vunpack.c.l.b16 %v1283
      %v1316 = vpack.c.b16 %v1301, %v1300
      %v1317 = vpack.c.b16 %v1303, %v1302
      %v1318 = vpack.c.b16 %v1305, %v1304
      %v1319 = vpack.c.b16 %v1307, %v1306
      %v1320 = vpack.c.b16 %v1309, %v1308
      %v1321 = vpack.c.b16 %v1311, %v1310
      %v1322 = vpack.c.b16 %v1313, %v1312
      %v1323 = vpack.c.b16 %v1315, %v1314
      %1332 = vmatpush.bf16.msra.mxu0 %v1323
      %1333 = vmatpush.bf16.msra.mxu0 %v1322
      %1334 = vmatpush.bf16.msra.mxu0 %v1321
      %1335 = vmatpush.bf16.msra.mxu0 %v1320
      %1336 = vmatpush.bf16.msra.mxu0 %v1319
      %1337 = vmatpush.bf16.msra.mxu0 %v1318
      %1338 = vmatpush.bf16.msra.mxu0 %v1317
      %1339 = vmatpush.bf16.msra.mxu0 %v1316
      %1340 = vmatmul.bf16.gmra.mxu0 %v1256
      %v1341 = vpop.f32.mrf.mxu0
      %v1342 = vadd.f32 0.0, %v1341
      %v1343 = vpop.f32.mrf.mxu0
      %v1344 = vadd.f32 0.0, %v1343
      %1345 = vmatmul.bf16.gmra.mxu0 %v1257
      %v1346 = vpop.f32.mrf.mxu0
      %v1347 = vadd.f32 0.0, %v1346
      %v1348 = vpop.f32.mrf.mxu0
      %v1349 = vadd.f32 0.0, %v1348
      %1350 = vmatmul.bf16.gmra.mxu0 %v1258
      %v1351 = vpop.f32.mrf.mxu0
      %v1352 = vadd.f32 0.0, %v1351
      %v1353 = vpop.f32.mrf.mxu0
      %v1354 = vadd.f32 0.0, %v1353
      %1355 = vmatmul.bf16.gmra.mxu0 %v1259
      %v1356 = vpop.f32.mrf.mxu0
      %v1357 = vadd.f32 0.0, %v1356
      %v1358 = vpop.f32.mrf.mxu0
      %v1359 = vadd.f32 0.0, %v1358
      %1360 = vdwg.mxu0
      %v1361 = vadd.f32 %v1260, %v1342
      %v1362 = vadd.f32 %v1261, %v1344
      %v1363 = vadd.f32 %v1262, %v1347
      %v1364 = vadd.f32 %v1263, %v1349
      %v1365 = vadd.f32 %v1264, %v1352
      %v1366 = vadd.f32 %v1265, %v1354
      %v1367 = vadd.f32 %v1266, %v1357
      %v1368 = vadd.f32 %v1267, %v1359
      %1369 = vst [vmem:[#allocation3] sm:$0xff] %v1361
      %1370 = vst [vmem:[#allocation3 + $0x8] sm:$0xff] %v1362
      %1371 = vst [vmem:[#allocation3 + $0x10] sm:$0xff] %v1363
      %1372 = vst [vmem:[#allocation3 + $0x18] sm:$0xff] %v1364
      %1373 = vst [vmem:[#allocation3 + $0x20] sm:$0xff] %v1365
      %1374 = vst [vmem:[#allocation3 + $0x28] sm:$0xff] %v1366
      %1375 = vst [vmem:[#allocation3 + $0x30] sm:$0xff] %v1367
      %1376 = vst [vmem:[#allocation3 + $0x38] sm:$0xff] %v1368
      %v1377 = vld [vmem:[%s783] sm:$0xff]
      %v1378 = vld [vmem:[%s783 + $0x10] sm:$0xff]
      %v1379 = vld [vmem:[%s783 + $0x20] sm:$0xff]
      %v1380 = vld [vmem:[%s783 + $0x30] sm:$0xff]
      %v1381 = vld [vmem:[%s783 + $0x40] sm:$0xff]
      %v1382 = vld [vmem:[%s783 + $0x50] sm:$0xff]
      %v1383 = vld [vmem:[%s783 + $0x60] sm:$0xff]
      %v1384 = vld [vmem:[%s783 + $0x70] sm:$0xff]
      %v1385 = vpack.c.bf16 %v1378, %v1377
      %v1386 = vpack.c.bf16 %v1380, %v1379
      %v1387 = vpack.c.bf16 %v1382, %v1381
      %v1388 = vpack.c.bf16 %v1384, %v1383
      %v1389 = vld [vmem:[#allocation3] sm:$0xff]
      %v1390 = vld [vmem:[#allocation3 + $0x8] sm:$0xff]
      %v1391 = vld [vmem:[#allocation3 + $0x10] sm:$0xff]
      %v1392 = vld [vmem:[#allocation3 + $0x18] sm:$0xff]
      %v1393 = vld [vmem:[#allocation3 + $0x20] sm:$0xff]
      %v1394 = vld [vmem:[#allocation3 + $0x28] sm:$0xff]
      %v1395 = vld [vmem:[#allocation3 + $0x30] sm:$0xff]
      %v1396 = vld [vmem:[#allocation3 + $0x38] sm:$0xff]
      %s1397 = scalar_lea.vmem %s338, 64
      %v1398 = vld [vmem:[%s1397] sm:$0xf]
      %v1399 = vld [vmem:[%s1397 + $0x4] sm:$0xf]
      %v1400 = vld [vmem:[%s1397 + $0x8] sm:$0xf]
      %v1401 = vld [vmem:[%s1397 + $0xc] sm:$0xf]
      %v1402 = vld [vmem:[%s1397 + $0x10] sm:$0xf]
      %v1403 = vld [vmem:[%s1397 + $0x14] sm:$0xf]
      %v1404 = vld [vmem:[%s1397 + $0x18] sm:$0xf]
      %v1405 = vld [vmem:[%s1397 + $0x1c] sm:$0xf]
      %v1406 = vld [vmem:[%s1397 + $0x20] sm:$0xf]
      %v1407 = vld [vmem:[%s1397 + $0x24] sm:$0xf]
      %v1408 = vld [vmem:[%s1397 + $0x28] sm:$0xf]
      %v1409 = vld [vmem:[%s1397 + $0x2c] sm:$0xf]
      %v1410 = vld [vmem:[%s1397 + $0x30] sm:$0xf]
      %v1411 = vld [vmem:[%s1397 + $0x34] sm:$0xf]
      %v1412 = vld [vmem:[%s1397 + $0x38] sm:$0xf]
      %v1413 = vld [vmem:[%s1397 + $0x3c] sm:$0xf]
      %v1430 = vunpack.c.l.b16 %v1398
      %v1431 = vunpack.c.l.b16 %v1399
      %v1432 = vunpack.c.l.b16 %v1400
      %v1433 = vunpack.c.l.b16 %v1401
      %v1434 = vunpack.c.l.b16 %v1402
      %v1435 = vunpack.c.l.b16 %v1403
      %v1436 = vunpack.c.l.b16 %v1404
      %v1437 = vunpack.c.l.b16 %v1405
      %v1438 = vunpack.c.l.b16 %v1406
      %v1439 = vunpack.c.l.b16 %v1407
      %v1440 = vunpack.c.l.b16 %v1408
      %v1441 = vunpack.c.l.b16 %v1409
      %v1442 = vunpack.c.l.b16 %v1410
      %v1443 = vunpack.c.l.b16 %v1411
      %v1444 = vunpack.c.l.b16 %v1412
      %v1445 = vunpack.c.l.b16 %v1413
      %v1446 = vpack.c.b16 %v1431, %v1430
      %v1447 = vpack.c.b16 %v1433, %v1432
      %v1448 = vpack.c.b16 %v1435, %v1434
      %v1449 = vpack.c.b16 %v1437, %v1436
      %v1450 = vpack.c.b16 %v1439, %v1438
      %v1451 = vpack.c.b16 %v1441, %v1440
      %v1452 = vpack.c.b16 %v1443, %v1442
      %v1453 = vpack.c.b16 %v1445, %v1444
      %1462 = vmatpush.bf16.msra.mxu0 %v1453
      %1463 = vmatpush.bf16.msra.mxu0 %v1452
      %1464 = vmatpush.bf16.msra.mxu0 %v1451
      %1465 = vmatpush.bf16.msra.mxu0 %v1450
      %1466 = vmatpush.bf16.msra.mxu0 %v1449
      %1467 = vmatpush.bf16.msra.mxu0 %v1448
      %1468 = vmatpush.bf16.msra.mxu0 %v1447
      %1469 = vmatpush.bf16.msra.mxu0 %v1446
      %1470 = vmatmul.bf16.gmra.mxu0 %v1385
      %v1471 = vpop.f32.mrf.mxu0
      %v1472 = vadd.f32 0.0, %v1471
      %v1473 = vpop.f32.mrf.mxu0
      %v1474 = vadd.f32 0.0, %v1473
      %1475 = vmatmul.bf16.gmra.mxu0 %v1386
      %v1476 = vpop.f32.mrf.mxu0
      %v1477 = vadd.f32 0.0, %v1476
      %v1478 = vpop.f32.mrf.mxu0
      %v1479 = vadd.f32 0.0, %v1478
      %1480 = vmatmul.bf16.gmra.mxu0 %v1387
      %v1481 = vpop.f32.mrf.mxu0
      %v1482 = vadd.f32 0.0, %v1481
      %v1483 = vpop.f32.mrf.mxu0
      %v1484 = vadd.f32 0.0, %v1483
      %1485 = vmatmul.bf16.gmra.mxu0 %v1388
      %v1486 = vpop.f32.mrf.mxu0
      %v1487 = vadd.f32 0.0, %v1486
      %v1488 = vpop.f32.mrf.mxu0
      %v1489 = vadd.f32 0.0, %v1488
      %1490 = vdwg.mxu0
      %v1491 = vadd.f32 %v1389, %v1472
      %v1492 = vadd.f32 %v1390, %v1474
      %v1493 = vadd.f32 %v1391, %v1477
      %v1494 = vadd.f32 %v1392, %v1479
      %v1495 = vadd.f32 %v1393, %v1482
      %v1496 = vadd.f32 %v1394, %v1484
      %v1497 = vadd.f32 %v1395, %v1487
      %v1498 = vadd.f32 %v1396, %v1489
      %1499 = vst [vmem:[#allocation3] sm:$0xff] %v1491
      %1500 = vst [vmem:[#allocation3 + $0x8] sm:$0xff] %v1492
      %1501 = vst [vmem:[#allocation3 + $0x10] sm:$0xff] %v1493
      %1502 = vst [vmem:[#allocation3 + $0x18] sm:$0xff] %v1494
      %1503 = vst [vmem:[#allocation3 + $0x20] sm:$0xff] %v1495
      %1504 = vst [vmem:[#allocation3 + $0x28] sm:$0xff] %v1496
      %1505 = vst [vmem:[#allocation3 + $0x30] sm:$0xff] %v1497
      %1506 = vst [vmem:[#allocation3 + $0x38] sm:$0xff] %v1498
      %v1507 = vld [vmem:[#allocation2 + $0x1] sm:$0xff]
      %v1508 = vld [vmem:[#allocation2 + $0x11] sm:$0xff]
      %v1509 = vld [vmem:[#allocation2 + $0x21] sm:$0xff]
      %v1510 = vld [vmem:[#allocation2 + $0x31] sm:$0xff]
      %v1511 = vld [vmem:[#allocation2 + $0x41] sm:$0xff]
      %v1512 = vld [vmem:[#allocation2 + $0x51] sm:$0xff]
      %v1513 = vld [vmem:[#allocation2 + $0x61] sm:$0xff]
      %v1514 = vld [vmem:[#allocation2 + $0x71] sm:$0xff]
      %v1515 = vpack.c.bf16 %v1508, %v1507
      %v1516 = vpack.c.bf16 %v1510, %v1509
      %v1517 = vpack.c.bf16 %v1512, %v1511
      %v1518 = vpack.c.bf16 %v1514, %v1513
      %v1519 = vld [vmem:[#allocation3] sm:$0xff]
      %v1520 = vld [vmem:[#allocation3 + $0x8] sm:$0xff]
      %v1521 = vld [vmem:[#allocation3 + $0x10] sm:$0xff]
      %v1522 = vld [vmem:[#allocation3 + $0x18] sm:$0xff]
      %v1523 = vld [vmem:[#allocation3 + $0x20] sm:$0xff]
      %v1524 = vld [vmem:[#allocation3 + $0x28] sm:$0xff]
      %v1525 = vld [vmem:[#allocation3 + $0x30] sm:$0xff]
      %v1526 = vld [vmem:[#allocation3 + $0x38] sm:$0xff]
      %s1527 = scalar_lea.vmem %s338, 128
      %v1528 = vld [vmem:[%s1527] sm:$0xf]
      %v1529 = vld [vmem:[%s1527 + $0x4] sm:$0xf]
      %v1530 = vld [vmem:[%s1527 + $0x8] sm:$0xf]
      %v1531 = vld [vmem:[%s1527 + $0xc] sm:$0xf]
      %v1532 = vld [vmem:[%s1527 + $0x10] sm:$0xf]
      %v1533 = vld [vmem:[%s1527 + $0x14] sm:$0xf]
      %v1534 = vld [vmem:[%s1527 + $0x18] sm:$0xf]
      %v1535 = vld [vmem:[%s1527 + $0x1c] sm:$0xf]
      %v1536 = vld [vmem:[%s1527 + $0x20] sm:$0xf]
      %v1537 = vld [vmem:[%s1527 + $0x24] sm:$0xf]
      %v1538 = vld [vmem:[%s1527 + $0x28] sm:$0xf]
      %v1539 = vld [vmem:[%s1527 + $0x2c] sm:$0xf]
      %v1540 = vld [vmem:[%s1527 + $0x30] sm:$0xf]
      %v1541 = vld [vmem:[%s1527 + $0x34] sm:$0xf]
      %v1542 = vld [vmem:[%s1527 + $0x38] sm:$0xf]
      %v1543 = vld [vmem:[%s1527 + $0x3c] sm:$0xf]
      %v1560 = vunpack.c.l.b16 %v1528
      %v1561 = vunpack.c.l.b16 %v1529
      %v1562 = vunpack.c.l.b16 %v1530
      %v1563 = vunpack.c.l.b16 %v1531
      %v1564 = vunpack.c.l.b16 %v1532
      %v1565 = vunpack.c.l.b16 %v1533
      %v1566 = vunpack.c.l.b16 %v1534
      %v1567 = vunpack.c.l.b16 %v1535
      %v1568 = vunpack.c.l.b16 %v1536
      %v1569 = vunpack.c.l.b16 %v1537
      %v1570 = vunpack.c.l.b16 %v1538
      %v1571 = vunpack.c.l.b16 %v1539
      %v1572 = vunpack.c.l.b16 %v1540
      %v1573 = vunpack.c.l.b16 %v1541
      %v1574 = vunpack.c.l.b16 %v1542
      %v1575 = vunpack.c.l.b16 %v1543
      %v1576 = vpack.c.b16 %v1561, %v1560
      %v1577 = vpack.c.b16 %v1563, %v1562
      %v1578 = vpack.c.b16 %v1565, %v1564
      %v1579 = vpack.c.b16 %v1567, %v1566
      %v1580 = vpack.c.b16 %v1569, %v1568
      %v1581 = vpack.c.b16 %v1571, %v1570
      %v1582 = vpack.c.b16 %v1573, %v1572
      %v1583 = vpack.c.b16 %v1575, %v1574
      %1592 = vmatpush.bf16.msra.mxu0 %v1583
      %1593 = vmatpush.bf16.msra.mxu0 %v1582
      %1594 = vmatpush.bf16.msra.mxu0 %v1581
      %1595 = vmatpush.bf16.msra.mxu0 %v1580
      %1596 = vmatpush.bf16.msra.mxu0 %v1579
      %1597 = vmatpush.bf16.msra.mxu0 %v1578
      %1598 = vmatpush.bf16.msra.mxu0 %v1577
      %1599 = vmatpush.bf16.msra.mxu0 %v1576
      %1600 = vmatmul.bf16.gmra.mxu0 %v1515
      %v1601 = vpop.f32.mrf.mxu0
      %v1602 = vadd.f32 0.0, %v1601
      %v1603 = vpop.f32.mrf.mxu0
      %v1604 = vadd.f32 0.0, %v1603
      %1605 = vmatmul.bf16.gmra.mxu0 %v1516
      %v1606 = vpop.f32.mrf.mxu0
      %v1607 = vadd.f32 0.0, %v1606
      %v1608 = vpop.f32.mrf.mxu0
      %v1609 = vadd.f32 0.0, %v1608
      %1610 = vmatmul.bf16.gmra.mxu0 %v1517
      %v1611 = vpop.f32.mrf.mxu0
      %v1612 = vadd.f32 0.0, %v1611
      %v1613 = vpop.f32.mrf.mxu0
      %v1614 = vadd.f32 0.0, %v1613
      %1615 = vmatmul.bf16.gmra.mxu0 %v1518
      %v1616 = vpop.f32.mrf.mxu0
      %v1617 = vadd.f32 0.0, %v1616
      %v1618 = vpop.f32.mrf.mxu0
      %v1619 = vadd.f32 0.0, %v1618
      %1620 = vdwg.mxu0
      %v1621 = vadd.f32 %v1519, %v1602
      %v1622 = vadd.f32 %v1520, %v1604
      %v1623 = vadd.f32 %v1521, %v1607
      %v1624 = vadd.f32 %v1522, %v1609
      %v1625 = vadd.f32 %v1523, %v1612
      %v1626 = vadd.f32 %v1524, %v1614
      %v1627 = vadd.f32 %v1525, %v1617
      %v1628 = vadd.f32 %v1526, %v1619
      %1629 = vst [vmem:[#allocation3] sm:$0xff] %v1621
      %1630 = vst [vmem:[#allocation3 + $0x8] sm:$0xff] %v1622
      %1631 = vst [vmem:[#allocation3 + $0x10] sm:$0xff] %v1623
      %1632 = vst [vmem:[#allocation3 + $0x18] sm:$0xff] %v1624
      %1633 = vst [vmem:[#allocation3 + $0x20] sm:$0xff] %v1625
      %1634 = vst [vmem:[#allocation3 + $0x28] sm:$0xff] %v1626
      %1635 = vst [vmem:[#allocation3 + $0x30] sm:$0xff] %v1627
      %1636 = vst [vmem:[#allocation3 + $0x38] sm:$0xff] %v1628
      %v1637 = vld [vmem:[%s1002] sm:$0xff]
      %v1638 = vld [vmem:[%s1002 + $0x10] sm:$0xff]
      %v1639 = vld [vmem:[%s1002 + $0x20] sm:$0xff]
      %v1640 = vld [vmem:[%s1002 + $0x30] sm:$0xff]
      %v1641 = vld [vmem:[%s1002 + $0x40] sm:$0xff]
      %v1642 = vld [vmem:[%s1002 + $0x50] sm:$0xff]
      %v1643 = vld [vmem:[%s1002 + $0x60] sm:$0xff]
      %v1644 = vld [vmem:[%s1002 + $0x70] sm:$0xff]
      %v1645 = vpack.c.bf16 %v1638, %v1637
      %v1646 = vpack.c.bf16 %v1640, %v1639
      %v1647 = vpack.c.bf16 %v1642, %v1641
      %v1648 = vpack.c.bf16 %v1644, %v1643
      %v1649 = vld [vmem:[#allocation3] sm:$0xff]
      %v1650 = vld [vmem:[#allocation3 + $0x8] sm:$0xff]
      %v1651 = vld [vmem:[#allocation3 + $0x10] sm:$0xff]
      %v1652 = vld [vmem:[#allocation3 + $0x18] sm:$0xff]
      %v1653 = vld [vmem:[#allocation3 + $0x20] sm:$0xff]
      %v1654 = vld [vmem:[#allocation3 + $0x28] sm:$0xff]
      %v1655 = vld [vmem:[#allocation3 + $0x30] sm:$0xff]
      %v1656 = vld [vmem:[#allocation3 + $0x38] sm:$0xff]
      %s1657 = scalar_lea.vmem %s338, 192
      %v1658 = vld [vmem:[%s1657] sm:$0xf]
      %v1659 = vld [vmem:[%s1657 + $0x4] sm:$0xf]
      %v1660 = vld [vmem:[%s1657 + $0x8] sm:$0xf]
      %v1661 = vld [vmem:[%s1657 + $0xc] sm:$0xf]
      %v1662 = vld [vmem:[%s1657 + $0x10] sm:$0xf]
      %v1663 = vld [vmem:[%s1657 + $0x14] sm:$0xf]
      %v1664 = vld [vmem:[%s1657 + $0x18] sm:$0xf]
      %v1665 = vld [vmem:[%s1657 + $0x1c] sm:$0xf]
      %v1666 = vld [vmem:[%s1657 + $0x20] sm:$0xf]
      %v1667 = vld [vmem:[%s1657 + $0x24] sm:$0xf]
      %v1668 = vld [vmem:[%s1657 + $0x28] sm:$0xf]
      %v1669 = vld [vmem:[%s1657 + $0x2c] sm:$0xf]
      %v1670 = vld [vmem:[%s1657 + $0x30] sm:$0xf]
      %v1671 = vld [vmem:[%s1657 + $0x34] sm:$0xf]
      %v1672 = vld [vmem:[%s1657 + $0x38] sm:$0xf]
      %v1673 = vld [vmem:[%s1657 + $0x3c] sm:$0xf]
      %v1690 = vunpack.c.l.b16 %v1658
      %v1691 = vunpack.c.l.b16 %v1659
      %v1692 = vunpack.c.l.b16 %v1660
      %v1693 = vunpack.c.l.b16 %v1661
      %v1694 = vunpack.c.l.b16 %v1662
      %v1695 = vunpack.c.l.b16 %v1663
      %v1696 = vunpack.c.l.b16 %v1664
      %v1697 = vunpack.c.l.b16 %v1665
      %v1698 = vunpack.c.l.b16 %v1666
      %v1699 = vunpack.c.l.b16 %v1667
      %v1700 = vunpack.c.l.b16 %v1668
      %v1701 = vunpack.c.l.b16 %v1669
      %v1702 = vunpack.c.l.b16 %v1670
      %v1703 = vunpack.c.l.b16 %v1671
      %v1704 = vunpack.c.l.b16 %v1672
      %v1705 = vunpack.c.l.b16 %v1673
      %v1706 = vpack.c.b16 %v1691, %v1690
      %v1707 = vpack.c.b16 %v1693, %v1692
      %v1708 = vpack.c.b16 %v1695, %v1694
      %v1709 = vpack.c.b16 %v1697, %v1696
      %v1710 = vpack.c.b16 %v1699, %v1698
      %v1711 = vpack.c.b16 %v1701, %v1700
      %v1712 = vpack.c.b16 %v1703, %v1702
      %v1713 = vpack.c.b16 %v1705, %v1704
      %1722 = vmatpush.bf16.msra.mxu0 %v1713
      %1723 = vmatpush.bf16.msra.mxu0 %v1712
      %1724 = vmatpush.bf16.msra.mxu0 %v1711
      %1725 = vmatpush.bf16.msra.mxu0 %v1710
      %1726 = vmatpush.bf16.msra.mxu0 %v1709
      %1727 = vmatpush.bf16.msra.mxu0 %v1708
      %1728 = vmatpush.bf16.msra.mxu0 %v1707
      %1729 = vmatpush.bf16.msra.mxu0 %v1706
      %1730 = vmatmul.bf16.gmra.mxu0 %v1645
      %v1731 = vpop.f32.mrf.mxu0
      %v1732 = vadd.f32 0.0, %v1731
      %v1733 = vpop.f32.mrf.mxu0
      %v1734 = vadd.f32 0.0, %v1733
      %1735 = vmatmul.bf16.gmra.mxu0 %v1646
      %v1736 = vpop.f32.mrf.mxu0
      %v1737 = vadd.f32 0.0, %v1736
      %v1738 = vpop.f32.mrf.mxu0
      %v1739 = vadd.f32 0.0, %v1738
      %1740 = vmatmul.bf16.gmra.mxu0 %v1647
      %v1741 = vpop.f32.mrf.mxu0
      %v1742 = vadd.f32 0.0, %v1741
      %v1743 = vpop.f32.mrf.mxu0
      %v1744 = vadd.f32 0.0, %v1743
      %1745 = vmatmul.bf16.gmra.mxu0 %v1648
      %v1746 = vpop.f32.mrf.mxu0
      %v1747 = vadd.f32 0.0, %v1746
      %v1748 = vpop.f32.mrf.mxu0
      %v1749 = vadd.f32 0.0, %v1748
      %1750 = vdwg.mxu0
      %v1751 = vadd.f32 %v1649, %v1732
      %v1752 = vadd.f32 %v1650, %v1734
      %v1753 = vadd.f32 %v1651, %v1737
      %v1754 = vadd.f32 %v1652, %v1739
      %v1755 = vadd.f32 %v1653, %v1742
      %v1756 = vadd.f32 %v1654, %v1744
      %v1757 = vadd.f32 %v1655, %v1747
      %v1758 = vadd.f32 %v1656, %v1749
      %1759 = vst [vmem:[#allocation3] sm:$0xff] %v1751
      %1760 = vst [vmem:[#allocation3 + $0x8] sm:$0xff] %v1752
      %1761 = vst [vmem:[#allocation3 + $0x10] sm:$0xff] %v1753
      %1762 = vst [vmem:[#allocation3 + $0x18] sm:$0xff] %v1754
      %1763 = vst [vmem:[#allocation3 + $0x20] sm:$0xff] %v1755
      %1764 = vst [vmem:[#allocation3 + $0x28] sm:$0xff] %v1756
      %1765 = vst [vmem:[#allocation3 + $0x30] sm:$0xff] %v1757
      %1766 = vst [vmem:[#allocation3 + $0x38] sm:$0xff] %v1758
      %v1767 = vld [vmem:[%s1221] sm:$0xff]
      %v1768 = vld [vmem:[%s1221 + $0x10] sm:$0xff]
      %v1769 = vld [vmem:[%s1221 + $0x20] sm:$0xff]
      %v1770 = vld [vmem:[%s1221 + $0x30] sm:$0xff]
      %v1771 = vld [vmem:[%s1221 + $0x40] sm:$0xff]
      %v1772 = vld [vmem:[%s1221 + $0x50] sm:$0xff]
      %v1773 = vld [vmem:[%s1221 + $0x60] sm:$0xff]
      %v1774 = vld [vmem:[%s1221 + $0x70] sm:$0xff]
      %v1775 = vpack.c.bf16 %v1768, %v1767
      %v1776 = vpack.c.bf16 %v1770, %v1769
      %v1777 = vpack.c.bf16 %v1772, %v1771
      %v1778 = vpack.c.bf16 %v1774, %v1773
      %v1779 = vld [vmem:[#allocation3] sm:$0xff]
      %v1780 = vld [vmem:[#allocation3 + $0x8] sm:$0xff]
      %v1781 = vld [vmem:[#allocation3 + $0x10] sm:$0xff]
      %v1782 = vld [vmem:[#allocation3 + $0x18] sm:$0xff]
      %v1783 = vld [vmem:[#allocation3 + $0x20] sm:$0xff]
      %v1784 = vld [vmem:[#allocation3 + $0x28] sm:$0xff]
      %v1785 = vld [vmem:[#allocation3 + $0x30] sm:$0xff]
      %v1786 = vld [vmem:[#allocation3 + $0x38] sm:$0xff]
      %s1787 = scalar_lea.vmem %s338, 256
      %v1788 = vld [vmem:[%s1787] sm:$0xf]
      %v1789 = vld [vmem:[%s1787 + $0x4] sm:$0xf]
      %v1790 = vld [vmem:[%s1787 + $0x8] sm:$0xf]
      %v1791 = vld [vmem:[%s1787 + $0xc] sm:$0xf]
      %v1792 = vld [vmem:[%s1787 + $0x10] sm:$0xf]
      %v1793 = vld [vmem:[%s1787 + $0x14] sm:$0xf]
      %v1794 = vld [vmem:[%s1787 + $0x18] sm:$0xf]
      %v1795 = vld [vmem:[%s1787 + $0x1c] sm:$0xf]
      %v1796 = vld [vmem:[%s1787 + $0x20] sm:$0xf]
      %v1797 = vld [vmem:[%s1787 + $0x24] sm:$0xf]
      %v1798 = vld [vmem:[%s1787 + $0x28] sm:$0xf]
      %v1799 = vld [vmem:[%s1787 + $0x2c] sm:$0xf]
      %v1800 = vld [vmem:[%s1787 + $0x30] sm:$0xf]
      %v1801 = vld [vmem:[%s1787 + $0x34] sm:$0xf]
      %v1802 = vld [vmem:[%s1787 + $0x38] sm:$0xf]
      %v1803 = vld [vmem:[%s1787 + $0x3c] sm:$0xf]
      %v1820 = vunpack.c.l.b16 %v1788
      %v1821 = vunpack.c.l.b16 %v1789
      %v1822 = vunpack.c.l.b16 %v1790
      %v1823 = vunpack.c.l.b16 %v1791
      %v1824 = vunpack.c.l.b16 %v1792
      %v1825 = vunpack.c.l.b16 %v1793
      %v1826 = vunpack.c.l.b16 %v1794
      %v1827 = vunpack.c.l.b16 %v1795
      %v1828 = vunpack.c.l.b16 %v1796
      %v1829 = vunpack.c.l.b16 %v1797
      %v1830 = vunpack.c.l.b16 %v1798
      %v1831 = vunpack.c.l.b16 %v1799
      %v1832 = vunpack.c.l.b16 %v1800
      %v1833 = vunpack.c.l.b16 %v1801
      %v1834 = vunpack.c.l.b16 %v1802
      %v1835 = vunpack.c.l.b16 %v1803
      %v1836 = vpack.c.b16 %v1821, %v1820
      %v1837 = vpack.c.b16 %v1823, %v1822
      %v1838 = vpack.c.b16 %v1825, %v1824
      %v1839 = vpack.c.b16 %v1827, %v1826
      %v1840 = vpack.c.b16 %v1829, %v1828
      %v1841 = vpack.c.b16 %v1831, %v1830
      %v1842 = vpack.c.b16 %v1833, %v1832
      %v1843 = vpack.c.b16 %v1835, %v1834
      %1852 = vmatpush.bf16.msra.mxu0 %v1843
      %1853 = vmatpush.bf16.msra.mxu0 %v1842
      %1854 = vmatpush.bf16.msra.mxu0 %v1841
      %1855 = vmatpush.bf16.msra.mxu0 %v1840
      %1856 = vmatpush.bf16.msra.mxu0 %v1839
      %1857 = vmatpush.bf16.msra.mxu0 %v1838
      %1858 = vmatpush.bf16.msra.mxu0 %v1837
      %1859 = vmatpush.bf16.msra.mxu0 %v1836
      %1860 = vmatmul.bf16.gmra.mxu0 %v1775
      %v1861 = vpop.f32.mrf.mxu0
      %v1862 = vadd.f32 0.0, %v1861
      %v1863 = vpop.f32.mrf.mxu0
      %v1864 = vadd.f32 0.0, %v1863
      %1865 = vmatmul.bf16.gmra.mxu0 %v1776
      %v1866 = vpop.f32.mrf.mxu0
      %v1867 = vadd.f32 0.0, %v1866
      %v1868 = vpop.f32.mrf.mxu0
      %v1869 = vadd.f32 0.0, %v1868
      %1870 = vmatmul.bf16.gmra.mxu0 %v1777
      %v1871 = vpop.f32.mrf.mxu0
      %v1872 = vadd.f32 0.0, %v1871
      %v1873 = vpop.f32.mrf.mxu0
      %v1874 = vadd.f32 0.0, %v1873
      %1875 = vmatmul.bf16.gmra.mxu0 %v1778
      %v1876 = vpop.f32.mrf.mxu0
      %v1877 = vadd.f32 0.0, %v1876
      %v1878 = vpop.f32.mrf.mxu0
      %v1879 = vadd.f32 0.0, %v1878
      %1880 = vdwg.mxu0
      %v1881 = vadd.f32 %v1779, %v1862
      %v1882 = vadd.f32 %v1780, %v1864
      %v1883 = vadd.f32 %v1781, %v1867
      %v1884 = vadd.f32 %v1782, %v1869
      %v1885 = vadd.f32 %v1783, %v1872
      %v1886 = vadd.f32 %v1784, %v1874
      %v1887 = vadd.f32 %v1785, %v1877
      %v1888 = vadd.f32 %v1786, %v1879
      %1889 = vst [vmem:[#allocation3] sm:$0xff] %v1881
      %1890 = vst [vmem:[#allocation3 + $0x8] sm:$0xff] %v1882
      %1891 = vst [vmem:[#allocation3 + $0x10] sm:$0xff] %v1883
      %1892 = vst [vmem:[#allocation3 + $0x18] sm:$0xff] %v1884
      %1893 = vst [vmem:[#allocation3 + $0x20] sm:$0xff] %v1885
      %1894 = vst [vmem:[#allocation3 + $0x28] sm:$0xff] %v1886
      %1895 = vst [vmem:[#allocation3 + $0x30] sm:$0xff] %v1887
      %1896 = vst [vmem:[#allocation3 + $0x38] sm:$0xff] %v1888
      %v1897 = vld [vmem:[%s1002 + $0x1] sm:$0xff]
      %v1898 = vld [vmem:[%s1002 + $0x11] sm:$0xff]
      %v1899 = vld [vmem:[%s1002 + $0x21] sm:$0xff]
      %v1900 = vld [vmem:[%s1002 + $0x31] sm:$0xff]
      %v1901 = vld [vmem:[%s1002 + $0x41] sm:$0xff]
      %v1902 = vld [vmem:[%s1002 + $0x51] sm:$0xff]
      %v1903 = vld [vmem:[%s1002 + $0x61] sm:$0xff]
      %v1904 = vld [vmem:[%s1002 + $0x71] sm:$0xff]
      %v1905 = vpack.c.bf16 %v1898, %v1897
      %v1906 = vpack.c.bf16 %v1900, %v1899
      %v1907 = vpack.c.bf16 %v1902, %v1901
      %v1908 = vpack.c.bf16 %v1904, %v1903
      %v1909 = vld [vmem:[#allocation3] sm:$0xff]
      %v1910 = vld [vmem:[#allocation3 + $0x8] sm:$0xff]
      %v1911 = vld [vmem:[#allocation3 + $0x10] sm:$0xff]
      %v1912 = vld [vmem:[#allocation3 + $0x18] sm:$0xff]
      %v1913 = vld [vmem:[#allocation3 + $0x20] sm:$0xff]
      %v1914 = vld [vmem:[#allocation3 + $0x28] sm:$0xff]
      %v1915 = vld [vmem:[#allocation3 + $0x30] sm:$0xff]
      %v1916 = vld [vmem:[#allocation3 + $0x38] sm:$0xff]
      %s1917 = scalar_lea.vmem %s338, 320
      %v1918 = vld [vmem:[%s1917] sm:$0xf]
      %v1919 = vld [vmem:[%s1917 + $0x4] sm:$0xf]
      %v1920 = vld [vmem:[%s1917 + $0x8] sm:$0xf]
      %v1921 = vld [vmem:[%s1917 + $0xc] sm:$0xf]
      %v1922 = vld [vmem:[%s1917 + $0x10] sm:$0xf]
      %v1923 = vld [vmem:[%s1917 + $0x14] sm:$0xf]
      %v1924 = vld [vmem:[%s1917 + $0x18] sm:$0xf]
      %v1925 = vld [vmem:[%s1917 + $0x1c] sm:$0xf]
      %v1926 = vld [vmem:[%s1917 + $0x20] sm:$0xf]
      %v1927 = vld [vmem:[%s1917 + $0x24] sm:$0xf]
      %v1928 = vld [vmem:[%s1917 + $0x28] sm:$0xf]
      %v1929 = vld [vmem:[%s1917 + $0x2c] sm:$0xf]
      %v1930 = vld [vmem:[%s1917 + $0x30] sm:$0xf]
      %v1931 = vld [vmem:[%s1917 + $0x34] sm:$0xf]
      %v1932 = vld [vmem:[%s1917 + $0x38] sm:$0xf]
      %v1933 = vld [vmem:[%s1917 + $0x3c] sm:$0xf]
      %v1950 = vunpack.c.l.b16 %v1918
      %v1951 = vunpack.c.l.b16 %v1919
      %v1952 = vunpack.c.l.b16 %v1920
      %v1953 = vunpack.c.l.b16 %v1921
      %v1954 = vunpack.c.l.b16 %v1922
      %v1955 = vunpack.c.l.b16 %v1923
      %v1956 = vunpack.c.l.b16 %v1924
      %v1957 = vunpack.c.l.b16 %v1925
      %v1958 = vunpack.c.l.b16 %v1926
      %v1959 = vunpack.c.l.b16 %v1927
      %v1960 = vunpack.c.l.b16 %v1928
      %v1961 = vunpack.c.l.b16 %v1929
      %v1962 = vunpack.c.l.b16 %v1930
      %v1963 = vunpack.c.l.b16 %v1931
      %v1964 = vunpack.c.l.b16 %v1932
      %v1965 = vunpack.c.l.b16 %v1933
      %v1966 = vpack.c.b16 %v1951, %v1950
      %v1967 = vpack.c.b16 %v1953, %v1952
      %v1968 = vpack.c.b16 %v1955, %v1954
      %v1969 = vpack.c.b16 %v1957, %v1956
      %v1970 = vpack.c.b16 %v1959, %v1958
      %v1971 = vpack.c.b16 %v1961, %v1960
      %v1972 = vpack.c.b16 %v1963, %v1962
      %v1973 = vpack.c.b16 %v1965, %v1964
      %1982 = vmatpush.bf16.msra.mxu0 %v1973
      %1983 = vmatpush.bf16.msra.mxu0 %v1972
      %1984 = vmatpush.bf16.msra.mxu0 %v1971
      %1985 = vmatpush.bf16.msra.mxu0 %v1970
      %1986 = vmatpush.bf16.msra.mxu0 %v1969
      %1987 = vmatpush.bf16.msra.mxu0 %v1968
      %1988 = vmatpush.bf16.msra.mxu0 %v1967
      %1989 = vmatpush.bf16.msra.mxu0 %v1966
      %1990 = vmatmul.bf16.gmra.mxu0 %v1905
      %v1991 = vpop.f32.mrf.mxu0
      %v1992 = vadd.f32 0.0, %v1991
      %v1993 = vpop.f32.mrf.mxu0
      %v1994 = vadd.f32 0.0, %v1993
      %1995 = vmatmul.bf16.gmra.mxu0 %v1906
      %v1996 = vpop.f32.mrf.mxu0
      %v1997 = vadd.f32 0.0, %v1996
      %v1998 = vpop.f32.mrf.mxu0
      %v1999 = vadd.f32 0.0, %v1998
      %2000 = vmatmul.bf16.gmra.mxu0 %v1907
      %v2001 = vpop.f32.mrf.mxu0
      %v2002 = vadd.f32 0.0, %v2001
      %v2003 = vpop.f32.mrf.mxu0
      %v2004 = vadd.f32 0.0, %v2003
      %2005 = vmatmul.bf16.gmra.mxu0 %v1908
      %v2006 = vpop.f32.mrf.mxu0
      %v2007 = vadd.f32 0.0, %v2006
      %v2008 = vpop.f32.mrf.mxu0
      %v2009 = vadd.f32 0.0, %v2008
      %2010 = vdwg.mxu0
      %v2011 = vadd.f32 %v1909, %v1992
      %v2012 = vadd.f32 %v1910, %v1994
      %v2013 = vadd.f32 %v1911, %v1997
      %v2014 = vadd.f32 %v1912, %v1999
      %v2015 = vadd.f32 %v1913, %v2002
      %v2016 = vadd.f32 %v1914, %v2004
      %v2017 = vadd.f32 %v1915, %v2007
      %v2018 = vadd.f32 %v1916, %v2009
      %2019 = vst [vmem:[#allocation3] sm:$0xff] %v2011
      %2020 = vst [vmem:[#allocation3 + $0x8] sm:$0xff] %v2012
      %2021 = vst [vmem:[#allocation3 + $0x10] sm:$0xff] %v2013
      %2022 = vst [vmem:[#allocation3 + $0x18] sm:$0xff] %v2014
      %2023 = vst [vmem:[#allocation3 + $0x20] sm:$0xff] %v2015
      %2024 = vst [vmem:[#allocation3 + $0x28] sm:$0xff] %v2016
      %2025 = vst [vmem:[#allocation3 + $0x30] sm:$0xff] %v2017
      %2026 = vst [vmem:[#allocation3 + $0x38] sm:$0xff] %v2018
      %s2027 = scalar_lea.vmem [#allocation2], 16
      %v2028 = vld [vmem:[%s2027] sm:$0xff]
      %v2029 = vld [vmem:[%s2027 + $0x10] sm:$0xff]
      %v2030 = vld [vmem:[%s2027 + $0x20] sm:$0xff]
      %v2031 = vld [vmem:[%s2027 + $0x30] sm:$0xff]
      %v2032 = vld [vmem:[%s2027 + $0x40] sm:$0xff]
      %v2033 = vld [vmem:[%s2027 + $0x50] sm:$0xff]
      %v2034 = vld [vmem:[%s2027 + $0x60] sm:$0xff]
      %v2035 = vld [vmem:[%s2027 + $0x70] sm:$0xff]
      %v2036 = vpack.c.bf16 %v2029, %v2028
      %v2037 = vpack.c.bf16 %v2031, %v2030
      %v2038 = vpack.c.bf16 %v2033, %v2032
      %v2039 = vpack.c.bf16 %v2035, %v2034
      %v2040 = vld [vmem:[#allocation3] sm:$0xff]
      %v2041 = vld [vmem:[#allocation3 + $0x8] sm:$0xff]
      %v2042 = vld [vmem:[#allocation3 + $0x10] sm:$0xff]
      %v2043 = vld [vmem:[#allocation3 + $0x18] sm:$0xff]
      %v2044 = vld [vmem:[#allocation3 + $0x20] sm:$0xff]
      %v2045 = vld [vmem:[#allocation3 + $0x28] sm:$0xff]
      %v2046 = vld [vmem:[#allocation3 + $0x30] sm:$0xff]
      %v2047 = vld [vmem:[#allocation3 + $0x38] sm:$0xff]
      %s2048 = scalar_lea.vmem %s338, 384
      %v2049 = vld [vmem:[%s2048] sm:$0xf]
      %v2050 = vld [vmem:[%s2048 + $0x4] sm:$0xf]
      %v2051 = vld [vmem:[%s2048 + $0x8] sm:$0xf]
      %v2052 = vld [vmem:[%s2048 + $0xc] sm:$0xf]
      %v2053 = vld [vmem:[%s2048 + $0x10] sm:$0xf]
      %v2054 = vld [vmem:[%s2048 + $0x14] sm:$0xf]
      %v2055 = vld [vmem:[%s2048 + $0x18] sm:$0xf]
      %v2056 = vld [vmem:[%s2048 + $0x1c] sm:$0xf]
      %v2057 = vld [vmem:[%s2048 + $0x20] sm:$0xf]
      %v2058 = vld [vmem:[%s2048 + $0x24] sm:$0xf]
      %v2059 = vld [vmem:[%s2048 + $0x28] sm:$0xf]
      %v2060 = vld [vmem:[%s2048 + $0x2c] sm:$0xf]
      %v2061 = vld [vmem:[%s2048 + $0x30] sm:$0xf]
      %v2062 = vld [vmem:[%s2048 + $0x34] sm:$0xf]
      %v2063 = vld [vmem:[%s2048 + $0x38] sm:$0xf]
      %v2064 = vld [vmem:[%s2048 + $0x3c] sm:$0xf]
      %v2081 = vunpack.c.l.b16 %v2049
      %v2082 = vunpack.c.l.b16 %v2050
      %v2083 = vunpack.c.l.b16 %v2051
      %v2084 = vunpack.c.l.b16 %v2052
      %v2085 = vunpack.c.l.b16 %v2053
      %v2086 = vunpack.c.l.b16 %v2054
      %v2087 = vunpack.c.l.b16 %v2055
      %v2088 = vunpack.c.l.b16 %v2056
      %v2089 = vunpack.c.l.b16 %v2057
      %v2090 = vunpack.c.l.b16 %v2058
      %v2091 = vunpack.c.l.b16 %v2059
      %v2092 = vunpack.c.l.b16 %v2060
      %v2093 = vunpack.c.l.b16 %v2061
      %v2094 = vunpack.c.l.b16 %v2062
      %v2095 = vunpack.c.l.b16 %v2063
      %v2096 = vunpack.c.l.b16 %v2064
      %v2097 = vpack.c.b16 %v2082, %v2081
      %v2098 = vpack.c.b16 %v2084, %v2083
      %v2099 = vpack.c.b16 %v2086, %v2085
      %v2100 = vpack.c.b16 %v2088, %v2087
      %v2101 = vpack.c.b16 %v2090, %v2089
      %v2102 = vpack.c.b16 %v2092, %v2091
      %v2103 = vpack.c.b16 %v2094, %v2093
      %v2104 = vpack.c.b16 %v2096, %v2095
      %2113 = vmatpush.bf16.msra.mxu0 %v2104
      %2114 = vmatpush.bf16.msra.mxu0 %v2103
      %2115 = vmatpush.bf16.msra.mxu0 %v2102
      %2116 = vmatpush.bf16.msra.mxu0 %v2101
      %2117 = vmatpush.bf16.msra.mxu0 %v2100
      %2118 = vmatpush.bf16.msra.mxu0 %v2099
      %2119 = vmatpush.bf16.msra.mxu0 %v2098
      %2120 = vmatpush.bf16.msra.mxu0 %v2097
      %2121 = vmatmul.bf16.gmra.mxu0 %v2036
      %v2122 = vpop.f32.mrf.mxu0
      %v2123 = vadd.f32 0.0, %v2122
      %v2124 = vpop.f32.mrf.mxu0
      %v2125 = vadd.f32 0.0, %v2124
      %2126 = vmatmul.bf16.gmra.mxu0 %v2037
      %v2127 = vpop.f32.mrf.mxu0
      %v2128 = vadd.f32 0.0, %v2127
      %v2129 = vpop.f32.mrf.mxu0
      %v2130 = vadd.f32 0.0, %v2129
      %2131 = vmatmul.bf16.gmra.mxu0 %v2038
      %v2132 = vpop.f32.mrf.mxu0
      %v2133 = vadd.f32 0.0, %v2132
      %v2134 = vpop.f32.mrf.mxu0
      %v2135 = vadd.f32 0.0, %v2134
      %2136 = vmatmul.bf16.gmra.mxu0 %v2039
      %v2137 = vpop.f32.mrf.mxu0
      %v2138 = vadd.f32 0.0, %v2137
      %v2139 = vpop.f32.mrf.mxu0
      %v2140 = vadd.f32 0.0, %v2139
      %2141 = vdwg.mxu0
      %v2142 = vadd.f32 %v2040, %v2123
      %v2143 = vadd.f32 %v2041, %v2125
      %v2144 = vadd.f32 %v2042, %v2128
      %v2145 = vadd.f32 %v2043, %v2130
      %v2146 = vadd.f32 %v2044, %v2133
      %v2147 = vadd.f32 %v2045, %v2135
      %v2148 = vadd.f32 %v2046, %v2138
      %v2149 = vadd.f32 %v2047, %v2140
      %2150 = vst [vmem:[#allocation3] sm:$0xff] %v2142
      %2151 = vst [vmem:[#allocation3 + $0x8] sm:$0xff] %v2143
      %2152 = vst [vmem:[#allocation3 + $0x10] sm:$0xff] %v2144
      %2153 = vst [vmem:[#allocation3 + $0x18] sm:$0xff] %v2145
      %2154 = vst [vmem:[#allocation3 + $0x20] sm:$0xff] %v2146
      %2155 = vst [vmem:[#allocation3 + $0x28] sm:$0xff] %v2147
      %2156 = vst [vmem:[#allocation3 + $0x30] sm:$0xff] %v2148
      %2157 = vst [vmem:[#allocation3 + $0x38] sm:$0xff] %v2149
      %s2158 = scalar_lea.vmem [#allocation2], 160
      %v2159 = vld [vmem:[%s2158] sm:$0xff]
      %v2160 = vld [vmem:[%s2158 + $0x10] sm:$0xff]
      %v2161 = vld [vmem:[%s2158 + $0x20] sm:$0xff]
      %v2162 = vld [vmem:[%s2158 + $0x30] sm:$0xff]
      %v2163 = vld [vmem:[%s2158 + $0x40] sm:$0xff]
      %v2164 = vld [vmem:[%s2158 + $0x50] sm:$0xff]
      %v2165 = vld [vmem:[%s2158 + $0x60] sm:$0xff]
      %v2166 = vld [vmem:[%s2158 + $0x70] sm:$0xff]
      %v2167 = vpack.c.bf16 %v2160, %v2159
      %v2168 = vpack.c.bf16 %v2162, %v2161
      %v2169 = vpack.c.bf16 %v2164, %v2163
      %v2170 = vpack.c.bf16 %v2166, %v2165
      %v2171 = vld [vmem:[#allocation3] sm:$0xff]
      %v2172 = vld [vmem:[#allocation3 + $0x8] sm:$0xff]
      %v2173 = vld [vmem:[#allocation3 + $0x10] sm:$0xff]
      %v2174 = vld [vmem:[#allocation3 + $0x18] sm:$0xff]
      %v2175 = vld [vmem:[#allocation3 + $0x20] sm:$0xff]
      %v2176 = vld [vmem:[#allocation3 + $0x28] sm:$0xff]
      %v2177 = vld [vmem:[#allocation3 + $0x30] sm:$0xff]
      %v2178 = vld [vmem:[#allocation3 + $0x38] sm:$0xff]
      %s2179 = scalar_lea.vmem %s338, 448
      %v2180 = vld [vmem:[%s2179] sm:$0xf]
      %v2181 = vld [vmem:[%s2179 + $0x4] sm:$0xf]
      %v2182 = vld [vmem:[%s2179 + $0x8] sm:$0xf]
      %v2183 = vld [vmem:[%s2179 + $0xc] sm:$0xf]
      %v2184 = vld [vmem:[%s2179 + $0x10] sm:$0xf]
      %v2185 = vld [vmem:[%s2179 + $0x14] sm:$0xf]
      %v2186 = vld [vmem:[%s2179 + $0x18] sm:$0xf]
      %v2187 = vld [vmem:[%s2179 + $0x1c] sm:$0xf]
      %v2188 = vld [vmem:[%s2179 + $0x20] sm:$0xf]
      %v2189 = vld [vmem:[%s2179 + $0x24] sm:$0xf]
      %v2190 = vld [vmem:[%s2179 + $0x28] sm:$0xf]
      %v2191 = vld [vmem:[%s2179 + $0x2c] sm:$0xf]
      %v2192 = vld [vmem:[%s2179 + $0x30] sm:$0xf]
      %v2193 = vld [vmem:[%s2179 + $0x34] sm:$0xf]
      %v2194 = vld [vmem:[%s2179 + $0x38] sm:$0xf]
      %v2195 = vld [vmem:[%s2179 + $0x3c] sm:$0xf]
      %v2212 = vunpack.c.l.b16 %v2180
      %v2213 = vunpack.c.l.b16 %v2181
      %v2214 = vunpack.c.l.b16 %v2182
      %v2215 = vunpack.c.l.b16 %v2183
      %v2216 = vunpack.c.l.b16 %v2184
      %v2217 = vunpack.c.l.b16 %v2185
      %v2218 = vunpack.c.l.b16 %v2186
      %v2219 = vunpack.c.l.b16 %v2187
      %v2220 = vunpack.c.l.b16 %v2188
      %v2221 = vunpack.c.l.b16 %v2189
      %v2222 = vunpack.c.l.b16 %v2190
      %v2223 = vunpack.c.l.b16 %v2191
      %v2224 = vunpack.c.l.b16 %v2192
      %v2225 = vunpack.c.l.b16 %v2193
      %v2226 = vunpack.c.l.b16 %v2194
      %v2227 = vunpack.c.l.b16 %v2195
      %v2228 = vpack.c.b16 %v2213, %v2212
      %v2229 = vpack.c.b16 %v2215, %v2214
      %v2230 = vpack.c.b16 %v2217, %v2216
      %v2231 = vpack.c.b16 %v2219, %v2218
      %v2232 = vpack.c.b16 %v2221, %v2220
      %v2233 = vpack.c.b16 %v2223, %v2222
      %v2234 = vpack.c.b16 %v2225, %v2224
      %v2235 = vpack.c.b16 %v2227, %v2226
      %2244 = vmatpush.bf16.msra.mxu0 %v2235
      %2245 = vmatpush.bf16.msra.mxu0 %v2234
      %2246 = vmatpush.bf16.msra.mxu0 %v2233
      %2247 = vmatpush.bf16.msra.mxu0 %v2232
      %2248 = vmatpush.bf16.msra.mxu0 %v2231
      %2249 = vmatpush.bf16.msra.mxu0 %v2230
      %2250 = vmatpush.bf16.msra.mxu0 %v2229
      %2251 = vmatpush.bf16.msra.mxu0 %v2228
      %2252 = vmatmul.bf16.gmra.mxu0 %v2167
      %v2253 = vpop.f32.mrf.mxu0
      %v2254 = vadd.f32 0.0, %v2253
      %v2255 = vpop.f32.mrf.mxu0
      %v2256 = vadd.f32 0.0, %v2255
      %2257 = vmatmul.bf16.gmra.mxu0 %v2168
      %v2258 = vpop.f32.mrf.mxu0
      %v2259 = vadd.f32 0.0, %v2258
      %v2260 = vpop.f32.mrf.mxu0
      %v2261 = vadd.f32 0.0, %v2260
      %2262 = vmatmul.bf16.gmra.mxu0 %v2169
      %v2263 = vpop.f32.mrf.mxu0
      %v2264 = vadd.f32 0.0, %v2263
      %v2265 = vpop.f32.mrf.mxu0
      %v2266 = vadd.f32 0.0, %v2265
      %2267 = vmatmul.bf16.gmra.mxu0 %v2170
      %v2268 = vpop.f32.mrf.mxu0
      %v2269 = vadd.f32 0.0, %v2268
      %v2270 = vpop.f32.mrf.mxu0
      %v2271 = vadd.f32 0.0, %v2270
      %2272 = vdwg.mxu0
      %v2273 = vadd.f32 %v2171, %v2254
      %v2274 = vadd.f32 %v2172, %v2256
      %v2275 = vadd.f32 %v2173, %v2259
      %v2276 = vadd.f32 %v2174, %v2261
      %v2277 = vadd.f32 %v2175, %v2264
      %v2278 = vadd.f32 %v2176, %v2266
      %v2279 = vadd.f32 %v2177, %v2269
      %v2280 = vadd.f32 %v2178, %v2271
      %2281 = vst [vmem:[#allocation3] sm:$0xff] %v2273
      %2282 = vst [vmem:[#allocation3 + $0x8] sm:$0xff] %v2274
      %2283 = vst [vmem:[#allocation3 + $0x10] sm:$0xff] %v2275
      %2284 = vst [vmem:[#allocation3 + $0x18] sm:$0xff] %v2276
      %2285 = vst [vmem:[#allocation3 + $0x20] sm:$0xff] %v2277
      %2286 = vst [vmem:[#allocation3 + $0x28] sm:$0xff] %v2278
      %2287 = vst [vmem:[#allocation3 + $0x30] sm:$0xff] %v2279
      %2288 = vst [vmem:[#allocation3 + $0x38] sm:$0xff] %v2280
      %v2289 = vld [vmem:[%s2027 + $0x1] sm:$0xff]
      %v2290 = vld [vmem:[%s2027 + $0x11] sm:$0xff]
      %v2291 = vld [vmem:[%s2027 + $0x21] sm:$0xff]
      %v2292 = vld [vmem:[%s2027 + $0x31] sm:$0xff]
      %v2293 = vld [vmem:[%s2027 + $0x41] sm:$0xff]
      %v2294 = vld [vmem:[%s2027 + $0x51] sm:$0xff]
      %v2295 = vld [vmem:[%s2027 + $0x61] sm:$0xff]
      %v2296 = vld [vmem:[%s2027 + $0x71] sm:$0xff]
      %v2297 = vpack.c.bf16 %v2290, %v2289
      %v2298 = vpack.c.bf16 %v2292, %v2291
      %v2299 = vpack.c.bf16 %v2294, %v2293
      %v2300 = vpack.c.bf16 %v2296, %v2295
      %v2301 = vld [vmem:[#allocation3] sm:$0xff]
      %v2302 = vld [vmem:[#allocation3 + $0x8] sm:$0xff]
      %v2303 = vld [vmem:[#allocation3 + $0x10] sm:$0xff]
      %v2304 = vld [vmem:[#allocation3 + $0x18] sm:$0xff]
      %v2305 = vld [vmem:[#allocation3 + $0x20] sm:$0xff]
      %v2306 = vld [vmem:[#allocation3 + $0x28] sm:$0xff]
      %v2307 = vld [vmem:[#allocation3 + $0x30] sm:$0xff]
      %v2308 = vld [vmem:[#allocation3 + $0x38] sm:$0xff]
      %s2309 = scalar_lea.vmem %s338, 512
      %v2310 = vld [vmem:[%s2309] sm:$0xf]
      %v2311 = vld [vmem:[%s2309 + $0x4] sm:$0xf]
      %v2312 = vld [vmem:[%s2309 + $0x8] sm:$0xf]
      %v2313 = vld [vmem:[%s2309 + $0xc] sm:$0xf]
      %v2314 = vld [vmem:[%s2309 + $0x10] sm:$0xf]
      %v2315 = vld [vmem:[%s2309 + $0x14] sm:$0xf]
      %v2316 = vld [vmem:[%s2309 + $0x18] sm:$0xf]
      %v2317 = vld [vmem:[%s2309 + $0x1c] sm:$0xf]
      %v2318 = vld [vmem:[%s2309 + $0x20] sm:$0xf]
      %v2319 = vld [vmem:[%s2309 + $0x24] sm:$0xf]
      %v2320 = vld [vmem:[%s2309 + $0x28] sm:$0xf]
      %v2321 = vld [vmem:[%s2309 + $0x2c] sm:$0xf]
      %v2322 = vld [vmem:[%s2309 + $0x30] sm:$0xf]
      %v2323 = vld [vmem:[%s2309 + $0x34] sm:$0xf]
      %v2324 = vld [vmem:[%s2309 + $0x38] sm:$0xf]
      %v2325 = vld [vmem:[%s2309 + $0x3c] sm:$0xf]
      %v2342 = vunpack.c.l.b16 %v2310
      %v2343 = vunpack.c.l.b16 %v2311
      %v2344 = vunpack.c.l.b16 %v2312
      %v2345 = vunpack.c.l.b16 %v2313
      %v2346 = vunpack.c.l.b16 %v2314
      %v2347 = vunpack.c.l.b16 %v2315
      %v2348 = vunpack.c.l.b16 %v2316
      %v2349 = vunpack.c.l.b16 %v2317
      %v2350 = vunpack.c.l.b16 %v2318
      %v2351 = vunpack.c.l.b16 %v2319
      %v2352 = vunpack.c.l.b16 %v2320
      %v2353 = vunpack.c.l.b16 %v2321
      %v2354 = vunpack.c.l.b16 %v2322
      %v2355 = vunpack.c.l.b16 %v2323
      %v2356 = vunpack.c.l.b16 %v2324
      %v2357 = vunpack.c.l.b16 %v2325
      %v2358 = vpack.c.b16 %v2343, %v2342
      %v2359 = vpack.c.b16 %v2345, %v2344
      %v2360 = vpack.c.b16 %v2347, %v2346
      %v2361 = vpack.c.b16 %v2349, %v2348
      %v2362 = vpack.c.b16 %v2351, %v2350
      %v2363 = vpack.c.b16 %v2353, %v2352
      %v2364 = vpack.c.b16 %v2355, %v2354
      %v2365 = vpack.c.b16 %v2357, %v2356
      %2374 = vmatpush.bf16.msra.mxu0 %v2365
      %2375 = vmatpush.bf16.msra.mxu0 %v2364
      %2376 = vmatpush.bf16.msra.mxu0 %v2363
      %2377 = vmatpush.bf16.msra.mxu0 %v2362
      %2378 = vmatpush.bf16.msra.mxu0 %v2361
      %2379 = vmatpush.bf16.msra.mxu0 %v2360
      %2380 = vmatpush.bf16.msra.mxu0 %v2359
      %2381 = vmatpush.bf16.msra.mxu0 %v2358
      %2382 = vmatmul.bf16.gmra.mxu0 %v2297
      %v2383 = vpop.f32.mrf.mxu0
      %v2384 = vadd.f32 0.0, %v2383
      %v2385 = vpop.f32.mrf.mxu0
      %v2386 = vadd.f32 0.0, %v2385
      %2387 = vmatmul.bf16.gmra.mxu0 %v2298
      %v2388 = vpop.f32.mrf.mxu0
      %v2389 = vadd.f32 0.0, %v2388
      %v2390 = vpop.f32.mrf.mxu0
      %v2391 = vadd.f32 0.0, %v2390
      %2392 = vmatmul.bf16.gmra.mxu0 %v2299
      %v2393 = vpop.f32.mrf.mxu0
      %v2394 = vadd.f32 0.0, %v2393
      %v2395 = vpop.f32.mrf.mxu0
      %v2396 = vadd.f32 0.0, %v2395
      %2397 = vmatmul.bf16.gmra.mxu0 %v2300
      %v2398 = vpop.f32.mrf.mxu0
      %v2399 = vadd.f32 0.0, %v2398
      %v2400 = vpop.f32.mrf.mxu0
      %v2401 = vadd.f32 0.0, %v2400
      %2402 = vdwg.mxu0
      %v2403 = vadd.f32 %v2301, %v2384
      %v2404 = vadd.f32 %v2302, %v2386
      %v2405 = vadd.f32 %v2303, %v2389
      %v2406 = vadd.f32 %v2304, %v2391
      %v2407 = vadd.f32 %v2305, %v2394
      %v2408 = vadd.f32 %v2306, %v2396
      %v2409 = vadd.f32 %v2307, %v2399
      %v2410 = vadd.f32 %v2308, %v2401
      %2411 = vst [vmem:[#allocation3] sm:$0xff] %v2403
      %2412 = vst [vmem:[#allocation3 + $0x8] sm:$0xff] %v2404
      %2413 = vst [vmem:[#allocation3 + $0x10] sm:$0xff] %v2405
      %2414 = vst [vmem:[#allocation3 + $0x18] sm:$0xff] %v2406
      %2415 = vst [vmem:[#allocation3 + $0x20] sm:$0xff] %v2407
      %2416 = vst [vmem:[#allocation3 + $0x28] sm:$0xff] %v2408
      %2417 = vst [vmem:[#allocation3 + $0x30] sm:$0xff] %v2409
      %2418 = vst [vmem:[#allocation3 + $0x38] sm:$0xff] %v2410
      %v2419 = vld [vmem:[#allocation3] sm:$0xff]
      %v2420 = vld [vmem:[#allocation3 + $0x8] sm:$0xff]
      %v2421 = vld [vmem:[#allocation3 + $0x10] sm:$0xff]
      %v2422 = vld [vmem:[#allocation3 + $0x18] sm:$0xff]
      %v2423 = vld [vmem:[#allocation3 + $0x20] sm:$0xff]
      %v2424 = vld [vmem:[#allocation3 + $0x28] sm:$0xff]
      %v2425 = vld [vmem:[#allocation3 + $0x30] sm:$0xff]
      %v2426 = vld [vmem:[#allocation3 + $0x38] sm:$0xff]
      %2427 = vst [vmem:[%s350] sm:$0xff] %v2419
      %2428 = vst [vmem:[%s350 + $0x8] sm:$0xff] %v2420
      %2429 = vst [vmem:[%s350 + $0x10] sm:$0xff] %v2421
      %2430 = vst [vmem:[%s350 + $0x18] sm:$0xff] %v2422
      %2431 = vst [vmem:[%s350 + $0x20] sm:$0xff] %v2423
      %2432 = vst [vmem:[%s350 + $0x28] sm:$0xff] %v2424
      %2433 = vst [vmem:[%s350 + $0x30] sm:$0xff] %v2425
      %2434 = vst [vmem:[%s350 + $0x38] sm:$0xff] %v2426
      %v2435 = vld [vmem:[%s1221] sm:$0xff]
      %v2436 = vld [vmem:[%s1221 + $0x10] sm:$0xff]
      %v2437 = vld [vmem:[%s1221 + $0x20] sm:$0xff]
      %v2438 = vld [vmem:[%s1221 + $0x30] sm:$0xff]
      %v2439 = vld [vmem:[%s1221 + $0x40] sm:$0xff]
      %v2440 = vld [vmem:[%s1221 + $0x50] sm:$0xff]
      %v2441 = vld [vmem:[%s1221 + $0x60] sm:$0xff]
      %v2442 = vld [vmem:[%s1221 + $0x70] sm:$0xff]
      %v2443 = vpack.c.bf16 %v2436, %v2435
      %v2444 = vpack.c.bf16 %v2438, %v2437
      %v2445 = vpack.c.bf16 %v2440, %v2439
      %v2446 = vpack.c.bf16 %v2442, %v2441
      %v2447 = vld [vmem:[%s342] sm:$0xf]
      %v2448 = vld [vmem:[%s342 + $0x4] sm:$0xf]
      %v2449 = vld [vmem:[%s342 + $0x8] sm:$0xf]
      %v2450 = vld [vmem:[%s342 + $0xc] sm:$0xf]
      %v2451 = vld [vmem:[%s342 + $0x10] sm:$0xf]
      %v2452 = vld [vmem:[%s342 + $0x14] sm:$0xf]
      %v2453 = vld [vmem:[%s342 + $0x18] sm:$0xf]
      %v2454 = vld [vmem:[%s342 + $0x1c] sm:$0xf]
      %v2455 = vld [vmem:[%s342 + $0x20] sm:$0xf]
      %v2456 = vld [vmem:[%s342 + $0x24] sm:$0xf]
      %v2457 = vld [vmem:[%s342 + $0x28] sm:$0xf]
      %v2458 = vld [vmem:[%s342 + $0x2c] sm:$0xf]
      %v2459 = vld [vmem:[%s342 + $0x30] sm:$0xf]
      %v2460 = vld [vmem:[%s342 + $0x34] sm:$0xf]
      %v2461 = vld [vmem:[%s342 + $0x38] sm:$0xf]
      %v2462 = vld [vmem:[%s342 + $0x3c] sm:$0xf]
      %v2479 = vunpack.c.l.b16 %v2447
      %v2480 = vunpack.c.l.b16 %v2448
      %v2481 = vunpack.c.l.b16 %v2449
      %v2482 = vunpack.c.l.b16 %v2450
      %v2483 = vunpack.c.l.b16 %v2451
      %v2484 = vunpack.c.l.b16 %v2452
      %v2485 = vunpack.c.l.b16 %v2453
      %v2486 = vunpack.c.l.b16 %v2454
      %v2487 = vunpack.c.l.b16 %v2455
      %v2488 = vunpack.c.l.b16 %v2456
      %v2489 = vunpack.c.l.b16 %v2457
      %v2490 = vunpack.c.l.b16 %v2458
      %v2491 = vunpack.c.l.b16 %v2459
      %v2492 = vunpack.c.l.b16 %v2460
      %v2493 = vunpack.c.l.b16 %v2461
      %v2494 = vunpack.c.l.b16 %v2462
      %v2495 = vpack.c.b16 %v2480, %v2479
      %v2496 = vpack.c.b16 %v2482, %v2481
      %v2497 = vpack.c.b16 %v2484, %v2483
      %v2498 = vpack.c.b16 %v2486, %v2485
      %v2499 = vpack.c.b16 %v2488, %v2487
      %v2500 = vpack.c.b16 %v2490, %v2489
      %v2501 = vpack.c.b16 %v2492, %v2491
      %v2502 = vpack.c.b16 %v2494, %v2493
      %2511 = vmatpush.bf16.msra.mxu0 %v2502
      %2512 = vmatpush.bf16.msra.mxu0 %v2501
      %2513 = vmatpush.bf16.msra.mxu0 %v2500
      %2514 = vmatpush.bf16.msra.mxu0 %v2499
      %2515 = vmatpush.bf16.msra.mxu0 %v2498
      %2516 = vmatpush.bf16.msra.mxu0 %v2497
      %2517 = vmatpush.bf16.msra.mxu0 %v2496
      %2518 = vmatpush.bf16.msra.mxu0 %v2495
      %2519 = vmatmul.bf16.gmra.mxu0 %v2443
      %v2520 = vpop.f32.mrf.mxu0
      %v2521 = vadd.f32 0.0, %v2520
      %v2522 = vpop.f32.mrf.mxu0
      %v2523 = vadd.f32 0.0, %v2522
      %2524 = vmatmul.bf16.gmra.mxu0 %v2444
      %v2525 = vpop.f32.mrf.mxu0
      %v2526 = vadd.f32 0.0, %v2525
      %v2527 = vpop.f32.mrf.mxu0
      %v2528 = vadd.f32 0.0, %v2527
      %2529 = vmatmul.bf16.gmra.mxu0 %v2445
      %v2530 = vpop.f32.mrf.mxu0
      %v2531 = vadd.f32 0.0, %v2530
      %v2532 = vpop.f32.mrf.mxu0
      %v2533 = vadd.f32 0.0, %v2532
      %2534 = vmatmul.bf16.gmra.mxu0 %v2446
      %v2535 = vpop.f32.mrf.mxu0
      %v2536 = vadd.f32 0.0, %v2535
      %v2537 = vpop.f32.mrf.mxu0
      %v2538 = vadd.f32 0.0, %v2537
      %2539 = vdwg.mxu0
      %2540 = vst [vmem:[%s358] sm:$0xff] %v2521
      %2541 = vst [vmem:[%s358 + $0x8] sm:$0xff] %v2523
      %2542 = vst [vmem:[%s358 + $0x10] sm:$0xff] %v2526
      %2543 = vst [vmem:[%s358 + $0x18] sm:$0xff] %v2528
      %2544 = vst [vmem:[%s358 + $0x20] sm:$0xff] %v2531
      %2545 = vst [vmem:[%s358 + $0x28] sm:$0xff] %v2533
      %2546 = vst [vmem:[%s358 + $0x30] sm:$0xff] %v2536
      %2547 = vst [vmem:[%s358 + $0x38] sm:$0xff] %v2538
      %p2548 = scmp.lt.s32.totalorder %s23, 1
      %s2549 = scalar_select %p2548, %s23, 1
      %p2550 = scmp.lt.s32.totalorder %s24, 0
      %s2551 = scalar_select %p2550, %s24, 0
      %s2552 = smul.addr %s2549, 8
      %s2553 = sadd.s32 %s2551, %s2552
      %s2554 = smul.addr %s2553, 8
      %s2555 = scalar_lea.vmem %s6, %s2554
      %p2556 = scmp.lt.s32.totalorder %s23, 1
      %s2557 = scalar_select %p2556, %s23, 1
      %p2558 = scmp.lt.s32.totalorder %s24, 0
      %s2559 = scalar_select %p2558, %s24, 0
      %s2560 = smul.addr %s2557, 8
      %s2561 = sadd.s32 %s2559, %s2560
      %s2562 = smul.addr %s2561, 8
      %s2563 = scalar_lea.vmem %s7, %s2562
      // Predicated region
      $region45: #{residual_block_forward.5} parent=43 // pred_check
        %p2564 = pneg %p192
      $region46: #{residual_block_forward.5} parent=43 // pred_check_branch
        %2566 = sbr.rel (%p2564) target = $region48
      $region47: #{residual_block_forward.5} parent=43 // pred_region
        _
      $region48: #{residual_block_forward.5} parent=43 // pred_fallthru
        _
      // Predicated region
      $region49: #{residual_block_forward.5} parent=43 // pred_check
        %p2567 = pneg %p220
      $region50: #{residual_block_forward.5} parent=43 // pred_check_branch
        %2569 = sbr.rel (%p2567) target = $region52
      $region51: #{residual_block_forward.5} parent=43 // pred_region
        _
      $region52: #{residual_block_forward.5} parent=43 // pred_fallthru
        _
    $region44: #{residual_block_forward.5} parent=5 // pred_fallthru
      _
    %p2570 = scmp.le.s32.totalorder 2, %s14
    // Predicated region
    $region53: #{residual_block_forward.5} parent=5 // pred_check
      %p2571 = pneg %p2570
    $region54: #{residual_block_forward.5} parent=5 // pred_check_branch
      %2573 = sbr.rel (%p2571) target = $region56
    $region55: #{residual_block_forward.5} parent=5 // pred_region
      %s2574 = ssub.s32 %s14, 2
      // Predicated region
      $region57: #{residual_block_forward.5} parent=55 // pred_check
        %p2575 = pneg %p198
      $region58: #{residual_block_forward.5} parent=55 // pred_check_branch
        %2577 = sbr.rel (%p2575) target = $region60
      $region59: #{residual_block_forward.5} parent=55 // pred_region
        %p2578 = scmp.lt.s32.totalorder %s25, 1
        %s2579 = scalar_select %p2578, %s25, 1
        %p2580 = scmp.lt.s32.totalorder %s26, 0
        %s2581 = scalar_select %p2580, %s26, 0
        %s2582 = smul.addr %s2579, 8
        %s2583 = sadd.s32 %s2581, %s2582
        %s2584 = smul.addr %s2583, 8
        %s2585 = scalar_lea.vmem %s6, %s2584
      $region60: #{residual_block_forward.5} parent=55 // pred_fallthru
        _
      // Predicated region
      $region61: #{residual_block_forward.5} parent=55 // pred_check
        %p2586 = pneg %p226
      $region62: #{residual_block_forward.5} parent=55 // pred_check_branch
        %2588 = sbr.rel (%p2586) target = $region64
      $region63: #{residual_block_forward.5} parent=55 // pred_region
        %p2589 = scmp.lt.s32.totalorder %s25, 1
        %s2590 = scalar_select %p2589, %s25, 1
        %p2591 = scmp.lt.s32.totalorder %s26, 0
        %s2592 = scalar_select %p2591, %s26, 0
        %s2593 = smul.addr %s2590, 8
        %s2594 = sadd.s32 %s2592, %s2593
        %s2595 = smul.addr %s2594, 8
        %s2596 = scalar_lea.vmem %s7, %s2595
      $region64: #{residual_block_forward.5} parent=55 // pred_fallthru
        _
    $region56: #{residual_block_forward.5} parent=5 // pred_fallthru
      _
  $region6: #{residual_block_forward.5} parent=0 // loop_footer
    %s18 = sadd.s32 1, %s14
  $region7: #{residual_block_forward.5} parent=0 // loop_footer_branch
    %13 = sbr.rel target = $region3
  $region8: #{residual_block_forward.5} parent=0 // loop_exit
    _

// kernel: residual_block_forward.7
$region0: #{residual_block_forward.7}
  #allocation0 [shape = 'u32[]', space=smem, size = 0x4, offset = 0x4, fixed_abs, tag = 'smem constant byte address 0x4 - core index']
  #allocation1 [shape = 'u32[72,128]{1,0:T(1,128)}', space=vmem, size = 0x9000, scoped, tag = 'internal scratch']
  #allocation2 [shape = 'f32[1,10,10,128]{3,2,1,0:T(8,128)}', space=vmem, size = 0x14000, scoped, tag = 'scratch operand']
  #allocation3 [shape = 'f32[64,128]{1,0:T(8,128)}', space=vmem, size = 0x8000, scoped, tag = 'scratch operand']
  %s0 = inlined_call_operand.vmem [shape: f32[1,128], index: 0, kind: input, shape index: {}]
  %s1 = inlined_call_operand.vmem [shape: f32[1,128], index: 1, kind: input, shape index: {}]
  %s2 = inlined_call_operand.vmem [shape: f32[1,10,10,1], index: 2, kind: input, shape index: {}]
  %s3 = inlined_call_operand.vmem [shape: f32[2,10,10,128], index: 3, kind: input, shape index: {}]
  %s4 = inlined_call_operand.vmem [shape: bf16[9,128,128], index: 4, kind: input, shape index: {}]
  %s5 = inlined_call_operand.vmem [shape: f32[2,8,8,128], index: 5, kind: input, shape index: {}]
  %s6 = inlined_call_operand.vmem [shape: f32[2,8,8,128], index: 6, kind: output, shape index: {}]
  %s7 = sld [smem:[#allocation0]]
  $region57: #{residual_block_forward.7} parent=0
    _
  %s9 = ssub.s32 1, %s7
  %s10 = scalar_select 0, %s9, %s7
  loop: start=0, step=1, limit=4
  $region2: #{residual_block_forward.7} parent=0 // loop_pre_header
    _
  $region3: #{residual_block_forward.7} parent=0 // loop_header
    %s12 = sphi 0, %s16
    %p13 = scmp.ge.s32.totalorder %s12, 4
    %s19 = sphi 0, %s31
    %s20 = sphi 0, %s27
    %s21 = sphi 0, %s19
    %s22 = sphi 0, %s20
    %s23 = sphi 0, %s21
    %s24 = sphi 0, %s22
    %s32 = sphi 0, %s32
    %s34 = sphi 0, %s32
    %s35 = sphi 0, %s34
    %s49 = sphi 0, %s35
    %s53 = sphi 0, %s53
    %s55 = sphi 0, %s53
    %s56 = sphi 0, %s55
    %s70 = sphi 0, %s56
    %s74 = sphi 0, %s74
    %s76 = sphi 0, %s74
    %s77 = sphi 0, %s76
    %s91 = sphi 0, %s77
    %s97 = sphi 0, %s99
    %s100 = sphi 0, %s97
    %s101 = sphi 0, %s100
    %s117 = sphi 0, %s101
    %s123 = sphi 0, %s125
    %s126 = sphi 0, %s123
    %s127 = sphi 0, %s126
    %s143 = sphi 0, %s127
    %s151 = sphi 0, %s153
    %s154 = sphi 0, %s151
    %s155 = sphi 0, %s154
    %s171 = sphi 0, %s155
    %s179 = sphi 0, %s181
    %s182 = sphi 0, %s179
    %s183 = sphi 0, %s182
    %s199 = sphi 0, %s183
  $region4: #{residual_block_forward.7} parent=0 // loop_header_branch
    %15 = sbr.rel (%p13) target = $region8
  $region5: #{residual_block_forward.7} parent=0 // loop_body
    %s17 = ssub.s32 %s12, 1
    %s18 = ssub.s32 %s12, 2
    %s25 = sadd.s32 1, %s20
    %p26 = scmp.ge.s32.totalorder %s25, 1
    %s27 = scalar_select %p26, 0, %s25
    %s28 = sadd.s32 1, %s19
    %s29 = scalar_select %p26, %s28, %s19
    %p30 = scmp.ge.s32.totalorder %s29, 2
    %s31 = scalar_select %p30, 0, %s29
    %s33 = sadd.s32 %s32, 1
    %p36 = scmp.eq.s32.totalorder %s12, 1
    %p37 = scmp.ne.s32.totalorder %s32, %s34
    %p38 = scmp.eq.s32.totalorder %s12, 0
    %p39 = por %p37, %p38
    %p40 = scmp.ne.s32.totalorder %s32, %s34
    %p41 = scmp.eq.s32.totalorder %s17, 1
    %p42 = por %p40, %p41
    %p43 = scmp.ne.s32.totalorder %s34, %s35
    %p44 = scmp.eq.s32.totalorder %s17, 0
    %p45 = por %p43, %p44
    %p46 = scmp.ne.s32.totalorder %s34, %s35
    %p47 = scmp.eq.s32.totalorder %s18, 1
    %p48 = por %p46, %p47
    %p50 = scmp.ne.s32.totalorder %s35, %s49
    %p51 = scmp.eq.s32.totalorder %s18, 0
    %p52 = por %p50, %p51
    %s54 = sadd.s32 %s53, 1
    %p57 = scmp.eq.s32.totalorder %s12, 1
    %p58 = scmp.ne.s32.totalorder %s53, %s55
    %p59 = scmp.eq.s32.totalorder %s12, 0
    %p60 = por %p58, %p59
    %p61 = scmp.ne.s32.totalorder %s53, %s55
    %p62 = scmp.eq.s32.totalorder %s17, 1
    %p63 = por %p61, %p62
    %p64 = scmp.ne.s32.totalorder %s55, %s56
    %p65 = scmp.eq.s32.totalorder %s17, 0
    %p66 = por %p64, %p65
    %p67 = scmp.ne.s32.totalorder %s55, %s56
    %p68 = scmp.eq.s32.totalorder %s18, 1
    %p69 = por %p67, %p68
    %p71 = scmp.ne.s32.totalorder %s56, %s70
    %p72 = scmp.eq.s32.totalorder %s18, 0
    %p73 = por %p71, %p72
    %s75 = sadd.s32 %s74, 1
    %p78 = scmp.eq.s32.totalorder %s12, 1
    %p79 = scmp.ne.s32.totalorder %s74, %s76
    %p80 = scmp.eq.s32.totalorder %s12, 0
    %p81 = por %p79, %p80
    %p82 = scmp.ne.s32.totalorder %s74, %s76
    %p83 = scmp.eq.s32.totalorder %s17, 1
    %p84 = por %p82, %p83
    %p85 = scmp.ne.s32.totalorder %s76, %s77
    %p86 = scmp.eq.s32.totalorder %s17, 0
    %p87 = por %p85, %p86
    %p88 = scmp.ne.s32.totalorder %s76, %s77
    %p89 = scmp.eq.s32.totalorder %s18, 1
    %p90 = por %p88, %p89
    %p92 = scmp.ne.s32.totalorder %s77, %s91
    %p93 = scmp.eq.s32.totalorder %s18, 0
    %p94 = por %p92, %p93
    %s95 = ssub.s32 %s19, %s31
    %p96 = scmp.eq.s32.totalorder %s95, 0
    %s98 = sadd.s32 %s97, 1
    %s99 = scalar_select %p96, %s97, %s98
    %p102 = pneg %p96
    %p103 = scmp.eq.s32.totalorder %s12, 1
    %p104 = por %p102, %p103
    %p105 = scmp.ne.s32.totalorder %s97, %s100
    %p106 = scmp.eq.s32.totalorder %s12, 0
    %p107 = por %p105, %p106
    %p108 = scmp.ne.s32.totalorder %s97, %s100
    %p109 = scmp.eq.s32.totalorder %s17, 1
    %p110 = por %p108, %p109
    %p111 = scmp.ne.s32.totalorder %s100, %s101
    %p112 = scmp.eq.s32.totalorder %s17, 0
    %p113 = por %p111, %p112
    %p114 = scmp.ne.s32.totalorder %s100, %s101
    %p115 = scmp.eq.s32.totalorder %s18, 1
    %p116 = por %p114, %p115
    %p118 = scmp.ne.s32.totalorder %s101, %s117
    %p119 = scmp.eq.s32.totalorder %s18, 0
    %p120 = por %p118, %p119
    %s121 = ssub.s32 %s20, %s27
    %p122 = scmp.eq.s32.totalorder %s121, 0
    %s124 = sadd.s32 %s123, 1
    %s125 = scalar_select %p122, %s123, %s124
    %p128 = pneg %p122
    %p129 = scmp.eq.s32.totalorder %s12, 1
    %p130 = por %p128, %p129
    %p131 = scmp.ne.s32.totalorder %s123, %s126
    %p132 = scmp.eq.s32.totalorder %s12, 0
    %p133 = por %p131, %p132
    %p134 = scmp.ne.s32.totalorder %s123, %s126
    %p135 = scmp.eq.s32.totalorder %s17, 1
    %p136 = por %p134, %p135
    %p137 = scmp.ne.s32.totalorder %s126, %s127
    %p138 = scmp.eq.s32.totalorder %s17, 0
    %p139 = por %p137, %p138
    %p140 = scmp.ne.s32.totalorder %s126, %s127
    %p141 = scmp.eq.s32.totalorder %s18, 1
    %p142 = por %p140, %p141
    %p144 = scmp.ne.s32.totalorder %s127, %s143
    %p145 = scmp.eq.s32.totalorder %s18, 0
    %p146 = por %p144, %p145
    %s147 = ssub.s32 %s19, %s31
    %s148 = ssub.s32 %s20, %s27
    %s149 = sor.u32 %s147, %s148
    %p150 = scmp.eq.s32.totalorder %s149, 0
    %s152 = sadd.s32 %s151, 1
    %s153 = scalar_select %p150, %s151, %s152
    %p156 = pneg %p150
    %p157 = scmp.eq.s32.totalorder %s12, 1
    %p158 = por %p156, %p157
    %p159 = scmp.ne.s32.totalorder %s151, %s154
    %p160 = scmp.eq.s32.totalorder %s12, 0
    %p161 = por %p159, %p160
    %p162 = scmp.ne.s32.totalorder %s151, %s154
    %p163 = scmp.eq.s32.totalorder %s17, 1
    %p164 = por %p162, %p163
    %p165 = scmp.ne.s32.totalorder %s154, %s155
    %p166 = scmp.eq.s32.totalorder %s17, 0
    %p167 = por %p165, %p166
    %p168 = scmp.ne.s32.totalorder %s154, %s155
    %p169 = scmp.eq.s32.totalorder %s18, 1
    %p170 = por %p168, %p169
    %p172 = scmp.ne.s32.totalorder %s155, %s171
    %p173 = scmp.eq.s32.totalorder %s18, 0
    %p174 = por %p172, %p173
    %s175 = ssub.s32 %s19, %s31
    %s176 = ssub.s32 %s20, %s27
    %s177 = sor.u32 %s175, %s176
    %p178 = scmp.eq.s32.totalorder %s177, 0
    %s180 = sadd.s32 %s179, 1
    %s181 = scalar_select %p178, %s179, %s180
    %p184 = pneg %p178
    %p185 = scmp.eq.s32.totalorder %s12, 1
    %p186 = por %p184, %p185
    %p187 = scmp.ne.s32.totalorder %s179, %s182
    %p188 = scmp.eq.s32.totalorder %s12, 0
    %p189 = por %p187, %p188
    %p190 = scmp.ne.s32.totalorder %s179, %s182
    %p191 = scmp.eq.s32.totalorder %s17, 1
    %p192 = por %p190, %p191
    %p193 = scmp.ne.s32.totalorder %s182, %s183
    %p194 = scmp.eq.s32.totalorder %s17, 0
    %p195 = por %p193, %p194
    %p196 = scmp.ne.s32.totalorder %s182, %s183
    %p197 = scmp.eq.s32.totalorder %s18, 1
    %p198 = por %p196, %p197
    %p200 = scmp.ne.s32.totalorder %s183, %s199
    %p201 = scmp.eq.s32.totalorder %s18, 0
    %p202 = por %p200, %p201
    %p203 = scmp.le.s32.totalorder 1, %s12
    %p204 = scmp.lt.s32.totalorder %s12, 3
    %p205 = pnand %p203, %p204
    %p206 = pneg %p205
    // Predicated region
    $region9: #{residual_block_forward.7} parent=5 // pred_check
      _
    $region10: #{residual_block_forward.7} parent=5 // pred_check_branch
      %208 = sbr.rel (%p205) target = $region12
    $region11: #{residual_block_forward.7} parent=5 // pred_region
      %s209 = ssub.s32 %s12, 1
      // Predicated region
      $region13: #{residual_block_forward.7} parent=11 // pred_check
        %p210 = pneg %p45
      $region14: #{residual_block_forward.7} parent=11 // pred_check_branch
        %212 = sbr.rel (%p210) target = $region16
      $region15: #{residual_block_forward.7} parent=11 // pred_region
        _
      $region16: #{residual_block_forward.7} parent=11 // pred_fallthru
        _
      // Predicated region
      $region17: #{residual_block_forward.7} parent=11 // pred_check
        %p213 = pneg %p66
      $region18: #{residual_block_forward.7} parent=11 // pred_check_branch
        %215 = sbr.rel (%p213) target = $region20
      $region19: #{residual_block_forward.7} parent=11 // pred_region
        _
      $region20: #{residual_block_forward.7} parent=11 // pred_fallthru
        _
      // Predicated region
      $region21: #{residual_block_forward.7} parent=11 // pred_check
        %p216 = pneg %p87
      $region22: #{residual_block_forward.7} parent=11 // pred_check_branch
        %218 = sbr.rel (%p216) target = $region24
      $region23: #{residual_block_forward.7} parent=11 // pred_region
        _
      $region24: #{residual_block_forward.7} parent=11 // pred_fallthru
        _
      // Predicated region
      $region25: #{residual_block_forward.7} parent=11 // pred_check
        %p219 = pneg %p139
      $region26: #{residual_block_forward.7} parent=11 // pred_check_branch
        %221 = sbr.rel (%p219) target = $region28
      $region27: #{residual_block_forward.7} parent=11 // pred_region
        %p222 = scmp.lt.s32.totalorder %s22, 0
        %s223 = scalar_select %p222, %s22, 0
        %s224 = smul.addr %s223, 4
        %s225 = scalar_lea.vmem %s4, %s224
      $region28: #{residual_block_forward.7} parent=11 // pred_fallthru
        _
    $region12: #{residual_block_forward.7} parent=5 // pred_fallthru
      _
    %p226 = scmp.lt.s32.totalorder %s12, 2
    // Predicated region
    $region29: #{residual_block_forward.7} parent=5 // pred_check
      %p227 = pneg %p226
    $region30: #{residual_block_forward.7} parent=5 // pred_check_branch
      %229 = sbr.rel (%p227) target = $region32
    $region31: #{residual_block_forward.7} parent=5 // pred_region
      // Predicated region
      $region33: #{residual_block_forward.7} parent=31 // pred_check
        %p230 = pneg %p107
      $region34: #{residual_block_forward.7} parent=31 // pred_check_branch
        %232 = sbr.rel (%p230) target = $region36
      $region35: #{residual_block_forward.7} parent=31 // pred_region
        %p233 = scmp.lt.s32.totalorder %s19, 1
        %s234 = scalar_select %p233, %s19, 1
        %s235 = smul.addr %s234, 20
        %s236 = smul.addr %s235, 8
        %s237 = scalar_lea.vmem %s3, %s236
      $region36: #{residual_block_forward.7} parent=31 // pred_fallthru
        _
      // Predicated region
      $region37: #{residual_block_forward.7} parent=31 // pred_check
        %p238 = pneg %p161
      $region38: #{residual_block_forward.7} parent=31 // pred_check_branch
        %240 = sbr.rel (%p238) target = $region40
      $region39: #{residual_block_forward.7} parent=31 // pred_region
        %p241 = scmp.lt.s32.totalorder %s19, 1
        %s242 = scalar_select %p241, %s19, 1
        %p243 = scmp.lt.s32.totalorder %s20, 0
        %s244 = scalar_select %p243, %s20, 0
        %s245 = smul.addr %s242, 8
        %s246 = sadd.s32 %s244, %s245
        %s247 = smul.addr %s246, 8
        %s248 = scalar_lea.vmem %s5, %s247
      $region40: #{residual_block_forward.7} parent=31 // pred_fallthru
        _
    $region32: #{residual_block_forward.7} parent=5 // pred_fallthru
      _
    %p249 = scmp.le.s32.totalorder 1, %s12
    %p250 = scmp.lt.s32.totalorder %s12, 3
    %p251 = pnand %p249, %p250
    %p252 = pneg %p251
    // Predicated region
    $region41: #{residual_block_forward.7} parent=5 // pred_check
      _
    $region42: #{residual_block_forward.7} parent=5 // pred_check_branch
      %254 = sbr.rel (%p251) target = $region44
    $region43: #{residual_block_forward.7} parent=5 // pred_region
      %s255 = ssub.s32 %s12, 1
      %p256 = pneg %p45
      %p257 = pneg %p42
      %p258 = pneg %p66
      %p259 = pneg %p63
      %p260 = pneg %p87
      %p261 = pneg %p84
      %p262 = scmp.lt.s32.totalorder %s21, 1
      %s263 = scalar_select %p262, %s21, 1
      %s264 = smul.addr %s263, 20
      %s265 = smul.addr %s264, 8
      %s266 = scalar_lea.vmem %s3, %s265
      %p267 = pneg %p113
      %p268 = pneg %p110
      %p269 = scmp.lt.s32.totalorder %s22, 0
      %s270 = scalar_select %p269, %s22, 0
      %s271 = smul.addr %s270, 4
      %s272 = scalar_lea.vmem %s4, %s271
      %p273 = pneg %p139
      %p274 = pneg %p136
      %p275 = scmp.lt.s32.totalorder %s21, 1
      %s276 = scalar_select %p275, %s21, 1
      %p277 = scmp.lt.s32.totalorder %s22, 0
      %s278 = scalar_select %p277, %s22, 0
      %s279 = smul.addr %s276, 8
      %s280 = sadd.s32 %s278, %s279
      %s281 = smul.addr %s280, 8
      %s282 = scalar_lea.vmem %s5, %s281
      %p283 = pneg %p167
      %p284 = pneg %p164
      %p285 = pneg %p195
      %p286 = pneg %p192
      %p287 = scmp.lt.s32.totalorder %s21, 1
      %s288 = scalar_select %p287, %s21, 1
      %p289 = scmp.lt.s32.totalorder %s22, 0
      %s290 = scalar_select %p289, %s22, 0
      %s291 = smul.addr %s288, 8
      %s292 = sadd.s32 %s290, %s291
      %s293 = smul.addr %s292, 8
      %s294 = scalar_lea.vmem %s6, %s293
      %p295 = scmp.lt.s32.totalorder %s21, 1
      %s296 = scalar_select %p295, %s21, 1
      %s297 = smul.addr %s296, 20
      %s298 = smul.addr %s297, 8
      %s299 = scalar_lea.vmem %s3, %s298
      %p300 = scmp.lt.s32.totalorder %s22, 0
      %s301 = scalar_select %p300, %s22, 0
      %s302 = smul.addr %s301, 4
      %s303 = scalar_lea.vmem %s4, %s302
      %p304 = scmp.lt.s32.totalorder %s21, 1
      %s305 = scalar_select %p304, %s21, 1
      %p306 = scmp.lt.s32.totalorder %s22, 0
      %s307 = scalar_select %p306, %s22, 0
      %s308 = smul.addr %s305, 8
      %s309 = sadd.s32 %s307, %s308
      %s310 = smul.addr %s309, 8
      %s311 = scalar_lea.vmem %s5, %s310
      %p312 = scmp.lt.s32.totalorder %s21, 1
      %s313 = scalar_select %p312, %s21, 1
      %p314 = scmp.lt.s32.totalorder %s22, 0
      %s315 = scalar_select %p314, %s22, 0
      %s316 = smul.addr %s313, 8
      %s317 = sadd.s32 %s315, %s316
      %s318 = smul.addr %s317, 8
      %s319 = scalar_lea.vmem %s6, %s318
      %v320 = vld [vmem:[%s0] sm:$0x1]
      %v321 = vld [vmem:[%s1] sm:$0x1]
      %v322 = vld [vmem:[%s299] sm:$0xff]
      %v323 = vld [vmem:[%s299 + $0x8] sm:$0x3]
      %v324 = vld [vmem:[%s299 + $0x10] sm:$0xff]
      %v325 = vld [vmem:[%s299 + $0x18] sm:$0x3]
      %v326 = vld [vmem:[%s299 + $0x20] sm:$0xff]
      %v327 = vld [vmem:[%s299 + $0x28] sm:$0x3]
      %v328 = vld [vmem:[%s299 + $0x30] sm:$0xff]
      %v329 = vld [vmem:[%s299 + $0x38] sm:$0x3]
      %v330 = vld [vmem:[%s299 + $0x40] sm:$0xff]
      %v331 = vld [vmem:[%s299 + $0x48] sm:$0x3]
      %v332 = vld [vmem:[%s299 + $0x50] sm:$0xff]
      %v333 = vld [vmem:[%s299 + $0x58] sm:$0x3]
      %v334 = vld [vmem:[%s299 + $0x60] sm:$0xff]
      %v335 = vld [vmem:[%s299 + $0x68] sm:$0x3]
      %v336 = vld [vmem:[%s299 + $0x70] sm:$0xff]
      %v337 = vld [vmem:[%s299 + $0x78] sm:$0x3]
      %v338 = vld [vmem:[%s299 + $0x80] sm:$0xff]
      %v339 = vld [vmem:[%s299 + $0x88] sm:$0x3]
      %v340 = vld [vmem:[%s299 + $0x90] sm:$0xff]
      %v341 = vld [vmem:[%s299 + $0x98] sm:$0x3]
      %v343 = vperm.slane %v320, 0
      %v345 = vmul.f32 %v322, %v343
      %v346 = vmul.f32 %v323, %v343
      %v347 = vmul.f32 %v324, %v343
      %v348 = vmul.f32 %v325, %v343
      %v349 = vmul.f32 %v326, %v343
      %v350 = vmul.f32 %v327, %v343
      %v351 = vmul.f32 %v328, %v343
      %v352 = vmul.f32 %v329, %v343
      %v353 = vmul.f32 %v330, %v343
      %v354 = vmul.f32 %v331, %v343
      %v355 = vmul.f32 %v332, %v343
      %v356 = vmul.f32 %v333, %v343
      %v357 = vmul.f32 %v334, %v343
      %v358 = vmul.f32 %v335, %v343
      %v359 = vmul.f32 %v336, %v343
      %v360 = vmul.f32 %v337, %v343
      %v361 = vmul.f32 %v338, %v343
      %v362 = vmul.f32 %v339, %v343
      %v363 = vmul.f32 %v340, %v343
      %v364 = vmul.f32 %v341, %v343
      %v366 = vperm.slane %v321, 0
      %v368 = vadd.f32 %v345, %v366
      %v369 = vadd.f32 %v346, %v366
      %v370 = vadd.f32 %v347, %v366
      %v371 = vadd.f32 %v348, %v366
      %v372 = vadd.f32 %v349, %v366
      %v373 = vadd.f32 %v350, %v366
      %v374 = vadd.f32 %v351, %v366
      %v375 = vadd.f32 %v352, %v366
      %v376 = vadd.f32 %v353, %v366
      %v377 = vadd.f32 %v354, %v366
      %v378 = vadd.f32 %v355, %v366
      %v379 = vadd.f32 %v356, %v366
      %v380 = vadd.f32 %v357, %v366
      %v381 = vadd.f32 %v358, %v366
      %v382 = vadd.f32 %v359, %v366
      %v383 = vadd.f32 %v360, %v366
      %v384 = vadd.f32 %v361, %v366
      %v385 = vadd.f32 %v362, %v366
      %v386 = vadd.f32 %v363, %v366
      %v387 = vadd.f32 %v364, %v366
      %v388 = vmax.f32 %v368, 0.0
      %v389 = vmax.f32 %v369, 0.0
      %v390 = vmax.f32 %v370, 0.0
      %v391 = vmax.f32 %v371, 0.0
      %v392 = vmax.f32 %v372, 0.0
      %v393 = vmax.f32 %v373, 0.0
      %v394 = vmax.f32 %v374, 0.0
      %v395 = vmax.f32 %v375, 0.0
      %v396 = vmax.f32 %v376, 0.0
      %v397 = vmax.f32 %v377, 0.0
      %v398 = vmax.f32 %v378, 0.0
      %v399 = vmax.f32 %v379, 0.0
      %v400 = vmax.f32 %v380, 0.0
      %v401 = vmax.f32 %v381, 0.0
      %v402 = vmax.f32 %v382, 0.0
      %v403 = vmax.f32 %v383, 0.0
      %v404 = vmax.f32 %v384, 0.0
      %v405 = vmax.f32 %v385, 0.0
      %v406 = vmax.f32 %v386, 0.0
      %v407 = vmax.f32 %v387, 0.0
      %v408 = vld [vmem:[%s2] sm:$0xff]
      %v409 = vld [vmem:[%s2 + $0x8] sm:$0x3]
      %v410 = vld [vmem:[%s2 + $0x10] sm:$0xff]
      %v411 = vld [vmem:[%s2 + $0x18] sm:$0x3]
      %v412 = vld [vmem:[%s2 + $0x20] sm:$0xff]
      %v413 = vld [vmem:[%s2 + $0x28] sm:$0x3]
      %v414 = vld [vmem:[%s2 + $0x30] sm:$0xff]
      %v415 = vld [vmem:[%s2 + $0x38] sm:$0x3]
      %v416 = vld [vmem:[%s2 + $0x40] sm:$0xff]
      %v417 = vld [vmem:[%s2 + $0x48] sm:$0x3]
      %v418 = vld [vmem:[%s2 + $0x50] sm:$0xff]
      %v419 = vld [vmem:[%s2 + $0x58] sm:$0x3]
      %v420 = vld [vmem:[%s2 + $0x60] sm:$0xff]
      %v421 = vld [vmem:[%s2 + $0x68] sm:$0x3]
      %v422 = vld [vmem:[%s2 + $0x70] sm:$0xff]
      %v423 = vld [vmem:[%s2 + $0x78] sm:$0x3]
      %v424 = vld [vmem:[%s2 + $0x80] sm:$0xff]
      %v425 = vld [vmem:[%s2 + $0x88] sm:$0x3]
      %v426 = vld [vmem:[%s2 + $0x90] sm:$0xff]
      %v427 = vld [vmem:[%s2 + $0x98] sm:$0x3]
      %429 = vset.pattern.permute.xlu0 0
      %430 = vperm.xlu0 %429, %v408
      %v431 = vpop.permute.xlu0 %430
      %434 = vset.pattern.permute.xlu0 0
      %435 = vperm.xlu0 %434, %v409
      %v436 = vpop.permute.xlu0 %435
      %439 = vset.pattern.permute.xlu0 0
      %440 = vperm.xlu0 %439, %v410
      %v441 = vpop.permute.xlu0 %440
      %444 = vset.pattern.permute.xlu0 0
      %445 = vperm.xlu0 %444, %v411
      %v446 = vpop.permute.xlu0 %445
      %449 = vset.pattern.permute.xlu0 0
      %450 = vperm.xlu0 %449, %v412
      %v451 = vpop.permute.xlu0 %450
      %454 = vset.pattern.permute.xlu0 0
      %455 = vperm.xlu0 %454, %v413
      %v456 = vpop.permute.xlu0 %455
      %459 = vset.pattern.permute.xlu0 0
      %460 = vperm.xlu0 %459, %v414
      %v461 = vpop.permute.xlu0 %460
      %464 = vset.pattern.permute.xlu0 0
      %465 = vperm.xlu0 %464, %v415
      %v466 = vpop.permute.xlu0 %465
      %469 = vset.pattern.permute.xlu0 0
      %470 = vperm.xlu0 %469, %v416
      %v471 = vpop.permute.xlu0 %470
      %474 = vset.pattern.permute.xlu0 0
      %475 = vperm.xlu0 %474, %v417
      %v476 = vpop.permute.xlu0 %475
      %479 = vset.pattern.permute.xlu0 0
      %480 = vperm.xlu0 %479, %v418
      %v481 = vpop.permute.xlu0 %480
      %484 = vset.pattern.permute.xlu0 0
      %485 = vperm.xlu0 %484, %v419
      %v486 = vpop.permute.xlu0 %485
      %489 = vset.pattern.permute.xlu0 0
      %490 = vperm.xlu0 %489, %v420
      %v491 = vpop.permute.xlu0 %490
      %494 = vset.pattern.permute.xlu0 0
      %495 = vperm.xlu0 %494, %v421
      %v496 = vpop.permute.xlu0 %495
      %499 = vset.pattern.permute.xlu0 0
      %500 = vperm.xlu0 %499, %v422
      %v501 = vpop.permute.xlu0 %500
      %504 = vset.pattern.permute.xlu0 0
      %505 = vperm.xlu0 %504, %v423
      %v506 = vpop.permute.xlu0 %505
      %509 = vset.pattern.permute.xlu0 0
      %510 = vperm.xlu0 %509, %v424
      %v511 = vpop.permute.xlu0 %510
      %514 = vset.pattern.permute.xlu0 0
      %515 = vperm.xlu0 %514, %v425
      %v516 = vpop.permute.xlu0 %515
      %519 = vset.pattern.permute.xlu0 0
      %520 = vperm.xlu0 %519, %v426
      %v521 = vpop.permute.xlu0 %520
      %524 = vset.pattern.permute.xlu0 0
      %525 = vperm.xlu0 %524, %v427
      %v526 = vpop.permute.xlu0 %525
      %v528 = vmul.f32 %v388, %v431
      %v529 = vmul.f32 %v389, %v436
      %v530 = vmul.f32 %v390, %v441
      %v531 = vmul.f32 %v391, %v446
      %v532 = vmul.f32 %v392, %v451
      %v533 = vmul.f32 %v393, %v456
      %v534 = vmul.f32 %v394, %v461
      %v535 = vmul.f32 %v395, %v466
      %v536 = vmul.f32 %v396, %v471
      %v537 = vmul.f32 %v397, %v476
      %v538 = vmul.f32 %v398, %v481
      %v539 = vmul.f32 %v399, %v486
      %v540 = vmul.f32 %v400, %v491
      %v541 = vmul.f32 %v401, %v496
      %v542 = vmul.f32 %v402, %v501
      %v543 = vmul.f32 %v403, %v506
      %v544 = vmul.f32 %v404, %v511
      %v545 = vmul.f32 %v405, %v516
      %v546 = vmul.f32 %v406, %v521
      %v547 = vmul.f32 %v407, %v526
      %548 = vst [vmem:[#allocation2] sm:$0xff] %v528
      %549 = vst [vmem:[#allocation2 + $0x8] sm:$0x3] %v529
      %550 = vst [vmem:[#allocation2 + $0x10] sm:$0xff] %v530
      %551 = vst [vmem:[#allocation2 + $0x18] sm:$0x3] %v531
      %552 = vst [vmem:[#allocation2 + $0x20] sm:$0xff] %v532
      %553 = vst [vmem:[#allocation2 + $0x28] sm:$0x3] %v533
      %554 = vst [vmem:[#allocation2 + $0x30] sm:$0xff] %v534
      %555 = vst [vmem:[#allocation2 + $0x38] sm:$0x3] %v535
      %556 = vst [vmem:[#allocation2 + $0x40] sm:$0xff] %v536
      %557 = vst [vmem:[#allocation2 + $0x48] sm:$0x3] %v537
      %558 = vst [vmem:[#allocation2 + $0x50] sm:$0xff] %v538
      %559 = vst [vmem:[#allocation2 + $0x58] sm:$0x3] %v539
      %560 = vst [vmem:[#allocation2 + $0x60] sm:$0xff] %v540
      %561 = vst [vmem:[#allocation2 + $0x68] sm:$0x3] %v541
      %562 = vst [vmem:[#allocation2 + $0x70] sm:$0xff] %v542
      %563 = vst [vmem:[#allocation2 + $0x78] sm:$0x3] %v543
      %564 = vst [vmem:[#allocation2 + $0x80] sm:$0xff] %v544
      %565 = vst [vmem:[#allocation2 + $0x88] sm:$0x3] %v545
      %566 = vst [vmem:[#allocation2 + $0x90] sm:$0xff] %v546
      %567 = vst [vmem:[#allocation2 + $0x98] sm:$0x3] %v547
      %568 = vst [vmem:[#allocation3] sm:$0xff] 0.0
      %569 = vst [vmem:[#allocation3 + $0x8] sm:$0xff] 0.0
      %570 = vst [vmem:[#allocation3 + $0x10] sm:$0xff] 0.0
      %571 = vst [vmem:[#allocation3 + $0x18] sm:$0xff] 0.0
      %572 = vst [vmem:[#allocation3 + $0x20] sm:$0xff] 0.0
      %573 = vst [vmem:[#allocation3 + $0x28] sm:$0xff] 0.0
      %574 = vst [vmem:[#allocation3 + $0x30] sm:$0xff] 0.0
      %575 = vst [vmem:[#allocation3 + $0x38] sm:$0xff] 0.0
      %v576 = vld [vmem:[#allocation2] sm:$0xff]
      %v577 = vld [vmem:[#allocation2 + $0x10] sm:$0xff]
      %v578 = vld [vmem:[#allocation2 + $0x20] sm:$0xff]
      %v579 = vld [vmem:[#allocation2 + $0x30] sm:$0xff]
      %v580 = vld [vmem:[#allocation2 + $0x40] sm:$0xff]
      %v581 = vld [vmem:[#allocation2 + $0x50] sm:$0xff]
      %v582 = vld [vmem:[#allocation2 + $0x60] sm:$0xff]
      %v583 = vld [vmem:[#allocation2 + $0x70] sm:$0xff]
      %v584 = vpack.c.bf16 %v577, %v576
      %v585 = vpack.c.bf16 %v579, %v578
      %v586 = vpack.c.bf16 %v581, %v580
      %v587 = vpack.c.bf16 %v583, %v582
      %v588 = vld [vmem:[#allocation3] sm:$0xff]
      %v589 = vld [vmem:[#allocation3 + $0x8] sm:$0xff]
      %v590 = vld [vmem:[#allocation3 + $0x10] sm:$0xff]
      %v591 = vld [vmem:[#allocation3 + $0x18] sm:$0xff]
      %v592 = vld [vmem:[#allocation3 + $0x20] sm:$0xff]
      %v593 = vld [vmem:[#allocation3 + $0x28] sm:$0xff]
      %v594 = vld [vmem:[#allocation3 + $0x30] sm:$0xff]
      %v595 = vld [vmem:[#allocation3 + $0x38] sm:$0xff]
      %v596 = vld [vmem:[%s303] sm:$0xf]
      %v597 = vld [vmem:[%s303 + $0x4] sm:$0xf]
      %v598 = vld [vmem:[%s303 + $0x8] sm:$0xf]
      %v599 = vld [vmem:[%s303 + $0xc] sm:$0xf]
      %v600 = vld [vmem:[%s303 + $0x10] sm:$0xf]
      %v601 = vld [vmem:[%s303 + $0x14] sm:$0xf]
      %v602 = vld [vmem:[%s303 + $0x18] sm:$0xf]
      %v603 = vld [vmem:[%s303 + $0x1c] sm:$0xf]
      %v604 = vld [vmem:[%s303 + $0x20] sm:$0xf]
      %v605 = vld [vmem:[%s303 + $0x24] sm:$0xf]
      %v606 = vld [vmem:[%s303 + $0x28] sm:$0xf]
      %v607 = vld [vmem:[%s303 + $0x2c] sm:$0xf]
      %v608 = vld [vmem:[%s303 + $0x30] sm:$0xf]
      %v609 = vld [vmem:[%s303 + $0x34] sm:$0xf]
      %v610 = vld [vmem:[%s303 + $0x38] sm:$0xf]
      %v611 = vld [vmem:[%s303 + $0x3c] sm:$0xf]
      %v628 = vunpack.c.l.b16 %v596
      %v629 = vunpack.c.l.b16 %v597
      %v630 = vunpack.c.l.b16 %v598
      %v631 = vunpack.c.l.b16 %v599
      %v632 = vunpack.c.l.b16 %v600
      %v633 = vunpack.c.l.b16 %v601
      %v634 = vunpack.c.l.b16 %v602
      %v635 = vunpack.c.l.b16 %v603
      %v636 = vunpack.c.l.b16 %v604
      %v637 = vunpack.c.l.b16 %v605
      %v638 = vunpack.c.l.b16 %v606
      %v639 = vunpack.c.l.b16 %v607
      %v640 = vunpack.c.l.b16 %v608
      %v641 = vunpack.c.l.b16 %v609
      %v642 = vunpack.c.l.b16 %v610
      %v643 = vunpack.c.l.b16 %v611
      %v644 = vpack.c.b16 %v629, %v628
      %v645 = vpack.c.b16 %v631, %v630
      %v646 = vpack.c.b16 %v633, %v632
      %v647 = vpack.c.b16 %v635, %v634
      %v648 = vpack.c.b16 %v637, %v636
      %v649 = vpack.c.b16 %v639, %v638
      %v650 = vpack.c.b16 %v641, %v640
      %v651 = vpack.c.b16 %v643, %v642
      %660 = vmatpush.bf16.msra.mxu0 %v651
      %661 = vmatpush.bf16.msra.mxu0 %v650
      %662 = vmatpush.bf16.msra.mxu0 %v649
      %663 = vmatpush.bf16.msra.mxu0 %v648
      %664 = vmatpush.bf16.msra.mxu0 %v647
      %665 = vmatpush.bf16.msra.mxu0 %v646
      %666 = vmatpush.bf16.msra.mxu0 %v645
      %667 = vmatpush.bf16.msra.mxu0 %v644
      %668 = vmatmul.bf16.gmra.mxu0 %v584
      %v669 = vpop.f32.mrf.mxu0
      %v670 = vadd.f32 0.0, %v669
      %v671 = vpop.f32.mrf.mxu0
      %v672 = vadd.f32 0.0, %v671
      %673 = vmatmul.bf16.gmra.mxu0 %v585
      %v674 = vpop.f32.mrf.mxu0
      %v675 = vadd.f32 0.0, %v674
      %v676 = vpop.f32.mrf.mxu0
      %v677 = vadd.f32 0.0, %v676
      %678 = vmatmul.bf16.gmra.mxu0 %v586
      %v679 = vpop.f32.mrf.mxu0
      %v680 = vadd.f32 0.0, %v679
      %v681 = vpop.f32.mrf.mxu0
      %v682 = vadd.f32 0.0, %v681
      %683 = vmatmul.bf16.gmra.mxu0 %v587
      %v684 = vpop.f32.mrf.mxu0
      %v685 = vadd.f32 0.0, %v684
      %v686 = vpop.f32.mrf.mxu0
      %v687 = vadd.f32 0.0, %v686
      %688 = vdwg.mxu0
      %v689 = vadd.f32 %v588, %v670
      %v690 = vadd.f32 %v589, %v672
      %v691 = vadd.f32 %v590, %v675
      %v692 = vadd.f32 %v591, %v677
      %v693 = vadd.f32 %v592, %v680
      %v694 = vadd.f32 %v593, %v682
      %v695 = vadd.f32 %v594, %v685
      %v696 = vadd.f32 %v595, %v687
      %697 = vst [vmem:[#allocation3] sm:$0xff] %v689
      %698 = vst [vmem:[#allocation3 + $0x8] sm:$0xff] %v690
      %699 = vst [vmem:[#allocation3 + $0x10] sm:$0xff] %v691
      %700 = vst [vmem:[#allocation3 + $0x18] sm:$0xff] %v692
      %701 = vst [vmem:[#allocation3 + $0x20] sm:$0xff] %v693
      %702 = vst [vmem:[#allocation3 + $0x28] sm:$0xff] %v694
      %703 = vst [vmem:[#allocation3 + $0x30] sm:$0xff] %v695
      %704 = vst [vmem:[#allocation3 + $0x38] sm:$0xff] %v696
      %v705 = vld [vmem:[#allocation2 + $0x1] sm:$0xff]
      %v706 = vld [vmem:[#allocation2 + $0x11] sm:$0xff]
      %v707 = vld [vmem:[#allocation2 + $0x21] sm:$0xff]
      %v708 = vld [vmem:[#allocation2 + $0x31] sm:$0xff]
      %v709 = vld [vmem:[#allocation2 + $0x41] sm:$0xff]
      %v710 = vld [vmem:[#allocation2 + $0x51] sm:$0xff]
      %v711 = vld [vmem:[#allocation2 + $0x61] sm:$0xff]
      %v712 = vld [vmem:[#allocation2 + $0x71] sm:$0xff]
      %v713 = vpack.c.bf16 %v706, %v705
      %v714 = vpack.c.bf16 %v708, %v707
      %v715 = vpack.c.bf16 %v710, %v709
      %v716 = vpack.c.bf16 %v712, %v711
      %v717 = vld [vmem:[#allocation3] sm:$0xff]
      %v718 = vld [vmem:[#allocation3 + $0x8] sm:$0xff]
      %v719 = vld [vmem:[#allocation3 + $0x10] sm:$0xff]
      %v720 = vld [vmem:[#allocation3 + $0x18] sm:$0xff]
      %v721 = vld [vmem:[#allocation3 + $0x20] sm:$0xff]
      %v722 = vld [vmem:[#allocation3 + $0x28] sm:$0xff]
      %v723 = vld [vmem:[#allocation3 + $0x30] sm:$0xff]
      %v724 = vld [vmem:[#allocation3 + $0x38] sm:$0xff]
      %s725 = scalar_lea.vmem %s303, 64
      %v726 = vld [vmem:[%s725] sm:$0xf]
      %v727 = vld [vmem:[%s725 + $0x4] sm:$0xf]
      %v728 = vld [vmem:[%s725 + $0x8] sm:$0xf]
      %v729 = vld [vmem:[%s725 + $0xc] sm:$0xf]
      %v730 = vld [vmem:[%s725 + $0x10] sm:$0xf]
      %v731 = vld [vmem:[%s725 + $0x14] sm:$0xf]
      %v732 = vld [vmem:[%s725 + $0x18] sm:$0xf]
      %v733 = vld [vmem:[%s725 + $0x1c] sm:$0xf]
      %v734 = vld [vmem:[%s725 + $0x20] sm:$0xf]
      %v735 = vld [vmem:[%s725 + $0x24] sm:$0xf]
      %v736 = vld [vmem:[%s725 + $0x28] sm:$0xf]
      %v737 = vld [vmem:[%s725 + $0x2c] sm:$0xf]
      %v738 = vld [vmem:[%s725 + $0x30] sm:$0xf]
      %v739 = vld [vmem:[%s725 + $0x34] sm:$0xf]
      %v740 = vld [vmem:[%s725 + $0x38] sm:$0xf]
      %v741 = vld [vmem:[%s725 + $0x3c] sm:$0xf]
      %v758 = vunpack.c.l.b16 %v726
      %v759 = vunpack.c.l.b16 %v727
      %v760 = vunpack.c.l.b16 %v728
      %v761 = vunpack.c.l.b16 %v729
      %v762 = vunpack.c.l.b16 %v730
      %v763 = vunpack.c.l.b16 %v731
      %v764 = vunpack.c.l.b16 %v732
      %v765 = vunpack.c.l.b16 %v733
      %v766 = vunpack.c.l.b16 %v734
      %v767 = vunpack.c.l.b16 %v735
      %v768 = vunpack.c.l.b16 %v736
      %v769 = vunpack.c.l.b16 %v737
      %v770 = vunpack.c.l.b16 %v738
      %v771 = vunpack.c.l.b16 %v739
      %v772 = vunpack.c.l.b16 %v740
      %v773 = vunpack.c.l.b16 %v741
      %v774 = vpack.c.b16 %v759, %v758
      %v775 = vpack.c.b16 %v761, %v760
      %v776 = vpack.c.b16 %v763, %v762
      %v777 = vpack.c.b16 %v765, %v764
      %v778 = vpack.c.b16 %v767, %v766
      %v779 = vpack.c.b16 %v769, %v768
      %v780 = vpack.c.b16 %v771, %v770
      %v781 = vpack.c.b16 %v773, %v772
      %790 = vmatpush.bf16.msra.mxu0 %v781
      %791 = vmatpush.bf16.msra.mxu0 %v780
      %792 = vmatpush.bf16.msra.mxu0 %v779
      %793 = vmatpush.bf16.msra.mxu0 %v778
      %794 = vmatpush.bf16.msra.mxu0 %v777
      %795 = vmatpush.bf16.msra.mxu0 %v776
      %796 = vmatpush.bf16.msra.mxu0 %v775
      %797 = vmatpush.bf16.msra.mxu0 %v774
      %798 = vmatmul.bf16.gmra.mxu0 %v713
      %v799 = vpop.f32.mrf.mxu0
      %v800 = vadd.f32 0.0, %v799
      %v801 = vpop.f32.mrf.mxu0
      %v802 = vadd.f32 0.0, %v801
      %803 = vmatmul.bf16.gmra.mxu0 %v714
      %v804 = vpop.f32.mrf.mxu0
      %v805 = vadd.f32 0.0, %v804
      %v806 = vpop.f32.mrf.mxu0
      %v807 = vadd.f32 0.0, %v806
      %808 = vmatmul.bf16.gmra.mxu0 %v715
      %v809 = vpop.f32.mrf.mxu0
      %v810 = vadd.f32 0.0, %v809
      %v811 = vpop.f32.mrf.mxu0
      %v812 = vadd.f32 0.0, %v811
      %813 = vmatmul.bf16.gmra.mxu0 %v716
      %v814 = vpop.f32.mrf.mxu0
      %v815 = vadd.f32 0.0, %v814
      %v816 = vpop.f32.mrf.mxu0
      %v817 = vadd.f32 0.0, %v816
      %818 = vdwg.mxu0
      %v819 = vadd.f32 %v717, %v800
      %v820 = vadd.f32 %v718, %v802
      %v821 = vadd.f32 %v719, %v805
      %v822 = vadd.f32 %v720, %v807
      %v823 = vadd.f32 %v721, %v810
      %v824 = vadd.f32 %v722, %v812
      %v825 = vadd.f32 %v723, %v815
      %v826 = vadd.f32 %v724, %v817
      %827 = vst [vmem:[#allocation3] sm:$0xff] %v819
      %828 = vst [vmem:[#allocation3 + $0x8] sm:$0xff] %v820
      %829 = vst [vmem:[#allocation3 + $0x10] sm:$0xff] %v821
      %830 = vst [vmem:[#allocation3 + $0x18] sm:$0xff] %v822
      %831 = vst [vmem:[#allocation3 + $0x20] sm:$0xff] %v823
      %832 = vst [vmem:[#allocation3 + $0x28] sm:$0xff] %v824
      %833 = vst [vmem:[#allocation3 + $0x30] sm:$0xff] %v825
      %834 = vst [vmem:[#allocation3 + $0x38] sm:$0xff] %v826
      %v835 = vld [vmem:[#allocation2 + $0x2] sm:$0xff]
      %v836 = vld [vmem:[#allocation2 + $0x12] sm:$0xff]
      %v837 = vld [vmem:[#allocation2 + $0x22] sm:$0xff]
      %v838 = vld [vmem:[#allocation2 + $0x32] sm:$0xff]
      %v839 = vld [vmem:[#allocation2 + $0x42] sm:$0xff]
      %v840 = vld [vmem:[#allocation2 + $0x52] sm:$0xff]
      %v841 = vld [vmem:[#allocation2 + $0x62] sm:$0xff]
      %v842 = vld [vmem:[#allocation2 + $0x72] sm:$0xff]
      %v843 = vpack.c.bf16 %v836, %v835
      %v844 = vpack.c.bf16 %v838, %v837
      %v845 = vpack.c.bf16 %v840, %v839
      %v846 = vpack.c.bf16 %v842, %v841
      %v847 = vld [vmem:[#allocation3] sm:$0xff]
      %v848 = vld [vmem:[#allocation3 + $0x8] sm:$0xff]
      %v849 = vld [vmem:[#allocation3 + $0x10] sm:$0xff]
      %v850 = vld [vmem:[#allocation3 + $0x18] sm:$0xff]
      %v851 = vld [vmem:[#allocation3 + $0x20] sm:$0xff]
      %v852 = vld [vmem:[#allocation3 + $0x28] sm:$0xff]
      %v853 = vld [vmem:[#allocation3 + $0x30] sm:$0xff]
      %v854 = vld [vmem:[#allocation3 + $0x38] sm:$0xff]
      %s855 = scalar_lea.vmem %s303, 128
      %v856 = vld [vmem:[%s855] sm:$0xf]
      %v857 = vld [vmem:[%s855 + $0x4] sm:$0xf]
      %v858 = vld [vmem:[%s855 + $0x8] sm:$0xf]
      %v859 = vld [vmem:[%s855 + $0xc] sm:$0xf]
      %v860 = vld [vmem:[%s855 + $0x10] sm:$0xf]
      %v861 = vld [vmem:[%s855 + $0x14] sm:$0xf]
      %v862 = vld [vmem:[%s855 + $0x18] sm:$0xf]
      %v863 = vld [vmem:[%s855 + $0x1c] sm:$0xf]
      %v864 = vld [vmem:[%s855 + $0x20] sm:$0xf]
      %v865 = vld [vmem:[%s855 + $0x24] sm:$0xf]
      %v866 = vld [vmem:[%s855 + $0x28] sm:$0xf]
      %v867 = vld [vmem:[%s855 + $0x2c] sm:$0xf]
      %v868 = vld [vmem:[%s855 + $0x30] sm:$0xf]
      %v869 = vld [vmem:[%s855 + $0x34] sm:$0xf]
      %v870 = vld [vmem:[%s855 + $0x38] sm:$0xf]
      %v871 = vld [vmem:[%s855 + $0x3c] sm:$0xf]
      %v888 = vunpack.c.l.b16 %v856
      %v889 = vunpack.c.l.b16 %v857
      %v890 = vunpack.c.l.b16 %v858
      %v891 = vunpack.c.l.b16 %v859
      %v892 = vunpack.c.l.b16 %v860
      %v893 = vunpack.c.l.b16 %v861
      %v894 = vunpack.c.l.b16 %v862
      %v895 = vunpack.c.l.b16 %v863
      %v896 = vunpack.c.l.b16 %v864
      %v897 = vunpack.c.l.b16 %v865
      %v898 = vunpack.c.l.b16 %v866
      %v899 = vunpack.c.l.b16 %v867
      %v900 = vunpack.c.l.b16 %v868
      %v901 = vunpack.c.l.b16 %v869
      %v902 = vunpack.c.l.b16 %v870
      %v903 = vunpack.c.l.b16 %v871
      %v904 = vpack.c.b16 %v889, %v888
      %v905 = vpack.c.b16 %v891, %v890
      %v906 = vpack.c.b16 %v893, %v892
      %v907 = vpack.c.b16 %v895, %v894
      %v908 = vpack.c.b16 %v897, %v896
      %v909 = vpack.c.b16 %v899, %v898
      %v910 = vpack.c.b16 %v901, %v900
      %v911 = vpack.c.b16 %v903, %v902
      %920 = vmatpush.bf16.msra.mxu0 %v911
      %921 = vmatpush.bf16.msra.mxu0 %v910
      %922 = vmatpush.bf16.msra.mxu0 %v909
      %923 = vmatpush.bf16.msra.mxu0 %v908
      %924 = vmatpush.bf16.msra.mxu0 %v907
      %925 = vmatpush.bf16.msra.mxu0 %v906
      %926 = vmatpush.bf16.msra.mxu0 %v905
      %927 = vmatpush.bf16.msra.mxu0 %v904
      %928 = vmatmul.bf16.gmra.mxu0 %v843
      %v929 = vpop.f32.mrf.mxu0
      %v930 = vadd.f32 0.0, %v929
      %v931 = vpop.f32.mrf.mxu0
      %v932 = vadd.f32 0.0, %v931
      %933 = vmatmul.bf16.gmra.mxu0 %v844
      %v934 = vpop.f32.mrf.mxu0
      %v935 = vadd.f32 0.0, %v934
      %v936 = vpop.f32.mrf.mxu0
      %v937 = vadd.f32 0.0, %v936
      %938 = vmatmul.bf16.gmra.mxu0 %v845
      %v939 = vpop.f32.mrf.mxu0
      %v940 = vadd.f32 0.0, %v939
      %v941 = vpop.f32.mrf.mxu0
      %v942 = vadd.f32 0.0, %v941
      %943 = vmatmul.bf16.gmra.mxu0 %v846
      %v944 = vpop.f32.mrf.mxu0
      %v945 = vadd.f32 0.0, %v944
      %v946 = vpop.f32.mrf.mxu0
      %v947 = vadd.f32 0.0, %v946
      %948 = vdwg.mxu0
      %v949 = vadd.f32 %v847, %v930
      %v950 = vadd.f32 %v848, %v932
      %v951 = vadd.f32 %v849, %v935
      %v952 = vadd.f32 %v850, %v937
      %v953 = vadd.f32 %v851, %v940
      %v954 = vadd.f32 %v852, %v942
      %v955 = vadd.f32 %v853, %v945
      %v956 = vadd.f32 %v854, %v947
      %957 = vst [vmem:[#allocation3] sm:$0xff] %v949
      %958 = vst [vmem:[#allocation3 + $0x8] sm:$0xff] %v950
      %959 = vst [vmem:[#allocation3 + $0x10] sm:$0xff] %v951
      %960 = vst [vmem:[#allocation3 + $0x18] sm:$0xff] %v952
      %961 = vst [vmem:[#allocation3 + $0x20] sm:$0xff] %v953
      %962 = vst [vmem:[#allocation3 + $0x28] sm:$0xff] %v954
      %963 = vst [vmem:[#allocation3 + $0x30] sm:$0xff] %v955
      %964 = vst [vmem:[#allocation3 + $0x38] sm:$0xff] %v956
      %s965 = scalar_lea.vmem [#allocation2], 16
      %v966 = vld [vmem:[%s965] sm:$0xff]
      %v967 = vld [vmem:[%s965 + $0x10] sm:$0xff]
      %v968 = vld [vmem:[%s965 + $0x20] sm:$0xff]
      %v969 = vld [vmem:[%s965 + $0x30] sm:$0xff]
      %v970 = vld [vmem:[%s965 + $0x40] sm:$0xff]
      %v971 = vld [vmem:[%s965 + $0x50] sm:$0xff]
      %v972 = vld [vmem:[%s965 + $0x60] sm:$0xff]
      %v973 = vld [vmem:[%s965 + $0x70] sm:$0xff]
      %v974 = vpack.c.bf16 %v967, %v966
      %v975 = vpack.c.bf16 %v969, %v968
      %v976 = vpack.c.bf16 %v971, %v970
      %v977 = vpack.c.bf16 %v973, %v972
      %v978 = vld [vmem:[#allocation3] sm:$0xff]
      %v979 = vld [vmem:[#allocation3 + $0x8] sm:$0xff]
      %v980 = vld [vmem:[#allocation3 + $0x10] sm:$0xff]
      %v981 = vld [vmem:[#allocation3 + $0x18] sm:$0xff]
      %v982 = vld [vmem:[#allocation3 + $0x20] sm:$0xff]
      %v983 = vld [vmem:[#allocation3 + $0x28] sm:$0xff]
      %v984 = vld [vmem:[#allocation3 + $0x30] sm:$0xff]
      %v985 = vld [vmem:[#allocation3 + $0x38] sm:$0xff]
      %s986 = scalar_lea.vmem %s303, 192
      %v987 = vld [vmem:[%s986] sm:$0xf]
      %v988 = vld [vmem:[%s986 + $0x4] sm:$0xf]
      %v989 = vld [vmem:[%s986 + $0x8] sm:$0xf]
      %v990 = vld [vmem:[%s986 + $0xc] sm:$0xf]
      %v991 = vld [vmem:[%s986 + $0x10] sm:$0xf]
      %v992 = vld [vmem:[%s986 + $0x14] sm:$0xf]
      %v993 = vld [vmem:[%s986 + $0x18] sm:$0xf]
      %v994 = vld [vmem:[%s986 + $0x1c] sm:$0xf]
      %v995 = vld [vmem:[%s986 + $0x20] sm:$0xf]
      %v996 = vld [vmem:[%s986 + $0x24] sm:$0xf]
      %v997 = vld [vmem:[%s986 + $0x28] sm:$0xf]
      %v998 = vld [vmem:[%s986 + $0x2c] sm:$0xf]
      %v999 = vld [vmem:[%s986 + $0x30] sm:$0xf]
      %v1000 = vld [vmem:[%s986 + $0x34] sm:$0xf]
      %v1001 = vld [vmem:[%s986 + $0x38] sm:$0xf]
      %v1002 = vld [vmem:[%s986 + $0x3c] sm:$0xf]
      %v1019 = vunpack.c.l.b16 %v987
      %v1020 = vunpack.c.l.b16 %v988
      %v1021 = vunpack.c.l.b16 %v989
      %v1022 = vunpack.c.l.b16 %v990
      %v1023 = vunpack.c.l.b16 %v991
      %v1024 = vunpack.c.l.b16 %v992
      %v1025 = vunpack.c.l.b16 %v993
      %v1026 = vunpack.c.l.b16 %v994
      %v1027 = vunpack.c.l.b16 %v995
      %v1028 = vunpack.c.l.b16 %v996
      %v1029 = vunpack.c.l.b16 %v997
      %v1030 = vunpack.c.l.b16 %v998
      %v1031 = vunpack.c.l.b16 %v999
      %v1032 = vunpack.c.l.b16 %v1000
      %v1033 = vunpack.c.l.b16 %v1001
      %v1034 = vunpack.c.l.b16 %v1002
      %v1035 = vpack.c.b16 %v1020, %v1019
      %v1036 = vpack.c.b16 %v1022, %v1021
      %v1037 = vpack.c.b16 %v1024, %v1023
      %v1038 = vpack.c.b16 %v1026, %v1025
      %v1039 = vpack.c.b16 %v1028, %v1027
      %v1040 = vpack.c.b16 %v1030, %v1029
      %v1041 = vpack.c.b16 %v1032, %v1031
      %v1042 = vpack.c.b16 %v1034, %v1033
      %1051 = vmatpush.bf16.msra.mxu0 %v1042
      %1052 = vmatpush.bf16.msra.mxu0 %v1041
      %1053 = vmatpush.bf16.msra.mxu0 %v1040
      %1054 = vmatpush.bf16.msra.mxu0 %v1039
      %1055 = vmatpush.bf16.msra.mxu0 %v1038
      %1056 = vmatpush.bf16.msra.mxu0 %v1037
      %1057 = vmatpush.bf16.msra.mxu0 %v1036
      %1058 = vmatpush.bf16.msra.mxu0 %v1035
      %1059 = vmatmul.bf16.gmra.mxu0 %v974
      %v1060 = vpop.f32.mrf.mxu0
      %v1061 = vadd.f32 0.0, %v1060
      %v1062 = vpop.f32.mrf.mxu0
      %v1063 = vadd.f32 0.0, %v1062
      %1064 = vmatmul.bf16.gmra.mxu0 %v975
      %v1065 = vpop.f32.mrf.mxu0
      %v1066 = vadd.f32 0.0, %v1065
      %v1067 = vpop.f32.mrf.mxu0
      %v1068 = vadd.f32 0.0, %v1067
      %1069 = vmatmul.bf16.gmra.mxu0 %v976
      %v1070 = vpop.f32.mrf.mxu0
      %v1071 = vadd.f32 0.0, %v1070
      %v1072 = vpop.f32.mrf.mxu0
      %v1073 = vadd.f32 0.0, %v1072
      %1074 = vmatmul.bf16.gmra.mxu0 %v977
      %v1075 = vpop.f32.mrf.mxu0
      %v1076 = vadd.f32 0.0, %v1075
      %v1077 = vpop.f32.mrf.mxu0
      %v1078 = vadd.f32 0.0, %v1077
      %1079 = vdwg.mxu0
      %v1080 = vadd.f32 %v978, %v1061
      %v1081 = vadd.f32 %v979, %v1063
      %v1082 = vadd.f32 %v980, %v1066
      %v1083 = vadd.f32 %v981, %v1068
      %v1084 = vadd.f32 %v982, %v1071
      %v1085 = vadd.f32 %v983, %v1073
      %v1086 = vadd.f32 %v984, %v1076
      %v1087 = vadd.f32 %v985, %v1078
      %1088 = vst [vmem:[#allocation3] sm:$0xff] %v1080
      %1089 = vst [vmem:[#allocation3 + $0x8] sm:$0xff] %v1081
      %1090 = vst [vmem:[#allocation3 + $0x10] sm:$0xff] %v1082
      %1091 = vst [vmem:[#allocation3 + $0x18] sm:$0xff] %v1083
      %1092 = vst [vmem:[#allocation3 + $0x20] sm:$0xff] %v1084
      %1093 = vst [vmem:[#allocation3 + $0x28] sm:$0xff] %v1085
      %1094 = vst [vmem:[#allocation3 + $0x30] sm:$0xff] %v1086
      %1095 = vst [vmem:[#allocation3 + $0x38] sm:$0xff] %v1087
      %v1096 = vld [vmem:[%s965 + $0x1] sm:$0xff]
      %v1097 = vld [vmem:[%s965 + $0x11] sm:$0xff]
      %v1098 = vld [vmem:[%s965 + $0x21] sm:$0xff]
      %v1099 = vld [vmem:[%s965 + $0x31] sm:$0xff]
      %v1100 = vld [vmem:[%s965 + $0x41] sm:$0xff]
      %v1101 = vld [vmem:[%s965 + $0x51] sm:$0xff]
      %v1102 = vld [vmem:[%s965 + $0x61] sm:$0xff]
      %v1103 = vld [vmem:[%s965 + $0x71] sm:$0xff]
      %v1104 = vpack.c.bf16 %v1097, %v1096
      %v1105 = vpack.c.bf16 %v1099, %v1098
      %v1106 = vpack.c.bf16 %v1101, %v1100
      %v1107 = vpack.c.bf16 %v1103, %v1102
      %v1108 = vld [vmem:[#allocation3] sm:$0xff]
      %v1109 = vld [vmem:[#allocation3 + $0x8] sm:$0xff]
      %v1110 = vld [vmem:[#allocation3 + $0x10] sm:$0xff]
      %v1111 = vld [vmem:[#allocation3 + $0x18] sm:$0xff]
      %v1112 = vld [vmem:[#allocation3 + $0x20] sm:$0xff]
      %v1113 = vld [vmem:[#allocation3 + $0x28] sm:$0xff]
      %v1114 = vld [vmem:[#allocation3 + $0x30] sm:$0xff]
      %v1115 = vld [vmem:[#allocation3 + $0x38] sm:$0xff]
      %s1116 = scalar_lea.vmem %s303, 256
      %v1117 = vld [vmem:[%s1116] sm:$0xf]
      %v1118 = vld [vmem:[%s1116 + $0x4] sm:$0xf]
      %v1119 = vld [vmem:[%s1116 + $0x8] sm:$0xf]
      %v1120 = vld [vmem:[%s1116 + $0xc] sm:$0xf]
      %v1121 = vld [vmem:[%s1116 + $0x10] sm:$0xf]
      %v1122 = vld [vmem:[%s1116 + $0x14] sm:$0xf]
      %v1123 = vld [vmem:[%s1116 + $0x18] sm:$0xf]
      %v1124 = vld [vmem:[%s1116 + $0x1c] sm:$0xf]
      %v1125 = vld [vmem:[%s1116 + $0x20] sm:$0xf]
      %v1126 = vld [vmem:[%s1116 + $0x24] sm:$0xf]
      %v1127 = vld [vmem:[%s1116 + $0x28] sm:$0xf]
      %v1128 = vld [vmem:[%s1116 + $0x2c] sm:$0xf]
      %v1129 = vld [vmem:[%s1116 + $0x30] sm:$0xf]
      %v1130 = vld [vmem:[%s1116 + $0x34] sm:$0xf]
      %v1131 = vld [vmem:[%s1116 + $0x38] sm:$0xf]
      %v1132 = vld [vmem:[%s1116 + $0x3c] sm:$0xf]
      %v1149 = vunpack.c.l.b16 %v1117
      %v1150 = vunpack.c.l.b16 %v1118
      %v1151 = vunpack.c.l.b16 %v1119
      %v1152 = vunpack.c.l.b16 %v1120
      %v1153 = vunpack.c.l.b16 %v1121
      %v1154 = vunpack.c.l.b16 %v1122
      %v1155 = vunpack.c.l.b16 %v1123
      %v1156 = vunpack.c.l.b16 %v1124
      %v1157 = vunpack.c.l.b16 %v1125
      %v1158 = vunpack.c.l.b16 %v1126
      %v1159 = vunpack.c.l.b16 %v1127
      %v1160 = vunpack.c.l.b16 %v1128
      %v1161 = vunpack.c.l.b16 %v1129
      %v1162 = vunpack.c.l.b16 %v1130
      %v1163 = vunpack.c.l.b16 %v1131
      %v1164 = vunpack.c.l.b16 %v1132
      %v1165 = vpack.c.b16 %v1150, %v1149
      %v1166 = vpack.c.b16 %v1152, %v1151
      %v1167 = vpack.c.b16 %v1154, %v1153
      %v1168 = vpack.c.b16 %v1156, %v1155
      %v1169 = vpack.c.b16 %v1158, %v1157
      %v1170 = vpack.c.b16 %v1160, %v1159
      %v1171 = vpack.c.b16 %v1162, %v1161
      %v1172 = vpack.c.b16 %v1164, %v1163
      %1181 = vmatpush.bf16.msra.mxu0 %v1172
      %1182 = vmatpush.bf16.msra.mxu0 %v1171
      %1183 = vmatpush.bf16.msra.mxu0 %v1170
      %1184 = vmatpush.bf16.msra.mxu0 %v1169
      %1185 = vmatpush.bf16.msra.mxu0 %v1168
      %1186 = vmatpush.bf16.msra.mxu0 %v1167
      %1187 = vmatpush.bf16.msra.mxu0 %v1166
      %1188 = vmatpush.bf16.msra.mxu0 %v1165
      %1189 = vmatmul.bf16.gmra.mxu0 %v1104
      %v1190 = vpop.f32.mrf.mxu0
      %v1191 = vadd.f32 0.0, %v1190
      %v1192 = vpop.f32.mrf.mxu0
      %v1193 = vadd.f32 0.0, %v1192
      %1194 = vmatmul.bf16.gmra.mxu0 %v1105
      %v1195 = vpop.f32.mrf.mxu0
      %v1196 = vadd.f32 0.0, %v1195
      %v1197 = vpop.f32.mrf.mxu0
      %v1198 = vadd.f32 0.0, %v1197
      %1199 = vmatmul.bf16.gmra.mxu0 %v1106
      %v1200 = vpop.f32.mrf.mxu0
      %v1201 = vadd.f32 0.0, %v1200
      %v1202 = vpop.f32.mrf.mxu0
      %v1203 = vadd.f32 0.0, %v1202
      %1204 = vmatmul.bf16.gmra.mxu0 %v1107
      %v1205 = vpop.f32.mrf.mxu0
      %v1206 = vadd.f32 0.0, %v1205
      %v1207 = vpop.f32.mrf.mxu0
      %v1208 = vadd.f32 0.0, %v1207
      %1209 = vdwg.mxu0
      %v1210 = vadd.f32 %v1108, %v1191
      %v1211 = vadd.f32 %v1109, %v1193
      %v1212 = vadd.f32 %v1110, %v1196
      %v1213 = vadd.f32 %v1111, %v1198
      %v1214 = vadd.f32 %v1112, %v1201
      %v1215 = vadd.f32 %v1113, %v1203
      %v1216 = vadd.f32 %v1114, %v1206
      %v1217 = vadd.f32 %v1115, %v1208
      %1218 = vst [vmem:[#allocation3] sm:$0xff] %v1210
      %1219 = vst [vmem:[#allocation3 + $0x8] sm:$0xff] %v1211
      %1220 = vst [vmem:[#allocation3 + $0x10] sm:$0xff] %v1212
      %1221 = vst [vmem:[#allocation3 + $0x18] sm:$0xff] %v1213
      %1222 = vst [vmem:[#allocation3 + $0x20] sm:$0xff] %v1214
      %1223 = vst [vmem:[#allocation3 + $0x28] sm:$0xff] %v1215
      %1224 = vst [vmem:[#allocation3 + $0x30] sm:$0xff] %v1216
      %1225 = vst [vmem:[#allocation3 + $0x38] sm:$0xff] %v1217
      %v1226 = vld [vmem:[%s965 + $0x2] sm:$0xff]
      %v1227 = vld [vmem:[%s965 + $0x12] sm:$0xff]
      %v1228 = vld [vmem:[%s965 + $0x22] sm:$0xff]
      %v1229 = vld [vmem:[%s965 + $0x32] sm:$0xff]
      %v1230 = vld [vmem:[%s965 + $0x42] sm:$0xff]
      %v1231 = vld [vmem:[%s965 + $0x52] sm:$0xff]
      %v1232 = vld [vmem:[%s965 + $0x62] sm:$0xff]
      %v1233 = vld [vmem:[%s965 + $0x72] sm:$0xff]
      %v1234 = vpack.c.bf16 %v1227, %v1226
      %v1235 = vpack.c.bf16 %v1229, %v1228
      %v1236 = vpack.c.bf16 %v1231, %v1230
      %v1237 = vpack.c.bf16 %v1233, %v1232
      %v1238 = vld [vmem:[#allocation3] sm:$0xff]
      %v1239 = vld [vmem:[#allocation3 + $0x8] sm:$0xff]
      %v1240 = vld [vmem:[#allocation3 + $0x10] sm:$0xff]
      %v1241 = vld [vmem:[#allocation3 + $0x18] sm:$0xff]
      %v1242 = vld [vmem:[#allocation3 + $0x20] sm:$0xff]
      %v1243 = vld [vmem:[#allocation3 + $0x28] sm:$0xff]
      %v1244 = vld [vmem:[#allocation3 + $0x30] sm:$0xff]
      %v1245 = vld [vmem:[#allocation3 + $0x38] sm:$0xff]
      %s1246 = scalar_lea.vmem %s303, 320
      %v1247 = vld [vmem:[%s1246] sm:$0xf]
      %v1248 = vld [vmem:[%s1246 + $0x4] sm:$0xf]
      %v1249 = vld [vmem:[%s1246 + $0x8] sm:$0xf]
      %v1250 = vld [vmem:[%s1246 + $0xc] sm:$0xf]
      %v1251 = vld [vmem:[%s1246 + $0x10] sm:$0xf]
      %v1252 = vld [vmem:[%s1246 + $0x14] sm:$0xf]
      %v1253 = vld [vmem:[%s1246 + $0x18] sm:$0xf]
      %v1254 = vld [vmem:[%s1246 + $0x1c] sm:$0xf]
      %v1255 = vld [vmem:[%s1246 + $0x20] sm:$0xf]
      %v1256 = vld [vmem:[%s1246 + $0x24] sm:$0xf]
      %v1257 = vld [vmem:[%s1246 + $0x28] sm:$0xf]
      %v1258 = vld [vmem:[%s1246 + $0x2c] sm:$0xf]
      %v1259 = vld [vmem:[%s1246 + $0x30] sm:$0xf]
      %v1260 = vld [vmem:[%s1246 + $0x34] sm:$0xf]
      %v1261 = vld [vmem:[%s1246 + $0x38] sm:$0xf]
      %v1262 = vld [vmem:[%s1246 + $0x3c] sm:$0xf]
      %v1279 = vunpack.c.l.b16 %v1247
      %v1280 = vunpack.c.l.b16 %v1248
      %v1281 = vunpack.c.l.b16 %v1249
      %v1282 = vunpack.c.l.b16 %v1250
      %v1283 = vunpack.c.l.b16 %v1251
      %v1284 = vunpack.c.l.b16 %v1252
      %v1285 = vunpack.c.l.b16 %v1253
      %v1286 = vunpack.c.l.b16 %v1254
      %v1287 = vunpack.c.l.b16 %v1255
      %v1288 = vunpack.c.l.b16 %v1256
      %v1289 = vunpack.c.l.b16 %v1257
      %v1290 = vunpack.c.l.b16 %v1258
      %v1291 = vunpack.c.l.b16 %v1259
      %v1292 = vunpack.c.l.b16 %v1260
      %v1293 = vunpack.c.l.b16 %v1261
      %v1294 = vunpack.c.l.b16 %v1262
      %v1295 = vpack.c.b16 %v1280, %v1279
      %v1296 = vpack.c.b16 %v1282, %v1281
      %v1297 = vpack.c.b16 %v1284, %v1283
      %v1298 = vpack.c.b16 %v1286, %v1285
      %v1299 = vpack.c.b16 %v1288, %v1287
      %v1300 = vpack.c.b16 %v1290, %v1289
      %v1301 = vpack.c.b16 %v1292, %v1291
      %v1302 = vpack.c.b16 %v1294, %v1293
      %1311 = vmatpush.bf16.msra.mxu0 %v1302
      %1312 = vmatpush.bf16.msra.mxu0 %v1301
      %1313 = vmatpush.bf16.msra.mxu0 %v1300
      %1314 = vmatpush.bf16.msra.mxu0 %v1299
      %1315 = vmatpush.bf16.msra.mxu0 %v1298
      %1316 = vmatpush.bf16.msra.mxu0 %v1297
      %1317 = vmatpush.bf16.msra.mxu0 %v1296
      %1318 = vmatpush.bf16.msra.mxu0 %v1295
      %1319 = vmatmul.bf16.gmra.mxu0 %v1234
      %v1320 = vpop.f32.mrf.mxu0
      %v1321 = vadd.f32 0.0, %v1320
      %v1322 = vpop.f32.mrf.mxu0
      %v1323 = vadd.f32 0.0, %v1322
      %1324 = vmatmul.bf16.gmra.mxu0 %v1235
      %v1325 = vpop.f32.mrf.mxu0
      %v1326 = vadd.f32 0.0, %v1325
      %v1327 = vpop.f32.mrf.mxu0
      %v1328 = vadd.f32 0.0, %v1327
      %1329 = vmatmul.bf16.gmra.mxu0 %v1236
      %v1330 = vpop.f32.mrf.mxu0
      %v1331 = vadd.f32 0.0, %v1330
      %v1332 = vpop.f32.mrf.mxu0
      %v1333 = vadd.f32 0.0, %v1332
      %1334 = vmatmul.bf16.gmra.mxu0 %v1237
      %v1335 = vpop.f32.mrf.mxu0
      %v1336 = vadd.f32 0.0, %v1335
      %v1337 = vpop.f32.mrf.mxu0
      %v1338 = vadd.f32 0.0, %v1337
      %1339 = vdwg.mxu0
      %v1340 = vadd.f32 %v1238, %v1321
      %v1341 = vadd.f32 %v1239, %v1323
      %v1342 = vadd.f32 %v1240, %v1326
      %v1343 = vadd.f32 %v1241, %v1328
      %v1344 = vadd.f32 %v1242, %v1331
      %v1345 = vadd.f32 %v1243, %v1333
      %v1346 = vadd.f32 %v1244, %v1336
      %v1347 = vadd.f32 %v1245, %v1338
      %1348 = vst [vmem:[#allocation3] sm:$0xff] %v1340
      %1349 = vst [vmem:[#allocation3 + $0x8] sm:$0xff] %v1341
      %1350 = vst [vmem:[#allocation3 + $0x10] sm:$0xff] %v1342
      %1351 = vst [vmem:[#allocation3 + $0x18] sm:$0xff] %v1343
      %1352 = vst [vmem:[#allocation3 + $0x20] sm:$0xff] %v1344
      %1353 = vst [vmem:[#allocation3 + $0x28] sm:$0xff] %v1345
      %1354 = vst [vmem:[#allocation3 + $0x30] sm:$0xff] %v1346
      %1355 = vst [vmem:[#allocation3 + $0x38] sm:$0xff] %v1347
      %s1356 = scalar_lea.vmem [#allocation2], 32
      %v1357 = vld [vmem:[%s1356] sm:$0xff]
      %v1358 = vld [vmem:[%s1356 + $0x10] sm:$0xff]
      %v1359 = vld [vmem:[%s1356 + $0x20] sm:$0xff]
      %v1360 = vld [vmem:[%s1356 + $0x30] sm:$0xff]
      %v1361 = vld [vmem:[%s1356 + $0x40] sm:$0xff]
      %v1362 = vld [vmem:[%s1356 + $0x50] sm:$0xff]
      %v1363 = vld [vmem:[%s1356 + $0x60] sm:$0xff]
      %v1364 = vld [vmem:[%s1356 + $0x70] sm:$0xff]
      %v1365 = vpack.c.bf16 %v1358, %v1357
      %v1366 = vpack.c.bf16 %v1360, %v1359
      %v1367 = vpack.c.bf16 %v1362, %v1361
      %v1368 = vpack.c.bf16 %v1364, %v1363
      %v1369 = vld [vmem:[#allocation3] sm:$0xff]
      %v1370 = vld [vmem:[#allocation3 + $0x8] sm:$0xff]
      %v1371 = vld [vmem:[#allocation3 + $0x10] sm:$0xff]
      %v1372 = vld [vmem:[#allocation3 + $0x18] sm:$0xff]
      %v1373 = vld [vmem:[#allocation3 + $0x20] sm:$0xff]
      %v1374 = vld [vmem:[#allocation3 + $0x28] sm:$0xff]
      %v1375 = vld [vmem:[#allocation3 + $0x30] sm:$0xff]
      %v1376 = vld [vmem:[#allocation3 + $0x38] sm:$0xff]
      %s1377 = scalar_lea.vmem %s303, 384
      %v1378 = vld [vmem:[%s1377] sm:$0xf]
      %v1379 = vld [vmem:[%s1377 + $0x4] sm:$0xf]
      %v1380 = vld [vmem:[%s1377 + $0x8] sm:$0xf]
      %v1381 = vld [vmem:[%s1377 + $0xc] sm:$0xf]
      %v1382 = vld [vmem:[%s1377 + $0x10] sm:$0xf]
      %v1383 = vld [vmem:[%s1377 + $0x14] sm:$0xf]
      %v1384 = vld [vmem:[%s1377 + $0x18] sm:$0xf]
      %v1385 = vld [vmem:[%s1377 + $0x1c] sm:$0xf]
      %v1386 = vld [vmem:[%s1377 + $0x20] sm:$0xf]
      %v1387 = vld [vmem:[%s1377 + $0x24] sm:$0xf]
      %v1388 = vld [vmem:[%s1377 + $0x28] sm:$0xf]
      %v1389 = vld [vmem:[%s1377 + $0x2c] sm:$0xf]
      %v1390 = vld [vmem:[%s1377 + $0x30] sm:$0xf]
      %v1391 = vld [vmem:[%s1377 + $0x34] sm:$0xf]
      %v1392 = vld [vmem:[%s1377 + $0x38] sm:$0xf]
      %v1393 = vld [vmem:[%s1377 + $0x3c] sm:$0xf]
      %v1410 = vunpack.c.l.b16 %v1378
      %v1411 = vunpack.c.l.b16 %v1379
      %v1412 = vunpack.c.l.b16 %v1380
      %v1413 = vunpack.c.l.b16 %v1381
      %v1414 = vunpack.c.l.b16 %v1382
      %v1415 = vunpack.c.l.b16 %v1383
      %v1416 = vunpack.c.l.b16 %v1384
      %v1417 = vunpack.c.l.b16 %v1385
      %v1418 = vunpack.c.l.b16 %v1386
      %v1419 = vunpack.c.l.b16 %v1387
      %v1420 = vunpack.c.l.b16 %v1388
      %v1421 = vunpack.c.l.b16 %v1389
      %v1422 = vunpack.c.l.b16 %v1390
      %v1423 = vunpack.c.l.b16 %v1391
      %v1424 = vunpack.c.l.b16 %v1392
      %v1425 = vunpack.c.l.b16 %v1393
      %v1426 = vpack.c.b16 %v1411, %v1410
      %v1427 = vpack.c.b16 %v1413, %v1412
      %v1428 = vpack.c.b16 %v1415, %v1414
      %v1429 = vpack.c.b16 %v1417, %v1416
      %v1430 = vpack.c.b16 %v1419, %v1418
      %v1431 = vpack.c.b16 %v1421, %v1420
      %v1432 = vpack.c.b16 %v1423, %v1422
      %v1433 = vpack.c.b16 %v1425, %v1424
      %1442 = vmatpush.bf16.msra.mxu0 %v1433
      %1443 = vmatpush.bf16.msra.mxu0 %v1432
      %1444 = vmatpush.bf16.msra.mxu0 %v1431
      %1445 = vmatpush.bf16.msra.mxu0 %v1430
      %1446 = vmatpush.bf16.msra.mxu0 %v1429
      %1447 = vmatpush.bf16.msra.mxu0 %v1428
      %1448 = vmatpush.bf16.msra.mxu0 %v1427
      %1449 = vmatpush.bf16.msra.mxu0 %v1426
      %1450 = vmatmul.bf16.gmra.mxu0 %v1365
      %v1451 = vpop.f32.mrf.mxu0
      %v1452 = vadd.f32 0.0, %v1451
      %v1453 = vpop.f32.mrf.mxu0
      %v1454 = vadd.f32 0.0, %v1453
      %1455 = vmatmul.bf16.gmra.mxu0 %v1366
      %v1456 = vpop.f32.mrf.mxu0
      %v1457 = vadd.f32 0.0, %v1456
      %v1458 = vpop.f32.mrf.mxu0
      %v1459 = vadd.f32 0.0, %v1458
      %1460 = vmatmul.bf16.gmra.mxu0 %v1367
      %v1461 = vpop.f32.mrf.mxu0
      %v1462 = vadd.f32 0.0, %v1461
      %v1463 = vpop.f32.mrf.mxu0
      %v1464 = vadd.f32 0.0, %v1463
      %1465 = vmatmul.bf16.gmra.mxu0 %v1368
      %v1466 = vpop.f32.mrf.mxu0
      %v1467 = vadd.f32 0.0, %v1466
      %v1468 = vpop.f32.mrf.mxu0
      %v1469 = vadd.f32 0.0, %v1468
      %1470 = vdwg.mxu0
      %v1471 = vadd.f32 %v1369, %v1452
      %v1472 = vadd.f32 %v1370, %v1454
      %v1473 = vadd.f32 %v1371, %v1457
      %v1474 = vadd.f32 %v1372, %v1459
      %v1475 = vadd.f32 %v1373, %v1462
      %v1476 = vadd.f32 %v1374, %v1464
      %v1477 = vadd.f32 %v1375, %v1467
      %v1478 = vadd.f32 %v1376, %v1469
      %1479 = vst [vmem:[#allocation3] sm:$0xff] %v1471
      %1480 = vst [vmem:[#allocation3 + $0x8] sm:$0xff] %v1472
      %1481 = vst [vmem:[#allocation3 + $0x10] sm:$0xff] %v1473
      %1482 = vst [vmem:[#allocation3 + $0x18] sm:$0xff] %v1474
      %1483 = vst [vmem:[#allocation3 + $0x20] sm:$0xff] %v1475
      %1484 = vst [vmem:[#allocation3 + $0x28] sm:$0xff] %v1476
      %1485 = vst [vmem:[#allocation3 + $0x30] sm:$0xff] %v1477
      %1486 = vst [vmem:[#allocation3 + $0x38] sm:$0xff] %v1478
      %v1487 = vld [vmem:[%s1356 + $0x1] sm:$0xff]
      %v1488 = vld [vmem:[%s1356 + $0x11] sm:$0xff]
      %v1489 = vld [vmem:[%s1356 + $0x21] sm:$0xff]
      %v1490 = vld [vmem:[%s1356 + $0x31] sm:$0xff]
      %v1491 = vld [vmem:[%s1356 + $0x41] sm:$0xff]
      %v1492 = vld [vmem:[%s1356 + $0x51] sm:$0xff]
      %v1493 = vld [vmem:[%s1356 + $0x61] sm:$0xff]
      %v1494 = vld [vmem:[%s1356 + $0x71] sm:$0xff]
      %v1495 = vpack.c.bf16 %v1488, %v1487
      %v1496 = vpack.c.bf16 %v1490, %v1489
      %v1497 = vpack.c.bf16 %v1492, %v1491
      %v1498 = vpack.c.bf16 %v1494, %v1493
      %v1499 = vld [vmem:[#allocation3] sm:$0xff]
      %v1500 = vld [vmem:[#allocation3 + $0x8] sm:$0xff]
      %v1501 = vld [vmem:[#allocation3 + $0x10] sm:$0xff]
      %v1502 = vld [vmem:[#allocation3 + $0x18] sm:$0xff]
      %v1503 = vld [vmem:[#allocation3 + $0x20] sm:$0xff]
      %v1504 = vld [vmem:[#allocation3 + $0x28] sm:$0xff]
      %v1505 = vld [vmem:[#allocation3 + $0x30] sm:$0xff]
      %v1506 = vld [vmem:[#allocation3 + $0x38] sm:$0xff]
      %s1507 = scalar_lea.vmem %s303, 448
      %v1508 = vld [vmem:[%s1507] sm:$0xf]
      %v1509 = vld [vmem:[%s1507 + $0x4] sm:$0xf]
      %v1510 = vld [vmem:[%s1507 + $0x8] sm:$0xf]
      %v1511 = vld [vmem:[%s1507 + $0xc] sm:$0xf]
      %v1512 = vld [vmem:[%s1507 + $0x10] sm:$0xf]
      %v1513 = vld [vmem:[%s1507 + $0x14] sm:$0xf]
      %v1514 = vld [vmem:[%s1507 + $0x18] sm:$0xf]
      %v1515 = vld [vmem:[%s1507 + $0x1c] sm:$0xf]
      %v1516 = vld [vmem:[%s1507 + $0x20] sm:$0xf]
      %v1517 = vld [vmem:[%s1507 + $0x24] sm:$0xf]
      %v1518 = vld [vmem:[%s1507 + $0x28] sm:$0xf]
      %v1519 = vld [vmem:[%s1507 + $0x2c] sm:$0xf]
      %v1520 = vld [vmem:[%s1507 + $0x30] sm:$0xf]
      %v1521 = vld [vmem:[%s1507 + $0x34] sm:$0xf]
      %v1522 = vld [vmem:[%s1507 + $0x38] sm:$0xf]
      %v1523 = vld [vmem:[%s1507 + $0x3c] sm:$0xf]
      %v1540 = vunpack.c.l.b16 %v1508
      %v1541 = vunpack.c.l.b16 %v1509
      %v1542 = vunpack.c.l.b16 %v1510
      %v1543 = vunpack.c.l.b16 %v1511
      %v1544 = vunpack.c.l.b16 %v1512
      %v1545 = vunpack.c.l.b16 %v1513
      %v1546 = vunpack.c.l.b16 %v1514
      %v1547 = vunpack.c.l.b16 %v1515
      %v1548 = vunpack.c.l.b16 %v1516
      %v1549 = vunpack.c.l.b16 %v1517
      %v1550 = vunpack.c.l.b16 %v1518
      %v1551 = vunpack.c.l.b16 %v1519
      %v1552 = vunpack.c.l.b16 %v1520
      %v1553 = vunpack.c.l.b16 %v1521
      %v1554 = vunpack.c.l.b16 %v1522
      %v1555 = vunpack.c.l.b16 %v1523
      %v1556 = vpack.c.b16 %v1541, %v1540
      %v1557 = vpack.c.b16 %v1543, %v1542
      %v1558 = vpack.c.b16 %v1545, %v1544
      %v1559 = vpack.c.b16 %v1547, %v1546
      %v1560 = vpack.c.b16 %v1549, %v1548
      %v1561 = vpack.c.b16 %v1551, %v1550
      %v1562 = vpack.c.b16 %v1553, %v1552
      %v1563 = vpack.c.b16 %v1555, %v1554
      %1572 = vmatpush.bf16.msra.mxu0 %v1563
      %1573 = vmatpush.bf16.msra.mxu0 %v1562
      %1574 = vmatpush.bf16.msra.mxu0 %v1561
      %1575 = vmatpush.bf16.msra.mxu0 %v1560
      %1576 = vmatpush.bf16.msra.mxu0 %v1559
      %1577 = vmatpush.bf16.msra.mxu0 %v1558
      %1578 = vmatpush.bf16.msra.mxu0 %v1557
      %1579 = vmatpush.bf16.msra.mxu0 %v1556
      %1580 = vmatmul.bf16.gmra.mxu0 %v1495
      %v1581 = vpop.f32.mrf.mxu0
      %v1582 = vadd.f32 0.0, %v1581
      %v1583 = vpop.f32.mrf.mxu0
      %v1584 = vadd.f32 0.0, %v1583
      %1585 = vmatmul.bf16.gmra.mxu0 %v1496
      %v1586 = vpop.f32.mrf.mxu0
      %v1587 = vadd.f32 0.0, %v1586
      %v1588 = vpop.f32.mrf.mxu0
      %v1589 = vadd.f32 0.0, %v1588
      %1590 = vmatmul.bf16.gmra.mxu0 %v1497
      %v1591 = vpop.f32.mrf.mxu0
      %v1592 = vadd.f32 0.0, %v1591
      %v1593 = vpop.f32.mrf.mxu0
      %v1594 = vadd.f32 0.0, %v1593
      %1595 = vmatmul.bf16.gmra.mxu0 %v1498
      %v1596 = vpop.f32.mrf.mxu0
      %v1597 = vadd.f32 0.0, %v1596
      %v1598 = vpop.f32.mrf.mxu0
      %v1599 = vadd.f32 0.0, %v1598
      %1600 = vdwg.mxu0
      %v1601 = vadd.f32 %v1499, %v1582
      %v1602 = vadd.f32 %v1500, %v1584
      %v1603 = vadd.f32 %v1501, %v1587
      %v1604 = vadd.f32 %v1502, %v1589
      %v1605 = vadd.f32 %v1503, %v1592
      %v1606 = vadd.f32 %v1504, %v1594
      %v1607 = vadd.f32 %v1505, %v1597
      %v1608 = vadd.f32 %v1506, %v1599
      %1609 = vst [vmem:[#allocation3] sm:$0xff] %v1601
      %1610 = vst [vmem:[#allocation3 + $0x8] sm:$0xff] %v1602
      %1611 = vst [vmem:[#allocation3 + $0x10] sm:$0xff] %v1603
      %1612 = vst [vmem:[#allocation3 + $0x18] sm:$0xff] %v1604
      %1613 = vst [vmem:[#allocation3 + $0x20] sm:$0xff] %v1605
      %1614 = vst [vmem:[#allocation3 + $0x28] sm:$0xff] %v1606
      %1615 = vst [vmem:[#allocation3 + $0x30] sm:$0xff] %v1607
      %1616 = vst [vmem:[#allocation3 + $0x38] sm:$0xff] %v1608
      %v1617 = vld [vmem:[%s1356 + $0x2] sm:$0xff]
      %v1618 = vld [vmem:[%s1356 + $0x12] sm:$0xff]
      %v1619 = vld [vmem:[%s1356 + $0x22] sm:$0xff]
      %v1620 = vld [vmem:[%s1356 + $0x32] sm:$0xff]
      %v1621 = vld [vmem:[%s1356 + $0x42] sm:$0xff]
      %v1622 = vld [vmem:[%s1356 + $0x52] sm:$0xff]
      %v1623 = vld [vmem:[%s1356 + $0x62] sm:$0xff]
      %v1624 = vld [vmem:[%s1356 + $0x72] sm:$0xff]
      %v1625 = vpack.c.bf16 %v1618, %v1617
      %v1626 = vpack.c.bf16 %v1620, %v1619
      %v1627 = vpack.c.bf16 %v1622, %v1621
      %v1628 = vpack.c.bf16 %v1624, %v1623
      %v1629 = vld [vmem:[#allocation3] sm:$0xff]
      %v1630 = vld [vmem:[#allocation3 + $0x8] sm:$0xff]
      %v1631 = vld [vmem:[#allocation3 + $0x10] sm:$0xff]
      %v1632 = vld [vmem:[#allocation3 + $0x18] sm:$0xff]
      %v1633 = vld [vmem:[#allocation3 + $0x20] sm:$0xff]
      %v1634 = vld [vmem:[#allocation3 + $0x28] sm:$0xff]
      %v1635 = vld [vmem:[#allocation3 + $0x30] sm:$0xff]
      %v1636 = vld [vmem:[#allocation3 + $0x38] sm:$0xff]
      %s1637 = scalar_lea.vmem %s303, 512
      %v1638 = vld [vmem:[%s1637] sm:$0xf]
      %v1639 = vld [vmem:[%s1637 + $0x4] sm:$0xf]
      %v1640 = vld [vmem:[%s1637 + $0x8] sm:$0xf]
      %v1641 = vld [vmem:[%s1637 + $0xc] sm:$0xf]
      %v1642 = vld [vmem:[%s1637 + $0x10] sm:$0xf]
      %v1643 = vld [vmem:[%s1637 + $0x14] sm:$0xf]
      %v1644 = vld [vmem:[%s1637 + $0x18] sm:$0xf]
      %v1645 = vld [vmem:[%s1637 + $0x1c] sm:$0xf]
      %v1646 = vld [vmem:[%s1637 + $0x20] sm:$0xf]
      %v1647 = vld [vmem:[%s1637 + $0x24] sm:$0xf]
      %v1648 = vld [vmem:[%s1637 + $0x28] sm:$0xf]
      %v1649 = vld [vmem:[%s1637 + $0x2c] sm:$0xf]
      %v1650 = vld [vmem:[%s1637 + $0x30] sm:$0xf]
      %v1651 = vld [vmem:[%s1637 + $0x34] sm:$0xf]
      %v1652 = vld [vmem:[%s1637 + $0x38] sm:$0xf]
      %v1653 = vld [vmem:[%s1637 + $0x3c] sm:$0xf]
      %v1670 = vunpack.c.l.b16 %v1638
      %v1671 = vunpack.c.l.b16 %v1639
      %v1672 = vunpack.c.l.b16 %v1640
      %v1673 = vunpack.c.l.b16 %v1641
      %v1674 = vunpack.c.l.b16 %v1642
      %v1675 = vunpack.c.l.b16 %v1643
      %v1676 = vunpack.c.l.b16 %v1644
      %v1677 = vunpack.c.l.b16 %v1645
      %v1678 = vunpack.c.l.b16 %v1646
      %v1679 = vunpack.c.l.b16 %v1647
      %v1680 = vunpack.c.l.b16 %v1648
      %v1681 = vunpack.c.l.b16 %v1649
      %v1682 = vunpack.c.l.b16 %v1650
      %v1683 = vunpack.c.l.b16 %v1651
      %v1684 = vunpack.c.l.b16 %v1652
      %v1685 = vunpack.c.l.b16 %v1653
      %v1686 = vpack.c.b16 %v1671, %v1670
      %v1687 = vpack.c.b16 %v1673, %v1672
      %v1688 = vpack.c.b16 %v1675, %v1674
      %v1689 = vpack.c.b16 %v1677, %v1676
      %v1690 = vpack.c.b16 %v1679, %v1678
      %v1691 = vpack.c.b16 %v1681, %v1680
      %v1692 = vpack.c.b16 %v1683, %v1682
      %v1693 = vpack.c.b16 %v1685, %v1684
      %1702 = vmatpush.bf16.msra.mxu0 %v1693
      %1703 = vmatpush.bf16.msra.mxu0 %v1692
      %1704 = vmatpush.bf16.msra.mxu0 %v1691
      %1705 = vmatpush.bf16.msra.mxu0 %v1690
      %1706 = vmatpush.bf16.msra.mxu0 %v1689
      %1707 = vmatpush.bf16.msra.mxu0 %v1688
      %1708 = vmatpush.bf16.msra.mxu0 %v1687
      %1709 = vmatpush.bf16.msra.mxu0 %v1686
      %1710 = vmatmul.bf16.gmra.mxu0 %v1625
      %v1711 = vpop.f32.mrf.mxu0
      %v1712 = vadd.f32 0.0, %v1711
      %v1713 = vpop.f32.mrf.mxu0
      %v1714 = vadd.f32 0.0, %v1713
      %1715 = vmatmul.bf16.gmra.mxu0 %v1626
      %v1716 = vpop.f32.mrf.mxu0
      %v1717 = vadd.f32 0.0, %v1716
      %v1718 = vpop.f32.mrf.mxu0
      %v1719 = vadd.f32 0.0, %v1718
      %1720 = vmatmul.bf16.gmra.mxu0 %v1627
      %v1721 = vpop.f32.mrf.mxu0
      %v1722 = vadd.f32 0.0, %v1721
      %v1723 = vpop.f32.mrf.mxu0
      %v1724 = vadd.f32 0.0, %v1723
      %1725 = vmatmul.bf16.gmra.mxu0 %v1628
      %v1726 = vpop.f32.mrf.mxu0
      %v1727 = vadd.f32 0.0, %v1726
      %v1728 = vpop.f32.mrf.mxu0
      %v1729 = vadd.f32 0.0, %v1728
      %1730 = vdwg.mxu0
      %v1731 = vadd.f32 %v1629, %v1712
      %v1732 = vadd.f32 %v1630, %v1714
      %v1733 = vadd.f32 %v1631, %v1717
      %v1734 = vadd.f32 %v1632, %v1719
      %v1735 = vadd.f32 %v1633, %v1722
      %v1736 = vadd.f32 %v1634, %v1724
      %v1737 = vadd.f32 %v1635, %v1727
      %v1738 = vadd.f32 %v1636, %v1729
      %1739 = vst [vmem:[#allocation3] sm:$0xff] %v1731
      %1740 = vst [vmem:[#allocation3 + $0x8] sm:$0xff] %v1732
      %1741 = vst [vmem:[#allocation3 + $0x10] sm:$0xff] %v1733
      %1742 = vst [vmem:[#allocation3 + $0x18] sm:$0xff] %v1734
      %1743 = vst [vmem:[#allocation3 + $0x20] sm:$0xff] %v1735
      %1744 = vst [vmem:[#allocation3 + $0x28] sm:$0xff] %v1736
      %1745 = vst [vmem:[#allocation3 + $0x30] sm:$0xff] %v1737
      %1746 = vst [vmem:[#allocation3 + $0x38] sm:$0xff] %v1738
      %v1747 = vld [vmem:[#allocation3] sm:$0xff]
      %v1748 = vld [vmem:[#allocation3 + $0x8] sm:$0xff]
      %v1749 = vld [vmem:[#allocation3 + $0x10] sm:$0xff]
      %v1750 = vld [vmem:[#allocation3 + $0x18] sm:$0xff]
      %v1751 = vld [vmem:[#allocation3 + $0x20] sm:$0xff]
      %v1752 = vld [vmem:[#allocation3 + $0x28] sm:$0xff]
      %v1753 = vld [vmem:[#allocation3 + $0x30] sm:$0xff]
      %v1754 = vld [vmem:[#allocation3 + $0x38] sm:$0xff]
      %v1755 = vld [vmem:[%s311] sm:$0xff]
      %v1756 = vld [vmem:[%s311 + $0x8] sm:$0xff]
      %v1757 = vld [vmem:[%s311 + $0x10] sm:$0xff]
      %v1758 = vld [vmem:[%s311 + $0x18] sm:$0xff]
      %v1759 = vld [vmem:[%s311 + $0x20] sm:$0xff]
      %v1760 = vld [vmem:[%s311 + $0x28] sm:$0xff]
      %v1761 = vld [vmem:[%s311 + $0x30] sm:$0xff]
      %v1762 = vld [vmem:[%s311 + $0x38] sm:$0xff]
      %v1763 = vadd.f32 %v1747, %v1755
      %v1764 = vadd.f32 %v1748, %v1756
      %v1765 = vadd.f32 %v1749, %v1757
      %v1766 = vadd.f32 %v1750, %v1758
      %v1767 = vadd.f32 %v1751, %v1759
      %v1768 = vadd.f32 %v1752, %v1760
      %v1769 = vadd.f32 %v1753, %v1761
      %v1770 = vadd.f32 %v1754, %v1762
      %1771 = vst [vmem:[%s319] sm:$0xff] %v1763
      %1772 = vst [vmem:[%s319 + $0x8] sm:$0xff] %v1764
      %1773 = vst [vmem:[%s319 + $0x10] sm:$0xff] %v1765
      %1774 = vst [vmem:[%s319 + $0x18] sm:$0xff] %v1766
      %1775 = vst [vmem:[%s319 + $0x20] sm:$0xff] %v1767
      %1776 = vst [vmem:[%s319 + $0x28] sm:$0xff] %v1768
      %1777 = vst [vmem:[%s319 + $0x30] sm:$0xff] %v1769
      %1778 = vst [vmem:[%s319 + $0x38] sm:$0xff] %v1770
      %p1779 = scmp.lt.s32.totalorder %s21, 1
      %s1780 = scalar_select %p1779, %s21, 1
      %p1781 = scmp.lt.s32.totalorder %s22, 0
      %s1782 = scalar_select %p1781, %s22, 0
      %s1783 = smul.addr %s1780, 8
      %s1784 = sadd.s32 %s1782, %s1783
      %s1785 = smul.addr %s1784, 8
      %s1786 = scalar_lea.vmem %s6, %s1785
      // Predicated region
      $region45: #{residual_block_forward.7} parent=43 // pred_check
        %p1787 = pneg %p192
      $region46: #{residual_block_forward.7} parent=43 // pred_check_branch
        %1789 = sbr.rel (%p1787) target = $region48
      $region47: #{residual_block_forward.7} parent=43 // pred_region
        _
      $region48: #{residual_block_forward.7} parent=43 // pred_fallthru
        _
    $region44: #{residual_block_forward.7} parent=5 // pred_fallthru
      _
    %p1790 = scmp.le.s32.totalorder 2, %s12
    // Predicated region
    $region49: #{residual_block_forward.7} parent=5 // pred_check
      %p1791 = pneg %p1790
    $region50: #{residual_block_forward.7} parent=5 // pred_check_branch
      %1793 = sbr.rel (%p1791) target = $region52
    $region51: #{residual_block_forward.7} parent=5 // pred_region
      %s1794 = ssub.s32 %s12, 2
      // Predicated region
      $region53: #{residual_block_forward.7} parent=51 // pred_check
        %p1795 = pneg %p198
      $region54: #{residual_block_forward.7} parent=51 // pred_check_branch
        %1797 = sbr.rel (%p1795) target = $region56
      $region55: #{residual_block_forward.7} parent=51 // pred_region
        %p1798 = scmp.lt.s32.totalorder %s23, 1
        %s1799 = scalar_select %p1798, %s23, 1
        %p1800 = scmp.lt.s32.totalorder %s24, 0
        %s1801 = scalar_select %p1800, %s24, 0
        %s1802 = smul.addr %s1799, 8
        %s1803 = sadd.s32 %s1801, %s1802
        %s1804 = smul.addr %s1803, 8
        %s1805 = scalar_lea.vmem %s6, %s1804
      $region56: #{residual_block_forward.7} parent=51 // pred_fallthru
        _
    $region52: #{residual_block_forward.7} parent=5 // pred_fallthru
      _
  $region6: #{residual_block_forward.7} parent=0 // loop_footer
    %s16 = sadd.s32 1, %s12
  $region7: #{residual_block_forward.7} parent=0 // loop_footer_branch
    %11 = sbr.rel target = $region3
  $region8: #{residual_block_forward.7} parent=0 // loop_exit
    _

</llo_original>
